<compile_context>
chip_gen: v7x
topology: tpu7x:2x2x1
jax: 0.10.0
libtpu: 0.0.40
codegen_flags: <defaults>
</compile_context>

<pallas_src>
import functools

import jax
import jax.numpy as jnp
from jax import lax
from jax.experimental import pallas as pl
from jax.experimental.pallas import tpu as pltpu

_HI = lax.Precision.HIGHEST


def _dot(a, b, precision=_HI):
    return jnp.dot(a, b, precision=precision, preferred_element_type=jnp.float32)


def ema_kernel(x_ref, phw_ref, w1bd_ref, b1_ref, uh2_ref, uw2_ref, w3s_ref,
               b3_ref, gamma_ref, beta_ref, sum2_ref, gs_ref, ex_ref, mask_ref,
               o_ref, *, w, hw, cg, eps, padded, mix_prec):
    m, hw_p = x_ref.shape
    inv_hw = 1.0 / hw
    x = x_ref[...].astype(jnp.float32)                                  # (M, hw_p)
    if padded:
        lanemask = mask_ref[pl.ds(4, 1), :]                             # in-image lanes (center tap)

    # ---- pool_h / pool_w fused into ONE matmul, then the shared 1x1 conv over the h+w axis ----
    x_hw = _dot(x, phw_ref[...], mix_prec)                              # (M, h+w)
    a = jax.nn.sigmoid(_dot(w1bd_ref[...], x_hw, mix_prec) + b1_ref[...])   # (M, h+w)
    # un-pool both directional gates back onto the hw lane axis (zero-extended unpool matrices)
    pre = x * _dot(a, uh2_ref[...], mix_prec) * _dot(a, uw2_ref[...], mix_prec)

    # ---- GroupNorm(num_groups == channels): per-row instance norm over the real hw lanes ----
    mu = jnp.sum(pre, axis=1, keepdims=True) * inv_hw
    cen = pre - mu
    if padded:
        cen = cen * lanemask
    var = jnp.sum(cen * cen, axis=1, keepdims=True) * inv_hw
    x1 = cen * lax.rsqrt(var + eps) * gamma_ref[...] + beta_ref[...]
    if padded:
        x1 = x1 * lanemask

    # ---- 3x3 conv (padding 1): accumulate nine roll+mask taps, no (9M, hw) staging buffer ----
    acc = jnp.zeros((m, hw_p), jnp.float32)
    for k in range(9):
        dy, dx = k // 3 - 1, k % 3 - 1
        s = dy * w + dx
        if s == 0:
            tap = x                                       # pad lanes of x are already zero
        else:
            tap = pltpu.roll(x, shift=(-s) % hw_p, axis=1) * mask_ref[pl.ds(k, 1), :]
        acc = acc + _dot(w3s_ref[k], tap, mix_prec)
    x2 = acc + b3_ref[...]
    if padded:
        x2 = x2 * lanemask

    # ---- cross attention: per-slice channel softmax of spatial means (x1 <-> x2 gating) ----
    m1 = jnp.sum(x1, axis=1, keepdims=True) * inv_hw                    # (M, 1)
    m2 = jnp.sum(x2, axis=1, keepdims=True) * inv_hw                    # (M, 1)
    mm = jnp.concatenate([m1, m2], axis=0)                              # (2M, 1): batch both softmaxes
    # Per-slice mean shift: softmax-invariant (value cancels exactly, so DEFAULT precision is
    # free) and it guarantees the denominator >= 1, so no NaN from underflowing exps.
    shift = _dot(sum2_ref[...], mm, lax.Precision.DEFAULT) * (1.0 / cg)
    zz = jnp.exp(mm - shift)
    den = _dot(sum2_ref[...], zz)                                       # per-slice sums, >= 1
    ss = zz / den
    s1 = ss[:m]                                                         # softmax of x1 spatial means
    s2 = ss[m:]                                                         # softmax of x2 spatial means
    wts = _dot(gs_ref[...], s1 * x2 + s2 * x1)                          # (BGT, hw_p)
    gate = _dot(ex_ref[...], jax.nn.sigmoid(wts))                       # (M, hw_p)
    o_ref[...] = (x * gate).astype(o_ref.dtype)


def _vmem_capacity_bytes():
    try:
        return int(pltpu.get_tpu_info().vmem_capacity_bytes)
    except Exception:
        return 64 * 1024 * 1024          # conservative default (v7x per-TensorCore VMEM)


def _vmem_need_bytes(m, bgt, hw_p, h, w):
    f = 4
    consts = (m * m + 9 * m * m + 4 * m * m + 4 * m
              + hw_p * (h + w) + 2 * (h + w) * hw_p
              + 2 * bgt * m + 9 * hw_p) * f
    io = 2 * m * hw_p * f                # x block + out block (one buffer each)
    live = 8 * m * hw_p * f              # in-kernel f32 temporaries (x, pre, x1, acc/x2, tap, gate, ...)
    return 2 * (consts + io) + live      # double-buffered pipelined operands


def _choose_bgt(bg, cg, hw_p, h, w, budget_bytes):
    """Slices per grid step.  Must divide bg, keep M = bgt*cg tile friendly (M % 8 == 0 or the
    full extent), fit the VMEM budget, keep M <= ~128 (the kron block-diagonal MAC waste grows
    with BGT) and keep >= 2 (ideally >= 4) grid steps so both v7x TensorCores get work."""
    rows = bg * cg
    cands = []
    for d in range(1, bg + 1):
        if bg % d:
            continue
        m = d * cg
        if (m % 8) and (m != rows):
            continue
        if _vmem_need_bytes(m, d, hw_p, h, w) > budget_bytes:
            continue
        cands.append(d)
    if not cands:
        raise ValueError(
            f"EMA pallas kernel: no tile-friendly block for bg={bg}, cg={cg}, hw_p={hw_p} within "
            f"a {budget_bytes}-byte VMEM budget (need bgt*cg % 8 == 0 or the full row extent).")
    for min_steps in (4, 2, 1):
        ok = [d for d in cands if bg // d >= min_steps]
        if not ok:
            continue
        capped = [d for d in ok if d * cg <= 128]
        return max(capped) if capped else min(ok)
    return cands[0]


def make_ema_forward(params, groups, x_shape, x_dtype=jnp.float32, *, eps=1e-5,
                     mixing_precision=_HI):
    """Build all EMA constants once (hoisted out of the per-call path) and return a jitted
    forward function x -> EMA(x)."""
    b, c, h, w = x_shape
    assert c % groups == 0 and (c // groups) > 0
    cg = c // groups
    bg = b * groups
    rows = bg * cg
    hw = h * w
    hw_p = ((hw + 127) // 128) * 128     # lane-dense padded spatial axis (unmasked vst's)

    vmem_cap = _vmem_capacity_bytes()
    vmem_limit = min(int(vmem_cap * 0.75), 100 * 1024 * 1024)
    bgt = _choose_bgt(bg, cg, hw_p, h, w, int(vmem_limit * 0.7))
    m = bgt * cg

    f32 = jnp.float32
    eye = jnp.eye(bgt, dtype=f32)

    # channel-mixing weights, block-diagonal over the BGT slices handled per grid step
    w1bd = jnp.kron(eye, params["w1"].astype(f32))                              # (M, M)
    w3k = jnp.transpose(params["w3"].astype(f32), (2, 3, 0, 1)).reshape(9, cg, cg)
    w3s = jnp.stack([jnp.kron(eye, w3k[k]) for k in range(9)], axis=0)          # (9, M, M)
    b1t = jnp.tile(params["b1"].astype(f32), bgt).reshape(m, 1)
    b3t = jnp.tile(params["b3"].astype(f32), bgt).reshape(m, 1)
    gammat = jnp.tile(params["gamma"].astype(f32), bgt).reshape(m, 1)
    betat = jnp.tile(params["beta"].astype(f32), bgt).reshape(m, 1)

    # fused pooling matrix (hw -> h+w) and zero-extended un-pooling matrices (h+w -> hw)
    p = jnp.arange(hw_p)
    py, px = p // w, p % w
    valid = p < hw
    ph = jnp.where((py[:, None] == jnp.arange(h)[None, :]) & valid[:, None], 1.0 / w, 0.0)
    pw = jnp.where((px[:, None] == jnp.arange(w)[None, :]) & valid[:, None], 1.0 / h, 0.0)
    phw = jnp.concatenate([ph, pw], axis=1).astype(f32)                         # (hw_p, h+w)
    on_h = ((jnp.arange(h)[:, None] == py[None, :]) & valid[None, :]).astype(f32)
    on_w = ((jnp.arange(w)[:, None] == px[None, :]) & valid[None, :]).astype(f32)
    uh2 = jnp.concatenate([on_h, jnp.zeros((w, hw_p), f32)], axis=0)            # (h+w, hw_p)
    uw2 = jnp.concatenate([jnp.zeros((h, hw_p), f32), on_w], axis=0)            # (h+w, hw_p)

    # slice-membership matrices (group-sum / row-expand) + batched sum-broadcast for the softmax
    gs = jnp.kron(eye, jnp.ones((1, cg), f32))                                  # (BGT, M)
    exm = jnp.kron(eye, jnp.ones((cg, 1), f32))                                 # (M, BGT)
    sum2 = jnp.kron(jnp.eye(2 * bgt, dtype=f32), jnp.ones((cg, cg), f32))       # (2M, 2M)

    # boundary masks for the nine shifted taps of the 3x3 conv (row 4 doubles as the lane mask)
    masks = []
    for k in range(9):
        dy, dx = k // 3 - 1, k % 3 - 1
        ok = valid & (py + dy >= 0) & (py + dy < h) & (px + dx >= 0) & (px + dx < w)
        masks.append(ok.astype(f32))
    mask9 = jnp.stack(masks, axis=0)                                            # (9, hw_p)

    consts = (phw, w1bd, b1t, uh2, uw2, w3s, b3t, gammat, betat, sum2, gs, exm, mask9)

    c2 = lambda i: (0, 0)
    c3 = lambda i: (0, 0, 0)
    grid_spec = pltpu.PrefetchScalarGridSpec(
        num_scalar_prefetch=0,
        grid=(bg // bgt,),
        in_specs=[
            pl.BlockSpec((m, hw_p), lambda i: (i, 0)),       # x
            pl.BlockSpec((hw_p, h + w), c2),                 # fused pool matrix
            pl.BlockSpec((m, m), c2),                        # 1x1 conv (block-diagonal)
            pl.BlockSpec((m, 1), c2),                        # b1
            pl.BlockSpec((h + w, hw_p), c2),                 # unpool (height gate)
            pl.BlockSpec((h + w, hw_p), c2),                 # unpool (width gate)
            pl.BlockSpec((9, m, m), c3),                     # 3x3 conv taps (block-diagonal)
            pl.BlockSpec((m, 1), c2),                        # b3
            pl.BlockSpec((m, 1), c2),                        # gamma
            pl.BlockSpec((m, 1), c2),                        # beta
            pl.BlockSpec((2 * m, 2 * m), c2),                # per-slice sum/broadcast (batched)
            pl.BlockSpec((bgt, m), c2),                      # group-sum
            pl.BlockSpec((m, bgt), c2),                      # row-expand
            pl.BlockSpec((9, hw_p), c2),                     # tap boundary masks
        ],
        out_specs=pl.BlockSpec((m, hw_p), lambda i: (i, 0)),
    )
    kern = functools.partial(ema_kernel, w=w, hw=hw, cg=cg, eps=eps,
                             padded=(hw_p != hw), mix_prec=mixing_precision)
    call = pl.pallas_call(
        kern,
        out_shape=jax.ShapeDtypeStruct((rows, hw_p), x_dtype),
        grid_spec=grid_spec,
        compiler_params=pltpu.CompilerParams(
            dimension_semantics=("parallel",),
            vmem_limit_bytes=vmem_limit,
        ),
    )

    @jax.jit
    def run(x, cs):
        gx = x.reshape(rows, hw)
        if hw_p != hw:
            gx = jnp.pad(gx, ((0, 0), (0, hw_p - hw)))
        out = call(gx, *cs)
        if hw_p != hw:
            out = out[:, :hw]
        return out.reshape(b, c, h, w)

    return lambda x: run(x, consts)


def ema_forward(x, params, groups, *, eps=1e-5):
    """One-shot convenience wrapper (prefer make_ema_forward to amortize the constant build)."""
    return make_ema_forward(params, groups, x.shape, x.dtype, eps=eps)(x)


def ema_reference(x, params, groups, eps=1e-5):
    """Pure-JAX reference matching the PyTorch EMA forward."""
    b, c, h, w = x.shape
    cg = c // groups
    g = x.reshape(b * groups, cg, h, w).astype(jnp.float32)
    x_h = jnp.mean(g, axis=3)                               # (bg, cg, h)
    x_w = jnp.mean(g, axis=2)                               # (bg, cg, w)
    cat = jnp.concatenate([x_h, x_w], axis=2)               # (bg, cg, h+w)
    mix = jnp.einsum("oi,bip->bop", params["w1"], cat,
                     precision=_HI) + params["b1"][None, :, None]
    a_h = jax.nn.sigmoid(mix[:, :, :h])[..., None]          # (bg, cg, h, 1)
    a_w = jax.nn.sigmoid(mix[:, :, h:])[:, :, None, :]      # (bg, cg, 1, w)
    pre = g * a_h * a_w
    mu = jnp.mean(pre, axis=(2, 3), keepdims=True)
    var = jnp.mean((pre - mu) ** 2, axis=(2, 3), keepdims=True)
    x1 = (pre - mu) / jnp.sqrt(var + eps)
    x1 = x1 * params["gamma"][None, :, None, None] + params["beta"][None, :, None, None]
    x2 = jax.lax.conv_general_dilated(
        g, params["w3"], window_strides=(1, 1), padding=((1, 1), (1, 1)),
        dimension_numbers=("NCHW", "OIHW", "NCHW"),
        precision=_HI) + params["b3"][None, :, None, None]
    s1 = jax.nn.softmax(jnp.mean(x1, axis=(2, 3)), axis=-1)  # (bg, cg)
    s2 = jax.nn.softmax(jnp.mean(x2, axis=(2, 3)), axis=-1)
    x12 = x2.reshape(b * groups, cg, h * w)
    x22 = x1.reshape(b * groups, cg, h * w)
    wts = (jnp.einsum("bc,bcp->bp", s1, x12, precision=_HI)
           + jnp.einsum("bc,bcp->bp", s2, x22, precision=_HI))
    gate = jax.nn.sigmoid(wts).reshape(b * groups, 1, h, w)
    return (g * gate).reshape(b, c, h, w).astype(x.dtype)


if __name__ == "__main__":
    key = jax.random.PRNGKey(0)
    b, c, h, w = 2, 8, 16, 16
    factor = 2                       # groups
    cg = c // factor
    ks = jax.random.split(key, 7)
    x = jax.random.normal(ks[0], (b, c, h, w), jnp.float32)
    params = {
        "w1": 0.3 * jax.random.normal(ks[1], (cg, cg), jnp.float32),
        "b1": 0.1 * jax.random.normal(ks[2], (cg,), jnp.float32),
        "w3": 0.2 * jax.random.normal(ks[3], (cg, cg, 3, 3), jnp.float32),
        "b3": 0.1 * jax.random.normal(ks[4], (cg,), jnp.float32),
        "gamma": jnp.ones((cg,), jnp.float32) + 0.1 * jax.random.normal(ks[5], (cg,), jnp.float32),
        "beta": 0.1 * jax.random.normal(ks[6], (cg,), jnp.float32),
    }

    fwd = make_ema_forward(params, factor, x.shape, x.dtype)
    out = jax.block_until_ready(fwd(x))
    ref = jax.block_until_ready(ema_reference(x, params, factor))
    err = float(jnp.max(jnp.abs(out - ref)))
    assert out.shape == x.shape and err < 1e-3, f"max abs err {err}"
    print("KERNEL_OK")
</pallas_src>

<mosaic_0001>
module attributes {stable_mosaic.version = 11 : i64} {
  func.func @ema_kernel(%arg0: i32, %arg1: memref<8x256xf32, #tpu.memory_space<vmem>>, %arg2: memref<256x32xf32, #tpu.memory_space<vmem>>, %arg3: memref<8x8xf32, #tpu.memory_space<vmem>>, %arg4: memref<8x1xf32, #tpu.memory_space<vmem>>, %arg5: memref<32x256xf32, #tpu.memory_space<vmem>>, %arg6: memref<32x256xf32, #tpu.memory_space<vmem>>, %arg7: memref<9x8x8xf32, #tpu.memory_space<vmem>>, %arg8: memref<8x1xf32, #tpu.memory_space<vmem>>, %arg9: memref<8x1xf32, #tpu.memory_space<vmem>>, %arg10: memref<8x1xf32, #tpu.memory_space<vmem>>, %arg11: memref<16x16xf32, #tpu.memory_space<vmem>>, %arg12: memref<2x8xf32, #tpu.memory_space<vmem>>, %arg13: memref<8x2xf32, #tpu.memory_space<vmem>>, %arg14: memref<9x256xf32, #tpu.memory_space<vmem>>, %arg15: memref<8x256xf32, #tpu.memory_space<vmem>>) attributes {dimension_semantics = [#tpu.dimension_semantics<parallel>], iteration_bounds = array<i64: 2>, scalar_prefetch = 0 : i64, scratch_operands = 0 : i64, tpu.core_type = #tpu.core_type<tc>, window_params = [{transform_indices = @transform_0, window_bounds = array<i64: 8, 256>}, {pipeline_mode = #tpu.pipeline_mode<synchronous>, transform_indices = @transform_1, window_bounds = array<i64: 256, 32>}, {pipeline_mode = #tpu.pipeline_mode<synchronous>, transform_indices = @transform_2, window_bounds = array<i64: 8, 8>}, {pipeline_mode = #tpu.pipeline_mode<synchronous>, transform_indices = @transform_3, window_bounds = array<i64: 8, 1>}, {pipeline_mode = #tpu.pipeline_mode<synchronous>, transform_indices = @transform_4, window_bounds = array<i64: 32, 256>}, {pipeline_mode = #tpu.pipeline_mode<synchronous>, transform_indices = @transform_5, window_bounds = array<i64: 32, 256>}, {pipeline_mode = #tpu.pipeline_mode<synchronous>, transform_indices = @transform_6, window_bounds = array<i64: 9, 8, 8>}, {pipeline_mode = #tpu.pipeline_mode<synchronous>, transform_indices = @transform_7, window_bounds = array<i64: 8, 1>}, {pipeline_mode = #tpu.pipeline_mode<synchronous>, transform_indices = @transform_8, window_bounds = array<i64: 8, 1>}, {pipeline_mode = #tpu.pipeline_mode<synchronous>, transform_indices = @transform_9, window_bounds = array<i64: 8, 1>}, {pipeline_mode = #tpu.pipeline_mode<synchronous>, transform_indices = @transform_10, window_bounds = array<i64: 16, 16>}, {pipeline_mode = #tpu.pipeline_mode<synchronous>, transform_indices = @transform_11, window_bounds = array<i64: 2, 8>}, {pipeline_mode = #tpu.pipeline_mode<synchronous>, transform_indices = @transform_12, window_bounds = array<i64: 8, 2>}, {pipeline_mode = #tpu.pipeline_mode<synchronous>, transform_indices = @transform_13, window_bounds = array<i64: 9, 256>}, {transform_indices = @transform_14, window_bounds = array<i64: 8, 256>}]} {
    %c0 = arith.constant 0 : index
    %c0_0 = arith.constant 0 : index
    %0 = vector.load %arg1[%c0, %c0_0] : memref<8x256xf32, #tpu.memory_space<vmem>>, vector<8x256xf32>
    %c0_1 = arith.constant 0 : index
    %c0_2 = arith.constant 0 : index
    %1 = vector.load %arg2[%c0_1, %c0_2] : memref<256x32xf32, #tpu.memory_space<vmem>>, vector<256x32xf32>
    %cst = arith.constant dense<0.000000e+00> : vector<8x32xf32>
    %2 = tpu.matmul %0, %1, %cst {dimension_numbers = #tpu.dot_dimension_numbers<[1], [0], [0], [1], [0, 0, 1, 1], [], []>, precision = #tpu.contract_precision<fp32>} : vector<8x256xf32>, vector<256x32xf32>, vector<8x32xf32> -> vector<8x32xf32>
    %c0_3 = arith.constant 0 : index
    %c0_4 = arith.constant 0 : index
    %3 = vector.load %arg3[%c0_3, %c0_4] : memref<8x8xf32, #tpu.memory_space<vmem>>, vector<8x8xf32>
    %cst_5 = arith.constant dense<0.000000e+00> : vector<8x32xf32>
    %4 = tpu.matmul %3, %2, %cst_5 {dimension_numbers = #tpu.dot_dimension_numbers<[1], [0], [0], [1], [0, 0, 1, 1], [], []>, precision = #tpu.contract_precision<fp32>} : vector<8x8xf32>, vector<8x32xf32>, vector<8x32xf32> -> vector<8x32xf32>
    %c0_6 = arith.constant 0 : index
    %c0_7 = arith.constant 0 : index
    %5 = vector.load %arg4[%c0_6, %c0_7] : memref<8x1xf32, #tpu.memory_space<vmem>>, vector<8x1xf32>
    %6 = vector.broadcast %5 : vector<8x1xf32> to vector<8x32xf32>
    %7 = arith.addf %4, %6 : vector<8x32xf32>
    %8 = arith.negf %7 : vector<8x32xf32>
    %9 = math.exp %8 : vector<8x32xf32>
    %cst_8 = arith.constant 1.000000e+00 : f32
    %10 = vector.broadcast %cst_8 : f32 to vector<8x32xf32>
    %11 = arith.addf %10, %9 : vector<8x32xf32>
    %12 = arith.divf %10, %11 : vector<8x32xf32>
    %c0_9 = arith.constant 0 : index
    %c0_10 = arith.constant 0 : index
    %13 = vector.load %arg5[%c0_9, %c0_10] : memref<32x256xf32, #tpu.memory_space<vmem>>, vector<32x256xf32>
    %cst_11 = arith.constant dense<0.000000e+00> : vector<8x256xf32>
    %14 = tpu.matmul %12, %13, %cst_11 {dimension_numbers = #tpu.dot_dimension_numbers<[1], [0], [0], [1], [0, 0, 1, 1], [], []>, precision = #tpu.contract_precision<fp32>} : vector<8x32xf32>, vector<32x256xf32>, vector<8x256xf32> -> vector<8x256xf32>
    %15 = arith.mulf %0, %14 : vector<8x256xf32>
    %c0_12 = arith.constant 0 : index
    %c0_13 = arith.constant 0 : index
    %16 = vector.load %arg6[%c0_12, %c0_13] : memref<32x256xf32, #tpu.memory_space<vmem>>, vector<32x256xf32>
    %cst_14 = arith.constant dense<0.000000e+00> : vector<8x256xf32>
    %17 = tpu.matmul %12, %16, %cst_14 {dimension_numbers = #tpu.dot_dimension_numbers<[1], [0], [0], [1], [0, 0, 1, 1], [], []>, precision = #tpu.contract_precision<fp32>} : vector<8x32xf32>, vector<32x256xf32>, vector<8x256xf32> -> vector<8x256xf32>
    %18 = arith.mulf %15, %17 : vector<8x256xf32>
    %cst_15 = arith.constant dense<0.000000e+00> : vector<8xf32>
    %19 = vector.multi_reduction <add>, %18, %cst_15 [1] : vector<8x256xf32> to vector<8xf32>
    %20 = vector.shape_cast %19 : vector<8xf32> to vector<8x1xf32>
    %cst_16 = arith.constant 3.906250e-03 : f32
    %21 = vector.broadcast %cst_16 : f32 to vector<8x1xf32>
    %22 = arith.mulf %20, %21 : vector<8x1xf32>
    %23 = vector.broadcast %22 : vector<8x1xf32> to vector<8x256xf32>
    %24 = arith.subf %18, %23 : vector<8x256xf32>
    %25 = arith.mulf %24, %24 : vector<8x256xf32>
    %cst_17 = arith.constant dense<0.000000e+00> : vector<8xf32>
    %26 = vector.multi_reduction <add>, %25, %cst_17 [1] : vector<8x256xf32> to vector<8xf32>
    %27 = vector.shape_cast %26 : vector<8xf32> to vector<8x1xf32>
    %cst_18 = arith.constant 3.906250e-03 : f32
    %28 = vector.broadcast %cst_18 : f32 to vector<8x1xf32>
    %29 = arith.mulf %27, %28 : vector<8x1xf32>
    %cst_19 = arith.constant 9.99999974E-6 : f32
    %30 = vector.broadcast %cst_19 : f32 to vector<8x1xf32>
    %31 = arith.addf %29, %30 : vector<8x1xf32>
    %32 = math.rsqrt %31 : vector<8x1xf32>
    %33 = vector.broadcast %32 : vector<8x1xf32> to vector<8x256xf32>
    %34 = arith.mulf %24, %33 : vector<8x256xf32>
    %c0_20 = arith.constant 0 : index
    %c0_21 = arith.constant 0 : index
    %35 = vector.load %arg9[%c0_20, %c0_21] : memref<8x1xf32, #tpu.memory_space<vmem>>, vector<8x1xf32>
    %36 = vector.broadcast %35 : vector<8x1xf32> to vector<8x256xf32>
    %37 = arith.mulf %34, %36 : vector<8x256xf32>
    %c0_22 = arith.constant 0 : index
    %c0_23 = arith.constant 0 : index
    %38 = vector.load %arg10[%c0_22, %c0_23] : memref<8x1xf32, #tpu.memory_space<vmem>>, vector<8x1xf32>
    %39 = vector.broadcast %38 : vector<8x1xf32> to vector<8x256xf32>
    %40 = arith.addf %37, %39 : vector<8x256xf32>
    %cst_24 = arith.constant 0.000000e+00 : f32
    %41 = vector.broadcast %cst_24 : f32 to vector<8x256xf32>
    %c17_i32 = arith.constant 17 : i32
    %42 = tpu.dynamic_rotate %0 by %c17_i32 dim 1 : vector<8x256xf32>, i32 -> vector<8x256xf32>
    %c0_25 = arith.constant 0 : index
    %c0_26 = arith.constant 0 : index
    %43 = vector.load %arg14[%c0_25, %c0_26] : memref<9x256xf32, #tpu.memory_space<vmem>>, vector<1x256xf32>
    %44 = vector.broadcast %43 : vector<1x256xf32> to vector<8x256xf32>
    %45 = arith.mulf %42, %44 : vector<8x256xf32>
    %c0_27 = arith.constant 0 : index
    %c0_28 = arith.constant 0 : index
    %c0_29 = arith.constant 0 : index
    %46 = vector.load %arg7[%c0_27, %c0_28, %c0_29] : memref<9x8x8xf32, #tpu.memory_space<vmem>>, vector<1x8x8xf32>
    %47 = vector.shape_cast %46 : vector<1x8x8xf32> to vector<8x8xf32>
    %cst_30 = arith.constant dense<0.000000e+00> : vector<8x256xf32>
    %48 = tpu.matmul %47, %45, %cst_30 {dimension_numbers = #tpu.dot_dimension_numbers<[1], [0], [0], [1], [0, 0, 1, 1], [], []>, precision = #tpu.contract_precision<fp32>} : vector<8x8xf32>, vector<8x256xf32>, vector<8x256xf32> -> vector<8x256xf32>
    %49 = arith.addf %41, %48 : vector<8x256xf32>
    %c16_i32 = arith.constant 16 : i32
    %50 = tpu.dynamic_rotate %0 by %c16_i32 dim 1 : vector<8x256xf32>, i32 -> vector<8x256xf32>
    %c1 = arith.constant 1 : index
    %c0_31 = arith.constant 0 : index
    %51 = vector.load %arg14[%c1, %c0_31] : memref<9x256xf32, #tpu.memory_space<vmem>>, vector<1x256xf32>
    %52 = vector.broadcast %51 : vector<1x256xf32> to vector<8x256xf32>
    %53 = arith.mulf %50, %52 : vector<8x256xf32>
    %c1_32 = arith.constant 1 : index
    %c0_33 = arith.constant 0 : index
    %c0_34 = arith.constant 0 : index
    %54 = vector.load %arg7[%c1_32, %c0_33, %c0_34] : memref<9x8x8xf32, #tpu.memory_space<vmem>>, vector<1x8x8xf32>
    %55 = vector.shape_cast %54 : vector<1x8x8xf32> to vector<8x8xf32>
    %cst_35 = arith.constant dense<0.000000e+00> : vector<8x256xf32>
    %56 = tpu.matmul %55, %53, %cst_35 {dimension_numbers = #tpu.dot_dimension_numbers<[1], [0], [0], [1], [0, 0, 1, 1], [], []>, precision = #tpu.contract_precision<fp32>} : vector<8x8xf32>, vector<8x256xf32>, vector<8x256xf32> -> vector<8x256xf32>
    %57 = arith.addf %49, %56 : vector<8x256xf32>
    %c15_i32 = arith.constant 15 : i32
    %58 = tpu.dynamic_rotate %0 by %c15_i32 dim 1 : vector<8x256xf32>, i32 -> vector<8x256xf32>
    %c2 = arith.constant 2 : index
    %c0_36 = arith.constant 0 : index
    %59 = vector.load %arg14[%c2, %c0_36] : memref<9x256xf32, #tpu.memory_space<vmem>>, vector<1x256xf32>
    %60 = vector.broadcast %59 : vector<1x256xf32> to vector<8x256xf32>
    %61 = arith.mulf %58, %60 : vector<8x256xf32>
    %c2_37 = arith.constant 2 : index
    %c0_38 = arith.constant 0 : index
    %c0_39 = arith.constant 0 : index
    %62 = vector.load %arg7[%c2_37, %c0_38, %c0_39] : memref<9x8x8xf32, #tpu.memory_space<vmem>>, vector<1x8x8xf32>
    %63 = vector.shape_cast %62 : vector<1x8x8xf32> to vector<8x8xf32>
    %cst_40 = arith.constant dense<0.000000e+00> : vector<8x256xf32>
    %64 = tpu.matmul %63, %61, %cst_40 {dimension_numbers = #tpu.dot_dimension_numbers<[1], [0], [0], [1], [0, 0, 1, 1], [], []>, precision = #tpu.contract_precision<fp32>} : vector<8x8xf32>, vector<8x256xf32>, vector<8x256xf32> -> vector<8x256xf32>
    %65 = arith.addf %57, %64 : vector<8x256xf32>
    %c1_i32 = arith.constant 1 : i32
    %66 = tpu.dynamic_rotate %0 by %c1_i32 dim 1 : vector<8x256xf32>, i32 -> vector<8x256xf32>
    %c3 = arith.constant 3 : index
    %c0_41 = arith.constant 0 : index
    %67 = vector.load %arg14[%c3, %c0_41] : memref<9x256xf32, #tpu.memory_space<vmem>>, vector<1x256xf32>
    %68 = vector.broadcast %67 : vector<1x256xf32> to vector<8x256xf32>
    %69 = arith.mulf %66, %68 : vector<8x256xf32>
    %c3_42 = arith.constant 3 : index
    %c0_43 = arith.constant 0 : index
    %c0_44 = arith.constant 0 : index
    %70 = vector.load %arg7[%c3_42, %c0_43, %c0_44] : memref<9x8x8xf32, #tpu.memory_space<vmem>>, vector<1x8x8xf32>
    %71 = vector.shape_cast %70 : vector<1x8x8xf32> to vector<8x8xf32>
    %cst_45 = arith.constant dense<0.000000e+00> : vector<8x256xf32>
    %72 = tpu.matmul %71, %69, %cst_45 {dimension_numbers = #tpu.dot_dimension_numbers<[1], [0], [0], [1], [0, 0, 1, 1], [], []>, precision = #tpu.contract_precision<fp32>} : vector<8x8xf32>, vector<8x256xf32>, vector<8x256xf32> -> vector<8x256xf32>
    %73 = arith.addf %65, %72 : vector<8x256xf32>
    %c4 = arith.constant 4 : index
    %c0_46 = arith.constant 0 : index
    %c0_47 = arith.constant 0 : index
    %74 = vector.load %arg7[%c4, %c0_46, %c0_47] : memref<9x8x8xf32, #tpu.memory_space<vmem>>, vector<1x8x8xf32>
    %75 = vector.shape_cast %74 : vector<1x8x8xf32> to vector<8x8xf32>
    %cst_48 = arith.constant dense<0.000000e+00> : vector<8x256xf32>
    %76 = tpu.matmul %75, %0, %cst_48 {dimension_numbers = #tpu.dot_dimension_numbers<[1], [0], [0], [1], [0, 0, 1, 1], [], []>, precision = #tpu.contract_precision<fp32>} : vector<8x8xf32>, vector<8x256xf32>, vector<8x256xf32> -> vector<8x256xf32>
    %77 = arith.addf %73, %76 : vector<8x256xf32>
    %c255_i32 = arith.constant 255 : i32
    %78 = tpu.dynamic_rotate %0 by %c255_i32 dim 1 : vector<8x256xf32>, i32 -> vector<8x256xf32>
    %c5 = arith.constant 5 : index
    %c0_49 = arith.constant 0 : index
    %79 = vector.load %arg14[%c5, %c0_49] : memref<9x256xf32, #tpu.memory_space<vmem>>, vector<1x256xf32>
    %80 = vector.broadcast %79 : vector<1x256xf32> to vector<8x256xf32>
    %81 = arith.mulf %78, %80 : vector<8x256xf32>
    %c5_50 = arith.constant 5 : index
    %c0_51 = arith.constant 0 : index
    %c0_52 = arith.constant 0 : index
    %82 = vector.load %arg7[%c5_50, %c0_51, %c0_52] : memref<9x8x8xf32, #tpu.memory_space<vmem>>, vector<1x8x8xf32>
    %83 = vector.shape_cast %82 : vector<1x8x8xf32> to vector<8x8xf32>
    %cst_53 = arith.constant dense<0.000000e+00> : vector<8x256xf32>
    %84 = tpu.matmul %83, %81, %cst_53 {dimension_numbers = #tpu.dot_dimension_numbers<[1], [0], [0], [1], [0, 0, 1, 1], [], []>, precision = #tpu.contract_precision<fp32>} : vector<8x8xf32>, vector<8x256xf32>, vector<8x256xf32> -> vector<8x256xf32>
    %85 = arith.addf %77, %84 : vector<8x256xf32>
    %c241_i32 = arith.constant 241 : i32
    %86 = tpu.dynamic_rotate %0 by %c241_i32 dim 1 : vector<8x256xf32>, i32 -> vector<8x256xf32>
    %c6 = arith.constant 6 : index
    %c0_54 = arith.constant 0 : index
    %87 = vector.load %arg14[%c6, %c0_54] : memref<9x256xf32, #tpu.memory_space<vmem>>, vector<1x256xf32>
    %88 = vector.broadcast %87 : vector<1x256xf32> to vector<8x256xf32>
    %89 = arith.mulf %86, %88 : vector<8x256xf32>
    %c6_55 = arith.constant 6 : index
    %c0_56 = arith.constant 0 : index
    %c0_57 = arith.constant 0 : index
    %90 = vector.load %arg7[%c6_55, %c0_56, %c0_57] : memref<9x8x8xf32, #tpu.memory_space<vmem>>, vector<1x8x8xf32>
    %91 = vector.shape_cast %90 : vector<1x8x8xf32> to vector<8x8xf32>
    %cst_58 = arith.constant dense<0.000000e+00> : vector<8x256xf32>
    %92 = tpu.matmul %91, %89, %cst_58 {dimension_numbers = #tpu.dot_dimension_numbers<[1], [0], [0], [1], [0, 0, 1, 1], [], []>, precision = #tpu.contract_precision<fp32>} : vector<8x8xf32>, vector<8x256xf32>, vector<8x256xf32> -> vector<8x256xf32>
    %93 = arith.addf %85, %92 : vector<8x256xf32>
    %c240_i32 = arith.constant 240 : i32
    %94 = tpu.dynamic_rotate %0 by %c240_i32 dim 1 : vector<8x256xf32>, i32 -> vector<8x256xf32>
    %c7 = arith.constant 7 : index
    %c0_59 = arith.constant 0 : index
    %95 = vector.load %arg14[%c7, %c0_59] : memref<9x256xf32, #tpu.memory_space<vmem>>, vector<1x256xf32>
    %96 = vector.broadcast %95 : vector<1x256xf32> to vector<8x256xf32>
    %97 = arith.mulf %94, %96 : vector<8x256xf32>
    %c7_60 = arith.constant 7 : index
    %c0_61 = arith.constant 0 : index
    %c0_62 = arith.constant 0 : index
    %98 = vector.load %arg7[%c7_60, %c0_61, %c0_62] : memref<9x8x8xf32, #tpu.memory_space<vmem>>, vector<1x8x8xf32>
    %99 = vector.shape_cast %98 : vector<1x8x8xf32> to vector<8x8xf32>
    %cst_63 = arith.constant dense<0.000000e+00> : vector<8x256xf32>
    %100 = tpu.matmul %99, %97, %cst_63 {dimension_numbers = #tpu.dot_dimension_numbers<[1], [0], [0], [1], [0, 0, 1, 1], [], []>, precision = #tpu.contract_precision<fp32>} : vector<8x8xf32>, vector<8x256xf32>, vector<8x256xf32> -> vector<8x256xf32>
    %101 = arith.addf %93, %100 : vector<8x256xf32>
    %c239_i32 = arith.constant 239 : i32
    %102 = tpu.dynamic_rotate %0 by %c239_i32 dim 1 : vector<8x256xf32>, i32 -> vector<8x256xf32>
    %c8 = arith.constant 8 : index
    %c0_64 = arith.constant 0 : index
    %103 = vector.load %arg14[%c8, %c0_64] : memref<9x256xf32, #tpu.memory_space<vmem>>, vector<1x256xf32>
    %104 = vector.broadcast %103 : vector<1x256xf32> to vector<8x256xf32>
    %105 = arith.mulf %102, %104 : vector<8x256xf32>
    %c8_65 = arith.constant 8 : index
    %c0_66 = arith.constant 0 : index
    %c0_67 = arith.constant 0 : index
    %106 = vector.load %arg7[%c8_65, %c0_66, %c0_67] : memref<9x8x8xf32, #tpu.memory_space<vmem>>, vector<1x8x8xf32>
    %107 = vector.shape_cast %106 : vector<1x8x8xf32> to vector<8x8xf32>
    %cst_68 = arith.constant dense<0.000000e+00> : vector<8x256xf32>
    %108 = tpu.matmul %107, %105, %cst_68 {dimension_numbers = #tpu.dot_dimension_numbers<[1], [0], [0], [1], [0, 0, 1, 1], [], []>, precision = #tpu.contract_precision<fp32>} : vector<8x8xf32>, vector<8x256xf32>, vector<8x256xf32> -> vector<8x256xf32>
    %109 = arith.addf %101, %108 : vector<8x256xf32>
    %c0_69 = arith.constant 0 : index
    %c0_70 = arith.constant 0 : index
    %110 = vector.load %arg8[%c0_69, %c0_70] : memref<8x1xf32, #tpu.memory_space<vmem>>, vector<8x1xf32>
    %111 = vector.broadcast %110 : vector<8x1xf32> to vector<8x256xf32>
    %112 = arith.addf %109, %111 : vector<8x256xf32>
    %cst_71 = arith.constant dense<0.000000e+00> : vector<8xf32>
    %113 = vector.multi_reduction <add>, %40, %cst_71 [1] : vector<8x256xf32> to vector<8xf32>
    %114 = vector.shape_cast %113 : vector<8xf32> to vector<8x1xf32>
    %cst_72 = arith.constant 3.906250e-03 : f32
    %115 = vector.broadcast %cst_72 : f32 to vector<8x1xf32>
    %116 = arith.mulf %114, %115 : vector<8x1xf32>
    %cst_73 = arith.constant dense<0.000000e+00> : vector<8xf32>
    %117 = vector.multi_reduction <add>, %112, %cst_73 [1] : vector<8x256xf32> to vector<8xf32>
    %118 = vector.shape_cast %117 : vector<8xf32> to vector<8x1xf32>
    %cst_74 = arith.constant 3.906250e-03 : f32
    %119 = vector.broadcast %cst_74 : f32 to vector<8x1xf32>
    %120 = arith.mulf %118, %119 : vector<8x1xf32>
    %121 = tpu.concatenate %116, %120 in 0 : vector<8x1xf32>, vector<8x1xf32> -> vector<16x1xf32>
    %c0_75 = arith.constant 0 : index
    %c0_76 = arith.constant 0 : index
    %122 = vector.load %arg11[%c0_75, %c0_76] : memref<16x16xf32, #tpu.memory_space<vmem>>, vector<16x16xf32>
    %cst_77 = arith.constant dense<0.000000e+00> : vector<16x1xf32>
    %123 = tpu.matmul %122, %121, %cst_77 {dimension_numbers = #tpu.dot_dimension_numbers<[1], [0], [0], [1], [0, 0, 1, 1], [], []>} : vector<16x16xf32>, vector<16x1xf32>, vector<16x1xf32> -> vector<16x1xf32>
    %cst_78 = arith.constant 2.500000e-01 : f32
    %124 = vector.broadcast %cst_78 : f32 to vector<16x1xf32>
    %125 = arith.mulf %123, %124 : vector<16x1xf32>
    %126 = arith.subf %121, %125 : vector<16x1xf32>
    %127 = math.exp %126 : vector<16x1xf32>
    %c0_79 = arith.constant 0 : index
    %c0_80 = arith.constant 0 : index
    %128 = vector.load %arg11[%c0_79, %c0_80] : memref<16x16xf32, #tpu.memory_space<vmem>>, vector<16x16xf32>
    %cst_81 = arith.constant dense<0.000000e+00> : vector<16x1xf32>
    %129 = tpu.matmul %128, %127, %cst_81 {dimension_numbers = #tpu.dot_dimension_numbers<[1], [0], [0], [1], [0, 0, 1, 1], [], []>, precision = #tpu.contract_precision<fp32>} : vector<16x16xf32>, vector<16x1xf32>, vector<16x1xf32> -> vector<16x1xf32>
    %130 = arith.divf %127, %129 : vector<16x1xf32>
    %131 = vector.extract_strided_slice %130 {offsets = [0, 0], sizes = [8, 1], strides = [1, 1]} : vector<16x1xf32> to vector<8x1xf32>
    %132 = vector.extract_strided_slice %130 {offsets = [8, 0], sizes = [8, 1], strides = [1, 1]} : vector<16x1xf32> to vector<8x1xf32>
    %c0_82 = arith.constant 0 : index
    %c0_83 = arith.constant 0 : index
    %133 = vector.load %arg12[%c0_82, %c0_83] : memref<2x8xf32, #tpu.memory_space<vmem>>, vector<2x8xf32>
    %134 = vector.broadcast %131 : vector<8x1xf32> to vector<8x256xf32>
    %135 = arith.mulf %134, %112 : vector<8x256xf32>
    %136 = vector.broadcast %132 : vector<8x1xf32> to vector<8x256xf32>
    %137 = arith.mulf %136, %40 : vector<8x256xf32>
    %138 = arith.addf %135, %137 : vector<8x256xf32>
    %cst_84 = arith.constant dense<0.000000e+00> : vector<2x256xf32>
    %139 = tpu.matmul %133, %138, %cst_84 {dimension_numbers = #tpu.dot_dimension_numbers<[1], [0], [0], [1], [0, 0, 1, 1], [], []>, precision = #tpu.contract_precision<fp32>} : vector<2x8xf32>, vector<8x256xf32>, vector<2x256xf32> -> vector<2x256xf32>
    %c0_85 = arith.constant 0 : index
    %c0_86 = arith.constant 0 : index
    %140 = vector.load %arg13[%c0_85, %c0_86] : memref<8x2xf32, #tpu.memory_space<vmem>>, vector<8x2xf32>
    %141 = arith.negf %139 : vector<2x256xf32>
    %142 = math.exp %141 : vector<2x256xf32>
    %cst_87 = arith.constant 1.000000e+00 : f32
    %143 = vector.broadcast %cst_87 : f32 to vector<2x256xf32>
    %144 = arith.addf %143, %142 : vector<2x256xf32>
    %145 = arith.divf %143, %144 : vector<2x256xf32>
    %cst_88 = arith.constant dense<0.000000e+00> : vector<8x256xf32>
    %146 = tpu.matmul %140, %145, %cst_88 {dimension_numbers = #tpu.dot_dimension_numbers<[1], [0], [0], [1], [0, 0, 1, 1], [], []>, precision = #tpu.contract_precision<fp32>} : vector<8x2xf32>, vector<2x256xf32>, vector<8x256xf32> -> vector<8x256xf32>
    %147 = arith.mulf %0, %146 : vector<8x256xf32>
    %c0_89 = arith.constant 0 : index
    %c0_90 = arith.constant 0 : index
    %148 = vector.load %arg15[%c0_89, %c0_90] : memref<8x256xf32, #tpu.memory_space<vmem>>, vector<8x256xf32>
    tpu.vector_store %arg15[%c0_89, %c0_90], %147 {strides = array<i32>} : memref<8x256xf32, #tpu.memory_space<vmem>>, vector<8x256xf32>,
    return
  }
  func.func @transform_0(%arg0: i32) -> (i32, i32) {
    %c0_i32 = arith.constant 0 : i32
    %c0_i32_0 = arith.constant 0 : i32
    return %arg0, %c0_i32 : i32, i32
  }
  func.func @transform_1(%arg0: i32) -> (i32, i32) {
    %c0_i32 = arith.constant 0 : i32
    %c0_i32_0 = arith.constant 0 : i32
    %c0_i32_1 = arith.constant 0 : i32
    return %c0_i32, %c0_i32_0 : i32, i32
  }
  func.func @transform_2(%arg0: i32) -> (i32, i32) {
    %c0_i32 = arith.constant 0 : i32
    %c0_i32_0 = arith.constant 0 : i32
    %c0_i32_1 = arith.constant 0 : i32
    return %c0_i32, %c0_i32_0 : i32, i32
  }
  func.func @transform_3(%arg0: i32) -> (i32, i32) {
    %c0_i32 = arith.constant 0 : i32
    %c0_i32_0 = arith.constant 0 : i32
    %c0_i32_1 = arith.constant 0 : i32
    return %c0_i32, %c0_i32_0 : i32, i32
  }
  func.func @transform_4(%arg0: i32) -> (i32, i32) {
    %c0_i32 = arith.constant 0 : i32
    %c0_i32_0 = arith.constant 0 : i32
    %c0_i32_1 = arith.constant 0 : i32
    return %c0_i32, %c0_i32_0 : i32, i32
  }
  func.func @transform_5(%arg0: i32) -> (i32, i32) {
    %c0_i32 = arith.constant 0 : i32
    %c0_i32_0 = arith.constant 0 : i32
    %c0_i32_1 = arith.constant 0 : i32
    return %c0_i32, %c0_i32_0 : i32, i32
  }
  func.func @transform_6(%arg0: i32) -> (i32, i32, i32) {
    %c0_i32 = arith.constant 0 : i32
    %c0_i32_0 = arith.constant 0 : i32
    %c0_i32_1 = arith.constant 0 : i32
    %c0_i32_2 = arith.constant 0 : i32
    return %c0_i32, %c0_i32_0, %c0_i32_1 : i32, i32, i32
  }
  func.func @transform_7(%arg0: i32) -> (i32, i32) {
    %c0_i32 = arith.constant 0 : i32
    %c0_i32_0 = arith.constant 0 : i32
    %c0_i32_1 = arith.constant 0 : i32
    return %c0_i32, %c0_i32_0 : i32, i32
  }
  func.func @transform_8(%arg0: i32) -> (i32, i32) {
    %c0_i32 = arith.constant 0 : i32
    %c0_i32_0 = arith.constant 0 : i32
    %c0_i32_1 = arith.constant 0 : i32
    return %c0_i32, %c0_i32_0 : i32, i32
  }
  func.func @transform_9(%arg0: i32) -> (i32, i32) {
    %c0_i32 = arith.constant 0 : i32
    %c0_i32_0 = arith.constant 0 : i32
    %c0_i32_1 = arith.constant 0 : i32
    return %c0_i32, %c0_i32_0 : i32, i32
  }
  func.func @transform_10(%arg0: i32) -> (i32, i32) {
    %c0_i32 = arith.constant 0 : i32
    %c0_i32_0 = arith.constant 0 : i32
    %c0_i32_1 = arith.constant 0 : i32
    return %c0_i32, %c0_i32_0 : i32, i32
  }
  func.func @transform_11(%arg0: i32) -> (i32, i32) {
    %c0_i32 = arith.constant 0 : i32
    %c0_i32_0 = arith.constant 0 : i32
    %c0_i32_1 = arith.constant 0 : i32
    return %c0_i32, %c0_i32_0 : i32, i32
  }
  func.func @transform_12(%arg0: i32) -> (i32, i32) {
    %c0_i32 = arith.constant 0 : i32
    %c0_i32_0 = arith.constant 0 : i32
    %c0_i32_1 = arith.constant 0 : i32
    return %c0_i32, %c0_i32_0 : i32, i32
  }
  func.func @transform_13(%arg0: i32) -> (i32, i32) {
    %c0_i32 = arith.constant 0 : i32
    %c0_i32_0 = arith.constant 0 : i32
    %c0_i32_1 = arith.constant 0 : i32
    return %c0_i32, %c0_i32_0 : i32, i32
  }
  func.func @transform_14(%arg0: i32) -> (i32, i32) {
    %c0_i32 = arith.constant 0 : i32
    %c0_i32_0 = arith.constant 0 : i32
    return %arg0, %c0_i32 : i32, i32
  }
}

</mosaic_0001>

<llo_original>
// kernel: run.1
$region0: #{run.1}
  #allocation0 [shape = 'u32[]', space=smem, size = 0x4, offset = 0x4, fixed_abs, tag = 'smem constant byte address 0x4 - core index']
  #allocation1 [shape = 'u32[144,128]{1,0:T(1,128)}', space=vmem, size = 0x12000, scoped, tag = 'internal scratch']
  %s0 = inlined_call_operand.vmem [shape: f32[16,256], index: 0, kind: input, shape index: {}]
  %s1 = inlined_call_operand.vmem [shape: f32[256,32], index: 1, kind: input, shape index: {}]
  %s2 = inlined_call_operand.vmem [shape: f32[8,8], index: 2, kind: input, shape index: {}]
  %s3 = inlined_call_operand.vmem [shape: f32[8,1], index: 3, kind: input, shape index: {}]
  %s4 = inlined_call_operand.vmem [shape: f32[32,256], index: 4, kind: input, shape index: {}]
  %s5 = inlined_call_operand.vmem [shape: f32[32,256], index: 5, kind: input, shape index: {}]
  %s6 = inlined_call_operand.vmem [shape: f32[9,8,8], index: 6, kind: input, shape index: {}]
  %s7 = inlined_call_operand.vmem [shape: f32[8,1], index: 7, kind: input, shape index: {}]
  %s8 = inlined_call_operand.vmem [shape: f32[8,1], index: 8, kind: input, shape index: {}]
  %s9 = inlined_call_operand.vmem [shape: f32[8,1], index: 9, kind: input, shape index: {}]
  %s10 = inlined_call_operand.vmem [shape: f32[16,16], index: 10, kind: input, shape index: {}]
  %s11 = inlined_call_operand.vmem [shape: f32[2,8], index: 11, kind: input, shape index: {}]
  %s12 = inlined_call_operand.vmem [shape: f32[8,2], index: 12, kind: input, shape index: {}]
  %s13 = inlined_call_operand.vmem [shape: f32[9,256], index: 13, kind: input, shape index: {}]
  %s14 = inlined_call_operand.vmem [shape: f32[16,256], index: 14, kind: output, shape index: {}]
  %s15 = sld [smem:[#allocation0]]
  $region89: #{run.1} parent=0
    _
  %s17 = ssub.s32 1, %s15
  %s18 = scalar_select 0, %s17, %s15
  loop: start=0, step=1, limit=4
  $region2: #{run.1} parent=0 // loop_pre_header
    _
  $region3: #{run.1} parent=0 // loop_header
    %s20 = sphi 0, %s24
    %p21 = scmp.ge.s32.totalorder %s20, 4
    %s30 = sphi 0, %s32
    %s33 = sphi 0, %s30
    %s34 = sphi 0, %s33
    %s50 = sphi 0, %s34
    %s54 = sphi 0, %s54
    %s56 = sphi 0, %s54
    %s57 = sphi 0, %s56
    %s71 = sphi 0, %s57
    %s75 = sphi 0, %s75
    %s77 = sphi 0, %s75
    %s78 = sphi 0, %s77
    %s92 = sphi 0, %s78
    %s96 = sphi 0, %s96
    %s98 = sphi 0, %s96
    %s99 = sphi 0, %s98
    %s113 = sphi 0, %s99
    %s117 = sphi 0, %s117
    %s119 = sphi 0, %s117
    %s120 = sphi 0, %s119
    %s134 = sphi 0, %s120
    %s138 = sphi 0, %s138
    %s140 = sphi 0, %s138
    %s141 = sphi 0, %s140
    %s155 = sphi 0, %s141
    %s159 = sphi 0, %s159
    %s161 = sphi 0, %s159
    %s162 = sphi 0, %s161
    %s176 = sphi 0, %s162
    %s180 = sphi 0, %s180
    %s182 = sphi 0, %s180
    %s183 = sphi 0, %s182
    %s197 = sphi 0, %s183
    %s201 = sphi 0, %s201
    %s203 = sphi 0, %s201
    %s204 = sphi 0, %s203
    %s218 = sphi 0, %s204
    %s222 = sphi 0, %s222
    %s224 = sphi 0, %s222
    %s225 = sphi 0, %s224
    %s239 = sphi 0, %s225
    %s243 = sphi 0, %s243
    %s245 = sphi 0, %s243
    %s246 = sphi 0, %s245
    %s260 = sphi 0, %s246
    %s264 = sphi 0, %s264
    %s266 = sphi 0, %s264
    %s267 = sphi 0, %s266
    %s281 = sphi 0, %s267
    %s285 = sphi 0, %s285
    %s287 = sphi 0, %s285
    %s288 = sphi 0, %s287
    %s302 = sphi 0, %s288
    %s306 = sphi 0, %s306
    %s308 = sphi 0, %s306
    %s309 = sphi 0, %s308
    %s323 = sphi 0, %s309
    %s329 = sphi 0, %s331
    %s332 = sphi 0, %s329
    %s333 = sphi 0, %s332
    %s349 = sphi 0, %s333
  $region4: #{run.1} parent=0 // loop_header_branch
    %23 = sbr.rel (%p21) target = $region8
  $region5: #{run.1} parent=0 // loop_body
    %s25 = ssub.s32 %s20, 1
    %s26 = ssub.s32 %s20, 2
    %s27 = sadd.s32 %s20, 1
    %s28 = ssub.s32 %s20, %s27
    %p29 = scmp.eq.s32.totalorder %s28, 0
    %s31 = sadd.s32 %s30, 1
    %s32 = scalar_select %p29, %s30, %s31
    %p35 = pneg %p29
    %p36 = scmp.eq.s32.totalorder %s20, 1
    %p37 = por %p35, %p36
    %p38 = scmp.ne.s32.totalorder %s30, %s33
    %p39 = scmp.eq.s32.totalorder %s20, 0
    %p40 = por %p38, %p39
    %p41 = scmp.ne.s32.totalorder %s30, %s33
    %p42 = scmp.eq.s32.totalorder %s25, 1
    %p43 = por %p41, %p42
    %p44 = scmp.ne.s32.totalorder %s33, %s34
    %p45 = scmp.eq.s32.totalorder %s25, 0
    %p46 = por %p44, %p45
    %p47 = scmp.ne.s32.totalorder %s33, %s34
    %p48 = scmp.eq.s32.totalorder %s26, 1
    %p49 = por %p47, %p48
    %p51 = scmp.ne.s32.totalorder %s34, %s50
    %p52 = scmp.eq.s32.totalorder %s26, 0
    %p53 = por %p51, %p52
    %s55 = sadd.s32 %s54, 1
    %p58 = scmp.eq.s32.totalorder %s20, 1
    %p59 = scmp.ne.s32.totalorder %s54, %s56
    %p60 = scmp.eq.s32.totalorder %s20, 0
    %p61 = por %p59, %p60
    %p62 = scmp.ne.s32.totalorder %s54, %s56
    %p63 = scmp.eq.s32.totalorder %s25, 1
    %p64 = por %p62, %p63
    %p65 = scmp.ne.s32.totalorder %s56, %s57
    %p66 = scmp.eq.s32.totalorder %s25, 0
    %p67 = por %p65, %p66
    %p68 = scmp.ne.s32.totalorder %s56, %s57
    %p69 = scmp.eq.s32.totalorder %s26, 1
    %p70 = por %p68, %p69
    %p72 = scmp.ne.s32.totalorder %s57, %s71
    %p73 = scmp.eq.s32.totalorder %s26, 0
    %p74 = por %p72, %p73
    %s76 = sadd.s32 %s75, 1
    %p79 = scmp.eq.s32.totalorder %s20, 1
    %p80 = scmp.ne.s32.totalorder %s75, %s77
    %p81 = scmp.eq.s32.totalorder %s20, 0
    %p82 = por %p80, %p81
    %p83 = scmp.ne.s32.totalorder %s75, %s77
    %p84 = scmp.eq.s32.totalorder %s25, 1
    %p85 = por %p83, %p84
    %p86 = scmp.ne.s32.totalorder %s77, %s78
    %p87 = scmp.eq.s32.totalorder %s25, 0
    %p88 = por %p86, %p87
    %p89 = scmp.ne.s32.totalorder %s77, %s78
    %p90 = scmp.eq.s32.totalorder %s26, 1
    %p91 = por %p89, %p90
    %p93 = scmp.ne.s32.totalorder %s78, %s92
    %p94 = scmp.eq.s32.totalorder %s26, 0
    %p95 = por %p93, %p94
    %s97 = sadd.s32 %s96, 1
    %p100 = scmp.eq.s32.totalorder %s20, 1
    %p101 = scmp.ne.s32.totalorder %s96, %s98
    %p102 = scmp.eq.s32.totalorder %s20, 0
    %p103 = por %p101, %p102
    %p104 = scmp.ne.s32.totalorder %s96, %s98
    %p105 = scmp.eq.s32.totalorder %s25, 1
    %p106 = por %p104, %p105
    %p107 = scmp.ne.s32.totalorder %s98, %s99
    %p108 = scmp.eq.s32.totalorder %s25, 0
    %p109 = por %p107, %p108
    %p110 = scmp.ne.s32.totalorder %s98, %s99
    %p111 = scmp.eq.s32.totalorder %s26, 1
    %p112 = por %p110, %p111
    %p114 = scmp.ne.s32.totalorder %s99, %s113
    %p115 = scmp.eq.s32.totalorder %s26, 0
    %p116 = por %p114, %p115
    %s118 = sadd.s32 %s117, 1
    %p121 = scmp.eq.s32.totalorder %s20, 1
    %p122 = scmp.ne.s32.totalorder %s117, %s119
    %p123 = scmp.eq.s32.totalorder %s20, 0
    %p124 = por %p122, %p123
    %p125 = scmp.ne.s32.totalorder %s117, %s119
    %p126 = scmp.eq.s32.totalorder %s25, 1
    %p127 = por %p125, %p126
    %p128 = scmp.ne.s32.totalorder %s119, %s120
    %p129 = scmp.eq.s32.totalorder %s25, 0
    %p130 = por %p128, %p129
    %p131 = scmp.ne.s32.totalorder %s119, %s120
    %p132 = scmp.eq.s32.totalorder %s26, 1
    %p133 = por %p131, %p132
    %p135 = scmp.ne.s32.totalorder %s120, %s134
    %p136 = scmp.eq.s32.totalorder %s26, 0
    %p137 = por %p135, %p136
    %s139 = sadd.s32 %s138, 1
    %p142 = scmp.eq.s32.totalorder %s20, 1
    %p143 = scmp.ne.s32.totalorder %s138, %s140
    %p144 = scmp.eq.s32.totalorder %s20, 0
    %p145 = por %p143, %p144
    %p146 = scmp.ne.s32.totalorder %s138, %s140
    %p147 = scmp.eq.s32.totalorder %s25, 1
    %p148 = por %p146, %p147
    %p149 = scmp.ne.s32.totalorder %s140, %s141
    %p150 = scmp.eq.s32.totalorder %s25, 0
    %p151 = por %p149, %p150
    %p152 = scmp.ne.s32.totalorder %s140, %s141
    %p153 = scmp.eq.s32.totalorder %s26, 1
    %p154 = por %p152, %p153
    %p156 = scmp.ne.s32.totalorder %s141, %s155
    %p157 = scmp.eq.s32.totalorder %s26, 0
    %p158 = por %p156, %p157
    %s160 = sadd.s32 %s159, 1
    %p163 = scmp.eq.s32.totalorder %s20, 1
    %p164 = scmp.ne.s32.totalorder %s159, %s161
    %p165 = scmp.eq.s32.totalorder %s20, 0
    %p166 = por %p164, %p165
    %p167 = scmp.ne.s32.totalorder %s159, %s161
    %p168 = scmp.eq.s32.totalorder %s25, 1
    %p169 = por %p167, %p168
    %p170 = scmp.ne.s32.totalorder %s161, %s162
    %p171 = scmp.eq.s32.totalorder %s25, 0
    %p172 = por %p170, %p171
    %p173 = scmp.ne.s32.totalorder %s161, %s162
    %p174 = scmp.eq.s32.totalorder %s26, 1
    %p175 = por %p173, %p174
    %p177 = scmp.ne.s32.totalorder %s162, %s176
    %p178 = scmp.eq.s32.totalorder %s26, 0
    %p179 = por %p177, %p178
    %s181 = sadd.s32 %s180, 1
    %p184 = scmp.eq.s32.totalorder %s20, 1
    %p185 = scmp.ne.s32.totalorder %s180, %s182
    %p186 = scmp.eq.s32.totalorder %s20, 0
    %p187 = por %p185, %p186
    %p188 = scmp.ne.s32.totalorder %s180, %s182
    %p189 = scmp.eq.s32.totalorder %s25, 1
    %p190 = por %p188, %p189
    %p191 = scmp.ne.s32.totalorder %s182, %s183
    %p192 = scmp.eq.s32.totalorder %s25, 0
    %p193 = por %p191, %p192
    %p194 = scmp.ne.s32.totalorder %s182, %s183
    %p195 = scmp.eq.s32.totalorder %s26, 1
    %p196 = por %p194, %p195
    %p198 = scmp.ne.s32.totalorder %s183, %s197
    %p199 = scmp.eq.s32.totalorder %s26, 0
    %p200 = por %p198, %p199
    %s202 = sadd.s32 %s201, 1
    %p205 = scmp.eq.s32.totalorder %s20, 1
    %p206 = scmp.ne.s32.totalorder %s201, %s203
    %p207 = scmp.eq.s32.totalorder %s20, 0
    %p208 = por %p206, %p207
    %p209 = scmp.ne.s32.totalorder %s201, %s203
    %p210 = scmp.eq.s32.totalorder %s25, 1
    %p211 = por %p209, %p210
    %p212 = scmp.ne.s32.totalorder %s203, %s204
    %p213 = scmp.eq.s32.totalorder %s25, 0
    %p214 = por %p212, %p213
    %p215 = scmp.ne.s32.totalorder %s203, %s204
    %p216 = scmp.eq.s32.totalorder %s26, 1
    %p217 = por %p215, %p216
    %p219 = scmp.ne.s32.totalorder %s204, %s218
    %p220 = scmp.eq.s32.totalorder %s26, 0
    %p221 = por %p219, %p220
    %s223 = sadd.s32 %s222, 1
    %p226 = scmp.eq.s32.totalorder %s20, 1
    %p227 = scmp.ne.s32.totalorder %s222, %s224
    %p228 = scmp.eq.s32.totalorder %s20, 0
    %p229 = por %p227, %p228
    %p230 = scmp.ne.s32.totalorder %s222, %s224
    %p231 = scmp.eq.s32.totalorder %s25, 1
    %p232 = por %p230, %p231
    %p233 = scmp.ne.s32.totalorder %s224, %s225
    %p234 = scmp.eq.s32.totalorder %s25, 0
    %p235 = por %p233, %p234
    %p236 = scmp.ne.s32.totalorder %s224, %s225
    %p237 = scmp.eq.s32.totalorder %s26, 1
    %p238 = por %p236, %p237
    %p240 = scmp.ne.s32.totalorder %s225, %s239
    %p241 = scmp.eq.s32.totalorder %s26, 0
    %p242 = por %p240, %p241
    %s244 = sadd.s32 %s243, 1
    %p247 = scmp.eq.s32.totalorder %s20, 1
    %p248 = scmp.ne.s32.totalorder %s243, %s245
    %p249 = scmp.eq.s32.totalorder %s20, 0
    %p250 = por %p248, %p249
    %p251 = scmp.ne.s32.totalorder %s243, %s245
    %p252 = scmp.eq.s32.totalorder %s25, 1
    %p253 = por %p251, %p252
    %p254 = scmp.ne.s32.totalorder %s245, %s246
    %p255 = scmp.eq.s32.totalorder %s25, 0
    %p256 = por %p254, %p255
    %p257 = scmp.ne.s32.totalorder %s245, %s246
    %p258 = scmp.eq.s32.totalorder %s26, 1
    %p259 = por %p257, %p258
    %p261 = scmp.ne.s32.totalorder %s246, %s260
    %p262 = scmp.eq.s32.totalorder %s26, 0
    %p263 = por %p261, %p262
    %s265 = sadd.s32 %s264, 1
    %p268 = scmp.eq.s32.totalorder %s20, 1
    %p269 = scmp.ne.s32.totalorder %s264, %s266
    %p270 = scmp.eq.s32.totalorder %s20, 0
    %p271 = por %p269, %p270
    %p272 = scmp.ne.s32.totalorder %s264, %s266
    %p273 = scmp.eq.s32.totalorder %s25, 1
    %p274 = por %p272, %p273
    %p275 = scmp.ne.s32.totalorder %s266, %s267
    %p276 = scmp.eq.s32.totalorder %s25, 0
    %p277 = por %p275, %p276
    %p278 = scmp.ne.s32.totalorder %s266, %s267
    %p279 = scmp.eq.s32.totalorder %s26, 1
    %p280 = por %p278, %p279
    %p282 = scmp.ne.s32.totalorder %s267, %s281
    %p283 = scmp.eq.s32.totalorder %s26, 0
    %p284 = por %p282, %p283
    %s286 = sadd.s32 %s285, 1
    %p289 = scmp.eq.s32.totalorder %s20, 1
    %p290 = scmp.ne.s32.totalorder %s285, %s287
    %p291 = scmp.eq.s32.totalorder %s20, 0
    %p292 = por %p290, %p291
    %p293 = scmp.ne.s32.totalorder %s285, %s287
    %p294 = scmp.eq.s32.totalorder %s25, 1
    %p295 = por %p293, %p294
    %p296 = scmp.ne.s32.totalorder %s287, %s288
    %p297 = scmp.eq.s32.totalorder %s25, 0
    %p298 = por %p296, %p297
    %p299 = scmp.ne.s32.totalorder %s287, %s288
    %p300 = scmp.eq.s32.totalorder %s26, 1
    %p301 = por %p299, %p300
    %p303 = scmp.ne.s32.totalorder %s288, %s302
    %p304 = scmp.eq.s32.totalorder %s26, 0
    %p305 = por %p303, %p304
    %s307 = sadd.s32 %s306, 1
    %p310 = scmp.eq.s32.totalorder %s20, 1
    %p311 = scmp.ne.s32.totalorder %s306, %s308
    %p312 = scmp.eq.s32.totalorder %s20, 0
    %p313 = por %p311, %p312
    %p314 = scmp.ne.s32.totalorder %s306, %s308
    %p315 = scmp.eq.s32.totalorder %s25, 1
    %p316 = por %p314, %p315
    %p317 = scmp.ne.s32.totalorder %s308, %s309
    %p318 = scmp.eq.s32.totalorder %s25, 0
    %p319 = por %p317, %p318
    %p320 = scmp.ne.s32.totalorder %s308, %s309
    %p321 = scmp.eq.s32.totalorder %s26, 1
    %p322 = por %p320, %p321
    %p324 = scmp.ne.s32.totalorder %s309, %s323
    %p325 = scmp.eq.s32.totalorder %s26, 0
    %p326 = por %p324, %p325
    %s327 = ssub.s32 %s20, %s27
    %p328 = scmp.eq.s32.totalorder %s327, 0
    %s330 = sadd.s32 %s329, 1
    %s331 = scalar_select %p328, %s329, %s330
    %p334 = pneg %p328
    %p335 = scmp.eq.s32.totalorder %s20, 1
    %p336 = por %p334, %p335
    %p337 = scmp.ne.s32.totalorder %s329, %s332
    %p338 = scmp.eq.s32.totalorder %s20, 0
    %p339 = por %p337, %p338
    %p340 = scmp.ne.s32.totalorder %s329, %s332
    %p341 = scmp.eq.s32.totalorder %s25, 1
    %p342 = por %p340, %p341
    %p343 = scmp.ne.s32.totalorder %s332, %s333
    %p344 = scmp.eq.s32.totalorder %s25, 0
    %p345 = por %p343, %p344
    %p346 = scmp.ne.s32.totalorder %s332, %s333
    %p347 = scmp.eq.s32.totalorder %s26, 1
    %p348 = por %p346, %p347
    %p350 = scmp.ne.s32.totalorder %s333, %s349
    %p351 = scmp.eq.s32.totalorder %s26, 0
    %p352 = por %p350, %p351
    %p353 = scmp.le.s32.totalorder 1, %s20
    %p354 = scmp.lt.s32.totalorder %s20, 3
    %p355 = pnand %p353, %p354
    %p356 = pneg %p355
    // Predicated region
    $region9: #{run.1} parent=5 // pred_check
      _
    $region10: #{run.1} parent=5 // pred_check_branch
      %358 = sbr.rel (%p355) target = $region12
    $region11: #{run.1} parent=5 // pred_region
      %s359 = ssub.s32 %s20, 1
      // Predicated region
      $region13: #{run.1} parent=11 // pred_check
        %p360 = pneg %p67
      $region14: #{run.1} parent=11 // pred_check_branch
        %362 = sbr.rel (%p360) target = $region16
      $region15: #{run.1} parent=11 // pred_region
        _
      $region16: #{run.1} parent=11 // pred_fallthru
        _
      // Predicated region
      $region17: #{run.1} parent=11 // pred_check
        %p363 = pneg %p88
      $region18: #{run.1} parent=11 // pred_check_branch
        %365 = sbr.rel (%p363) target = $region20
      $region19: #{run.1} parent=11 // pred_region
        _
      $region20: #{run.1} parent=11 // pred_fallthru
        _
      // Predicated region
      $region21: #{run.1} parent=11 // pred_check
        %p366 = pneg %p109
      $region22: #{run.1} parent=11 // pred_check_branch
        %368 = sbr.rel (%p366) target = $region24
      $region23: #{run.1} parent=11 // pred_region
        _
      $region24: #{run.1} parent=11 // pred_fallthru
        _
      // Predicated region
      $region25: #{run.1} parent=11 // pred_check
        %p369 = pneg %p130
      $region26: #{run.1} parent=11 // pred_check_branch
        %371 = sbr.rel (%p369) target = $region28
      $region27: #{run.1} parent=11 // pred_region
        _
      $region28: #{run.1} parent=11 // pred_fallthru
        _
      // Predicated region
      $region29: #{run.1} parent=11 // pred_check
        %p372 = pneg %p151
      $region30: #{run.1} parent=11 // pred_check_branch
        %374 = sbr.rel (%p372) target = $region32
      $region31: #{run.1} parent=11 // pred_region
        _
      $region32: #{run.1} parent=11 // pred_fallthru
        _
      // Predicated region
      $region33: #{run.1} parent=11 // pred_check
        %p375 = pneg %p172
      $region34: #{run.1} parent=11 // pred_check_branch
        %377 = sbr.rel (%p375) target = $region36
      $region35: #{run.1} parent=11 // pred_region
        _
      $region36: #{run.1} parent=11 // pred_fallthru
        _
      // Predicated region
      $region37: #{run.1} parent=11 // pred_check
        %p378 = pneg %p193
      $region38: #{run.1} parent=11 // pred_check_branch
        %380 = sbr.rel (%p378) target = $region40
      $region39: #{run.1} parent=11 // pred_region
        _
      $region40: #{run.1} parent=11 // pred_fallthru
        _
      // Predicated region
      $region41: #{run.1} parent=11 // pred_check
        %p381 = pneg %p214
      $region42: #{run.1} parent=11 // pred_check_branch
        %383 = sbr.rel (%p381) target = $region44
      $region43: #{run.1} parent=11 // pred_region
        _
      $region44: #{run.1} parent=11 // pred_fallthru
        _
      // Predicated region
      $region45: #{run.1} parent=11 // pred_check
        %p384 = pneg %p235
      $region46: #{run.1} parent=11 // pred_check_branch
        %386 = sbr.rel (%p384) target = $region48
      $region47: #{run.1} parent=11 // pred_region
        _
      $region48: #{run.1} parent=11 // pred_fallthru
        _
      // Predicated region
      $region49: #{run.1} parent=11 // pred_check
        %p387 = pneg %p256
      $region50: #{run.1} parent=11 // pred_check_branch
        %389 = sbr.rel (%p387) target = $region52
      $region51: #{run.1} parent=11 // pred_region
        _
      $region52: #{run.1} parent=11 // pred_fallthru
        _
      // Predicated region
      $region53: #{run.1} parent=11 // pred_check
        %p390 = pneg %p277
      $region54: #{run.1} parent=11 // pred_check_branch
        %392 = sbr.rel (%p390) target = $region56
      $region55: #{run.1} parent=11 // pred_region
        _
      $region56: #{run.1} parent=11 // pred_fallthru
        _
      // Predicated region
      $region57: #{run.1} parent=11 // pred_check
        %p393 = pneg %p298
      $region58: #{run.1} parent=11 // pred_check_branch
        %395 = sbr.rel (%p393) target = $region60
      $region59: #{run.1} parent=11 // pred_region
        _
      $region60: #{run.1} parent=11 // pred_fallthru
        _
      // Predicated region
      $region61: #{run.1} parent=11 // pred_check
        %p396 = pneg %p319
      $region62: #{run.1} parent=11 // pred_check_branch
        %398 = sbr.rel (%p396) target = $region64
      $region63: #{run.1} parent=11 // pred_region
        _
      $region64: #{run.1} parent=11 // pred_fallthru
        _
    $region12: #{run.1} parent=5 // pred_fallthru
      _
    %p399 = scmp.lt.s32.totalorder %s20, 2
    // Predicated region
    $region65: #{run.1} parent=5 // pred_check
      %p400 = pneg %p399
    $region66: #{run.1} parent=5 // pred_check_branch
      %402 = sbr.rel (%p400) target = $region68
    $region67: #{run.1} parent=5 // pred_region
      // Predicated region
      $region69: #{run.1} parent=67 // pred_check
        %p403 = pneg %p40
      $region70: #{run.1} parent=67 // pred_check_branch
        %405 = sbr.rel (%p403) target = $region72
      $region71: #{run.1} parent=67 // pred_region
        %p406 = scmp.lt.s32.totalorder %s20, 1
        %s407 = scalar_select %p406, %s20, 1
        %s408 = smul.addr %s407, 2
        %s409 = smul.addr %s408, 8
        %s410 = scalar_lea.vmem %s0, %s409
      $region72: #{run.1} parent=67 // pred_fallthru
        _
    $region68: #{run.1} parent=5 // pred_fallthru
      _
    %p411 = scmp.le.s32.totalorder 1, %s20
    %p412 = scmp.lt.s32.totalorder %s20, 3
    %p413 = pnand %p411, %p412
    %p414 = pneg %p413
    // Predicated region
    $region73: #{run.1} parent=5 // pred_check
      _
    $region74: #{run.1} parent=5 // pred_check_branch
      %416 = sbr.rel (%p413) target = $region76
    $region75: #{run.1} parent=5 // pred_region
      %s417 = ssub.s32 %s20, 1
      %p418 = scmp.lt.s32.totalorder %s25, 1
      %s419 = scalar_select %p418, %s25, 1
      %s420 = smul.addr %s419, 2
      %s421 = smul.addr %s420, 8
      %s422 = scalar_lea.vmem %s0, %s421
      %p423 = pneg %p46
      %p424 = pneg %p43
      %p425 = pneg %p67
      %p426 = pneg %p64
      %p427 = pneg %p88
      %p428 = pneg %p85
      %p429 = pneg %p109
      %p430 = pneg %p106
      %p431 = pneg %p130
      %p432 = pneg %p127
      %p433 = pneg %p151
      %p434 = pneg %p148
      %p435 = pneg %p172
      %p436 = pneg %p169
      %p437 = pneg %p193
      %p438 = pneg %p190
      %p439 = pneg %p214
      %p440 = pneg %p211
      %p441 = pneg %p235
      %p442 = pneg %p232
      %p443 = pneg %p256
      %p444 = pneg %p253
      %p445 = pneg %p277
      %p446 = pneg %p274
      %p447 = pneg %p298
      %p448 = pneg %p295
      %p449 = pneg %p319
      %p450 = pneg %p316
      %p451 = pneg %p345
      %p452 = pneg %p342
      %p453 = scmp.lt.s32.totalorder %s25, 1
      %s454 = scalar_select %p453, %s25, 1
      %s455 = smul.addr %s454, 2
      %s456 = smul.addr %s455, 8
      %s457 = scalar_lea.vmem %s14, %s456
      %p458 = scmp.lt.s32.totalorder %s25, 1
      %s459 = scalar_select %p458, %s25, 1
      %s460 = smul.addr %s459, 2
      %s461 = smul.addr %s460, 8
      %s462 = scalar_lea.vmem %s0, %s461
      %p463 = scmp.lt.s32.totalorder %s25, 1
      %s464 = scalar_select %p463, %s25, 1
      %s465 = smul.addr %s464, 2
      %s466 = smul.addr %s465, 8
      %s467 = scalar_lea.vmem %s14, %s466
      %v468 = vld [vmem:[%s462] sm:$0xff]
      %v469 = vld [vmem:[%s462 + $0x8] sm:$0xff]
      %v470 = vld [vmem:[%s1] sm:$0xff]
      %v471 = vld [vmem:[%s1 + $0x8] sm:$0xff]
      %v472 = vld [vmem:[%s1 + $0x10] sm:$0xff]
      %v473 = vld [vmem:[%s1 + $0x18] sm:$0xff]
      %v474 = vld [vmem:[%s1 + $0x20] sm:$0xff]
      %v475 = vld [vmem:[%s1 + $0x28] sm:$0xff]
      %v476 = vld [vmem:[%s1 + $0x30] sm:$0xff]
      %v477 = vld [vmem:[%s1 + $0x38] sm:$0xff]
      %v478 = vld [vmem:[%s1 + $0x40] sm:$0xff]
      %v479 = vld [vmem:[%s1 + $0x48] sm:$0xff]
      %v480 = vld [vmem:[%s1 + $0x50] sm:$0xff]
      %v481 = vld [vmem:[%s1 + $0x58] sm:$0xff]
      %v482 = vld [vmem:[%s1 + $0x60] sm:$0xff]
      %v483 = vld [vmem:[%s1 + $0x68] sm:$0xff]
      %v484 = vld [vmem:[%s1 + $0x70] sm:$0xff]
      %v485 = vld [vmem:[%s1 + $0x78] sm:$0xff]
      %v486 = vld [vmem:[%s1 + $0x80] sm:$0xff]
      %v487 = vld [vmem:[%s1 + $0x88] sm:$0xff]
      %v488 = vld [vmem:[%s1 + $0x90] sm:$0xff]
      %v489 = vld [vmem:[%s1 + $0x98] sm:$0xff]
      %v490 = vld [vmem:[%s1 + $0xa0] sm:$0xff]
      %v491 = vld [vmem:[%s1 + $0xa8] sm:$0xff]
      %v492 = vld [vmem:[%s1 + $0xb0] sm:$0xff]
      %v493 = vld [vmem:[%s1 + $0xb8] sm:$0xff]
      %v494 = vld [vmem:[%s1 + $0xc0] sm:$0xff]
      %v495 = vld [vmem:[%s1 + $0xc8] sm:$0xff]
      %v496 = vld [vmem:[%s1 + $0xd0] sm:$0xff]
      %v497 = vld [vmem:[%s1 + $0xd8] sm:$0xff]
      %v498 = vld [vmem:[%s1 + $0xe0] sm:$0xff]
      %v499 = vld [vmem:[%s1 + $0xe8] sm:$0xff]
      %v500 = vld [vmem:[%s1 + $0xf0] sm:$0xff]
      %v501 = vld [vmem:[%s1 + $0xf8] sm:$0xff]
      %502 = vmatprep.subr.mxu0 0.0
      %v503 = vand.u32 %v470, 4294901760
      %504 = vmatpush1.msra.mxu0 %v503
      %505 = vmatprep.subr.mxu0 0.0
      %v506 = vand.u32 %v471, 4294901760
      %507 = vmatpush1.msra.mxu0 %v506
      %508 = vmatprep.subr.mxu0 0.0
      %v509 = vand.u32 %v472, 4294901760
      %510 = vmatpush1.msra.mxu0 %v509
      %511 = vmatprep.subr.mxu0 0.0
      %v512 = vand.u32 %v473, 4294901760
      %513 = vmatpush1.msra.mxu0 %v512
      %514 = vmatprep.subr.mxu0 0.0
      %v515 = vand.u32 %v474, 4294901760
      %516 = vmatpush1.msra.mxu0 %v515
      %517 = vmatprep.subr.mxu0 0.0
      %v518 = vand.u32 %v475, 4294901760
      %519 = vmatpush1.msra.mxu0 %v518
      %520 = vmatprep.subr.mxu0 0.0
      %v521 = vand.u32 %v476, 4294901760
      %522 = vmatpush1.msra.mxu0 %v521
      %523 = vmatprep.subr.mxu0 0.0
      %v524 = vand.u32 %v477, 4294901760
      %525 = vmatpush1.msra.mxu0 %v524
      %526 = vmatprep.subr.mxu0 0.0
      %v527 = vand.u32 %v478, 4294901760
      %528 = vmatpush1.msra.mxu0 %v527
      %529 = vmatprep.subr.mxu0 0.0
      %v530 = vand.u32 %v479, 4294901760
      %531 = vmatpush1.msra.mxu0 %v530
      %532 = vmatprep.subr.mxu0 0.0
      %v533 = vand.u32 %v480, 4294901760
      %534 = vmatpush1.msra.mxu0 %v533
      %535 = vmatprep.subr.mxu0 0.0
      %v536 = vand.u32 %v481, 4294901760
      %537 = vmatpush1.msra.mxu0 %v536
      %538 = vmatprep.subr.mxu0 0.0
      %v539 = vand.u32 %v482, 4294901760
      %540 = vmatpush1.msra.mxu0 %v539
      %541 = vmatprep.subr.mxu0 0.0
      %v542 = vand.u32 %v483, 4294901760
      %543 = vmatpush1.msra.mxu0 %v542
      %544 = vmatprep.subr.mxu0 0.0
      %v545 = vand.u32 %v484, 4294901760
      %546 = vmatpush1.msra.mxu0 %v545
      %547 = vmatprep.subr.mxu0 0.0
      %v548 = vand.u32 %v485, 4294901760
      %549 = vmatpush1.msra.mxu0 %v548
      %550 = vmatprep.subr.mxu0 0.0
      %v551 = vand.u32 %v486, 4294901760
      %552 = vmatpush1.msra.mxu0 %v551
      %553 = vmatprep.subr.mxu0 0.0
      %v554 = vand.u32 %v487, 4294901760
      %555 = vmatpush1.msra.mxu0 %v554
      %556 = vmatprep.subr.mxu0 0.0
      %v557 = vand.u32 %v488, 4294901760
      %558 = vmatpush1.msra.mxu0 %v557
      %559 = vmatprep.subr.mxu0 0.0
      %v560 = vand.u32 %v489, 4294901760
      %561 = vmatpush1.msra.mxu0 %v560
      %562 = vmatprep.subr.mxu0 0.0
      %v563 = vand.u32 %v490, 4294901760
      %564 = vmatpush1.msra.mxu0 %v563
      %565 = vmatprep.subr.mxu0 0.0
      %v566 = vand.u32 %v491, 4294901760
      %567 = vmatpush1.msra.mxu0 %v566
      %568 = vmatprep.subr.mxu0 0.0
      %v569 = vand.u32 %v492, 4294901760
      %570 = vmatpush1.msra.mxu0 %v569
      %571 = vmatprep.subr.mxu0 0.0
      %v572 = vand.u32 %v493, 4294901760
      %573 = vmatpush1.msra.mxu0 %v572
      %574 = vmatprep.subr.mxu0 0.0
      %v575 = vand.u32 %v494, 4294901760
      %576 = vmatpush1.msra.mxu0 %v575
      %577 = vmatprep.subr.mxu0 0.0
      %v578 = vand.u32 %v495, 4294901760
      %579 = vmatpush1.msra.mxu0 %v578
      %580 = vmatprep.subr.mxu0 0.0
      %v581 = vand.u32 %v496, 4294901760
      %582 = vmatpush1.msra.mxu0 %v581
      %583 = vmatprep.subr.mxu0 0.0
      %v584 = vand.u32 %v497, 4294901760
      %585 = vmatpush1.msra.mxu0 %v584
      %586 = vmatprep.subr.mxu0 0.0
      %v587 = vand.u32 %v498, 4294901760
      %588 = vmatpush1.msra.mxu0 %v587
      %589 = vmatprep.subr.mxu0 0.0
      %v590 = vand.u32 %v499, 4294901760
      %591 = vmatpush1.msra.mxu0 %v590
      %592 = vmatprep.subr.mxu0 0.0
      %v593 = vand.u32 %v500, 4294901760
      %594 = vmatpush1.msra.mxu0 %v593
      %595 = vmatprep.subr.mxu0 0.0
      %v596 = vand.u32 %v501, 4294901760
      %597 = vmatpush1.msra.mxu0 %v596
      %v598 = vand.u32 %v469, 4294901760
      %v599 = vsub.f32 %v469, %v598
      %v600 = vand.u32 %v599, 4294901760
      %v601 = vsub.f32 %v599, %v600
      %v602 = vand.u32 %v601, 4294901760
      %603 = vmatprep.mubr.f32.mxu0 %v602
      %v604 = vand.u32 %v468, 4294901760
      %v605 = vsub.f32 %v468, %v604
      %v606 = vand.u32 %v605, 4294901760
      %v607 = vsub.f32 %v605, %v606
      %v608 = vand.u32 %v607, 4294901760
      %609 = vmatmul.mubr.f32.gmra.mrb[0].mxu0 %v608
      %v610 = vpop.f32.mrb[0].mxu0
      %v611 = vadd.f32 0.0, %v610
      %v612 = vpop.f32.mrb[0].mxu0
      %613 = vdwg.mxu0
      %614 = vmatprep.subr.mxu0 0.0
      %v615 = vand.u32 %v470, 4294901760
      %v616 = vsub.f32 %v470, %v615
      %v617 = vand.u32 %v616, 4294901760
      %v618 = vsub.f32 %v616, %v617
      %v619 = vand.u32 %v618, 4294901760
      %620 = vmatpush1.msra.mxu0 %v619
      %621 = vmatprep.subr.mxu0 0.0
      %v622 = vand.u32 %v471, 4294901760
      %v623 = vsub.f32 %v471, %v622
      %v624 = vand.u32 %v623, 4294901760
      %v625 = vsub.f32 %v623, %v624
      %v626 = vand.u32 %v625, 4294901760
      %627 = vmatpush1.msra.mxu0 %v626
      %628 = vmatprep.subr.mxu0 0.0
      %v629 = vand.u32 %v472, 4294901760
      %v630 = vsub.f32 %v472, %v629
      %v631 = vand.u32 %v630, 4294901760
      %v632 = vsub.f32 %v630, %v631
      %v633 = vand.u32 %v632, 4294901760
      %634 = vmatpush1.msra.mxu0 %v633
      %635 = vmatprep.subr.mxu0 0.0
      %v636 = vand.u32 %v473, 4294901760
      %v637 = vsub.f32 %v473, %v636
      %v638 = vand.u32 %v637, 4294901760
      %v639 = vsub.f32 %v637, %v638
      %v640 = vand.u32 %v639, 4294901760
      %641 = vmatpush1.msra.mxu0 %v640
      %642 = vmatprep.subr.mxu0 0.0
      %v643 = vand.u32 %v474, 4294901760
      %v644 = vsub.f32 %v474, %v643
      %v645 = vand.u32 %v644, 4294901760
      %v646 = vsub.f32 %v644, %v645
      %v647 = vand.u32 %v646, 4294901760
      %648 = vmatpush1.msra.mxu0 %v647
      %649 = vmatprep.subr.mxu0 0.0
      %v650 = vand.u32 %v475, 4294901760
      %v651 = vsub.f32 %v475, %v650
      %v652 = vand.u32 %v651, 4294901760
      %v653 = vsub.f32 %v651, %v652
      %v654 = vand.u32 %v653, 4294901760
      %655 = vmatpush1.msra.mxu0 %v654
      %656 = vmatprep.subr.mxu0 0.0
      %v657 = vand.u32 %v476, 4294901760
      %v658 = vsub.f32 %v476, %v657
      %v659 = vand.u32 %v658, 4294901760
      %v660 = vsub.f32 %v658, %v659
      %v661 = vand.u32 %v660, 4294901760
      %662 = vmatpush1.msra.mxu0 %v661
      %663 = vmatprep.subr.mxu0 0.0
      %v664 = vand.u32 %v477, 4294901760
      %v665 = vsub.f32 %v477, %v664
      %v666 = vand.u32 %v665, 4294901760
      %v667 = vsub.f32 %v665, %v666
      %v668 = vand.u32 %v667, 4294901760
      %669 = vmatpush1.msra.mxu0 %v668
      %670 = vmatprep.subr.mxu0 0.0
      %v671 = vand.u32 %v478, 4294901760
      %v672 = vsub.f32 %v478, %v671
      %v673 = vand.u32 %v672, 4294901760
      %v674 = vsub.f32 %v672, %v673
      %v675 = vand.u32 %v674, 4294901760
      %676 = vmatpush1.msra.mxu0 %v675
      %677 = vmatprep.subr.mxu0 0.0
      %v678 = vand.u32 %v479, 4294901760
      %v679 = vsub.f32 %v479, %v678
      %v680 = vand.u32 %v679, 4294901760
      %v681 = vsub.f32 %v679, %v680
      %v682 = vand.u32 %v681, 4294901760
      %683 = vmatpush1.msra.mxu0 %v682
      %684 = vmatprep.subr.mxu0 0.0
      %v685 = vand.u32 %v480, 4294901760
      %v686 = vsub.f32 %v480, %v685
      %v687 = vand.u32 %v686, 4294901760
      %v688 = vsub.f32 %v686, %v687
      %v689 = vand.u32 %v688, 4294901760
      %690 = vmatpush1.msra.mxu0 %v689
      %691 = vmatprep.subr.mxu0 0.0
      %v692 = vand.u32 %v481, 4294901760
      %v693 = vsub.f32 %v481, %v692
      %v694 = vand.u32 %v693, 4294901760
      %v695 = vsub.f32 %v693, %v694
      %v696 = vand.u32 %v695, 4294901760
      %697 = vmatpush1.msra.mxu0 %v696
      %698 = vmatprep.subr.mxu0 0.0
      %v699 = vand.u32 %v482, 4294901760
      %v700 = vsub.f32 %v482, %v699
      %v701 = vand.u32 %v700, 4294901760
      %v702 = vsub.f32 %v700, %v701
      %v703 = vand.u32 %v702, 4294901760
      %704 = vmatpush1.msra.mxu0 %v703
      %705 = vmatprep.subr.mxu0 0.0
      %v706 = vand.u32 %v483, 4294901760
      %v707 = vsub.f32 %v483, %v706
      %v708 = vand.u32 %v707, 4294901760
      %v709 = vsub.f32 %v707, %v708
      %v710 = vand.u32 %v709, 4294901760
      %711 = vmatpush1.msra.mxu0 %v710
      %712 = vmatprep.subr.mxu0 0.0
      %v713 = vand.u32 %v484, 4294901760
      %v714 = vsub.f32 %v484, %v713
      %v715 = vand.u32 %v714, 4294901760
      %v716 = vsub.f32 %v714, %v715
      %v717 = vand.u32 %v716, 4294901760
      %718 = vmatpush1.msra.mxu0 %v717
      %719 = vmatprep.subr.mxu0 0.0
      %v720 = vand.u32 %v485, 4294901760
      %v721 = vsub.f32 %v485, %v720
      %v722 = vand.u32 %v721, 4294901760
      %v723 = vsub.f32 %v721, %v722
      %v724 = vand.u32 %v723, 4294901760
      %725 = vmatpush1.msra.mxu0 %v724
      %726 = vmatprep.subr.mxu0 0.0
      %v727 = vand.u32 %v486, 4294901760
      %v728 = vsub.f32 %v486, %v727
      %v729 = vand.u32 %v728, 4294901760
      %v730 = vsub.f32 %v728, %v729
      %v731 = vand.u32 %v730, 4294901760
      %732 = vmatpush1.msra.mxu0 %v731
      %733 = vmatprep.subr.mxu0 0.0
      %v734 = vand.u32 %v487, 4294901760
      %v735 = vsub.f32 %v487, %v734
      %v736 = vand.u32 %v735, 4294901760
      %v737 = vsub.f32 %v735, %v736
      %v738 = vand.u32 %v737, 4294901760
      %739 = vmatpush1.msra.mxu0 %v738
      %740 = vmatprep.subr.mxu0 0.0
      %v741 = vand.u32 %v488, 4294901760
      %v742 = vsub.f32 %v488, %v741
      %v743 = vand.u32 %v742, 4294901760
      %v744 = vsub.f32 %v742, %v743
      %v745 = vand.u32 %v744, 4294901760
      %746 = vmatpush1.msra.mxu0 %v745
      %747 = vmatprep.subr.mxu0 0.0
      %v748 = vand.u32 %v489, 4294901760
      %v749 = vsub.f32 %v489, %v748
      %v750 = vand.u32 %v749, 4294901760
      %v751 = vsub.f32 %v749, %v750
      %v752 = vand.u32 %v751, 4294901760
      %753 = vmatpush1.msra.mxu0 %v752
      %754 = vmatprep.subr.mxu0 0.0
      %v755 = vand.u32 %v490, 4294901760
      %v756 = vsub.f32 %v490, %v755
      %v757 = vand.u32 %v756, 4294901760
      %v758 = vsub.f32 %v756, %v757
      %v759 = vand.u32 %v758, 4294901760
      %760 = vmatpush1.msra.mxu0 %v759
      %761 = vmatprep.subr.mxu0 0.0
      %v762 = vand.u32 %v491, 4294901760
      %v763 = vsub.f32 %v491, %v762
      %v764 = vand.u32 %v763, 4294901760
      %v765 = vsub.f32 %v763, %v764
      %v766 = vand.u32 %v765, 4294901760
      %767 = vmatpush1.msra.mxu0 %v766
      %768 = vmatprep.subr.mxu0 0.0
      %v769 = vand.u32 %v492, 4294901760
      %v770 = vsub.f32 %v492, %v769
      %v771 = vand.u32 %v770, 4294901760
      %v772 = vsub.f32 %v770, %v771
      %v773 = vand.u32 %v772, 4294901760
      %774 = vmatpush1.msra.mxu0 %v773
      %775 = vmatprep.subr.mxu0 0.0
      %v776 = vand.u32 %v493, 4294901760
      %v777 = vsub.f32 %v493, %v776
      %v778 = vand.u32 %v777, 4294901760
      %v779 = vsub.f32 %v777, %v778
      %v780 = vand.u32 %v779, 4294901760
      %781 = vmatpush1.msra.mxu0 %v780
      %782 = vmatprep.subr.mxu0 0.0
      %v783 = vand.u32 %v494, 4294901760
      %v784 = vsub.f32 %v494, %v783
      %v785 = vand.u32 %v784, 4294901760
      %v786 = vsub.f32 %v784, %v785
      %v787 = vand.u32 %v786, 4294901760
      %788 = vmatpush1.msra.mxu0 %v787
      %789 = vmatprep.subr.mxu0 0.0
      %v790 = vand.u32 %v495, 4294901760
      %v791 = vsub.f32 %v495, %v790
      %v792 = vand.u32 %v791, 4294901760
      %v793 = vsub.f32 %v791, %v792
      %v794 = vand.u32 %v793, 4294901760
      %795 = vmatpush1.msra.mxu0 %v794
      %796 = vmatprep.subr.mxu0 0.0
      %v797 = vand.u32 %v496, 4294901760
      %v798 = vsub.f32 %v496, %v797
      %v799 = vand.u32 %v798, 4294901760
      %v800 = vsub.f32 %v798, %v799
      %v801 = vand.u32 %v800, 4294901760
      %802 = vmatpush1.msra.mxu0 %v801
      %803 = vmatprep.subr.mxu0 0.0
      %v804 = vand.u32 %v497, 4294901760
      %v805 = vsub.f32 %v497, %v804
      %v806 = vand.u32 %v805, 4294901760
      %v807 = vsub.f32 %v805, %v806
      %v808 = vand.u32 %v807, 4294901760
      %809 = vmatpush1.msra.mxu0 %v808
      %810 = vmatprep.subr.mxu0 0.0
      %v811 = vand.u32 %v498, 4294901760
      %v812 = vsub.f32 %v498, %v811
      %v813 = vand.u32 %v812, 4294901760
      %v814 = vsub.f32 %v812, %v813
      %v815 = vand.u32 %v814, 4294901760
      %816 = vmatpush1.msra.mxu0 %v815
      %817 = vmatprep.subr.mxu0 0.0
      %v818 = vand.u32 %v499, 4294901760
      %v819 = vsub.f32 %v499, %v818
      %v820 = vand.u32 %v819, 4294901760
      %v821 = vsub.f32 %v819, %v820
      %v822 = vand.u32 %v821, 4294901760
      %823 = vmatpush1.msra.mxu0 %v822
      %824 = vmatprep.subr.mxu0 0.0
      %v825 = vand.u32 %v500, 4294901760
      %v826 = vsub.f32 %v500, %v825
      %v827 = vand.u32 %v826, 4294901760
      %v828 = vsub.f32 %v826, %v827
      %v829 = vand.u32 %v828, 4294901760
      %830 = vmatpush1.msra.mxu0 %v829
      %831 = vmatprep.subr.mxu0 0.0
      %v832 = vand.u32 %v501, 4294901760
      %v833 = vsub.f32 %v501, %v832
      %v834 = vand.u32 %v833, 4294901760
      %v835 = vsub.f32 %v833, %v834
      %v836 = vand.u32 %v835, 4294901760
      %837 = vmatpush1.msra.mxu0 %v836
      %v838 = vand.u32 %v469, 4294901760
      %839 = vmatprep.mubr.f32.mxu0 %v838
      %v840 = vand.u32 %v468, 4294901760
      %841 = vmatmul.mubr.f32.gmra.mrb[0].mxu0 %v840
      %v842 = vpop.f32.mrb[0].mxu0
      %v843 = vadd.f32 %v611, %v842
      %v844 = vpop.f32.mrb[0].mxu0
      %845 = vdwg.mxu0
      %846 = vmatprep.subr.mxu0 0.0
      %v847 = vand.u32 %v470, 4294901760
      %v848 = vsub.f32 %v470, %v847
      %849 = vmatpush1.msra.mxu0 %v848
      %850 = vmatprep.subr.mxu0 0.0
      %v851 = vand.u32 %v471, 4294901760
      %v852 = vsub.f32 %v471, %v851
      %853 = vmatpush1.msra.mxu0 %v852
      %854 = vmatprep.subr.mxu0 0.0
      %v855 = vand.u32 %v472, 4294901760
      %v856 = vsub.f32 %v472, %v855
      %857 = vmatpush1.msra.mxu0 %v856
      %858 = vmatprep.subr.mxu0 0.0
      %v859 = vand.u32 %v473, 4294901760
      %v860 = vsub.f32 %v473, %v859
      %861 = vmatpush1.msra.mxu0 %v860
      %862 = vmatprep.subr.mxu0 0.0
      %v863 = vand.u32 %v474, 4294901760
      %v864 = vsub.f32 %v474, %v863
      %865 = vmatpush1.msra.mxu0 %v864
      %866 = vmatprep.subr.mxu0 0.0
      %v867 = vand.u32 %v475, 4294901760
      %v868 = vsub.f32 %v475, %v867
      %869 = vmatpush1.msra.mxu0 %v868
      %870 = vmatprep.subr.mxu0 0.0
      %v871 = vand.u32 %v476, 4294901760
      %v872 = vsub.f32 %v476, %v871
      %873 = vmatpush1.msra.mxu0 %v872
      %874 = vmatprep.subr.mxu0 0.0
      %v875 = vand.u32 %v477, 4294901760
      %v876 = vsub.f32 %v477, %v875
      %877 = vmatpush1.msra.mxu0 %v876
      %878 = vmatprep.subr.mxu0 0.0
      %v879 = vand.u32 %v478, 4294901760
      %v880 = vsub.f32 %v478, %v879
      %881 = vmatpush1.msra.mxu0 %v880
      %882 = vmatprep.subr.mxu0 0.0
      %v883 = vand.u32 %v479, 4294901760
      %v884 = vsub.f32 %v479, %v883
      %885 = vmatpush1.msra.mxu0 %v884
      %886 = vmatprep.subr.mxu0 0.0
      %v887 = vand.u32 %v480, 4294901760
      %v888 = vsub.f32 %v480, %v887
      %889 = vmatpush1.msra.mxu0 %v888
      %890 = vmatprep.subr.mxu0 0.0
      %v891 = vand.u32 %v481, 4294901760
      %v892 = vsub.f32 %v481, %v891
      %893 = vmatpush1.msra.mxu0 %v892
      %894 = vmatprep.subr.mxu0 0.0
      %v895 = vand.u32 %v482, 4294901760
      %v896 = vsub.f32 %v482, %v895
      %897 = vmatpush1.msra.mxu0 %v896
      %898 = vmatprep.subr.mxu0 0.0
      %v899 = vand.u32 %v483, 4294901760
      %v900 = vsub.f32 %v483, %v899
      %901 = vmatpush1.msra.mxu0 %v900
      %902 = vmatprep.subr.mxu0 0.0
      %v903 = vand.u32 %v484, 4294901760
      %v904 = vsub.f32 %v484, %v903
      %905 = vmatpush1.msra.mxu0 %v904
      %906 = vmatprep.subr.mxu0 0.0
      %v907 = vand.u32 %v485, 4294901760
      %v908 = vsub.f32 %v485, %v907
      %909 = vmatpush1.msra.mxu0 %v908
      %910 = vmatprep.subr.mxu0 0.0
      %v911 = vand.u32 %v486, 4294901760
      %v912 = vsub.f32 %v486, %v911
      %913 = vmatpush1.msra.mxu0 %v912
      %914 = vmatprep.subr.mxu0 0.0
      %v915 = vand.u32 %v487, 4294901760
      %v916 = vsub.f32 %v487, %v915
      %917 = vmatpush1.msra.mxu0 %v916
      %918 = vmatprep.subr.mxu0 0.0
      %v919 = vand.u32 %v488, 4294901760
      %v920 = vsub.f32 %v488, %v919
      %921 = vmatpush1.msra.mxu0 %v920
      %922 = vmatprep.subr.mxu0 0.0
      %v923 = vand.u32 %v489, 4294901760
      %v924 = vsub.f32 %v489, %v923
      %925 = vmatpush1.msra.mxu0 %v924
      %926 = vmatprep.subr.mxu0 0.0
      %v927 = vand.u32 %v490, 4294901760
      %v928 = vsub.f32 %v490, %v927
      %929 = vmatpush1.msra.mxu0 %v928
      %930 = vmatprep.subr.mxu0 0.0
      %v931 = vand.u32 %v491, 4294901760
      %v932 = vsub.f32 %v491, %v931
      %933 = vmatpush1.msra.mxu0 %v932
      %934 = vmatprep.subr.mxu0 0.0
      %v935 = vand.u32 %v492, 4294901760
      %v936 = vsub.f32 %v492, %v935
      %937 = vmatpush1.msra.mxu0 %v936
      %938 = vmatprep.subr.mxu0 0.0
      %v939 = vand.u32 %v493, 4294901760
      %v940 = vsub.f32 %v493, %v939
      %941 = vmatpush1.msra.mxu0 %v940
      %942 = vmatprep.subr.mxu0 0.0
      %v943 = vand.u32 %v494, 4294901760
      %v944 = vsub.f32 %v494, %v943
      %945 = vmatpush1.msra.mxu0 %v944
      %946 = vmatprep.subr.mxu0 0.0
      %v947 = vand.u32 %v495, 4294901760
      %v948 = vsub.f32 %v495, %v947
      %949 = vmatpush1.msra.mxu0 %v948
      %950 = vmatprep.subr.mxu0 0.0
      %v951 = vand.u32 %v496, 4294901760
      %v952 = vsub.f32 %v496, %v951
      %953 = vmatpush1.msra.mxu0 %v952
      %954 = vmatprep.subr.mxu0 0.0
      %v955 = vand.u32 %v497, 4294901760
      %v956 = vsub.f32 %v497, %v955
      %957 = vmatpush1.msra.mxu0 %v956
      %958 = vmatprep.subr.mxu0 0.0
      %v959 = vand.u32 %v498, 4294901760
      %v960 = vsub.f32 %v498, %v959
      %961 = vmatpush1.msra.mxu0 %v960
      %962 = vmatprep.subr.mxu0 0.0
      %v963 = vand.u32 %v499, 4294901760
      %v964 = vsub.f32 %v499, %v963
      %965 = vmatpush1.msra.mxu0 %v964
      %966 = vmatprep.subr.mxu0 0.0
      %v967 = vand.u32 %v500, 4294901760
      %v968 = vsub.f32 %v500, %v967
      %969 = vmatpush1.msra.mxu0 %v968
      %970 = vmatprep.subr.mxu0 0.0
      %v971 = vand.u32 %v501, 4294901760
      %v972 = vsub.f32 %v501, %v971
      %973 = vmatpush1.msra.mxu0 %v972
      %v974 = vand.u32 %v469, 4294901760
      %v975 = vsub.f32 %v469, %v974
      %976 = vmatprep.mubr.f32.mxu0 %v975
      %v977 = vand.u32 %v468, 4294901760
      %v978 = vsub.f32 %v468, %v977
      %979 = vmatmul.mubr.f32.gmra.mrb[0].mxu0 %v978
      %v980 = vpop.f32.mrb[0].mxu0
      %v981 = vadd.f32 %v843, %v980
      %v982 = vpop.f32.mrb[0].mxu0
      %983 = vdwg.mxu0
      %984 = vmatprep.subr.mxu0 0.0
      %v985 = vand.u32 %v470, 4294901760
      %986 = vmatpush1.msra.mxu0 %v985
      %987 = vmatprep.subr.mxu0 0.0
      %v988 = vand.u32 %v471, 4294901760
      %989 = vmatpush1.msra.mxu0 %v988
      %990 = vmatprep.subr.mxu0 0.0
      %v991 = vand.u32 %v472, 4294901760
      %992 = vmatpush1.msra.mxu0 %v991
      %993 = vmatprep.subr.mxu0 0.0
      %v994 = vand.u32 %v473, 4294901760
      %995 = vmatpush1.msra.mxu0 %v994
      %996 = vmatprep.subr.mxu0 0.0
      %v997 = vand.u32 %v474, 4294901760
      %998 = vmatpush1.msra.mxu0 %v997
      %999 = vmatprep.subr.mxu0 0.0
      %v1000 = vand.u32 %v475, 4294901760
      %1001 = vmatpush1.msra.mxu0 %v1000
      %1002 = vmatprep.subr.mxu0 0.0
      %v1003 = vand.u32 %v476, 4294901760
      %1004 = vmatpush1.msra.mxu0 %v1003
      %1005 = vmatprep.subr.mxu0 0.0
      %v1006 = vand.u32 %v477, 4294901760
      %1007 = vmatpush1.msra.mxu0 %v1006
      %1008 = vmatprep.subr.mxu0 0.0
      %v1009 = vand.u32 %v478, 4294901760
      %1010 = vmatpush1.msra.mxu0 %v1009
      %1011 = vmatprep.subr.mxu0 0.0
      %v1012 = vand.u32 %v479, 4294901760
      %1013 = vmatpush1.msra.mxu0 %v1012
      %1014 = vmatprep.subr.mxu0 0.0
      %v1015 = vand.u32 %v480, 4294901760
      %1016 = vmatpush1.msra.mxu0 %v1015
      %1017 = vmatprep.subr.mxu0 0.0
      %v1018 = vand.u32 %v481, 4294901760
      %1019 = vmatpush1.msra.mxu0 %v1018
      %1020 = vmatprep.subr.mxu0 0.0
      %v1021 = vand.u32 %v482, 4294901760
      %1022 = vmatpush1.msra.mxu0 %v1021
      %1023 = vmatprep.subr.mxu0 0.0
      %v1024 = vand.u32 %v483, 4294901760
      %1025 = vmatpush1.msra.mxu0 %v1024
      %1026 = vmatprep.subr.mxu0 0.0
      %v1027 = vand.u32 %v484, 4294901760
      %1028 = vmatpush1.msra.mxu0 %v1027
      %1029 = vmatprep.subr.mxu0 0.0
      %v1030 = vand.u32 %v485, 4294901760
      %1031 = vmatpush1.msra.mxu0 %v1030
      %1032 = vmatprep.subr.mxu0 0.0
      %v1033 = vand.u32 %v486, 4294901760
      %1034 = vmatpush1.msra.mxu0 %v1033
      %1035 = vmatprep.subr.mxu0 0.0
      %v1036 = vand.u32 %v487, 4294901760
      %1037 = vmatpush1.msra.mxu0 %v1036
      %1038 = vmatprep.subr.mxu0 0.0
      %v1039 = vand.u32 %v488, 4294901760
      %1040 = vmatpush1.msra.mxu0 %v1039
      %1041 = vmatprep.subr.mxu0 0.0
      %v1042 = vand.u32 %v489, 4294901760
      %1043 = vmatpush1.msra.mxu0 %v1042
      %1044 = vmatprep.subr.mxu0 0.0
      %v1045 = vand.u32 %v490, 4294901760
      %1046 = vmatpush1.msra.mxu0 %v1045
      %1047 = vmatprep.subr.mxu0 0.0
      %v1048 = vand.u32 %v491, 4294901760
      %1049 = vmatpush1.msra.mxu0 %v1048
      %1050 = vmatprep.subr.mxu0 0.0
      %v1051 = vand.u32 %v492, 4294901760
      %1052 = vmatpush1.msra.mxu0 %v1051
      %1053 = vmatprep.subr.mxu0 0.0
      %v1054 = vand.u32 %v493, 4294901760
      %1055 = vmatpush1.msra.mxu0 %v1054
      %1056 = vmatprep.subr.mxu0 0.0
      %v1057 = vand.u32 %v494, 4294901760
      %1058 = vmatpush1.msra.mxu0 %v1057
      %1059 = vmatprep.subr.mxu0 0.0
      %v1060 = vand.u32 %v495, 4294901760
      %1061 = vmatpush1.msra.mxu0 %v1060
      %1062 = vmatprep.subr.mxu0 0.0
      %v1063 = vand.u32 %v496, 4294901760
      %1064 = vmatpush1.msra.mxu0 %v1063
      %1065 = vmatprep.subr.mxu0 0.0
      %v1066 = vand.u32 %v497, 4294901760
      %1067 = vmatpush1.msra.mxu0 %v1066
      %1068 = vmatprep.subr.mxu0 0.0
      %v1069 = vand.u32 %v498, 4294901760
      %1070 = vmatpush1.msra.mxu0 %v1069
      %1071 = vmatprep.subr.mxu0 0.0
      %v1072 = vand.u32 %v499, 4294901760
      %1073 = vmatpush1.msra.mxu0 %v1072
      %1074 = vmatprep.subr.mxu0 0.0
      %v1075 = vand.u32 %v500, 4294901760
      %1076 = vmatpush1.msra.mxu0 %v1075
      %1077 = vmatprep.subr.mxu0 0.0
      %v1078 = vand.u32 %v501, 4294901760
      %1079 = vmatpush1.msra.mxu0 %v1078
      %v1080 = vand.u32 %v469, 4294901760
      %v1081 = vsub.f32 %v469, %v1080
      %v1082 = vand.u32 %v1081, 4294901760
      %1083 = vmatprep.mubr.f32.mxu0 %v1082
      %v1084 = vand.u32 %v468, 4294901760
      %v1085 = vsub.f32 %v468, %v1084
      %v1086 = vand.u32 %v1085, 4294901760
      %1087 = vmatmul.mubr.f32.gmra.mrb[0].mxu0 %v1086
      %v1088 = vpop.f32.mrb[0].mxu0
      %v1089 = vadd.f32 %v981, %v1088
      %v1090 = vpop.f32.mrb[0].mxu0
      %1091 = vdwg.mxu0
      %1092 = vmatprep.subr.mxu0 0.0
      %v1093 = vand.u32 %v470, 4294901760
      %v1094 = vsub.f32 %v470, %v1093
      %v1095 = vand.u32 %v1094, 4294901760
      %1096 = vmatpush1.msra.mxu0 %v1095
      %1097 = vmatprep.subr.mxu0 0.0
      %v1098 = vand.u32 %v471, 4294901760
      %v1099 = vsub.f32 %v471, %v1098
      %v1100 = vand.u32 %v1099, 4294901760
      %1101 = vmatpush1.msra.mxu0 %v1100
      %1102 = vmatprep.subr.mxu0 0.0
      %v1103 = vand.u32 %v472, 4294901760
      %v1104 = vsub.f32 %v472, %v1103
      %v1105 = vand.u32 %v1104, 4294901760
      %1106 = vmatpush1.msra.mxu0 %v1105
      %1107 = vmatprep.subr.mxu0 0.0
      %v1108 = vand.u32 %v473, 4294901760
      %v1109 = vsub.f32 %v473, %v1108
      %v1110 = vand.u32 %v1109, 4294901760
      %1111 = vmatpush1.msra.mxu0 %v1110
      %1112 = vmatprep.subr.mxu0 0.0
      %v1113 = vand.u32 %v474, 4294901760
      %v1114 = vsub.f32 %v474, %v1113
      %v1115 = vand.u32 %v1114, 4294901760
      %1116 = vmatpush1.msra.mxu0 %v1115
      %1117 = vmatprep.subr.mxu0 0.0
      %v1118 = vand.u32 %v475, 4294901760
      %v1119 = vsub.f32 %v475, %v1118
      %v1120 = vand.u32 %v1119, 4294901760
      %1121 = vmatpush1.msra.mxu0 %v1120
      %1122 = vmatprep.subr.mxu0 0.0
      %v1123 = vand.u32 %v476, 4294901760
      %v1124 = vsub.f32 %v476, %v1123
      %v1125 = vand.u32 %v1124, 4294901760
      %1126 = vmatpush1.msra.mxu0 %v1125
      %1127 = vmatprep.subr.mxu0 0.0
      %v1128 = vand.u32 %v477, 4294901760
      %v1129 = vsub.f32 %v477, %v1128
      %v1130 = vand.u32 %v1129, 4294901760
      %1131 = vmatpush1.msra.mxu0 %v1130
      %1132 = vmatprep.subr.mxu0 0.0
      %v1133 = vand.u32 %v478, 4294901760
      %v1134 = vsub.f32 %v478, %v1133
      %v1135 = vand.u32 %v1134, 4294901760
      %1136 = vmatpush1.msra.mxu0 %v1135
      %1137 = vmatprep.subr.mxu0 0.0
      %v1138 = vand.u32 %v479, 4294901760
      %v1139 = vsub.f32 %v479, %v1138
      %v1140 = vand.u32 %v1139, 4294901760
      %1141 = vmatpush1.msra.mxu0 %v1140
      %1142 = vmatprep.subr.mxu0 0.0
      %v1143 = vand.u32 %v480, 4294901760
      %v1144 = vsub.f32 %v480, %v1143
      %v1145 = vand.u32 %v1144, 4294901760
      %1146 = vmatpush1.msra.mxu0 %v1145
      %1147 = vmatprep.subr.mxu0 0.0
      %v1148 = vand.u32 %v481, 4294901760
      %v1149 = vsub.f32 %v481, %v1148
      %v1150 = vand.u32 %v1149, 4294901760
      %1151 = vmatpush1.msra.mxu0 %v1150
      %1152 = vmatprep.subr.mxu0 0.0
      %v1153 = vand.u32 %v482, 4294901760
      %v1154 = vsub.f32 %v482, %v1153
      %v1155 = vand.u32 %v1154, 4294901760
      %1156 = vmatpush1.msra.mxu0 %v1155
      %1157 = vmatprep.subr.mxu0 0.0
      %v1158 = vand.u32 %v483, 4294901760
      %v1159 = vsub.f32 %v483, %v1158
      %v1160 = vand.u32 %v1159, 4294901760
      %1161 = vmatpush1.msra.mxu0 %v1160
      %1162 = vmatprep.subr.mxu0 0.0
      %v1163 = vand.u32 %v484, 4294901760
      %v1164 = vsub.f32 %v484, %v1163
      %v1165 = vand.u32 %v1164, 4294901760
      %1166 = vmatpush1.msra.mxu0 %v1165
      %1167 = vmatprep.subr.mxu0 0.0
      %v1168 = vand.u32 %v485, 4294901760
      %v1169 = vsub.f32 %v485, %v1168
      %v1170 = vand.u32 %v1169, 4294901760
      %1171 = vmatpush1.msra.mxu0 %v1170
      %1172 = vmatprep.subr.mxu0 0.0
      %v1173 = vand.u32 %v486, 4294901760
      %v1174 = vsub.f32 %v486, %v1173
      %v1175 = vand.u32 %v1174, 4294901760
      %1176 = vmatpush1.msra.mxu0 %v1175
      %1177 = vmatprep.subr.mxu0 0.0
      %v1178 = vand.u32 %v487, 4294901760
      %v1179 = vsub.f32 %v487, %v1178
      %v1180 = vand.u32 %v1179, 4294901760
      %1181 = vmatpush1.msra.mxu0 %v1180
      %1182 = vmatprep.subr.mxu0 0.0
      %v1183 = vand.u32 %v488, 4294901760
      %v1184 = vsub.f32 %v488, %v1183
      %v1185 = vand.u32 %v1184, 4294901760
      %1186 = vmatpush1.msra.mxu0 %v1185
      %1187 = vmatprep.subr.mxu0 0.0
      %v1188 = vand.u32 %v489, 4294901760
      %v1189 = vsub.f32 %v489, %v1188
      %v1190 = vand.u32 %v1189, 4294901760
      %1191 = vmatpush1.msra.mxu0 %v1190
      %1192 = vmatprep.subr.mxu0 0.0
      %v1193 = vand.u32 %v490, 4294901760
      %v1194 = vsub.f32 %v490, %v1193
      %v1195 = vand.u32 %v1194, 4294901760
      %1196 = vmatpush1.msra.mxu0 %v1195
      %1197 = vmatprep.subr.mxu0 0.0
      %v1198 = vand.u32 %v491, 4294901760
      %v1199 = vsub.f32 %v491, %v1198
      %v1200 = vand.u32 %v1199, 4294901760
      %1201 = vmatpush1.msra.mxu0 %v1200
      %1202 = vmatprep.subr.mxu0 0.0
      %v1203 = vand.u32 %v492, 4294901760
      %v1204 = vsub.f32 %v492, %v1203
      %v1205 = vand.u32 %v1204, 4294901760
      %1206 = vmatpush1.msra.mxu0 %v1205
      %1207 = vmatprep.subr.mxu0 0.0
      %v1208 = vand.u32 %v493, 4294901760
      %v1209 = vsub.f32 %v493, %v1208
      %v1210 = vand.u32 %v1209, 4294901760
      %1211 = vmatpush1.msra.mxu0 %v1210
      %1212 = vmatprep.subr.mxu0 0.0
      %v1213 = vand.u32 %v494, 4294901760
      %v1214 = vsub.f32 %v494, %v1213
      %v1215 = vand.u32 %v1214, 4294901760
      %1216 = vmatpush1.msra.mxu0 %v1215
      %1217 = vmatprep.subr.mxu0 0.0
      %v1218 = vand.u32 %v495, 4294901760
      %v1219 = vsub.f32 %v495, %v1218
      %v1220 = vand.u32 %v1219, 4294901760
      %1221 = vmatpush1.msra.mxu0 %v1220
      %1222 = vmatprep.subr.mxu0 0.0
      %v1223 = vand.u32 %v496, 4294901760
      %v1224 = vsub.f32 %v496, %v1223
      %v1225 = vand.u32 %v1224, 4294901760
      %1226 = vmatpush1.msra.mxu0 %v1225
      %1227 = vmatprep.subr.mxu0 0.0
      %v1228 = vand.u32 %v497, 4294901760
      %v1229 = vsub.f32 %v497, %v1228
      %v1230 = vand.u32 %v1229, 4294901760
      %1231 = vmatpush1.msra.mxu0 %v1230
      %1232 = vmatprep.subr.mxu0 0.0
      %v1233 = vand.u32 %v498, 4294901760
      %v1234 = vsub.f32 %v498, %v1233
      %v1235 = vand.u32 %v1234, 4294901760
      %1236 = vmatpush1.msra.mxu0 %v1235
      %1237 = vmatprep.subr.mxu0 0.0
      %v1238 = vand.u32 %v499, 4294901760
      %v1239 = vsub.f32 %v499, %v1238
      %v1240 = vand.u32 %v1239, 4294901760
      %1241 = vmatpush1.msra.mxu0 %v1240
      %1242 = vmatprep.subr.mxu0 0.0
      %v1243 = vand.u32 %v500, 4294901760
      %v1244 = vsub.f32 %v500, %v1243
      %v1245 = vand.u32 %v1244, 4294901760
      %1246 = vmatpush1.msra.mxu0 %v1245
      %1247 = vmatprep.subr.mxu0 0.0
      %v1248 = vand.u32 %v501, 4294901760
      %v1249 = vsub.f32 %v501, %v1248
      %v1250 = vand.u32 %v1249, 4294901760
      %1251 = vmatpush1.msra.mxu0 %v1250
      %v1252 = vand.u32 %v469, 4294901760
      %1253 = vmatprep.mubr.f32.mxu0 %v1252
      %v1254 = vand.u32 %v468, 4294901760
      %1255 = vmatmul.mubr.f32.gmra.mrb[0].mxu0 %v1254
      %v1256 = vpop.f32.mrb[0].mxu0
      %v1257 = vadd.f32 %v1089, %v1256
      %v1258 = vpop.f32.mrb[0].mxu0
      %1259 = vdwg.mxu0
      %1260 = vmatprep.subr.mxu0 0.0
      %v1261 = vand.u32 %v470, 4294901760
      %1262 = vmatpush1.msra.mxu0 %v1261
      %1263 = vmatprep.subr.mxu0 0.0
      %v1264 = vand.u32 %v471, 4294901760
      %1265 = vmatpush1.msra.mxu0 %v1264
      %1266 = vmatprep.subr.mxu0 0.0
      %v1267 = vand.u32 %v472, 4294901760
      %1268 = vmatpush1.msra.mxu0 %v1267
      %1269 = vmatprep.subr.mxu0 0.0
      %v1270 = vand.u32 %v473, 4294901760
      %1271 = vmatpush1.msra.mxu0 %v1270
      %1272 = vmatprep.subr.mxu0 0.0
      %v1273 = vand.u32 %v474, 4294901760
      %1274 = vmatpush1.msra.mxu0 %v1273
      %1275 = vmatprep.subr.mxu0 0.0
      %v1276 = vand.u32 %v475, 4294901760
      %1277 = vmatpush1.msra.mxu0 %v1276
      %1278 = vmatprep.subr.mxu0 0.0
      %v1279 = vand.u32 %v476, 4294901760
      %1280 = vmatpush1.msra.mxu0 %v1279
      %1281 = vmatprep.subr.mxu0 0.0
      %v1282 = vand.u32 %v477, 4294901760
      %1283 = vmatpush1.msra.mxu0 %v1282
      %1284 = vmatprep.subr.mxu0 0.0
      %v1285 = vand.u32 %v478, 4294901760
      %1286 = vmatpush1.msra.mxu0 %v1285
      %1287 = vmatprep.subr.mxu0 0.0
      %v1288 = vand.u32 %v479, 4294901760
      %1289 = vmatpush1.msra.mxu0 %v1288
      %1290 = vmatprep.subr.mxu0 0.0
      %v1291 = vand.u32 %v480, 4294901760
      %1292 = vmatpush1.msra.mxu0 %v1291
      %1293 = vmatprep.subr.mxu0 0.0
      %v1294 = vand.u32 %v481, 4294901760
      %1295 = vmatpush1.msra.mxu0 %v1294
      %1296 = vmatprep.subr.mxu0 0.0
      %v1297 = vand.u32 %v482, 4294901760
      %1298 = vmatpush1.msra.mxu0 %v1297
      %1299 = vmatprep.subr.mxu0 0.0
      %v1300 = vand.u32 %v483, 4294901760
      %1301 = vmatpush1.msra.mxu0 %v1300
      %1302 = vmatprep.subr.mxu0 0.0
      %v1303 = vand.u32 %v484, 4294901760
      %1304 = vmatpush1.msra.mxu0 %v1303
      %1305 = vmatprep.subr.mxu0 0.0
      %v1306 = vand.u32 %v485, 4294901760
      %1307 = vmatpush1.msra.mxu0 %v1306
      %1308 = vmatprep.subr.mxu0 0.0
      %v1309 = vand.u32 %v486, 4294901760
      %1310 = vmatpush1.msra.mxu0 %v1309
      %1311 = vmatprep.subr.mxu0 0.0
      %v1312 = vand.u32 %v487, 4294901760
      %1313 = vmatpush1.msra.mxu0 %v1312
      %1314 = vmatprep.subr.mxu0 0.0
      %v1315 = vand.u32 %v488, 4294901760
      %1316 = vmatpush1.msra.mxu0 %v1315
      %1317 = vmatprep.subr.mxu0 0.0
      %v1318 = vand.u32 %v489, 4294901760
      %1319 = vmatpush1.msra.mxu0 %v1318
      %1320 = vmatprep.subr.mxu0 0.0
      %v1321 = vand.u32 %v490, 4294901760
      %1322 = vmatpush1.msra.mxu0 %v1321
      %1323 = vmatprep.subr.mxu0 0.0
      %v1324 = vand.u32 %v491, 4294901760
      %1325 = vmatpush1.msra.mxu0 %v1324
      %1326 = vmatprep.subr.mxu0 0.0
      %v1327 = vand.u32 %v492, 4294901760
      %1328 = vmatpush1.msra.mxu0 %v1327
      %1329 = vmatprep.subr.mxu0 0.0
      %v1330 = vand.u32 %v493, 4294901760
      %1331 = vmatpush1.msra.mxu0 %v1330
      %1332 = vmatprep.subr.mxu0 0.0
      %v1333 = vand.u32 %v494, 4294901760
      %1334 = vmatpush1.msra.mxu0 %v1333
      %1335 = vmatprep.subr.mxu0 0.0
      %v1336 = vand.u32 %v495, 4294901760
      %1337 = vmatpush1.msra.mxu0 %v1336
      %1338 = vmatprep.subr.mxu0 0.0
      %v1339 = vand.u32 %v496, 4294901760
      %1340 = vmatpush1.msra.mxu0 %v1339
      %1341 = vmatprep.subr.mxu0 0.0
      %v1342 = vand.u32 %v497, 4294901760
      %1343 = vmatpush1.msra.mxu0 %v1342
      %1344 = vmatprep.subr.mxu0 0.0
      %v1345 = vand.u32 %v498, 4294901760
      %1346 = vmatpush1.msra.mxu0 %v1345
      %1347 = vmatprep.subr.mxu0 0.0
      %v1348 = vand.u32 %v499, 4294901760
      %1349 = vmatpush1.msra.mxu0 %v1348
      %1350 = vmatprep.subr.mxu0 0.0
      %v1351 = vand.u32 %v500, 4294901760
      %1352 = vmatpush1.msra.mxu0 %v1351
      %1353 = vmatprep.subr.mxu0 0.0
      %v1354 = vand.u32 %v501, 4294901760
      %1355 = vmatpush1.msra.mxu0 %v1354
      %v1356 = vand.u32 %v469, 4294901760
      %1357 = vmatprep.mubr.f32.mxu0 %v1356
      %v1358 = vand.u32 %v468, 4294901760
      %1359 = vmatmul.mubr.f32.gmra.mrb[0].mxu0 %v1358
      %v1360 = vpop.f32.mrb[0].mxu0
      %v1361 = vadd.f32 %v1257, %v1360
      %v1362 = vpop.f32.mrb[0].mxu0
      %1363 = vdwg.mxu0
      %v1364 = vld [vmem:[%s2] sm:$0xff]
      %v1365 = vld [vmem:[%s3] sm:$0xff]
      %1367 = vset.pattern.permute.xlu0 0
      %1368 = vperm.xlu0 %1367, %v1365
      %v1369 = vpop.permute.xlu0 %1368
      %vm1371 = vcmask 64512
      %v1373 = vsel %vm1371, %v1364, 0
      %1375 = vmatprep.subr.mxu0 0.0
      %v1376 = vand.u32 %v1361, 4294901760
      %1377 = vmatpush1.msra.mxu0 %v1376
      %1378 = vmatprep.subr.mxu0 0.0
      %1379 = vmatpush1.msra.mxu0 0.0
      %1380 = vmatprep.subr.mxu0 0.0
      %1381 = vmatpush1.msra.mxu0 0.0
      %1382 = vmatprep.subr.mxu0 0.0
      %1383 = vmatpush1.msra.mxu0 0.0
      %1384 = vmatprep.subr.mxu0 0.0
      %1385 = vmatpush1.msra.mxu0 0.0
      %1386 = vmatprep.subr.mxu0 0.0
      %1387 = vmatpush1.msra.mxu0 0.0
      %1388 = vmatprep.subr.mxu0 0.0
      %1389 = vmatpush1.msra.mxu0 0.0
      %1390 = vmatprep.subr.mxu0 0.0
      %1391 = vmatpush1.msra.mxu0 0.0
      %1392 = vmatprep.subr.mxu0 0.0
      %1393 = vmatpush1.msra.mxu0 0.0
      %1394 = vmatprep.subr.mxu0 0.0
      %1395 = vmatpush1.msra.mxu0 0.0
      %1396 = vmatprep.subr.mxu0 0.0
      %1397 = vmatpush1.msra.mxu0 0.0
      %1398 = vmatprep.subr.mxu0 0.0
      %1399 = vmatpush1.msra.mxu0 0.0
      %1400 = vmatprep.subr.mxu0 0.0
      %1401 = vmatpush1.msra.mxu0 0.0
      %1402 = vmatprep.subr.mxu0 0.0
      %1403 = vmatpush1.msra.mxu0 0.0
      %1404 = vmatprep.subr.mxu0 0.0
      %1405 = vmatpush1.msra.mxu0 0.0
      %1406 = vmatprep.subr.mxu0 0.0
      %1407 = vmatpush1.msra.mxu0 0.0
      %1408 = vmatprep.subr.mxu0 0.0
      %1409 = vmatpush1.msra.mxu0 0.0
      %1410 = vmatprep.subr.mxu0 0.0
      %1411 = vmatpush1.msra.mxu0 0.0
      %1412 = vmatprep.subr.mxu0 0.0
      %1413 = vmatpush1.msra.mxu0 0.0
      %1414 = vmatprep.subr.mxu0 0.0
      %1415 = vmatpush1.msra.mxu0 0.0
      %1416 = vmatprep.subr.mxu0 0.0
      %1417 = vmatpush1.msra.mxu0 0.0
      %1418 = vmatprep.subr.mxu0 0.0
      %1419 = vmatpush1.msra.mxu0 0.0
      %1420 = vmatprep.subr.mxu0 0.0
      %1421 = vmatpush1.msra.mxu0 0.0
      %1422 = vmatprep.subr.mxu0 0.0
      %1423 = vmatpush1.msra.mxu0 0.0
      %1424 = vmatprep.subr.mxu0 0.0
      %1425 = vmatpush1.msra.mxu0 0.0
      %1426 = vmatprep.subr.mxu0 0.0
      %1427 = vmatpush1.msra.mxu0 0.0
      %1428 = vmatprep.subr.mxu0 0.0
      %1429 = vmatpush1.msra.mxu0 0.0
      %1430 = vmatprep.subr.mxu0 0.0
      %1431 = vmatpush1.msra.mxu0 0.0
      %1432 = vmatprep.subr.mxu0 0.0
      %1433 = vmatpush1.msra.mxu0 0.0
      %1434 = vmatprep.subr.mxu0 0.0
      %1435 = vmatpush1.msra.mxu0 0.0
      %1436 = vmatprep.subr.mxu0 0.0
      %1437 = vmatpush1.msra.mxu0 0.0
      %1438 = vmatprep.subr.mxu0 0.0
      %1439 = vmatpush1.msra.mxu0 0.0
      %1440 = vmatprep.mubr.f32.mxu0 0.0
      %v1441 = vand.u32 %v1373, 4294901760
      %v1442 = vsub.f32 %v1373, %v1441
      %v1443 = vand.u32 %v1442, 4294901760
      %v1444 = vsub.f32 %v1442, %v1443
      %v1445 = vand.u32 %v1444, 4294901760
      %1446 = vmatmul.mubr.f32.gmra.mrb[0].mxu0 %v1445
      %v1447 = vpop.f32.mrb[0].mxu0
      %v1448 = vadd.f32 %v1369, %v1447
      %v1449 = vpop.f32.mrb[0].mxu0
      %1450 = vdwg.mxu0
      %1451 = vmatprep.subr.mxu0 0.0
      %v1452 = vand.u32 %v1361, 4294901760
      %v1453 = vsub.f32 %v1361, %v1452
      %v1454 = vand.u32 %v1453, 4294901760
      %v1455 = vsub.f32 %v1453, %v1454
      %v1456 = vand.u32 %v1455, 4294901760
      %1457 = vmatpush1.msra.mxu0 %v1456
      %1458 = vmatprep.subr.mxu0 0.0
      %1459 = vmatpush1.msra.mxu0 0.0
      %1460 = vmatprep.subr.mxu0 0.0
      %1461 = vmatpush1.msra.mxu0 0.0
      %1462 = vmatprep.subr.mxu0 0.0
      %1463 = vmatpush1.msra.mxu0 0.0
      %1464 = vmatprep.subr.mxu0 0.0
      %1465 = vmatpush1.msra.mxu0 0.0
      %1466 = vmatprep.subr.mxu0 0.0
      %1467 = vmatpush1.msra.mxu0 0.0
      %1468 = vmatprep.subr.mxu0 0.0
      %1469 = vmatpush1.msra.mxu0 0.0
      %1470 = vmatprep.subr.mxu0 0.0
      %1471 = vmatpush1.msra.mxu0 0.0
      %1472 = vmatprep.subr.mxu0 0.0
      %1473 = vmatpush1.msra.mxu0 0.0
      %1474 = vmatprep.subr.mxu0 0.0
      %1475 = vmatpush1.msra.mxu0 0.0
      %1476 = vmatprep.subr.mxu0 0.0
      %1477 = vmatpush1.msra.mxu0 0.0
      %1478 = vmatprep.subr.mxu0 0.0
      %1479 = vmatpush1.msra.mxu0 0.0
      %1480 = vmatprep.subr.mxu0 0.0
      %1481 = vmatpush1.msra.mxu0 0.0
      %1482 = vmatprep.subr.mxu0 0.0
      %1483 = vmatpush1.msra.mxu0 0.0
      %1484 = vmatprep.subr.mxu0 0.0
      %1485 = vmatpush1.msra.mxu0 0.0
      %1486 = vmatprep.subr.mxu0 0.0
      %1487 = vmatpush1.msra.mxu0 0.0
      %1488 = vmatprep.subr.mxu0 0.0
      %1489 = vmatpush1.msra.mxu0 0.0
      %1490 = vmatprep.subr.mxu0 0.0
      %1491 = vmatpush1.msra.mxu0 0.0
      %1492 = vmatprep.subr.mxu0 0.0
      %1493 = vmatpush1.msra.mxu0 0.0
      %1494 = vmatprep.subr.mxu0 0.0
      %1495 = vmatpush1.msra.mxu0 0.0
      %1496 = vmatprep.subr.mxu0 0.0
      %1497 = vmatpush1.msra.mxu0 0.0
      %1498 = vmatprep.subr.mxu0 0.0
      %1499 = vmatpush1.msra.mxu0 0.0
      %1500 = vmatprep.subr.mxu0 0.0
      %1501 = vmatpush1.msra.mxu0 0.0
      %1502 = vmatprep.subr.mxu0 0.0
      %1503 = vmatpush1.msra.mxu0 0.0
      %1504 = vmatprep.subr.mxu0 0.0
      %1505 = vmatpush1.msra.mxu0 0.0
      %1506 = vmatprep.subr.mxu0 0.0
      %1507 = vmatpush1.msra.mxu0 0.0
      %1508 = vmatprep.subr.mxu0 0.0
      %1509 = vmatpush1.msra.mxu0 0.0
      %1510 = vmatprep.subr.mxu0 0.0
      %1511 = vmatpush1.msra.mxu0 0.0
      %1512 = vmatprep.subr.mxu0 0.0
      %1513 = vmatpush1.msra.mxu0 0.0
      %1514 = vmatprep.subr.mxu0 0.0
      %1515 = vmatpush1.msra.mxu0 0.0
      %1516 = vmatprep.subr.mxu0 0.0
      %1517 = vmatpush1.msra.mxu0 0.0
      %1518 = vmatprep.subr.mxu0 0.0
      %1519 = vmatpush1.msra.mxu0 0.0
      %1520 = vmatprep.mubr.f32.mxu0 0.0
      %v1521 = vand.u32 %v1373, 4294901760
      %1522 = vmatmul.mubr.f32.gmra.mrb[0].mxu0 %v1521
      %v1523 = vpop.f32.mrb[0].mxu0
      %v1524 = vadd.f32 %v1448, %v1523
      %v1525 = vpop.f32.mrb[0].mxu0
      %1526 = vdwg.mxu0
      %1527 = vmatprep.subr.mxu0 0.0
      %v1528 = vand.u32 %v1361, 4294901760
      %v1529 = vsub.f32 %v1361, %v1528
      %1530 = vmatpush1.msra.mxu0 %v1529
      %1531 = vmatprep.subr.mxu0 0.0
      %1532 = vmatpush1.msra.mxu0 0.0
      %1533 = vmatprep.subr.mxu0 0.0
      %1534 = vmatpush1.msra.mxu0 0.0
      %1535 = vmatprep.subr.mxu0 0.0
      %1536 = vmatpush1.msra.mxu0 0.0
      %1537 = vmatprep.subr.mxu0 0.0
      %1538 = vmatpush1.msra.mxu0 0.0
      %1539 = vmatprep.subr.mxu0 0.0
      %1540 = vmatpush1.msra.mxu0 0.0
      %1541 = vmatprep.subr.mxu0 0.0
      %1542 = vmatpush1.msra.mxu0 0.0
      %1543 = vmatprep.subr.mxu0 0.0
      %1544 = vmatpush1.msra.mxu0 0.0
      %1545 = vmatprep.subr.mxu0 0.0
      %1546 = vmatpush1.msra.mxu0 0.0
      %1547 = vmatprep.subr.mxu0 0.0
      %1548 = vmatpush1.msra.mxu0 0.0
      %1549 = vmatprep.subr.mxu0 0.0
      %1550 = vmatpush1.msra.mxu0 0.0
      %1551 = vmatprep.subr.mxu0 0.0
      %1552 = vmatpush1.msra.mxu0 0.0
      %1553 = vmatprep.subr.mxu0 0.0
      %1554 = vmatpush1.msra.mxu0 0.0
      %1555 = vmatprep.subr.mxu0 0.0
      %1556 = vmatpush1.msra.mxu0 0.0
      %1557 = vmatprep.subr.mxu0 0.0
      %1558 = vmatpush1.msra.mxu0 0.0
      %1559 = vmatprep.subr.mxu0 0.0
      %1560 = vmatpush1.msra.mxu0 0.0
      %1561 = vmatprep.subr.mxu0 0.0
      %1562 = vmatpush1.msra.mxu0 0.0
      %1563 = vmatprep.subr.mxu0 0.0
      %1564 = vmatpush1.msra.mxu0 0.0
      %1565 = vmatprep.subr.mxu0 0.0
      %1566 = vmatpush1.msra.mxu0 0.0
      %1567 = vmatprep.subr.mxu0 0.0
      %1568 = vmatpush1.msra.mxu0 0.0
      %1569 = vmatprep.subr.mxu0 0.0
      %1570 = vmatpush1.msra.mxu0 0.0
      %1571 = vmatprep.subr.mxu0 0.0
      %1572 = vmatpush1.msra.mxu0 0.0
      %1573 = vmatprep.subr.mxu0 0.0
      %1574 = vmatpush1.msra.mxu0 0.0
      %1575 = vmatprep.subr.mxu0 0.0
      %1576 = vmatpush1.msra.mxu0 0.0
      %1577 = vmatprep.subr.mxu0 0.0
      %1578 = vmatpush1.msra.mxu0 0.0
      %1579 = vmatprep.subr.mxu0 0.0
      %1580 = vmatpush1.msra.mxu0 0.0
      %1581 = vmatprep.subr.mxu0 0.0
      %1582 = vmatpush1.msra.mxu0 0.0
      %1583 = vmatprep.subr.mxu0 0.0
      %1584 = vmatpush1.msra.mxu0 0.0
      %1585 = vmatprep.subr.mxu0 0.0
      %1586 = vmatpush1.msra.mxu0 0.0
      %1587 = vmatprep.subr.mxu0 0.0
      %1588 = vmatpush1.msra.mxu0 0.0
      %1589 = vmatprep.subr.mxu0 0.0
      %1590 = vmatpush1.msra.mxu0 0.0
      %1591 = vmatprep.subr.mxu0 0.0
      %1592 = vmatpush1.msra.mxu0 0.0
      %1593 = vmatprep.mubr.f32.mxu0 0.0
      %v1594 = vand.u32 %v1373, 4294901760
      %v1595 = vsub.f32 %v1373, %v1594
      %1596 = vmatmul.mubr.f32.gmra.mrb[0].mxu0 %v1595
      %v1597 = vpop.f32.mrb[0].mxu0
      %v1598 = vadd.f32 %v1524, %v1597
      %v1599 = vpop.f32.mrb[0].mxu0
      %1600 = vdwg.mxu0
      %1601 = vmatprep.subr.mxu0 0.0
      %v1602 = vand.u32 %v1361, 4294901760
      %1603 = vmatpush1.msra.mxu0 %v1602
      %1604 = vmatprep.subr.mxu0 0.0
      %1605 = vmatpush1.msra.mxu0 0.0
      %1606 = vmatprep.subr.mxu0 0.0
      %1607 = vmatpush1.msra.mxu0 0.0
      %1608 = vmatprep.subr.mxu0 0.0
      %1609 = vmatpush1.msra.mxu0 0.0
      %1610 = vmatprep.subr.mxu0 0.0
      %1611 = vmatpush1.msra.mxu0 0.0
      %1612 = vmatprep.subr.mxu0 0.0
      %1613 = vmatpush1.msra.mxu0 0.0
      %1614 = vmatprep.subr.mxu0 0.0
      %1615 = vmatpush1.msra.mxu0 0.0
      %1616 = vmatprep.subr.mxu0 0.0
      %1617 = vmatpush1.msra.mxu0 0.0
      %1618 = vmatprep.subr.mxu0 0.0
      %1619 = vmatpush1.msra.mxu0 0.0
      %1620 = vmatprep.subr.mxu0 0.0
      %1621 = vmatpush1.msra.mxu0 0.0
      %1622 = vmatprep.subr.mxu0 0.0
      %1623 = vmatpush1.msra.mxu0 0.0
      %1624 = vmatprep.subr.mxu0 0.0
      %1625 = vmatpush1.msra.mxu0 0.0
      %1626 = vmatprep.subr.mxu0 0.0
      %1627 = vmatpush1.msra.mxu0 0.0
      %1628 = vmatprep.subr.mxu0 0.0
      %1629 = vmatpush1.msra.mxu0 0.0
      %1630 = vmatprep.subr.mxu0 0.0
      %1631 = vmatpush1.msra.mxu0 0.0
      %1632 = vmatprep.subr.mxu0 0.0
      %1633 = vmatpush1.msra.mxu0 0.0
      %1634 = vmatprep.subr.mxu0 0.0
      %1635 = vmatpush1.msra.mxu0 0.0
      %1636 = vmatprep.subr.mxu0 0.0
      %1637 = vmatpush1.msra.mxu0 0.0
      %1638 = vmatprep.subr.mxu0 0.0
      %1639 = vmatpush1.msra.mxu0 0.0
      %1640 = vmatprep.subr.mxu0 0.0
      %1641 = vmatpush1.msra.mxu0 0.0
      %1642 = vmatprep.subr.mxu0 0.0
      %1643 = vmatpush1.msra.mxu0 0.0
      %1644 = vmatprep.subr.mxu0 0.0
      %1645 = vmatpush1.msra.mxu0 0.0
      %1646 = vmatprep.subr.mxu0 0.0
      %1647 = vmatpush1.msra.mxu0 0.0
      %1648 = vmatprep.subr.mxu0 0.0
      %1649 = vmatpush1.msra.mxu0 0.0
      %1650 = vmatprep.subr.mxu0 0.0
      %1651 = vmatpush1.msra.mxu0 0.0
      %1652 = vmatprep.subr.mxu0 0.0
      %1653 = vmatpush1.msra.mxu0 0.0
      %1654 = vmatprep.subr.mxu0 0.0
      %1655 = vmatpush1.msra.mxu0 0.0
      %1656 = vmatprep.subr.mxu0 0.0
      %1657 = vmatpush1.msra.mxu0 0.0
      %1658 = vmatprep.subr.mxu0 0.0
      %1659 = vmatpush1.msra.mxu0 0.0
      %1660 = vmatprep.subr.mxu0 0.0
      %1661 = vmatpush1.msra.mxu0 0.0
      %1662 = vmatprep.subr.mxu0 0.0
      %1663 = vmatpush1.msra.mxu0 0.0
      %1664 = vmatprep.subr.mxu0 0.0
      %1665 = vmatpush1.msra.mxu0 0.0
      %1666 = vmatprep.mubr.f32.mxu0 0.0
      %v1667 = vand.u32 %v1373, 4294901760
      %v1668 = vsub.f32 %v1373, %v1667
      %v1669 = vand.u32 %v1668, 4294901760
      %1670 = vmatmul.mubr.f32.gmra.mrb[0].mxu0 %v1669
      %v1671 = vpop.f32.mrb[0].mxu0
      %v1672 = vadd.f32 %v1598, %v1671
      %v1673 = vpop.f32.mrb[0].mxu0
      %1674 = vdwg.mxu0
      %1675 = vmatprep.subr.mxu0 0.0
      %v1676 = vand.u32 %v1361, 4294901760
      %v1677 = vsub.f32 %v1361, %v1676
      %v1678 = vand.u32 %v1677, 4294901760
      %1679 = vmatpush1.msra.mxu0 %v1678
      %1680 = vmatprep.subr.mxu0 0.0
      %1681 = vmatpush1.msra.mxu0 0.0
      %1682 = vmatprep.subr.mxu0 0.0
      %1683 = vmatpush1.msra.mxu0 0.0
      %1684 = vmatprep.subr.mxu0 0.0
      %1685 = vmatpush1.msra.mxu0 0.0
      %1686 = vmatprep.subr.mxu0 0.0
      %1687 = vmatpush1.msra.mxu0 0.0
      %1688 = vmatprep.subr.mxu0 0.0
      %1689 = vmatpush1.msra.mxu0 0.0
      %1690 = vmatprep.subr.mxu0 0.0
      %1691 = vmatpush1.msra.mxu0 0.0
      %1692 = vmatprep.subr.mxu0 0.0
      %1693 = vmatpush1.msra.mxu0 0.0
      %1694 = vmatprep.subr.mxu0 0.0
      %1695 = vmatpush1.msra.mxu0 0.0
      %1696 = vmatprep.subr.mxu0 0.0
      %1697 = vmatpush1.msra.mxu0 0.0
      %1698 = vmatprep.subr.mxu0 0.0
      %1699 = vmatpush1.msra.mxu0 0.0
      %1700 = vmatprep.subr.mxu0 0.0
      %1701 = vmatpush1.msra.mxu0 0.0
      %1702 = vmatprep.subr.mxu0 0.0
      %1703 = vmatpush1.msra.mxu0 0.0
      %1704 = vmatprep.subr.mxu0 0.0
      %1705 = vmatpush1.msra.mxu0 0.0
      %1706 = vmatprep.subr.mxu0 0.0
      %1707 = vmatpush1.msra.mxu0 0.0
      %1708 = vmatprep.subr.mxu0 0.0
      %1709 = vmatpush1.msra.mxu0 0.0
      %1710 = vmatprep.subr.mxu0 0.0
      %1711 = vmatpush1.msra.mxu0 0.0
      %1712 = vmatprep.subr.mxu0 0.0
      %1713 = vmatpush1.msra.mxu0 0.0
      %1714 = vmatprep.subr.mxu0 0.0
      %1715 = vmatpush1.msra.mxu0 0.0
      %1716 = vmatprep.subr.mxu0 0.0
      %1717 = vmatpush1.msra.mxu0 0.0
      %1718 = vmatprep.subr.mxu0 0.0
      %1719 = vmatpush1.msra.mxu0 0.0
      %1720 = vmatprep.subr.mxu0 0.0
      %1721 = vmatpush1.msra.mxu0 0.0
      %1722 = vmatprep.subr.mxu0 0.0
      %1723 = vmatpush1.msra.mxu0 0.0
      %1724 = vmatprep.subr.mxu0 0.0
      %1725 = vmatpush1.msra.mxu0 0.0
      %1726 = vmatprep.subr.mxu0 0.0
      %1727 = vmatpush1.msra.mxu0 0.0
      %1728 = vmatprep.subr.mxu0 0.0
      %1729 = vmatpush1.msra.mxu0 0.0
      %1730 = vmatprep.subr.mxu0 0.0
      %1731 = vmatpush1.msra.mxu0 0.0
      %1732 = vmatprep.subr.mxu0 0.0
      %1733 = vmatpush1.msra.mxu0 0.0
      %1734 = vmatprep.subr.mxu0 0.0
      %1735 = vmatpush1.msra.mxu0 0.0
      %1736 = vmatprep.subr.mxu0 0.0
      %1737 = vmatpush1.msra.mxu0 0.0
      %1738 = vmatprep.subr.mxu0 0.0
      %1739 = vmatpush1.msra.mxu0 0.0
      %1740 = vmatprep.subr.mxu0 0.0
      %1741 = vmatpush1.msra.mxu0 0.0
      %1742 = vmatprep.mubr.f32.mxu0 0.0
      %v1743 = vand.u32 %v1373, 4294901760
      %1744 = vmatmul.mubr.f32.gmra.mrb[0].mxu0 %v1743
      %v1745 = vpop.f32.mrb[0].mxu0
      %v1746 = vadd.f32 %v1672, %v1745
      %v1747 = vpop.f32.mrb[0].mxu0
      %1748 = vdwg.mxu0
      %1749 = vmatprep.subr.mxu0 0.0
      %v1750 = vand.u32 %v1361, 4294901760
      %1751 = vmatpush1.msra.mxu0 %v1750
      %1752 = vmatprep.subr.mxu0 0.0
      %1753 = vmatpush1.msra.mxu0 0.0
      %1754 = vmatprep.subr.mxu0 0.0
      %1755 = vmatpush1.msra.mxu0 0.0
      %1756 = vmatprep.subr.mxu0 0.0
      %1757 = vmatpush1.msra.mxu0 0.0
      %1758 = vmatprep.subr.mxu0 0.0
      %1759 = vmatpush1.msra.mxu0 0.0
      %1760 = vmatprep.subr.mxu0 0.0
      %1761 = vmatpush1.msra.mxu0 0.0
      %1762 = vmatprep.subr.mxu0 0.0
      %1763 = vmatpush1.msra.mxu0 0.0
      %1764 = vmatprep.subr.mxu0 0.0
      %1765 = vmatpush1.msra.mxu0 0.0
      %1766 = vmatprep.subr.mxu0 0.0
      %1767 = vmatpush1.msra.mxu0 0.0
      %1768 = vmatprep.subr.mxu0 0.0
      %1769 = vmatpush1.msra.mxu0 0.0
      %1770 = vmatprep.subr.mxu0 0.0
      %1771 = vmatpush1.msra.mxu0 0.0
      %1772 = vmatprep.subr.mxu0 0.0
      %1773 = vmatpush1.msra.mxu0 0.0
      %1774 = vmatprep.subr.mxu0 0.0
      %1775 = vmatpush1.msra.mxu0 0.0
      %1776 = vmatprep.subr.mxu0 0.0
      %1777 = vmatpush1.msra.mxu0 0.0
      %1778 = vmatprep.subr.mxu0 0.0
      %1779 = vmatpush1.msra.mxu0 0.0
      %1780 = vmatprep.subr.mxu0 0.0
      %1781 = vmatpush1.msra.mxu0 0.0
      %1782 = vmatprep.subr.mxu0 0.0
      %1783 = vmatpush1.msra.mxu0 0.0
      %1784 = vmatprep.subr.mxu0 0.0
      %1785 = vmatpush1.msra.mxu0 0.0
      %1786 = vmatprep.subr.mxu0 0.0
      %1787 = vmatpush1.msra.mxu0 0.0
      %1788 = vmatprep.subr.mxu0 0.0
      %1789 = vmatpush1.msra.mxu0 0.0
      %1790 = vmatprep.subr.mxu0 0.0
      %1791 = vmatpush1.msra.mxu0 0.0
      %1792 = vmatprep.subr.mxu0 0.0
      %1793 = vmatpush1.msra.mxu0 0.0
      %1794 = vmatprep.subr.mxu0 0.0
      %1795 = vmatpush1.msra.mxu0 0.0
      %1796 = vmatprep.subr.mxu0 0.0
      %1797 = vmatpush1.msra.mxu0 0.0
      %1798 = vmatprep.subr.mxu0 0.0
      %1799 = vmatpush1.msra.mxu0 0.0
      %1800 = vmatprep.subr.mxu0 0.0
      %1801 = vmatpush1.msra.mxu0 0.0
      %1802 = vmatprep.subr.mxu0 0.0
      %1803 = vmatpush1.msra.mxu0 0.0
      %1804 = vmatprep.subr.mxu0 0.0
      %1805 = vmatpush1.msra.mxu0 0.0
      %1806 = vmatprep.subr.mxu0 0.0
      %1807 = vmatpush1.msra.mxu0 0.0
      %1808 = vmatprep.subr.mxu0 0.0
      %1809 = vmatpush1.msra.mxu0 0.0
      %1810 = vmatprep.subr.mxu0 0.0
      %1811 = vmatpush1.msra.mxu0 0.0
      %1812 = vmatprep.subr.mxu0 0.0
      %1813 = vmatpush1.msra.mxu0 0.0
      %1814 = vmatprep.mubr.f32.mxu0 0.0
      %v1815 = vand.u32 %v1373, 4294901760
      %1816 = vmatmul.mubr.f32.gmra.mrb[0].mxu0 %v1815
      %v1817 = vpop.f32.mrb[0].mxu0
      %v1818 = vadd.f32 %v1746, %v1817
      %v1819 = vpop.f32.mrb[0].mxu0
      %1820 = vdwg.mxu0
      %v1821 = vxor.u32 %v1818, 2147483648
      %v1822 = vmul.f32 %v1821, 1.442695
      %v1823 = vpow.pop %v1822
      %v1824 = vadd.f32 %v1823, 1.0
      %v1825 = vrcp.pop %v1824
      %v1826 = vmul.f32 1.0, %v1825
      %v1827 = vld [vmem:[%s4] sm:$0xff]
      %v1828 = vld [vmem:[%s4 + $0x8] sm:$0xff]
      %v1829 = vld [vmem:[%s4 + $0x10] sm:$0xff]
      %v1830 = vld [vmem:[%s4 + $0x18] sm:$0xff]
      %v1831 = vld [vmem:[%s4 + $0x20] sm:$0xff]
      %v1832 = vld [vmem:[%s4 + $0x28] sm:$0xff]
      %v1833 = vld [vmem:[%s4 + $0x30] sm:$0xff]
      %v1834 = vld [vmem:[%s4 + $0x38] sm:$0xff]
      %vm1835 = vcmask 261120
      %v1837 = vsel %vm1835, %v1826, 0
      %v1839 = vand.u32 %v1828, 4294901760
      %1840 = vmatprep.subr.mxu0 %v1839
      %v1841 = vand.u32 %v1827, 4294901760
      %1842 = vmatpush1.msra.mxu0 %v1841
      %v1843 = vand.u32 %v1830, 4294901760
      %1844 = vmatprep.subr.mxu0 %v1843
      %v1845 = vand.u32 %v1829, 4294901760
      %1846 = vmatpush1.msra.mxu0 %v1845
      %v1847 = vand.u32 %v1832, 4294901760
      %1848 = vmatprep.subr.mxu0 %v1847
      %v1849 = vand.u32 %v1831, 4294901760
      %1850 = vmatpush1.msra.mxu0 %v1849
      %v1851 = vand.u32 %v1834, 4294901760
      %1852 = vmatprep.subr.mxu0 %v1851
      %v1853 = vand.u32 %v1833, 4294901760
      %1854 = vmatpush1.msra.mxu0 %v1853
      %1855 = vmatprep.subr.mxu0 0.0
      %1856 = vmatpush1.msra.mxu0 0.0
      %1857 = vmatprep.subr.mxu0 0.0
      %1858 = vmatpush1.msra.mxu0 0.0
      %1859 = vmatprep.subr.mxu0 0.0
      %1860 = vmatpush1.msra.mxu0 0.0
      %1861 = vmatprep.subr.mxu0 0.0
      %1862 = vmatpush1.msra.mxu0 0.0
      %1863 = vmatprep.subr.mxu0 0.0
      %1864 = vmatpush1.msra.mxu0 0.0
      %1865 = vmatprep.subr.mxu0 0.0
      %1866 = vmatpush1.msra.mxu0 0.0
      %1867 = vmatprep.subr.mxu0 0.0
      %1868 = vmatpush1.msra.mxu0 0.0
      %1869 = vmatprep.subr.mxu0 0.0
      %1870 = vmatpush1.msra.mxu0 0.0
      %1871 = vmatprep.subr.mxu0 0.0
      %1872 = vmatpush1.msra.mxu0 0.0
      %1873 = vmatprep.subr.mxu0 0.0
      %1874 = vmatpush1.msra.mxu0 0.0
      %1875 = vmatprep.subr.mxu0 0.0
      %1876 = vmatpush1.msra.mxu0 0.0
      %1877 = vmatprep.subr.mxu0 0.0
      %1878 = vmatpush1.msra.mxu0 0.0
      %1879 = vmatprep.subr.mxu0 0.0
      %1880 = vmatpush1.msra.mxu0 0.0
      %1881 = vmatprep.subr.mxu0 0.0
      %1882 = vmatpush1.msra.mxu0 0.0
      %1883 = vmatprep.subr.mxu0 0.0
      %1884 = vmatpush1.msra.mxu0 0.0
      %1885 = vmatprep.subr.mxu0 0.0
      %1886 = vmatpush1.msra.mxu0 0.0
      %1887 = vmatprep.subr.mxu0 0.0
      %1888 = vmatpush1.msra.mxu0 0.0
      %1889 = vmatprep.subr.mxu0 0.0
      %1890 = vmatpush1.msra.mxu0 0.0
      %1891 = vmatprep.subr.mxu0 0.0
      %1892 = vmatpush1.msra.mxu0 0.0
      %1893 = vmatprep.subr.mxu0 0.0
      %1894 = vmatpush1.msra.mxu0 0.0
      %1895 = vmatprep.subr.mxu0 0.0
      %1896 = vmatpush1.msra.mxu0 0.0
      %1897 = vmatprep.subr.mxu0 0.0
      %1898 = vmatpush1.msra.mxu0 0.0
      %1899 = vmatprep.subr.mxu0 0.0
      %1900 = vmatpush1.msra.mxu0 0.0
      %1901 = vmatprep.subr.mxu0 0.0
      %1902 = vmatpush1.msra.mxu0 0.0
      %1903 = vmatprep.subr.mxu0 0.0
      %1904 = vmatpush1.msra.mxu0 0.0
      %1905 = vmatprep.subr.mxu0 0.0
      %1906 = vmatpush1.msra.mxu0 0.0
      %1907 = vmatprep.subr.mxu0 0.0
      %1908 = vmatpush1.msra.mxu0 0.0
      %1909 = vmatprep.subr.mxu0 0.0
      %1910 = vmatpush1.msra.mxu0 0.0
      %1911 = vmatprep.mubr.f32.mxu0 0.0
      %v1912 = vand.u32 %v1837, 4294901760
      %v1913 = vsub.f32 %v1837, %v1912
      %v1914 = vand.u32 %v1913, 4294901760
      %v1915 = vsub.f32 %v1913, %v1914
      %v1916 = vand.u32 %v1915, 4294901760
      %1917 = vmatmul.mubr.f32.gmra.mrb[0].mxu0 %v1916
      %v1918 = vpop.f32.mrb[0].mxu0
      %v1919 = vadd.f32 0.0, %v1918
      %v1920 = vpop.f32.mrb[0].mxu0
      %v1921 = vadd.f32 0.0, %v1920
      %1922 = vdwg.mxu0
      %v1923 = vand.u32 %v1828, 4294901760
      %v1924 = vsub.f32 %v1828, %v1923
      %v1925 = vand.u32 %v1924, 4294901760
      %v1926 = vsub.f32 %v1924, %v1925
      %v1927 = vand.u32 %v1926, 4294901760
      %1928 = vmatprep.subr.mxu0 %v1927
      %v1929 = vand.u32 %v1827, 4294901760
      %v1930 = vsub.f32 %v1827, %v1929
      %v1931 = vand.u32 %v1930, 4294901760
      %v1932 = vsub.f32 %v1930, %v1931
      %v1933 = vand.u32 %v1932, 4294901760
      %1934 = vmatpush1.msra.mxu0 %v1933
      %v1935 = vand.u32 %v1830, 4294901760
      %v1936 = vsub.f32 %v1830, %v1935
      %v1937 = vand.u32 %v1936, 4294901760
      %v1938 = vsub.f32 %v1936, %v1937
      %v1939 = vand.u32 %v1938, 4294901760
      %1940 = vmatprep.subr.mxu0 %v1939
      %v1941 = vand.u32 %v1829, 4294901760
      %v1942 = vsub.f32 %v1829, %v1941
      %v1943 = vand.u32 %v1942, 4294901760
      %v1944 = vsub.f32 %v1942, %v1943
      %v1945 = vand.u32 %v1944, 4294901760
      %1946 = vmatpush1.msra.mxu0 %v1945
      %v1947 = vand.u32 %v1832, 4294901760
      %v1948 = vsub.f32 %v1832, %v1947
      %v1949 = vand.u32 %v1948, 4294901760
      %v1950 = vsub.f32 %v1948, %v1949
      %v1951 = vand.u32 %v1950, 4294901760
      %1952 = vmatprep.subr.mxu0 %v1951
      %v1953 = vand.u32 %v1831, 4294901760
      %v1954 = vsub.f32 %v1831, %v1953
      %v1955 = vand.u32 %v1954, 4294901760
      %v1956 = vsub.f32 %v1954, %v1955
      %v1957 = vand.u32 %v1956, 4294901760
      %1958 = vmatpush1.msra.mxu0 %v1957
      %v1959 = vand.u32 %v1834, 4294901760
      %v1960 = vsub.f32 %v1834, %v1959
      %v1961 = vand.u32 %v1960, 4294901760
      %v1962 = vsub.f32 %v1960, %v1961
      %v1963 = vand.u32 %v1962, 4294901760
      %1964 = vmatprep.subr.mxu0 %v1963
      %v1965 = vand.u32 %v1833, 4294901760
      %v1966 = vsub.f32 %v1833, %v1965
      %v1967 = vand.u32 %v1966, 4294901760
      %v1968 = vsub.f32 %v1966, %v1967
      %v1969 = vand.u32 %v1968, 4294901760
      %1970 = vmatpush1.msra.mxu0 %v1969
      %1971 = vmatprep.subr.mxu0 0.0
      %1972 = vmatpush1.msra.mxu0 0.0
      %1973 = vmatprep.subr.mxu0 0.0
      %1974 = vmatpush1.msra.mxu0 0.0
      %1975 = vmatprep.subr.mxu0 0.0
      %1976 = vmatpush1.msra.mxu0 0.0
      %1977 = vmatprep.subr.mxu0 0.0
      %1978 = vmatpush1.msra.mxu0 0.0
      %1979 = vmatprep.subr.mxu0 0.0
      %1980 = vmatpush1.msra.mxu0 0.0
      %1981 = vmatprep.subr.mxu0 0.0
      %1982 = vmatpush1.msra.mxu0 0.0
      %1983 = vmatprep.subr.mxu0 0.0
      %1984 = vmatpush1.msra.mxu0 0.0
      %1985 = vmatprep.subr.mxu0 0.0
      %1986 = vmatpush1.msra.mxu0 0.0
      %1987 = vmatprep.subr.mxu0 0.0
      %1988 = vmatpush1.msra.mxu0 0.0
      %1989 = vmatprep.subr.mxu0 0.0
      %1990 = vmatpush1.msra.mxu0 0.0
      %1991 = vmatprep.subr.mxu0 0.0
      %1992 = vmatpush1.msra.mxu0 0.0
      %1993 = vmatprep.subr.mxu0 0.0
      %1994 = vmatpush1.msra.mxu0 0.0
      %1995 = vmatprep.subr.mxu0 0.0
      %1996 = vmatpush1.msra.mxu0 0.0
      %1997 = vmatprep.subr.mxu0 0.0
      %1998 = vmatpush1.msra.mxu0 0.0
      %1999 = vmatprep.subr.mxu0 0.0
      %2000 = vmatpush1.msra.mxu0 0.0
      %2001 = vmatprep.subr.mxu0 0.0
      %2002 = vmatpush1.msra.mxu0 0.0
      %2003 = vmatprep.subr.mxu0 0.0
      %2004 = vmatpush1.msra.mxu0 0.0
      %2005 = vmatprep.subr.mxu0 0.0
      %2006 = vmatpush1.msra.mxu0 0.0
      %2007 = vmatprep.subr.mxu0 0.0
      %2008 = vmatpush1.msra.mxu0 0.0
      %2009 = vmatprep.subr.mxu0 0.0
      %2010 = vmatpush1.msra.mxu0 0.0
      %2011 = vmatprep.subr.mxu0 0.0
      %2012 = vmatpush1.msra.mxu0 0.0
      %2013 = vmatprep.subr.mxu0 0.0
      %2014 = vmatpush1.msra.mxu0 0.0
      %2015 = vmatprep.subr.mxu0 0.0
      %2016 = vmatpush1.msra.mxu0 0.0
      %2017 = vmatprep.subr.mxu0 0.0
      %2018 = vmatpush1.msra.mxu0 0.0
      %2019 = vmatprep.subr.mxu0 0.0
      %2020 = vmatpush1.msra.mxu0 0.0
      %2021 = vmatprep.subr.mxu0 0.0
      %2022 = vmatpush1.msra.mxu0 0.0
      %2023 = vmatprep.subr.mxu0 0.0
      %2024 = vmatpush1.msra.mxu0 0.0
      %2025 = vmatprep.subr.mxu0 0.0
      %2026 = vmatpush1.msra.mxu0 0.0
      %2027 = vmatprep.mubr.f32.mxu0 0.0
      %v2028 = vand.u32 %v1837, 4294901760
      %2029 = vmatmul.mubr.f32.gmra.mrb[0].mxu0 %v2028
      %v2030 = vpop.f32.mrb[0].mxu0
      %v2031 = vadd.f32 %v1919, %v2030
      %v2032 = vpop.f32.mrb[0].mxu0
      %v2033 = vadd.f32 %v1921, %v2032
      %2034 = vdwg.mxu0
      %v2035 = vand.u32 %v1828, 4294901760
      %v2036 = vsub.f32 %v1828, %v2035
      %2037 = vmatprep.subr.mxu0 %v2036
      %v2038 = vand.u32 %v1827, 4294901760
      %v2039 = vsub.f32 %v1827, %v2038
      %2040 = vmatpush1.msra.mxu0 %v2039
      %v2041 = vand.u32 %v1830, 4294901760
      %v2042 = vsub.f32 %v1830, %v2041
      %2043 = vmatprep.subr.mxu0 %v2042
      %v2044 = vand.u32 %v1829, 4294901760
      %v2045 = vsub.f32 %v1829, %v2044
      %2046 = vmatpush1.msra.mxu0 %v2045
      %v2047 = vand.u32 %v1832, 4294901760
      %v2048 = vsub.f32 %v1832, %v2047
      %2049 = vmatprep.subr.mxu0 %v2048
      %v2050 = vand.u32 %v1831, 4294901760
      %v2051 = vsub.f32 %v1831, %v2050
      %2052 = vmatpush1.msra.mxu0 %v2051
      %v2053 = vand.u32 %v1834, 4294901760
      %v2054 = vsub.f32 %v1834, %v2053
      %2055 = vmatprep.subr.mxu0 %v2054
      %v2056 = vand.u32 %v1833, 4294901760
      %v2057 = vsub.f32 %v1833, %v2056
      %2058 = vmatpush1.msra.mxu0 %v2057
      %2059 = vmatprep.subr.mxu0 0.0
      %2060 = vmatpush1.msra.mxu0 0.0
      %2061 = vmatprep.subr.mxu0 0.0
      %2062 = vmatpush1.msra.mxu0 0.0
      %2063 = vmatprep.subr.mxu0 0.0
      %2064 = vmatpush1.msra.mxu0 0.0
      %2065 = vmatprep.subr.mxu0 0.0
      %2066 = vmatpush1.msra.mxu0 0.0
      %2067 = vmatprep.subr.mxu0 0.0
      %2068 = vmatpush1.msra.mxu0 0.0
      %2069 = vmatprep.subr.mxu0 0.0
      %2070 = vmatpush1.msra.mxu0 0.0
      %2071 = vmatprep.subr.mxu0 0.0
      %2072 = vmatpush1.msra.mxu0 0.0
      %2073 = vmatprep.subr.mxu0 0.0
      %2074 = vmatpush1.msra.mxu0 0.0
      %2075 = vmatprep.subr.mxu0 0.0
      %2076 = vmatpush1.msra.mxu0 0.0
      %2077 = vmatprep.subr.mxu0 0.0
      %2078 = vmatpush1.msra.mxu0 0.0
      %2079 = vmatprep.subr.mxu0 0.0
      %2080 = vmatpush1.msra.mxu0 0.0
      %2081 = vmatprep.subr.mxu0 0.0
      %2082 = vmatpush1.msra.mxu0 0.0
      %2083 = vmatprep.subr.mxu0 0.0
      %2084 = vmatpush1.msra.mxu0 0.0
      %2085 = vmatprep.subr.mxu0 0.0
      %2086 = vmatpush1.msra.mxu0 0.0
      %2087 = vmatprep.subr.mxu0 0.0
      %2088 = vmatpush1.msra.mxu0 0.0
      %2089 = vmatprep.subr.mxu0 0.0
      %2090 = vmatpush1.msra.mxu0 0.0
      %2091 = vmatprep.subr.mxu0 0.0
      %2092 = vmatpush1.msra.mxu0 0.0
      %2093 = vmatprep.subr.mxu0 0.0
      %2094 = vmatpush1.msra.mxu0 0.0
      %2095 = vmatprep.subr.mxu0 0.0
      %2096 = vmatpush1.msra.mxu0 0.0
      %2097 = vmatprep.subr.mxu0 0.0
      %2098 = vmatpush1.msra.mxu0 0.0
      %2099 = vmatprep.subr.mxu0 0.0
      %2100 = vmatpush1.msra.mxu0 0.0
      %2101 = vmatprep.subr.mxu0 0.0
      %2102 = vmatpush1.msra.mxu0 0.0
      %2103 = vmatprep.subr.mxu0 0.0
      %2104 = vmatpush1.msra.mxu0 0.0
      %2105 = vmatprep.subr.mxu0 0.0
      %2106 = vmatpush1.msra.mxu0 0.0
      %2107 = vmatprep.subr.mxu0 0.0
      %2108 = vmatpush1.msra.mxu0 0.0
      %2109 = vmatprep.subr.mxu0 0.0
      %2110 = vmatpush1.msra.mxu0 0.0
      %2111 = vmatprep.subr.mxu0 0.0
      %2112 = vmatpush1.msra.mxu0 0.0
      %2113 = vmatprep.subr.mxu0 0.0
      %2114 = vmatpush1.msra.mxu0 0.0
      %2115 = vmatprep.mubr.f32.mxu0 0.0
      %v2116 = vand.u32 %v1837, 4294901760
      %v2117 = vsub.f32 %v1837, %v2116
      %2118 = vmatmul.mubr.f32.gmra.mrb[0].mxu0 %v2117
      %v2119 = vpop.f32.mrb[0].mxu0
      %v2120 = vadd.f32 %v2031, %v2119
      %v2121 = vpop.f32.mrb[0].mxu0
      %v2122 = vadd.f32 %v2033, %v2121
      %2123 = vdwg.mxu0
      %v2124 = vand.u32 %v1828, 4294901760
      %2125 = vmatprep.subr.mxu0 %v2124
      %v2126 = vand.u32 %v1827, 4294901760
      %2127 = vmatpush1.msra.mxu0 %v2126
      %v2128 = vand.u32 %v1830, 4294901760
      %2129 = vmatprep.subr.mxu0 %v2128
      %v2130 = vand.u32 %v1829, 4294901760
      %2131 = vmatpush1.msra.mxu0 %v2130
      %v2132 = vand.u32 %v1832, 4294901760
      %2133 = vmatprep.subr.mxu0 %v2132
      %v2134 = vand.u32 %v1831, 4294901760
      %2135 = vmatpush1.msra.mxu0 %v2134
      %v2136 = vand.u32 %v1834, 4294901760
      %2137 = vmatprep.subr.mxu0 %v2136
      %v2138 = vand.u32 %v1833, 4294901760
      %2139 = vmatpush1.msra.mxu0 %v2138
      %2140 = vmatprep.subr.mxu0 0.0
      %2141 = vmatpush1.msra.mxu0 0.0
      %2142 = vmatprep.subr.mxu0 0.0
      %2143 = vmatpush1.msra.mxu0 0.0
      %2144 = vmatprep.subr.mxu0 0.0
      %2145 = vmatpush1.msra.mxu0 0.0
      %2146 = vmatprep.subr.mxu0 0.0
      %2147 = vmatpush1.msra.mxu0 0.0
      %2148 = vmatprep.subr.mxu0 0.0
      %2149 = vmatpush1.msra.mxu0 0.0
      %2150 = vmatprep.subr.mxu0 0.0
      %2151 = vmatpush1.msra.mxu0 0.0
      %2152 = vmatprep.subr.mxu0 0.0
      %2153 = vmatpush1.msra.mxu0 0.0
      %2154 = vmatprep.subr.mxu0 0.0
      %2155 = vmatpush1.msra.mxu0 0.0
      %2156 = vmatprep.subr.mxu0 0.0
      %2157 = vmatpush1.msra.mxu0 0.0
      %2158 = vmatprep.subr.mxu0 0.0
      %2159 = vmatpush1.msra.mxu0 0.0
      %2160 = vmatprep.subr.mxu0 0.0
      %2161 = vmatpush1.msra.mxu0 0.0
      %2162 = vmatprep.subr.mxu0 0.0
      %2163 = vmatpush1.msra.mxu0 0.0
      %2164 = vmatprep.subr.mxu0 0.0
      %2165 = vmatpush1.msra.mxu0 0.0
      %2166 = vmatprep.subr.mxu0 0.0
      %2167 = vmatpush1.msra.mxu0 0.0
      %2168 = vmatprep.subr.mxu0 0.0
      %2169 = vmatpush1.msra.mxu0 0.0
      %2170 = vmatprep.subr.mxu0 0.0
      %2171 = vmatpush1.msra.mxu0 0.0
      %2172 = vmatprep.subr.mxu0 0.0
      %2173 = vmatpush1.msra.mxu0 0.0
      %2174 = vmatprep.subr.mxu0 0.0
      %2175 = vmatpush1.msra.mxu0 0.0
      %2176 = vmatprep.subr.mxu0 0.0
      %2177 = vmatpush1.msra.mxu0 0.0
      %2178 = vmatprep.subr.mxu0 0.0
      %2179 = vmatpush1.msra.mxu0 0.0
      %2180 = vmatprep.subr.mxu0 0.0
      %2181 = vmatpush1.msra.mxu0 0.0
      %2182 = vmatprep.subr.mxu0 0.0
      %2183 = vmatpush1.msra.mxu0 0.0
      %2184 = vmatprep.subr.mxu0 0.0
      %2185 = vmatpush1.msra.mxu0 0.0
      %2186 = vmatprep.subr.mxu0 0.0
      %2187 = vmatpush1.msra.mxu0 0.0
      %2188 = vmatprep.subr.mxu0 0.0
      %2189 = vmatpush1.msra.mxu0 0.0
      %2190 = vmatprep.subr.mxu0 0.0
      %2191 = vmatpush1.msra.mxu0 0.0
      %2192 = vmatprep.subr.mxu0 0.0
      %2193 = vmatpush1.msra.mxu0 0.0
      %2194 = vmatprep.subr.mxu0 0.0
      %2195 = vmatpush1.msra.mxu0 0.0
      %2196 = vmatprep.mubr.f32.mxu0 0.0
      %v2197 = vand.u32 %v1837, 4294901760
      %v2198 = vsub.f32 %v1837, %v2197
      %v2199 = vand.u32 %v2198, 4294901760
      %2200 = vmatmul.mubr.f32.gmra.mrb[0].mxu0 %v2199
      %v2201 = vpop.f32.mrb[0].mxu0
      %v2202 = vadd.f32 %v2120, %v2201
      %v2203 = vpop.f32.mrb[0].mxu0
      %v2204 = vadd.f32 %v2122, %v2203
      %2205 = vdwg.mxu0
      %v2206 = vand.u32 %v1828, 4294901760
      %v2207 = vsub.f32 %v1828, %v2206
      %v2208 = vand.u32 %v2207, 4294901760
      %2209 = vmatprep.subr.mxu0 %v2208
      %v2210 = vand.u32 %v1827, 4294901760
      %v2211 = vsub.f32 %v1827, %v2210
      %v2212 = vand.u32 %v2211, 4294901760
      %2213 = vmatpush1.msra.mxu0 %v2212
      %v2214 = vand.u32 %v1830, 4294901760
      %v2215 = vsub.f32 %v1830, %v2214
      %v2216 = vand.u32 %v2215, 4294901760
      %2217 = vmatprep.subr.mxu0 %v2216
      %v2218 = vand.u32 %v1829, 4294901760
      %v2219 = vsub.f32 %v1829, %v2218
      %v2220 = vand.u32 %v2219, 4294901760
      %2221 = vmatpush1.msra.mxu0 %v2220
      %v2222 = vand.u32 %v1832, 4294901760
      %v2223 = vsub.f32 %v1832, %v2222
      %v2224 = vand.u32 %v2223, 4294901760
      %2225 = vmatprep.subr.mxu0 %v2224
      %v2226 = vand.u32 %v1831, 4294901760
      %v2227 = vsub.f32 %v1831, %v2226
      %v2228 = vand.u32 %v2227, 4294901760
      %2229 = vmatpush1.msra.mxu0 %v2228
      %v2230 = vand.u32 %v1834, 4294901760
      %v2231 = vsub.f32 %v1834, %v2230
      %v2232 = vand.u32 %v2231, 4294901760
      %2233 = vmatprep.subr.mxu0 %v2232
      %v2234 = vand.u32 %v1833, 4294901760
      %v2235 = vsub.f32 %v1833, %v2234
      %v2236 = vand.u32 %v2235, 4294901760
      %2237 = vmatpush1.msra.mxu0 %v2236
      %2238 = vmatprep.subr.mxu0 0.0
      %2239 = vmatpush1.msra.mxu0 0.0
      %2240 = vmatprep.subr.mxu0 0.0
      %2241 = vmatpush1.msra.mxu0 0.0
      %2242 = vmatprep.subr.mxu0 0.0
      %2243 = vmatpush1.msra.mxu0 0.0
      %2244 = vmatprep.subr.mxu0 0.0
      %2245 = vmatpush1.msra.mxu0 0.0
      %2246 = vmatprep.subr.mxu0 0.0
      %2247 = vmatpush1.msra.mxu0 0.0
      %2248 = vmatprep.subr.mxu0 0.0
      %2249 = vmatpush1.msra.mxu0 0.0
      %2250 = vmatprep.subr.mxu0 0.0
      %2251 = vmatpush1.msra.mxu0 0.0
      %2252 = vmatprep.subr.mxu0 0.0
      %2253 = vmatpush1.msra.mxu0 0.0
      %2254 = vmatprep.subr.mxu0 0.0
      %2255 = vmatpush1.msra.mxu0 0.0
      %2256 = vmatprep.subr.mxu0 0.0
      %2257 = vmatpush1.msra.mxu0 0.0
      %2258 = vmatprep.subr.mxu0 0.0
      %2259 = vmatpush1.msra.mxu0 0.0
      %2260 = vmatprep.subr.mxu0 0.0
      %2261 = vmatpush1.msra.mxu0 0.0
      %2262 = vmatprep.subr.mxu0 0.0
      %2263 = vmatpush1.msra.mxu0 0.0
      %2264 = vmatprep.subr.mxu0 0.0
      %2265 = vmatpush1.msra.mxu0 0.0
      %2266 = vmatprep.subr.mxu0 0.0
      %2267 = vmatpush1.msra.mxu0 0.0
      %2268 = vmatprep.subr.mxu0 0.0
      %2269 = vmatpush1.msra.mxu0 0.0
      %2270 = vmatprep.subr.mxu0 0.0
      %2271 = vmatpush1.msra.mxu0 0.0
      %2272 = vmatprep.subr.mxu0 0.0
      %2273 = vmatpush1.msra.mxu0 0.0
      %2274 = vmatprep.subr.mxu0 0.0
      %2275 = vmatpush1.msra.mxu0 0.0
      %2276 = vmatprep.subr.mxu0 0.0
      %2277 = vmatpush1.msra.mxu0 0.0
      %2278 = vmatprep.subr.mxu0 0.0
      %2279 = vmatpush1.msra.mxu0 0.0
      %2280 = vmatprep.subr.mxu0 0.0
      %2281 = vmatpush1.msra.mxu0 0.0
      %2282 = vmatprep.subr.mxu0 0.0
      %2283 = vmatpush1.msra.mxu0 0.0
      %2284 = vmatprep.subr.mxu0 0.0
      %2285 = vmatpush1.msra.mxu0 0.0
      %2286 = vmatprep.subr.mxu0 0.0
      %2287 = vmatpush1.msra.mxu0 0.0
      %2288 = vmatprep.subr.mxu0 0.0
      %2289 = vmatpush1.msra.mxu0 0.0
      %2290 = vmatprep.subr.mxu0 0.0
      %2291 = vmatpush1.msra.mxu0 0.0
      %2292 = vmatprep.subr.mxu0 0.0
      %2293 = vmatpush1.msra.mxu0 0.0
      %2294 = vmatprep.mubr.f32.mxu0 0.0
      %v2295 = vand.u32 %v1837, 4294901760
      %2296 = vmatmul.mubr.f32.gmra.mrb[0].mxu0 %v2295
      %v2297 = vpop.f32.mrb[0].mxu0
      %v2298 = vadd.f32 %v2202, %v2297
      %v2299 = vpop.f32.mrb[0].mxu0
      %v2300 = vadd.f32 %v2204, %v2299
      %2301 = vdwg.mxu0
      %v2302 = vand.u32 %v1828, 4294901760
      %2303 = vmatprep.subr.mxu0 %v2302
      %v2304 = vand.u32 %v1827, 4294901760
      %2305 = vmatpush1.msra.mxu0 %v2304
      %v2306 = vand.u32 %v1830, 4294901760
      %2307 = vmatprep.subr.mxu0 %v2306
      %v2308 = vand.u32 %v1829, 4294901760
      %2309 = vmatpush1.msra.mxu0 %v2308
      %v2310 = vand.u32 %v1832, 4294901760
      %2311 = vmatprep.subr.mxu0 %v2310
      %v2312 = vand.u32 %v1831, 4294901760
      %2313 = vmatpush1.msra.mxu0 %v2312
      %v2314 = vand.u32 %v1834, 4294901760
      %2315 = vmatprep.subr.mxu0 %v2314
      %v2316 = vand.u32 %v1833, 4294901760
      %2317 = vmatpush1.msra.mxu0 %v2316
      %2318 = vmatprep.subr.mxu0 0.0
      %2319 = vmatpush1.msra.mxu0 0.0
      %2320 = vmatprep.subr.mxu0 0.0
      %2321 = vmatpush1.msra.mxu0 0.0
      %2322 = vmatprep.subr.mxu0 0.0
      %2323 = vmatpush1.msra.mxu0 0.0
      %2324 = vmatprep.subr.mxu0 0.0
      %2325 = vmatpush1.msra.mxu0 0.0
      %2326 = vmatprep.subr.mxu0 0.0
      %2327 = vmatpush1.msra.mxu0 0.0
      %2328 = vmatprep.subr.mxu0 0.0
      %2329 = vmatpush1.msra.mxu0 0.0
      %2330 = vmatprep.subr.mxu0 0.0
      %2331 = vmatpush1.msra.mxu0 0.0
      %2332 = vmatprep.subr.mxu0 0.0
      %2333 = vmatpush1.msra.mxu0 0.0
      %2334 = vmatprep.subr.mxu0 0.0
      %2335 = vmatpush1.msra.mxu0 0.0
      %2336 = vmatprep.subr.mxu0 0.0
      %2337 = vmatpush1.msra.mxu0 0.0
      %2338 = vmatprep.subr.mxu0 0.0
      %2339 = vmatpush1.msra.mxu0 0.0
      %2340 = vmatprep.subr.mxu0 0.0
      %2341 = vmatpush1.msra.mxu0 0.0
      %2342 = vmatprep.subr.mxu0 0.0
      %2343 = vmatpush1.msra.mxu0 0.0
      %2344 = vmatprep.subr.mxu0 0.0
      %2345 = vmatpush1.msra.mxu0 0.0
      %2346 = vmatprep.subr.mxu0 0.0
      %2347 = vmatpush1.msra.mxu0 0.0
      %2348 = vmatprep.subr.mxu0 0.0
      %2349 = vmatpush1.msra.mxu0 0.0
      %2350 = vmatprep.subr.mxu0 0.0
      %2351 = vmatpush1.msra.mxu0 0.0
      %2352 = vmatprep.subr.mxu0 0.0
      %2353 = vmatpush1.msra.mxu0 0.0
      %2354 = vmatprep.subr.mxu0 0.0
      %2355 = vmatpush1.msra.mxu0 0.0
      %2356 = vmatprep.subr.mxu0 0.0
      %2357 = vmatpush1.msra.mxu0 0.0
      %2358 = vmatprep.subr.mxu0 0.0
      %2359 = vmatpush1.msra.mxu0 0.0
      %2360 = vmatprep.subr.mxu0 0.0
      %2361 = vmatpush1.msra.mxu0 0.0
      %2362 = vmatprep.subr.mxu0 0.0
      %2363 = vmatpush1.msra.mxu0 0.0
      %2364 = vmatprep.subr.mxu0 0.0
      %2365 = vmatpush1.msra.mxu0 0.0
      %2366 = vmatprep.subr.mxu0 0.0
      %2367 = vmatpush1.msra.mxu0 0.0
      %2368 = vmatprep.subr.mxu0 0.0
      %2369 = vmatpush1.msra.mxu0 0.0
      %2370 = vmatprep.subr.mxu0 0.0
      %2371 = vmatpush1.msra.mxu0 0.0
      %2372 = vmatprep.subr.mxu0 0.0
      %2373 = vmatpush1.msra.mxu0 0.0
      %2374 = vmatprep.mubr.f32.mxu0 0.0
      %v2375 = vand.u32 %v1837, 4294901760
      %2376 = vmatmul.mubr.f32.gmra.mrb[0].mxu0 %v2375
      %v2377 = vpop.f32.mrb[0].mxu0
      %v2378 = vadd.f32 %v2298, %v2377
      %v2379 = vpop.f32.mrb[0].mxu0
      %v2380 = vadd.f32 %v2300, %v2379
      %2381 = vdwg.mxu0
      %v2382 = vmul.f32 %v468, %v2378
      %v2383 = vmul.f32 %v469, %v2380
      %v2384 = vld [vmem:[%s5] sm:$0xff]
      %v2385 = vld [vmem:[%s5 + $0x8] sm:$0xff]
      %v2386 = vld [vmem:[%s5 + $0x10] sm:$0xff]
      %v2387 = vld [vmem:[%s5 + $0x18] sm:$0xff]
      %v2388 = vld [vmem:[%s5 + $0x20] sm:$0xff]
      %v2389 = vld [vmem:[%s5 + $0x28] sm:$0xff]
      %v2390 = vld [vmem:[%s5 + $0x30] sm:$0xff]
      %v2391 = vld [vmem:[%s5 + $0x38] sm:$0xff]
      %v2392 = vand.u32 %v2385, 4294901760
      %2393 = vmatprep.subr.mxu0 %v2392
      %v2394 = vand.u32 %v2384, 4294901760
      %2395 = vmatpush1.msra.mxu0 %v2394
      %v2396 = vand.u32 %v2387, 4294901760
      %2397 = vmatprep.subr.mxu0 %v2396
      %v2398 = vand.u32 %v2386, 4294901760
      %2399 = vmatpush1.msra.mxu0 %v2398
      %v2400 = vand.u32 %v2389, 4294901760
      %2401 = vmatprep.subr.mxu0 %v2400
      %v2402 = vand.u32 %v2388, 4294901760
      %2403 = vmatpush1.msra.mxu0 %v2402
      %v2404 = vand.u32 %v2391, 4294901760
      %2405 = vmatprep.subr.mxu0 %v2404
      %v2406 = vand.u32 %v2390, 4294901760
      %2407 = vmatpush1.msra.mxu0 %v2406
      %2408 = vmatprep.subr.mxu0 0.0
      %2409 = vmatpush1.msra.mxu0 0.0
      %2410 = vmatprep.subr.mxu0 0.0
      %2411 = vmatpush1.msra.mxu0 0.0
      %2412 = vmatprep.subr.mxu0 0.0
      %2413 = vmatpush1.msra.mxu0 0.0
      %2414 = vmatprep.subr.mxu0 0.0
      %2415 = vmatpush1.msra.mxu0 0.0
      %2416 = vmatprep.subr.mxu0 0.0
      %2417 = vmatpush1.msra.mxu0 0.0
      %2418 = vmatprep.subr.mxu0 0.0
      %2419 = vmatpush1.msra.mxu0 0.0
      %2420 = vmatprep.subr.mxu0 0.0
      %2421 = vmatpush1.msra.mxu0 0.0
      %2422 = vmatprep.subr.mxu0 0.0
      %2423 = vmatpush1.msra.mxu0 0.0
      %2424 = vmatprep.subr.mxu0 0.0
      %2425 = vmatpush1.msra.mxu0 0.0
      %2426 = vmatprep.subr.mxu0 0.0
      %2427 = vmatpush1.msra.mxu0 0.0
      %2428 = vmatprep.subr.mxu0 0.0
      %2429 = vmatpush1.msra.mxu0 0.0
      %2430 = vmatprep.subr.mxu0 0.0
      %2431 = vmatpush1.msra.mxu0 0.0
      %2432 = vmatprep.subr.mxu0 0.0
      %2433 = vmatpush1.msra.mxu0 0.0
      %2434 = vmatprep.subr.mxu0 0.0
      %2435 = vmatpush1.msra.mxu0 0.0
      %2436 = vmatprep.subr.mxu0 0.0
      %2437 = vmatpush1.msra.mxu0 0.0
      %2438 = vmatprep.subr.mxu0 0.0
      %2439 = vmatpush1.msra.mxu0 0.0
      %2440 = vmatprep.subr.mxu0 0.0
      %2441 = vmatpush1.msra.mxu0 0.0
      %2442 = vmatprep.subr.mxu0 0.0
      %2443 = vmatpush1.msra.mxu0 0.0
      %2444 = vmatprep.subr.mxu0 0.0
      %2445 = vmatpush1.msra.mxu0 0.0
      %2446 = vmatprep.subr.mxu0 0.0
      %2447 = vmatpush1.msra.mxu0 0.0
      %2448 = vmatprep.subr.mxu0 0.0
      %2449 = vmatpush1.msra.mxu0 0.0
      %2450 = vmatprep.subr.mxu0 0.0
      %2451 = vmatpush1.msra.mxu0 0.0
      %2452 = vmatprep.subr.mxu0 0.0
      %2453 = vmatpush1.msra.mxu0 0.0
      %2454 = vmatprep.subr.mxu0 0.0
      %2455 = vmatpush1.msra.mxu0 0.0
      %2456 = vmatprep.subr.mxu0 0.0
      %2457 = vmatpush1.msra.mxu0 0.0
      %2458 = vmatprep.subr.mxu0 0.0
      %2459 = vmatpush1.msra.mxu0 0.0
      %2460 = vmatprep.subr.mxu0 0.0
      %2461 = vmatpush1.msra.mxu0 0.0
      %2462 = vmatprep.subr.mxu0 0.0
      %2463 = vmatpush1.msra.mxu0 0.0
      %2464 = vmatprep.mubr.f32.mxu0 0.0
      %v2465 = vand.u32 %v1837, 4294901760
      %v2466 = vsub.f32 %v1837, %v2465
      %v2467 = vand.u32 %v2466, 4294901760
      %v2468 = vsub.f32 %v2466, %v2467
      %v2469 = vand.u32 %v2468, 4294901760
      %2470 = vmatmul.mubr.f32.gmra.mrb[0].mxu0 %v2469
      %v2471 = vpop.f32.mrb[0].mxu0
      %v2472 = vadd.f32 0.0, %v2471
      %v2473 = vpop.f32.mrb[0].mxu0
      %v2474 = vadd.f32 0.0, %v2473
      %2475 = vdwg.mxu0
      %v2476 = vand.u32 %v2385, 4294901760
      %v2477 = vsub.f32 %v2385, %v2476
      %v2478 = vand.u32 %v2477, 4294901760
      %v2479 = vsub.f32 %v2477, %v2478
      %v2480 = vand.u32 %v2479, 4294901760
      %2481 = vmatprep.subr.mxu0 %v2480
      %v2482 = vand.u32 %v2384, 4294901760
      %v2483 = vsub.f32 %v2384, %v2482
      %v2484 = vand.u32 %v2483, 4294901760
      %v2485 = vsub.f32 %v2483, %v2484
      %v2486 = vand.u32 %v2485, 4294901760
      %2487 = vmatpush1.msra.mxu0 %v2486
      %v2488 = vand.u32 %v2387, 4294901760
      %v2489 = vsub.f32 %v2387, %v2488
      %v2490 = vand.u32 %v2489, 4294901760
      %v2491 = vsub.f32 %v2489, %v2490
      %v2492 = vand.u32 %v2491, 4294901760
      %2493 = vmatprep.subr.mxu0 %v2492
      %v2494 = vand.u32 %v2386, 4294901760
      %v2495 = vsub.f32 %v2386, %v2494
      %v2496 = vand.u32 %v2495, 4294901760
      %v2497 = vsub.f32 %v2495, %v2496
      %v2498 = vand.u32 %v2497, 4294901760
      %2499 = vmatpush1.msra.mxu0 %v2498
      %v2500 = vand.u32 %v2389, 4294901760
      %v2501 = vsub.f32 %v2389, %v2500
      %v2502 = vand.u32 %v2501, 4294901760
      %v2503 = vsub.f32 %v2501, %v2502
      %v2504 = vand.u32 %v2503, 4294901760
      %2505 = vmatprep.subr.mxu0 %v2504
      %v2506 = vand.u32 %v2388, 4294901760
      %v2507 = vsub.f32 %v2388, %v2506
      %v2508 = vand.u32 %v2507, 4294901760
      %v2509 = vsub.f32 %v2507, %v2508
      %v2510 = vand.u32 %v2509, 4294901760
      %2511 = vmatpush1.msra.mxu0 %v2510
      %v2512 = vand.u32 %v2391, 4294901760
      %v2513 = vsub.f32 %v2391, %v2512
      %v2514 = vand.u32 %v2513, 4294901760
      %v2515 = vsub.f32 %v2513, %v2514
      %v2516 = vand.u32 %v2515, 4294901760
      %2517 = vmatprep.subr.mxu0 %v2516
      %v2518 = vand.u32 %v2390, 4294901760
      %v2519 = vsub.f32 %v2390, %v2518
      %v2520 = vand.u32 %v2519, 4294901760
      %v2521 = vsub.f32 %v2519, %v2520
      %v2522 = vand.u32 %v2521, 4294901760
      %2523 = vmatpush1.msra.mxu0 %v2522
      %2524 = vmatprep.subr.mxu0 0.0
      %2525 = vmatpush1.msra.mxu0 0.0
      %2526 = vmatprep.subr.mxu0 0.0
      %2527 = vmatpush1.msra.mxu0 0.0
      %2528 = vmatprep.subr.mxu0 0.0
      %2529 = vmatpush1.msra.mxu0 0.0
      %2530 = vmatprep.subr.mxu0 0.0
      %2531 = vmatpush1.msra.mxu0 0.0
      %2532 = vmatprep.subr.mxu0 0.0
      %2533 = vmatpush1.msra.mxu0 0.0
      %2534 = vmatprep.subr.mxu0 0.0
      %2535 = vmatpush1.msra.mxu0 0.0
      %2536 = vmatprep.subr.mxu0 0.0
      %2537 = vmatpush1.msra.mxu0 0.0
      %2538 = vmatprep.subr.mxu0 0.0
      %2539 = vmatpush1.msra.mxu0 0.0
      %2540 = vmatprep.subr.mxu0 0.0
      %2541 = vmatpush1.msra.mxu0 0.0
      %2542 = vmatprep.subr.mxu0 0.0
      %2543 = vmatpush1.msra.mxu0 0.0
      %2544 = vmatprep.subr.mxu0 0.0
      %2545 = vmatpush1.msra.mxu0 0.0
      %2546 = vmatprep.subr.mxu0 0.0
      %2547 = vmatpush1.msra.mxu0 0.0
      %2548 = vmatprep.subr.mxu0 0.0
      %2549 = vmatpush1.msra.mxu0 0.0
      %2550 = vmatprep.subr.mxu0 0.0
      %2551 = vmatpush1.msra.mxu0 0.0
      %2552 = vmatprep.subr.mxu0 0.0
      %2553 = vmatpush1.msra.mxu0 0.0
      %2554 = vmatprep.subr.mxu0 0.0
      %2555 = vmatpush1.msra.mxu0 0.0
      %2556 = vmatprep.subr.mxu0 0.0
      %2557 = vmatpush1.msra.mxu0 0.0
      %2558 = vmatprep.subr.mxu0 0.0
      %2559 = vmatpush1.msra.mxu0 0.0
      %2560 = vmatprep.subr.mxu0 0.0
      %2561 = vmatpush1.msra.mxu0 0.0
      %2562 = vmatprep.subr.mxu0 0.0
      %2563 = vmatpush1.msra.mxu0 0.0
      %2564 = vmatprep.subr.mxu0 0.0
      %2565 = vmatpush1.msra.mxu0 0.0
      %2566 = vmatprep.subr.mxu0 0.0
      %2567 = vmatpush1.msra.mxu0 0.0
      %2568 = vmatprep.subr.mxu0 0.0
      %2569 = vmatpush1.msra.mxu0 0.0
      %2570 = vmatprep.subr.mxu0 0.0
      %2571 = vmatpush1.msra.mxu0 0.0
      %2572 = vmatprep.subr.mxu0 0.0
      %2573 = vmatpush1.msra.mxu0 0.0
      %2574 = vmatprep.subr.mxu0 0.0
      %2575 = vmatpush1.msra.mxu0 0.0
      %2576 = vmatprep.subr.mxu0 0.0
      %2577 = vmatpush1.msra.mxu0 0.0
      %2578 = vmatprep.subr.mxu0 0.0
      %2579 = vmatpush1.msra.mxu0 0.0
      %2580 = vmatprep.mubr.f32.mxu0 0.0
      %v2581 = vand.u32 %v1837, 4294901760
      %2582 = vmatmul.mubr.f32.gmra.mrb[0].mxu0 %v2581
      %v2583 = vpop.f32.mrb[0].mxu0
      %v2584 = vadd.f32 %v2472, %v2583
      %v2585 = vpop.f32.mrb[0].mxu0
      %v2586 = vadd.f32 %v2474, %v2585
      %2587 = vdwg.mxu0
      %v2588 = vand.u32 %v2385, 4294901760
      %v2589 = vsub.f32 %v2385, %v2588
      %2590 = vmatprep.subr.mxu0 %v2589
      %v2591 = vand.u32 %v2384, 4294901760
      %v2592 = vsub.f32 %v2384, %v2591
      %2593 = vmatpush1.msra.mxu0 %v2592
      %v2594 = vand.u32 %v2387, 4294901760
      %v2595 = vsub.f32 %v2387, %v2594
      %2596 = vmatprep.subr.mxu0 %v2595
      %v2597 = vand.u32 %v2386, 4294901760
      %v2598 = vsub.f32 %v2386, %v2597
      %2599 = vmatpush1.msra.mxu0 %v2598
      %v2600 = vand.u32 %v2389, 4294901760
      %v2601 = vsub.f32 %v2389, %v2600
      %2602 = vmatprep.subr.mxu0 %v2601
      %v2603 = vand.u32 %v2388, 4294901760
      %v2604 = vsub.f32 %v2388, %v2603
      %2605 = vmatpush1.msra.mxu0 %v2604
      %v2606 = vand.u32 %v2391, 4294901760
      %v2607 = vsub.f32 %v2391, %v2606
      %2608 = vmatprep.subr.mxu0 %v2607
      %v2609 = vand.u32 %v2390, 4294901760
      %v2610 = vsub.f32 %v2390, %v2609
      %2611 = vmatpush1.msra.mxu0 %v2610
      %2612 = vmatprep.subr.mxu0 0.0
      %2613 = vmatpush1.msra.mxu0 0.0
      %2614 = vmatprep.subr.mxu0 0.0
      %2615 = vmatpush1.msra.mxu0 0.0
      %2616 = vmatprep.subr.mxu0 0.0
      %2617 = vmatpush1.msra.mxu0 0.0
      %2618 = vmatprep.subr.mxu0 0.0
      %2619 = vmatpush1.msra.mxu0 0.0
      %2620 = vmatprep.subr.mxu0 0.0
      %2621 = vmatpush1.msra.mxu0 0.0
      %2622 = vmatprep.subr.mxu0 0.0
      %2623 = vmatpush1.msra.mxu0 0.0
      %2624 = vmatprep.subr.mxu0 0.0
      %2625 = vmatpush1.msra.mxu0 0.0
      %2626 = vmatprep.subr.mxu0 0.0
      %2627 = vmatpush1.msra.mxu0 0.0
      %2628 = vmatprep.subr.mxu0 0.0
      %2629 = vmatpush1.msra.mxu0 0.0
      %2630 = vmatprep.subr.mxu0 0.0
      %2631 = vmatpush1.msra.mxu0 0.0
      %2632 = vmatprep.subr.mxu0 0.0
      %2633 = vmatpush1.msra.mxu0 0.0
      %2634 = vmatprep.subr.mxu0 0.0
      %2635 = vmatpush1.msra.mxu0 0.0
      %2636 = vmatprep.subr.mxu0 0.0
      %2637 = vmatpush1.msra.mxu0 0.0
      %2638 = vmatprep.subr.mxu0 0.0
      %2639 = vmatpush1.msra.mxu0 0.0
      %2640 = vmatprep.subr.mxu0 0.0
      %2641 = vmatpush1.msra.mxu0 0.0
      %2642 = vmatprep.subr.mxu0 0.0
      %2643 = vmatpush1.msra.mxu0 0.0
      %2644 = vmatprep.subr.mxu0 0.0
      %2645 = vmatpush1.msra.mxu0 0.0
      %2646 = vmatprep.subr.mxu0 0.0
      %2647 = vmatpush1.msra.mxu0 0.0
      %2648 = vmatprep.subr.mxu0 0.0
      %2649 = vmatpush1.msra.mxu0 0.0
      %2650 = vmatprep.subr.mxu0 0.0
      %2651 = vmatpush1.msra.mxu0 0.0
      %2652 = vmatprep.subr.mxu0 0.0
      %2653 = vmatpush1.msra.mxu0 0.0
      %2654 = vmatprep.subr.mxu0 0.0
      %2655 = vmatpush1.msra.mxu0 0.0
      %2656 = vmatprep.subr.mxu0 0.0
      %2657 = vmatpush1.msra.mxu0 0.0
      %2658 = vmatprep.subr.mxu0 0.0
      %2659 = vmatpush1.msra.mxu0 0.0
      %2660 = vmatprep.subr.mxu0 0.0
      %2661 = vmatpush1.msra.mxu0 0.0
      %2662 = vmatprep.subr.mxu0 0.0
      %2663 = vmatpush1.msra.mxu0 0.0
      %2664 = vmatprep.subr.mxu0 0.0
      %2665 = vmatpush1.msra.mxu0 0.0
      %2666 = vmatprep.subr.mxu0 0.0
      %2667 = vmatpush1.msra.mxu0 0.0
      %2668 = vmatprep.mubr.f32.mxu0 0.0
      %v2669 = vand.u32 %v1837, 4294901760
      %v2670 = vsub.f32 %v1837, %v2669
      %2671 = vmatmul.mubr.f32.gmra.mrb[0].mxu0 %v2670
      %v2672 = vpop.f32.mrb[0].mxu0
      %v2673 = vadd.f32 %v2584, %v2672
      %v2674 = vpop.f32.mrb[0].mxu0
      %v2675 = vadd.f32 %v2586, %v2674
      %2676 = vdwg.mxu0
      %v2677 = vand.u32 %v2385, 4294901760
      %2678 = vmatprep.subr.mxu0 %v2677
      %v2679 = vand.u32 %v2384, 4294901760
      %2680 = vmatpush1.msra.mxu0 %v2679
      %v2681 = vand.u32 %v2387, 4294901760
      %2682 = vmatprep.subr.mxu0 %v2681
      %v2683 = vand.u32 %v2386, 4294901760
      %2684 = vmatpush1.msra.mxu0 %v2683
      %v2685 = vand.u32 %v2389, 4294901760
      %2686 = vmatprep.subr.mxu0 %v2685
      %v2687 = vand.u32 %v2388, 4294901760
      %2688 = vmatpush1.msra.mxu0 %v2687
      %v2689 = vand.u32 %v2391, 4294901760
      %2690 = vmatprep.subr.mxu0 %v2689
      %v2691 = vand.u32 %v2390, 4294901760
      %2692 = vmatpush1.msra.mxu0 %v2691
      %2693 = vmatprep.subr.mxu0 0.0
      %2694 = vmatpush1.msra.mxu0 0.0
      %2695 = vmatprep.subr.mxu0 0.0
      %2696 = vmatpush1.msra.mxu0 0.0
      %2697 = vmatprep.subr.mxu0 0.0
      %2698 = vmatpush1.msra.mxu0 0.0
      %2699 = vmatprep.subr.mxu0 0.0
      %2700 = vmatpush1.msra.mxu0 0.0
      %2701 = vmatprep.subr.mxu0 0.0
      %2702 = vmatpush1.msra.mxu0 0.0
      %2703 = vmatprep.subr.mxu0 0.0
      %2704 = vmatpush1.msra.mxu0 0.0
      %2705 = vmatprep.subr.mxu0 0.0
      %2706 = vmatpush1.msra.mxu0 0.0
      %2707 = vmatprep.subr.mxu0 0.0
      %2708 = vmatpush1.msra.mxu0 0.0
      %2709 = vmatprep.subr.mxu0 0.0
      %2710 = vmatpush1.msra.mxu0 0.0
      %2711 = vmatprep.subr.mxu0 0.0
      %2712 = vmatpush1.msra.mxu0 0.0
      %2713 = vmatprep.subr.mxu0 0.0
      %2714 = vmatpush1.msra.mxu0 0.0
      %2715 = vmatprep.subr.mxu0 0.0
      %2716 = vmatpush1.msra.mxu0 0.0
      %2717 = vmatprep.subr.mxu0 0.0
      %2718 = vmatpush1.msra.mxu0 0.0
      %2719 = vmatprep.subr.mxu0 0.0
      %2720 = vmatpush1.msra.mxu0 0.0
      %2721 = vmatprep.subr.mxu0 0.0
      %2722 = vmatpush1.msra.mxu0 0.0
      %2723 = vmatprep.subr.mxu0 0.0
      %2724 = vmatpush1.msra.mxu0 0.0
      %2725 = vmatprep.subr.mxu0 0.0
      %2726 = vmatpush1.msra.mxu0 0.0
      %2727 = vmatprep.subr.mxu0 0.0
      %2728 = vmatpush1.msra.mxu0 0.0
      %2729 = vmatprep.subr.mxu0 0.0
      %2730 = vmatpush1.msra.mxu0 0.0
      %2731 = vmatprep.subr.mxu0 0.0
      %2732 = vmatpush1.msra.mxu0 0.0
      %2733 = vmatprep.subr.mxu0 0.0
      %2734 = vmatpush1.msra.mxu0 0.0
      %2735 = vmatprep.subr.mxu0 0.0
      %2736 = vmatpush1.msra.mxu0 0.0
      %2737 = vmatprep.subr.mxu0 0.0
      %2738 = vmatpush1.msra.mxu0 0.0
      %2739 = vmatprep.subr.mxu0 0.0
      %2740 = vmatpush1.msra.mxu0 0.0
      %2741 = vmatprep.subr.mxu0 0.0
      %2742 = vmatpush1.msra.mxu0 0.0
      %2743 = vmatprep.subr.mxu0 0.0
      %2744 = vmatpush1.msra.mxu0 0.0
      %2745 = vmatprep.subr.mxu0 0.0
      %2746 = vmatpush1.msra.mxu0 0.0
      %2747 = vmatprep.subr.mxu0 0.0
      %2748 = vmatpush1.msra.mxu0 0.0
      %2749 = vmatprep.mubr.f32.mxu0 0.0
      %v2750 = vand.u32 %v1837, 4294901760
      %v2751 = vsub.f32 %v1837, %v2750
      %v2752 = vand.u32 %v2751, 4294901760
      %2753 = vmatmul.mubr.f32.gmra.mrb[0].mxu0 %v2752
      %v2754 = vpop.f32.mrb[0].mxu0
      %v2755 = vadd.f32 %v2673, %v2754
      %v2756 = vpop.f32.mrb[0].mxu0
      %v2757 = vadd.f32 %v2675, %v2756
      %2758 = vdwg.mxu0
      %v2759 = vand.u32 %v2385, 4294901760
      %v2760 = vsub.f32 %v2385, %v2759
      %v2761 = vand.u32 %v2760, 4294901760
      %2762 = vmatprep.subr.mxu0 %v2761
      %v2763 = vand.u32 %v2384, 4294901760
      %v2764 = vsub.f32 %v2384, %v2763
      %v2765 = vand.u32 %v2764, 4294901760
      %2766 = vmatpush1.msra.mxu0 %v2765
      %v2767 = vand.u32 %v2387, 4294901760
      %v2768 = vsub.f32 %v2387, %v2767
      %v2769 = vand.u32 %v2768, 4294901760
      %2770 = vmatprep.subr.mxu0 %v2769
      %v2771 = vand.u32 %v2386, 4294901760
      %v2772 = vsub.f32 %v2386, %v2771
      %v2773 = vand.u32 %v2772, 4294901760
      %2774 = vmatpush1.msra.mxu0 %v2773
      %v2775 = vand.u32 %v2389, 4294901760
      %v2776 = vsub.f32 %v2389, %v2775
      %v2777 = vand.u32 %v2776, 4294901760
      %2778 = vmatprep.subr.mxu0 %v2777
      %v2779 = vand.u32 %v2388, 4294901760
      %v2780 = vsub.f32 %v2388, %v2779
      %v2781 = vand.u32 %v2780, 4294901760
      %2782 = vmatpush1.msra.mxu0 %v2781
      %v2783 = vand.u32 %v2391, 4294901760
      %v2784 = vsub.f32 %v2391, %v2783
      %v2785 = vand.u32 %v2784, 4294901760
      %2786 = vmatprep.subr.mxu0 %v2785
      %v2787 = vand.u32 %v2390, 4294901760
      %v2788 = vsub.f32 %v2390, %v2787
      %v2789 = vand.u32 %v2788, 4294901760
      %2790 = vmatpush1.msra.mxu0 %v2789
      %2791 = vmatprep.subr.mxu0 0.0
      %2792 = vmatpush1.msra.mxu0 0.0
      %2793 = vmatprep.subr.mxu0 0.0
      %2794 = vmatpush1.msra.mxu0 0.0
      %2795 = vmatprep.subr.mxu0 0.0
      %2796 = vmatpush1.msra.mxu0 0.0
      %2797 = vmatprep.subr.mxu0 0.0
      %2798 = vmatpush1.msra.mxu0 0.0
      %2799 = vmatprep.subr.mxu0 0.0
      %2800 = vmatpush1.msra.mxu0 0.0
      %2801 = vmatprep.subr.mxu0 0.0
      %2802 = vmatpush1.msra.mxu0 0.0
      %2803 = vmatprep.subr.mxu0 0.0
      %2804 = vmatpush1.msra.mxu0 0.0
      %2805 = vmatprep.subr.mxu0 0.0
      %2806 = vmatpush1.msra.mxu0 0.0
      %2807 = vmatprep.subr.mxu0 0.0
      %2808 = vmatpush1.msra.mxu0 0.0
      %2809 = vmatprep.subr.mxu0 0.0
      %2810 = vmatpush1.msra.mxu0 0.0
      %2811 = vmatprep.subr.mxu0 0.0
      %2812 = vmatpush1.msra.mxu0 0.0
      %2813 = vmatprep.subr.mxu0 0.0
      %2814 = vmatpush1.msra.mxu0 0.0
      %2815 = vmatprep.subr.mxu0 0.0
      %2816 = vmatpush1.msra.mxu0 0.0
      %2817 = vmatprep.subr.mxu0 0.0
      %2818 = vmatpush1.msra.mxu0 0.0
      %2819 = vmatprep.subr.mxu0 0.0
      %2820 = vmatpush1.msra.mxu0 0.0
      %2821 = vmatprep.subr.mxu0 0.0
      %2822 = vmatpush1.msra.mxu0 0.0
      %2823 = vmatprep.subr.mxu0 0.0
      %2824 = vmatpush1.msra.mxu0 0.0
      %2825 = vmatprep.subr.mxu0 0.0
      %2826 = vmatpush1.msra.mxu0 0.0
      %2827 = vmatprep.subr.mxu0 0.0
      %2828 = vmatpush1.msra.mxu0 0.0
      %2829 = vmatprep.subr.mxu0 0.0
      %2830 = vmatpush1.msra.mxu0 0.0
      %2831 = vmatprep.subr.mxu0 0.0
      %2832 = vmatpush1.msra.mxu0 0.0
      %2833 = vmatprep.subr.mxu0 0.0
      %2834 = vmatpush1.msra.mxu0 0.0
      %2835 = vmatprep.subr.mxu0 0.0
      %2836 = vmatpush1.msra.mxu0 0.0
      %2837 = vmatprep.subr.mxu0 0.0
      %2838 = vmatpush1.msra.mxu0 0.0
      %2839 = vmatprep.subr.mxu0 0.0
      %2840 = vmatpush1.msra.mxu0 0.0
      %2841 = vmatprep.subr.mxu0 0.0
      %2842 = vmatpush1.msra.mxu0 0.0
      %2843 = vmatprep.subr.mxu0 0.0
      %2844 = vmatpush1.msra.mxu0 0.0
      %2845 = vmatprep.subr.mxu0 0.0
      %2846 = vmatpush1.msra.mxu0 0.0
      %2847 = vmatprep.mubr.f32.mxu0 0.0
      %v2848 = vand.u32 %v1837, 4294901760
      %2849 = vmatmul.mubr.f32.gmra.mrb[0].mxu0 %v2848
      %v2850 = vpop.f32.mrb[0].mxu0
      %v2851 = vadd.f32 %v2755, %v2850
      %v2852 = vpop.f32.mrb[0].mxu0
      %v2853 = vadd.f32 %v2757, %v2852
      %2854 = vdwg.mxu0
      %v2855 = vand.u32 %v2385, 4294901760
      %2856 = vmatprep.subr.mxu0 %v2855
      %v2857 = vand.u32 %v2384, 4294901760
      %2858 = vmatpush1.msra.mxu0 %v2857
      %v2859 = vand.u32 %v2387, 4294901760
      %2860 = vmatprep.subr.mxu0 %v2859
      %v2861 = vand.u32 %v2386, 4294901760
      %2862 = vmatpush1.msra.mxu0 %v2861
      %v2863 = vand.u32 %v2389, 4294901760
      %2864 = vmatprep.subr.mxu0 %v2863
      %v2865 = vand.u32 %v2388, 4294901760
      %2866 = vmatpush1.msra.mxu0 %v2865
      %v2867 = vand.u32 %v2391, 4294901760
      %2868 = vmatprep.subr.mxu0 %v2867
      %v2869 = vand.u32 %v2390, 4294901760
      %2870 = vmatpush1.msra.mxu0 %v2869
      %2871 = vmatprep.subr.mxu0 0.0
      %2872 = vmatpush1.msra.mxu0 0.0
      %2873 = vmatprep.subr.mxu0 0.0
      %2874 = vmatpush1.msra.mxu0 0.0
      %2875 = vmatprep.subr.mxu0 0.0
      %2876 = vmatpush1.msra.mxu0 0.0
      %2877 = vmatprep.subr.mxu0 0.0
      %2878 = vmatpush1.msra.mxu0 0.0
      %2879 = vmatprep.subr.mxu0 0.0
      %2880 = vmatpush1.msra.mxu0 0.0
      %2881 = vmatprep.subr.mxu0 0.0
      %2882 = vmatpush1.msra.mxu0 0.0
      %2883 = vmatprep.subr.mxu0 0.0
      %2884 = vmatpush1.msra.mxu0 0.0
      %2885 = vmatprep.subr.mxu0 0.0
      %2886 = vmatpush1.msra.mxu0 0.0
      %2887 = vmatprep.subr.mxu0 0.0
      %2888 = vmatpush1.msra.mxu0 0.0
      %2889 = vmatprep.subr.mxu0 0.0
      %2890 = vmatpush1.msra.mxu0 0.0
      %2891 = vmatprep.subr.mxu0 0.0
      %2892 = vmatpush1.msra.mxu0 0.0
      %2893 = vmatprep.subr.mxu0 0.0
      %2894 = vmatpush1.msra.mxu0 0.0
      %2895 = vmatprep.subr.mxu0 0.0
      %2896 = vmatpush1.msra.mxu0 0.0
      %2897 = vmatprep.subr.mxu0 0.0
      %2898 = vmatpush1.msra.mxu0 0.0
      %2899 = vmatprep.subr.mxu0 0.0
      %2900 = vmatpush1.msra.mxu0 0.0
      %2901 = vmatprep.subr.mxu0 0.0
      %2902 = vmatpush1.msra.mxu0 0.0
      %2903 = vmatprep.subr.mxu0 0.0
      %2904 = vmatpush1.msra.mxu0 0.0
      %2905 = vmatprep.subr.mxu0 0.0
      %2906 = vmatpush1.msra.mxu0 0.0
      %2907 = vmatprep.subr.mxu0 0.0
      %2908 = vmatpush1.msra.mxu0 0.0
      %2909 = vmatprep.subr.mxu0 0.0
      %2910 = vmatpush1.msra.mxu0 0.0
      %2911 = vmatprep.subr.mxu0 0.0
      %2912 = vmatpush1.msra.mxu0 0.0
      %2913 = vmatprep.subr.mxu0 0.0
      %2914 = vmatpush1.msra.mxu0 0.0
      %2915 = vmatprep.subr.mxu0 0.0
      %2916 = vmatpush1.msra.mxu0 0.0
      %2917 = vmatprep.subr.mxu0 0.0
      %2918 = vmatpush1.msra.mxu0 0.0
      %2919 = vmatprep.subr.mxu0 0.0
      %2920 = vmatpush1.msra.mxu0 0.0
      %2921 = vmatprep.subr.mxu0 0.0
      %2922 = vmatpush1.msra.mxu0 0.0
      %2923 = vmatprep.subr.mxu0 0.0
      %2924 = vmatpush1.msra.mxu0 0.0
      %2925 = vmatprep.subr.mxu0 0.0
      %2926 = vmatpush1.msra.mxu0 0.0
      %2927 = vmatprep.mubr.f32.mxu0 0.0
      %v2928 = vand.u32 %v1837, 4294901760
      %2929 = vmatmul.mubr.f32.gmra.mrb[0].mxu0 %v2928
      %v2930 = vpop.f32.mrb[0].mxu0
      %v2931 = vadd.f32 %v2851, %v2930
      %v2932 = vpop.f32.mrb[0].mxu0
      %v2933 = vadd.f32 %v2853, %v2932
      %2934 = vdwg.mxu0
      %v2935 = vmul.f32 %v2382, %v2931
      %v2936 = vmul.f32 %v2383, %v2933
      %v2937 = vadd.f32 %v2935, %v2936
      %2938 = vadd.xlane.f32.xlu0 %v2937
      %v2939 = vpop.xlane.xlu0 %2938
      %v2940 = vmul.f32 %v2939, 0.00390625
      %v2941 = vsub.f32 %v2935, %v2940
      %v2942 = vsub.f32 %v2936, %v2940
      %v2943 = vmul.f32 %v2941, %v2941
      %v2944 = vmul.f32 %v2942, %v2942
      %v2945 = vadd.f32 %v2943, %v2944
      %2946 = vadd.xlane.f32.xlu0 %v2945
      %v2947 = vpop.xlane.xlu0 %2946
      %v2948 = vmul.f32 %v2947, 0.00390625
      %v2949 = vadd.f32 %v2948, 1e-05
      %v2950 = vrsqrt.pop %v2949
      %v2951 = vmul.f32 %v2941, %v2950
      %v2952 = vmul.f32 %v2942, %v2950
      %v2953 = vld [vmem:[%s8] sm:$0xff]
      %2955 = vset.pattern.permute.xlu0 0
      %2956 = vperm.xlu0 %2955, %v2953
      %v2957 = vpop.permute.xlu0 %2956
      %v2959 = vmul.f32 %v2951, %v2957
      %v2960 = vmul.f32 %v2952, %v2957
      %v2961 = vld [vmem:[%s9] sm:$0xff]
      %2963 = vset.pattern.permute.xlu0 0
      %2964 = vperm.xlu0 %2963, %v2961
      %v2965 = vpop.permute.xlu0 %2964
      %v2967 = vadd.f32 %v2959, %v2965
      %v2968 = vadd.f32 %v2960, %v2965
      %2969 = vrot.lane.b32.xlu0 %v468, 17
      %v2970 = vpop.permute.xlu0 %2969
      %2971 = vrot.lane.b32.xlu0 %v469, 17
      %v2972 = vpop.permute.xlu0 %2971
      %v2973 = vlaneseq
      %v2974 = vand.u32 %v2973, 127
      %vm2975 = vcmp.lt.s32.totalorder %v2974, 17
      %v2976 = vsel %vm2975, %v2970, %v2972
      %v2977 = vsel %vm2975, %v2972, %v2970
      %v2978 = vld [vmem:[%s13] ss:$8 sm:$0x3]
      %v2980 = vlaneseq
      %v2981 = vshrl.u32 %v2980, 7
      %v2982 = vsub.s32 0, %v2981
      %v2983 = vrot.slane %v2978, %v2982
      %v2984 = vlaneseq
      %v2985 = vshrl.u32 %v2984, 7
      %v2986 = vsub.s32 1, %v2985
      %v2987 = vrot.slane %v2978, %v2986
      %v2990 = vmul.f32 %v2977, %v2983
      %v2991 = vmul.f32 %v2976, %v2987
      %v2992 = vld [vmem:[%s6] sm:$0xff]
      %2993 = vrot.lane.b32.xlu0 %v468, 16
      %v2994 = vpop.permute.xlu0 %2993
      %2995 = vrot.lane.b32.xlu0 %v469, 16
      %v2996 = vpop.permute.xlu0 %2995
      %vm2997 = vcmp.lt.s32.totalorder %v2974, 16
      %v2998 = vsel %vm2997, %v2994, %v2996
      %v2999 = vsel %vm2997, %v2996, %v2994
      %s3000 = scalar_lea.vmem %s13, 1
      %v3001 = vld [vmem:[%s3000] ss:$8 sm:$0x3]
      %v3003 = vlaneseq
      %v3004 = vshrl.u32 %v3003, 7
      %v3005 = vsub.s32 0, %v3004
      %v3006 = vrot.slane %v3001, %v3005
      %v3007 = vlaneseq
      %v3008 = vshrl.u32 %v3007, 7
      %v3009 = vsub.s32 1, %v3008
      %v3010 = vrot.slane %v3001, %v3009
      %v3013 = vmul.f32 %v2999, %v3006
      %v3014 = vmul.f32 %v2998, %v3010
      %s3015 = scalar_lea.vmem %s6, 8
      %v3016 = vld [vmem:[%s3015] sm:$0xff]
      %v3018 = vsel %vm1371, %v3016, 0
      %v3020 = vand.u32 %v3014, 4294901760
      %3021 = vmatprep.subr.mxu0 %v3020
      %v3022 = vand.u32 %v3013, 4294901760
      %3023 = vmatpush1.msra.mxu0 %v3022
      %3024 = vmatprep.subr.mxu0 0.0
      %3025 = vmatpush1.msra.mxu0 0.0
      %3026 = vmatprep.subr.mxu0 0.0
      %3027 = vmatpush1.msra.mxu0 0.0
      %3028 = vmatprep.subr.mxu0 0.0
      %3029 = vmatpush1.msra.mxu0 0.0
      %3030 = vmatprep.subr.mxu0 0.0
      %3031 = vmatpush1.msra.mxu0 0.0
      %3032 = vmatprep.subr.mxu0 0.0
      %3033 = vmatpush1.msra.mxu0 0.0
      %3034 = vmatprep.subr.mxu0 0.0
      %3035 = vmatpush1.msra.mxu0 0.0
      %3036 = vmatprep.subr.mxu0 0.0
      %3037 = vmatpush1.msra.mxu0 0.0
      %3038 = vmatprep.subr.mxu0 0.0
      %3039 = vmatpush1.msra.mxu0 0.0
      %3040 = vmatprep.subr.mxu0 0.0
      %3041 = vmatpush1.msra.mxu0 0.0
      %3042 = vmatprep.subr.mxu0 0.0
      %3043 = vmatpush1.msra.mxu0 0.0
      %3044 = vmatprep.subr.mxu0 0.0
      %3045 = vmatpush1.msra.mxu0 0.0
      %3046 = vmatprep.subr.mxu0 0.0
      %3047 = vmatpush1.msra.mxu0 0.0
      %3048 = vmatprep.subr.mxu0 0.0
      %3049 = vmatpush1.msra.mxu0 0.0
      %3050 = vmatprep.subr.mxu0 0.0
      %3051 = vmatpush1.msra.mxu0 0.0
      %3052 = vmatprep.subr.mxu0 0.0
      %3053 = vmatpush1.msra.mxu0 0.0
      %3054 = vmatprep.subr.mxu0 0.0
      %3055 = vmatpush1.msra.mxu0 0.0
      %3056 = vmatprep.subr.mxu0 0.0
      %3057 = vmatpush1.msra.mxu0 0.0
      %3058 = vmatprep.subr.mxu0 0.0
      %3059 = vmatpush1.msra.mxu0 0.0
      %3060 = vmatprep.subr.mxu0 0.0
      %3061 = vmatpush1.msra.mxu0 0.0
      %3062 = vmatprep.subr.mxu0 0.0
      %3063 = vmatpush1.msra.mxu0 0.0
      %3064 = vmatprep.subr.mxu0 0.0
      %3065 = vmatpush1.msra.mxu0 0.0
      %3066 = vmatprep.subr.mxu0 0.0
      %3067 = vmatpush1.msra.mxu0 0.0
      %3068 = vmatprep.subr.mxu0 0.0
      %3069 = vmatpush1.msra.mxu0 0.0
      %3070 = vmatprep.subr.mxu0 0.0
      %3071 = vmatpush1.msra.mxu0 0.0
      %3072 = vmatprep.subr.mxu0 0.0
      %3073 = vmatpush1.msra.mxu0 0.0
      %3074 = vmatprep.subr.mxu0 0.0
      %3075 = vmatpush1.msra.mxu0 0.0
      %3076 = vmatprep.subr.mxu0 0.0
      %3077 = vmatpush1.msra.mxu0 0.0
      %3078 = vmatprep.subr.mxu0 0.0
      %3079 = vmatpush1.msra.mxu0 0.0
      %3080 = vmatprep.subr.mxu0 0.0
      %3081 = vmatpush1.msra.mxu0 0.0
      %3082 = vmatprep.subr.mxu0 0.0
      %3083 = vmatpush1.msra.mxu0 0.0
      %3084 = vmatprep.subr.mxu0 0.0
      %3085 = vmatpush1.msra.mxu0 0.0
      %3086 = vmatprep.mubr.f32.mxu0 0.0
      %v3087 = vand.u32 %v3018, 4294901760
      %v3088 = vsub.f32 %v3018, %v3087
      %v3089 = vand.u32 %v3088, 4294901760
      %v3090 = vsub.f32 %v3088, %v3089
      %v3091 = vand.u32 %v3090, 4294901760
      %3092 = vmatmul.mubr.f32.gmra.mrb[0].mxu0 %v3091
      %v3093 = vpop.f32.mrb[0].mxu0
      %v3094 = vadd.f32 0.0, %v3093
      %v3095 = vpop.f32.mrb[0].mxu0
      %v3096 = vadd.f32 0.0, %v3095
      %3097 = vdwg.mxu0
      %v3098 = vand.u32 %v3014, 4294901760
      %v3099 = vsub.f32 %v3014, %v3098
      %v3100 = vand.u32 %v3099, 4294901760
      %v3101 = vsub.f32 %v3099, %v3100
      %v3102 = vand.u32 %v3101, 4294901760
      %3103 = vmatprep.subr.mxu0 %v3102
      %v3104 = vand.u32 %v3013, 4294901760
      %v3105 = vsub.f32 %v3013, %v3104
      %v3106 = vand.u32 %v3105, 4294901760
      %v3107 = vsub.f32 %v3105, %v3106
      %v3108 = vand.u32 %v3107, 4294901760
      %3109 = vmatpush1.msra.mxu0 %v3108
      %3110 = vmatprep.subr.mxu0 0.0
      %3111 = vmatpush1.msra.mxu0 0.0
      %3112 = vmatprep.subr.mxu0 0.0
      %3113 = vmatpush1.msra.mxu0 0.0
      %3114 = vmatprep.subr.mxu0 0.0
      %3115 = vmatpush1.msra.mxu0 0.0
      %3116 = vmatprep.subr.mxu0 0.0
      %3117 = vmatpush1.msra.mxu0 0.0
      %3118 = vmatprep.subr.mxu0 0.0
      %3119 = vmatpush1.msra.mxu0 0.0
      %3120 = vmatprep.subr.mxu0 0.0
      %3121 = vmatpush1.msra.mxu0 0.0
      %3122 = vmatprep.subr.mxu0 0.0
      %3123 = vmatpush1.msra.mxu0 0.0
      %3124 = vmatprep.subr.mxu0 0.0
      %3125 = vmatpush1.msra.mxu0 0.0
      %3126 = vmatprep.subr.mxu0 0.0
      %3127 = vmatpush1.msra.mxu0 0.0
      %3128 = vmatprep.subr.mxu0 0.0
      %3129 = vmatpush1.msra.mxu0 0.0
      %3130 = vmatprep.subr.mxu0 0.0
      %3131 = vmatpush1.msra.mxu0 0.0
      %3132 = vmatprep.subr.mxu0 0.0
      %3133 = vmatpush1.msra.mxu0 0.0
      %3134 = vmatprep.subr.mxu0 0.0
      %3135 = vmatpush1.msra.mxu0 0.0
      %3136 = vmatprep.subr.mxu0 0.0
      %3137 = vmatpush1.msra.mxu0 0.0
      %3138 = vmatprep.subr.mxu0 0.0
      %3139 = vmatpush1.msra.mxu0 0.0
      %3140 = vmatprep.subr.mxu0 0.0
      %3141 = vmatpush1.msra.mxu0 0.0
      %3142 = vmatprep.subr.mxu0 0.0
      %3143 = vmatpush1.msra.mxu0 0.0
      %3144 = vmatprep.subr.mxu0 0.0
      %3145 = vmatpush1.msra.mxu0 0.0
      %3146 = vmatprep.subr.mxu0 0.0
      %3147 = vmatpush1.msra.mxu0 0.0
      %3148 = vmatprep.subr.mxu0 0.0
      %3149 = vmatpush1.msra.mxu0 0.0
      %3150 = vmatprep.subr.mxu0 0.0
      %3151 = vmatpush1.msra.mxu0 0.0
      %3152 = vmatprep.subr.mxu0 0.0
      %3153 = vmatpush1.msra.mxu0 0.0
      %3154 = vmatprep.subr.mxu0 0.0
      %3155 = vmatpush1.msra.mxu0 0.0
      %3156 = vmatprep.subr.mxu0 0.0
      %3157 = vmatpush1.msra.mxu0 0.0
      %3158 = vmatprep.subr.mxu0 0.0
      %3159 = vmatpush1.msra.mxu0 0.0
      %3160 = vmatprep.subr.mxu0 0.0
      %3161 = vmatpush1.msra.mxu0 0.0
      %3162 = vmatprep.subr.mxu0 0.0
      %3163 = vmatpush1.msra.mxu0 0.0
      %3164 = vmatprep.subr.mxu0 0.0
      %3165 = vmatpush1.msra.mxu0 0.0
      %3166 = vmatprep.subr.mxu0 0.0
      %3167 = vmatpush1.msra.mxu0 0.0
      %3168 = vmatprep.subr.mxu0 0.0
      %3169 = vmatpush1.msra.mxu0 0.0
      %3170 = vmatprep.subr.mxu0 0.0
      %3171 = vmatpush1.msra.mxu0 0.0
      %3172 = vmatprep.mubr.f32.mxu0 0.0
      %v3173 = vand.u32 %v3018, 4294901760
      %3174 = vmatmul.mubr.f32.gmra.mrb[0].mxu0 %v3173
      %v3175 = vpop.f32.mrb[0].mxu0
      %v3176 = vadd.f32 %v3094, %v3175
      %v3177 = vpop.f32.mrb[0].mxu0
      %v3178 = vadd.f32 %v3096, %v3177
      %3179 = vdwg.mxu0
      %v3180 = vand.u32 %v3014, 4294901760
      %v3181 = vsub.f32 %v3014, %v3180
      %3182 = vmatprep.subr.mxu0 %v3181
      %v3183 = vand.u32 %v3013, 4294901760
      %v3184 = vsub.f32 %v3013, %v3183
      %3185 = vmatpush1.msra.mxu0 %v3184
      %3186 = vmatprep.subr.mxu0 0.0
      %3187 = vmatpush1.msra.mxu0 0.0
      %3188 = vmatprep.subr.mxu0 0.0
      %3189 = vmatpush1.msra.mxu0 0.0
      %3190 = vmatprep.subr.mxu0 0.0
      %3191 = vmatpush1.msra.mxu0 0.0
      %3192 = vmatprep.subr.mxu0 0.0
      %3193 = vmatpush1.msra.mxu0 0.0
      %3194 = vmatprep.subr.mxu0 0.0
      %3195 = vmatpush1.msra.mxu0 0.0
      %3196 = vmatprep.subr.mxu0 0.0
      %3197 = vmatpush1.msra.mxu0 0.0
      %3198 = vmatprep.subr.mxu0 0.0
      %3199 = vmatpush1.msra.mxu0 0.0
      %3200 = vmatprep.subr.mxu0 0.0
      %3201 = vmatpush1.msra.mxu0 0.0
      %3202 = vmatprep.subr.mxu0 0.0
      %3203 = vmatpush1.msra.mxu0 0.0
      %3204 = vmatprep.subr.mxu0 0.0
      %3205 = vmatpush1.msra.mxu0 0.0
      %3206 = vmatprep.subr.mxu0 0.0
      %3207 = vmatpush1.msra.mxu0 0.0
      %3208 = vmatprep.subr.mxu0 0.0
      %3209 = vmatpush1.msra.mxu0 0.0
      %3210 = vmatprep.subr.mxu0 0.0
      %3211 = vmatpush1.msra.mxu0 0.0
      %3212 = vmatprep.subr.mxu0 0.0
      %3213 = vmatpush1.msra.mxu0 0.0
      %3214 = vmatprep.subr.mxu0 0.0
      %3215 = vmatpush1.msra.mxu0 0.0
      %3216 = vmatprep.subr.mxu0 0.0
      %3217 = vmatpush1.msra.mxu0 0.0
      %3218 = vmatprep.subr.mxu0 0.0
      %3219 = vmatpush1.msra.mxu0 0.0
      %3220 = vmatprep.subr.mxu0 0.0
      %3221 = vmatpush1.msra.mxu0 0.0
      %3222 = vmatprep.subr.mxu0 0.0
      %3223 = vmatpush1.msra.mxu0 0.0
      %3224 = vmatprep.subr.mxu0 0.0
      %3225 = vmatpush1.msra.mxu0 0.0
      %3226 = vmatprep.subr.mxu0 0.0
      %3227 = vmatpush1.msra.mxu0 0.0
      %3228 = vmatprep.subr.mxu0 0.0
      %3229 = vmatpush1.msra.mxu0 0.0
      %3230 = vmatprep.subr.mxu0 0.0
      %3231 = vmatpush1.msra.mxu0 0.0
      %3232 = vmatprep.subr.mxu0 0.0
      %3233 = vmatpush1.msra.mxu0 0.0
      %3234 = vmatprep.subr.mxu0 0.0
      %3235 = vmatpush1.msra.mxu0 0.0
      %3236 = vmatprep.subr.mxu0 0.0
      %3237 = vmatpush1.msra.mxu0 0.0
      %3238 = vmatprep.subr.mxu0 0.0
      %3239 = vmatpush1.msra.mxu0 0.0
      %3240 = vmatprep.subr.mxu0 0.0
      %3241 = vmatpush1.msra.mxu0 0.0
      %3242 = vmatprep.subr.mxu0 0.0
      %3243 = vmatpush1.msra.mxu0 0.0
      %3244 = vmatprep.subr.mxu0 0.0
      %3245 = vmatpush1.msra.mxu0 0.0
      %3246 = vmatprep.subr.mxu0 0.0
      %3247 = vmatpush1.msra.mxu0 0.0
      %3248 = vmatprep.mubr.f32.mxu0 0.0
      %v3249 = vand.u32 %v3018, 4294901760
      %v3250 = vsub.f32 %v3018, %v3249
      %3251 = vmatmul.mubr.f32.gmra.mrb[0].mxu0 %v3250
      %v3252 = vpop.f32.mrb[0].mxu0
      %v3253 = vadd.f32 %v3176, %v3252
      %v3254 = vpop.f32.mrb[0].mxu0
      %v3255 = vadd.f32 %v3178, %v3254
      %3256 = vdwg.mxu0
      %v3257 = vand.u32 %v3014, 4294901760
      %3258 = vmatprep.subr.mxu0 %v3257
      %v3259 = vand.u32 %v3013, 4294901760
      %3260 = vmatpush1.msra.mxu0 %v3259
      %3261 = vmatprep.subr.mxu0 0.0
      %3262 = vmatpush1.msra.mxu0 0.0
      %3263 = vmatprep.subr.mxu0 0.0
      %3264 = vmatpush1.msra.mxu0 0.0
      %3265 = vmatprep.subr.mxu0 0.0
      %3266 = vmatpush1.msra.mxu0 0.0
      %3267 = vmatprep.subr.mxu0 0.0
      %3268 = vmatpush1.msra.mxu0 0.0
      %3269 = vmatprep.subr.mxu0 0.0
      %3270 = vmatpush1.msra.mxu0 0.0
      %3271 = vmatprep.subr.mxu0 0.0
      %3272 = vmatpush1.msra.mxu0 0.0
      %3273 = vmatprep.subr.mxu0 0.0
      %3274 = vmatpush1.msra.mxu0 0.0
      %3275 = vmatprep.subr.mxu0 0.0
      %3276 = vmatpush1.msra.mxu0 0.0
      %3277 = vmatprep.subr.mxu0 0.0
      %3278 = vmatpush1.msra.mxu0 0.0
      %3279 = vmatprep.subr.mxu0 0.0
      %3280 = vmatpush1.msra.mxu0 0.0
      %3281 = vmatprep.subr.mxu0 0.0
      %3282 = vmatpush1.msra.mxu0 0.0
      %3283 = vmatprep.subr.mxu0 0.0
      %3284 = vmatpush1.msra.mxu0 0.0
      %3285 = vmatprep.subr.mxu0 0.0
      %3286 = vmatpush1.msra.mxu0 0.0
      %3287 = vmatprep.subr.mxu0 0.0
      %3288 = vmatpush1.msra.mxu0 0.0
      %3289 = vmatprep.subr.mxu0 0.0
      %3290 = vmatpush1.msra.mxu0 0.0
      %3291 = vmatprep.subr.mxu0 0.0
      %3292 = vmatpush1.msra.mxu0 0.0
      %3293 = vmatprep.subr.mxu0 0.0
      %3294 = vmatpush1.msra.mxu0 0.0
      %3295 = vmatprep.subr.mxu0 0.0
      %3296 = vmatpush1.msra.mxu0 0.0
      %3297 = vmatprep.subr.mxu0 0.0
      %3298 = vmatpush1.msra.mxu0 0.0
      %3299 = vmatprep.subr.mxu0 0.0
      %3300 = vmatpush1.msra.mxu0 0.0
      %3301 = vmatprep.subr.mxu0 0.0
      %3302 = vmatpush1.msra.mxu0 0.0
      %3303 = vmatprep.subr.mxu0 0.0
      %3304 = vmatpush1.msra.mxu0 0.0
      %3305 = vmatprep.subr.mxu0 0.0
      %3306 = vmatpush1.msra.mxu0 0.0
      %3307 = vmatprep.subr.mxu0 0.0
      %3308 = vmatpush1.msra.mxu0 0.0
      %3309 = vmatprep.subr.mxu0 0.0
      %3310 = vmatpush1.msra.mxu0 0.0
      %3311 = vmatprep.subr.mxu0 0.0
      %3312 = vmatpush1.msra.mxu0 0.0
      %3313 = vmatprep.subr.mxu0 0.0
      %3314 = vmatpush1.msra.mxu0 0.0
      %3315 = vmatprep.subr.mxu0 0.0
      %3316 = vmatpush1.msra.mxu0 0.0
      %3317 = vmatprep.subr.mxu0 0.0
      %3318 = vmatpush1.msra.mxu0 0.0
      %3319 = vmatprep.subr.mxu0 0.0
      %3320 = vmatpush1.msra.mxu0 0.0
      %3321 = vmatprep.subr.mxu0 0.0
      %3322 = vmatpush1.msra.mxu0 0.0
      %3323 = vmatprep.mubr.f32.mxu0 0.0
      %v3324 = vand.u32 %v3018, 4294901760
      %v3325 = vsub.f32 %v3018, %v3324
      %v3326 = vand.u32 %v3325, 4294901760
      %3327 = vmatmul.mubr.f32.gmra.mrb[0].mxu0 %v3326
      %v3328 = vpop.f32.mrb[0].mxu0
      %v3329 = vadd.f32 %v3253, %v3328
      %v3330 = vpop.f32.mrb[0].mxu0
      %v3331 = vadd.f32 %v3255, %v3330
      %3332 = vdwg.mxu0
      %v3333 = vand.u32 %v3014, 4294901760
      %v3334 = vsub.f32 %v3014, %v3333
      %v3335 = vand.u32 %v3334, 4294901760
      %3336 = vmatprep.subr.mxu0 %v3335
      %v3337 = vand.u32 %v3013, 4294901760
      %v3338 = vsub.f32 %v3013, %v3337
      %v3339 = vand.u32 %v3338, 4294901760
      %3340 = vmatpush1.msra.mxu0 %v3339
      %3341 = vmatprep.subr.mxu0 0.0
      %3342 = vmatpush1.msra.mxu0 0.0
      %3343 = vmatprep.subr.mxu0 0.0
      %3344 = vmatpush1.msra.mxu0 0.0
      %3345 = vmatprep.subr.mxu0 0.0
      %3346 = vmatpush1.msra.mxu0 0.0
      %3347 = vmatprep.subr.mxu0 0.0
      %3348 = vmatpush1.msra.mxu0 0.0
      %3349 = vmatprep.subr.mxu0 0.0
      %3350 = vmatpush1.msra.mxu0 0.0
      %3351 = vmatprep.subr.mxu0 0.0
      %3352 = vmatpush1.msra.mxu0 0.0
      %3353 = vmatprep.subr.mxu0 0.0
      %3354 = vmatpush1.msra.mxu0 0.0
      %3355 = vmatprep.subr.mxu0 0.0
      %3356 = vmatpush1.msra.mxu0 0.0
      %3357 = vmatprep.subr.mxu0 0.0
      %3358 = vmatpush1.msra.mxu0 0.0
      %3359 = vmatprep.subr.mxu0 0.0
      %3360 = vmatpush1.msra.mxu0 0.0
      %3361 = vmatprep.subr.mxu0 0.0
      %3362 = vmatpush1.msra.mxu0 0.0
      %3363 = vmatprep.subr.mxu0 0.0
      %3364 = vmatpush1.msra.mxu0 0.0
      %3365 = vmatprep.subr.mxu0 0.0
      %3366 = vmatpush1.msra.mxu0 0.0
      %3367 = vmatprep.subr.mxu0 0.0
      %3368 = vmatpush1.msra.mxu0 0.0
      %3369 = vmatprep.subr.mxu0 0.0
      %3370 = vmatpush1.msra.mxu0 0.0
      %3371 = vmatprep.subr.mxu0 0.0
      %3372 = vmatpush1.msra.mxu0 0.0
      %3373 = vmatprep.subr.mxu0 0.0
      %3374 = vmatpush1.msra.mxu0 0.0
      %3375 = vmatprep.subr.mxu0 0.0
      %3376 = vmatpush1.msra.mxu0 0.0
      %3377 = vmatprep.subr.mxu0 0.0
      %3378 = vmatpush1.msra.mxu0 0.0
      %3379 = vmatprep.subr.mxu0 0.0
      %3380 = vmatpush1.msra.mxu0 0.0
      %3381 = vmatprep.subr.mxu0 0.0
      %3382 = vmatpush1.msra.mxu0 0.0
      %3383 = vmatprep.subr.mxu0 0.0
      %3384 = vmatpush1.msra.mxu0 0.0
      %3385 = vmatprep.subr.mxu0 0.0
      %3386 = vmatpush1.msra.mxu0 0.0
      %3387 = vmatprep.subr.mxu0 0.0
      %3388 = vmatpush1.msra.mxu0 0.0
      %3389 = vmatprep.subr.mxu0 0.0
      %3390 = vmatpush1.msra.mxu0 0.0
      %3391 = vmatprep.subr.mxu0 0.0
      %3392 = vmatpush1.msra.mxu0 0.0
      %3393 = vmatprep.subr.mxu0 0.0
      %3394 = vmatpush1.msra.mxu0 0.0
      %3395 = vmatprep.subr.mxu0 0.0
      %3396 = vmatpush1.msra.mxu0 0.0
      %3397 = vmatprep.subr.mxu0 0.0
      %3398 = vmatpush1.msra.mxu0 0.0
      %3399 = vmatprep.subr.mxu0 0.0
      %3400 = vmatpush1.msra.mxu0 0.0
      %3401 = vmatprep.subr.mxu0 0.0
      %3402 = vmatpush1.msra.mxu0 0.0
      %3403 = vmatprep.mubr.f32.mxu0 0.0
      %v3404 = vand.u32 %v3018, 4294901760
      %3405 = vmatmul.mubr.f32.gmra.mrb[0].mxu0 %v3404
      %v3406 = vpop.f32.mrb[0].mxu0
      %v3407 = vadd.f32 %v3329, %v3406
      %v3408 = vpop.f32.mrb[0].mxu0
      %v3409 = vadd.f32 %v3331, %v3408
      %3410 = vdwg.mxu0
      %v3411 = vand.u32 %v3014, 4294901760
      %3412 = vmatprep.subr.mxu0 %v3411
      %v3413 = vand.u32 %v3013, 4294901760
      %3414 = vmatpush1.msra.mxu0 %v3413
      %3415 = vmatprep.subr.mxu0 0.0
      %3416 = vmatpush1.msra.mxu0 0.0
      %3417 = vmatprep.subr.mxu0 0.0
      %3418 = vmatpush1.msra.mxu0 0.0
      %3419 = vmatprep.subr.mxu0 0.0
      %3420 = vmatpush1.msra.mxu0 0.0
      %3421 = vmatprep.subr.mxu0 0.0
      %3422 = vmatpush1.msra.mxu0 0.0
      %3423 = vmatprep.subr.mxu0 0.0
      %3424 = vmatpush1.msra.mxu0 0.0
      %3425 = vmatprep.subr.mxu0 0.0
      %3426 = vmatpush1.msra.mxu0 0.0
      %3427 = vmatprep.subr.mxu0 0.0
      %3428 = vmatpush1.msra.mxu0 0.0
      %3429 = vmatprep.subr.mxu0 0.0
      %3430 = vmatpush1.msra.mxu0 0.0
      %3431 = vmatprep.subr.mxu0 0.0
      %3432 = vmatpush1.msra.mxu0 0.0
      %3433 = vmatprep.subr.mxu0 0.0
      %3434 = vmatpush1.msra.mxu0 0.0
      %3435 = vmatprep.subr.mxu0 0.0
      %3436 = vmatpush1.msra.mxu0 0.0
      %3437 = vmatprep.subr.mxu0 0.0
      %3438 = vmatpush1.msra.mxu0 0.0
      %3439 = vmatprep.subr.mxu0 0.0
      %3440 = vmatpush1.msra.mxu0 0.0
      %3441 = vmatprep.subr.mxu0 0.0
      %3442 = vmatpush1.msra.mxu0 0.0
      %3443 = vmatprep.subr.mxu0 0.0
      %3444 = vmatpush1.msra.mxu0 0.0
      %3445 = vmatprep.subr.mxu0 0.0
      %3446 = vmatpush1.msra.mxu0 0.0
      %3447 = vmatprep.subr.mxu0 0.0
      %3448 = vmatpush1.msra.mxu0 0.0
      %3449 = vmatprep.subr.mxu0 0.0
      %3450 = vmatpush1.msra.mxu0 0.0
      %3451 = vmatprep.subr.mxu0 0.0
      %3452 = vmatpush1.msra.mxu0 0.0
      %3453 = vmatprep.subr.mxu0 0.0
      %3454 = vmatpush1.msra.mxu0 0.0
      %3455 = vmatprep.subr.mxu0 0.0
      %3456 = vmatpush1.msra.mxu0 0.0
      %3457 = vmatprep.subr.mxu0 0.0
      %3458 = vmatpush1.msra.mxu0 0.0
      %3459 = vmatprep.subr.mxu0 0.0
      %3460 = vmatpush1.msra.mxu0 0.0
      %3461 = vmatprep.subr.mxu0 0.0
      %3462 = vmatpush1.msra.mxu0 0.0
      %3463 = vmatprep.subr.mxu0 0.0
      %3464 = vmatpush1.msra.mxu0 0.0
      %3465 = vmatprep.subr.mxu0 0.0
      %3466 = vmatpush1.msra.mxu0 0.0
      %3467 = vmatprep.subr.mxu0 0.0
      %3468 = vmatpush1.msra.mxu0 0.0
      %3469 = vmatprep.subr.mxu0 0.0
      %3470 = vmatpush1.msra.mxu0 0.0
      %3471 = vmatprep.subr.mxu0 0.0
      %3472 = vmatpush1.msra.mxu0 0.0
      %3473 = vmatprep.subr.mxu0 0.0
      %3474 = vmatpush1.msra.mxu0 0.0
      %3475 = vmatprep.subr.mxu0 0.0
      %3476 = vmatpush1.msra.mxu0 0.0
      %3477 = vmatprep.mubr.f32.mxu0 0.0
      %v3478 = vand.u32 %v3018, 4294901760
      %3479 = vmatmul.mubr.f32.gmra.mrb[0].mxu0 %v3478
      %v3480 = vpop.f32.mrb[0].mxu0
      %v3481 = vadd.f32 %v3407, %v3480
      %v3482 = vpop.f32.mrb[0].mxu0
      %v3483 = vadd.f32 %v3409, %v3482
      %3484 = vdwg.mxu0
      %v3486 = vsel %vm1371, %v2992, 0
      %v3488 = vand.u32 %v2991, 4294901760
      %3489 = vmatprep.subr.mxu0 %v3488
      %v3490 = vand.u32 %v2990, 4294901760
      %3491 = vmatpush1.msra.mxu0 %v3490
      %3492 = vmatprep.subr.mxu0 0.0
      %3493 = vmatpush1.msra.mxu0 0.0
      %3494 = vmatprep.subr.mxu0 0.0
      %3495 = vmatpush1.msra.mxu0 0.0
      %3496 = vmatprep.subr.mxu0 0.0
      %3497 = vmatpush1.msra.mxu0 0.0
      %3498 = vmatprep.subr.mxu0 0.0
      %3499 = vmatpush1.msra.mxu0 0.0
      %3500 = vmatprep.subr.mxu0 0.0
      %3501 = vmatpush1.msra.mxu0 0.0
      %3502 = vmatprep.subr.mxu0 0.0
      %3503 = vmatpush1.msra.mxu0 0.0
      %3504 = vmatprep.subr.mxu0 0.0
      %3505 = vmatpush1.msra.mxu0 0.0
      %3506 = vmatprep.subr.mxu0 0.0
      %3507 = vmatpush1.msra.mxu0 0.0
      %3508 = vmatprep.subr.mxu0 0.0
      %3509 = vmatpush1.msra.mxu0 0.0
      %3510 = vmatprep.subr.mxu0 0.0
      %3511 = vmatpush1.msra.mxu0 0.0
      %3512 = vmatprep.subr.mxu0 0.0
      %3513 = vmatpush1.msra.mxu0 0.0
      %3514 = vmatprep.subr.mxu0 0.0
      %3515 = vmatpush1.msra.mxu0 0.0
      %3516 = vmatprep.subr.mxu0 0.0
      %3517 = vmatpush1.msra.mxu0 0.0
      %3518 = vmatprep.subr.mxu0 0.0
      %3519 = vmatpush1.msra.mxu0 0.0
      %3520 = vmatprep.subr.mxu0 0.0
      %3521 = vmatpush1.msra.mxu0 0.0
      %3522 = vmatprep.subr.mxu0 0.0
      %3523 = vmatpush1.msra.mxu0 0.0
      %3524 = vmatprep.subr.mxu0 0.0
      %3525 = vmatpush1.msra.mxu0 0.0
      %3526 = vmatprep.subr.mxu0 0.0
      %3527 = vmatpush1.msra.mxu0 0.0
      %3528 = vmatprep.subr.mxu0 0.0
      %3529 = vmatpush1.msra.mxu0 0.0
      %3530 = vmatprep.subr.mxu0 0.0
      %3531 = vmatpush1.msra.mxu0 0.0
      %3532 = vmatprep.subr.mxu0 0.0
      %3533 = vmatpush1.msra.mxu0 0.0
      %3534 = vmatprep.subr.mxu0 0.0
      %3535 = vmatpush1.msra.mxu0 0.0
      %3536 = vmatprep.subr.mxu0 0.0
      %3537 = vmatpush1.msra.mxu0 0.0
      %3538 = vmatprep.subr.mxu0 0.0
      %3539 = vmatpush1.msra.mxu0 0.0
      %3540 = vmatprep.subr.mxu0 0.0
      %3541 = vmatpush1.msra.mxu0 0.0
      %3542 = vmatprep.subr.mxu0 0.0
      %3543 = vmatpush1.msra.mxu0 0.0
      %3544 = vmatprep.subr.mxu0 0.0
      %3545 = vmatpush1.msra.mxu0 0.0
      %3546 = vmatprep.subr.mxu0 0.0
      %3547 = vmatpush1.msra.mxu0 0.0
      %3548 = vmatprep.subr.mxu0 0.0
      %3549 = vmatpush1.msra.mxu0 0.0
      %3550 = vmatprep.subr.mxu0 0.0
      %3551 = vmatpush1.msra.mxu0 0.0
      %3552 = vmatprep.subr.mxu0 0.0
      %3553 = vmatpush1.msra.mxu0 0.0
      %3554 = vmatprep.mubr.f32.mxu0 0.0
      %v3555 = vand.u32 %v3486, 4294901760
      %v3556 = vsub.f32 %v3486, %v3555
      %v3557 = vand.u32 %v3556, 4294901760
      %v3558 = vsub.f32 %v3556, %v3557
      %v3559 = vand.u32 %v3558, 4294901760
      %3560 = vmatmul.mubr.f32.gmra.mrb[0].mxu0 %v3559
      %v3561 = vpop.f32.mrb[0].mxu0
      %v3562 = vadd.f32 %v3481, %v3561
      %v3563 = vpop.f32.mrb[0].mxu0
      %v3564 = vadd.f32 %v3483, %v3563
      %3565 = vdwg.mxu0
      %v3566 = vand.u32 %v2991, 4294901760
      %v3567 = vsub.f32 %v2991, %v3566
      %v3568 = vand.u32 %v3567, 4294901760
      %v3569 = vsub.f32 %v3567, %v3568
      %v3570 = vand.u32 %v3569, 4294901760
      %3571 = vmatprep.subr.mxu0 %v3570
      %v3572 = vand.u32 %v2990, 4294901760
      %v3573 = vsub.f32 %v2990, %v3572
      %v3574 = vand.u32 %v3573, 4294901760
      %v3575 = vsub.f32 %v3573, %v3574
      %v3576 = vand.u32 %v3575, 4294901760
      %3577 = vmatpush1.msra.mxu0 %v3576
      %3578 = vmatprep.subr.mxu0 0.0
      %3579 = vmatpush1.msra.mxu0 0.0
      %3580 = vmatprep.subr.mxu0 0.0
      %3581 = vmatpush1.msra.mxu0 0.0
      %3582 = vmatprep.subr.mxu0 0.0
      %3583 = vmatpush1.msra.mxu0 0.0
      %3584 = vmatprep.subr.mxu0 0.0
      %3585 = vmatpush1.msra.mxu0 0.0
      %3586 = vmatprep.subr.mxu0 0.0
      %3587 = vmatpush1.msra.mxu0 0.0
      %3588 = vmatprep.subr.mxu0 0.0
      %3589 = vmatpush1.msra.mxu0 0.0
      %3590 = vmatprep.subr.mxu0 0.0
      %3591 = vmatpush1.msra.mxu0 0.0
      %3592 = vmatprep.subr.mxu0 0.0
      %3593 = vmatpush1.msra.mxu0 0.0
      %3594 = vmatprep.subr.mxu0 0.0
      %3595 = vmatpush1.msra.mxu0 0.0
      %3596 = vmatprep.subr.mxu0 0.0
      %3597 = vmatpush1.msra.mxu0 0.0
      %3598 = vmatprep.subr.mxu0 0.0
      %3599 = vmatpush1.msra.mxu0 0.0
      %3600 = vmatprep.subr.mxu0 0.0
      %3601 = vmatpush1.msra.mxu0 0.0
      %3602 = vmatprep.subr.mxu0 0.0
      %3603 = vmatpush1.msra.mxu0 0.0
      %3604 = vmatprep.subr.mxu0 0.0
      %3605 = vmatpush1.msra.mxu0 0.0
      %3606 = vmatprep.subr.mxu0 0.0
      %3607 = vmatpush1.msra.mxu0 0.0
      %3608 = vmatprep.subr.mxu0 0.0
      %3609 = vmatpush1.msra.mxu0 0.0
      %3610 = vmatprep.subr.mxu0 0.0
      %3611 = vmatpush1.msra.mxu0 0.0
      %3612 = vmatprep.subr.mxu0 0.0
      %3613 = vmatpush1.msra.mxu0 0.0
      %3614 = vmatprep.subr.mxu0 0.0
      %3615 = vmatpush1.msra.mxu0 0.0
      %3616 = vmatprep.subr.mxu0 0.0
      %3617 = vmatpush1.msra.mxu0 0.0
      %3618 = vmatprep.subr.mxu0 0.0
      %3619 = vmatpush1.msra.mxu0 0.0
      %3620 = vmatprep.subr.mxu0 0.0
      %3621 = vmatpush1.msra.mxu0 0.0
      %3622 = vmatprep.subr.mxu0 0.0
      %3623 = vmatpush1.msra.mxu0 0.0
      %3624 = vmatprep.subr.mxu0 0.0
      %3625 = vmatpush1.msra.mxu0 0.0
      %3626 = vmatprep.subr.mxu0 0.0
      %3627 = vmatpush1.msra.mxu0 0.0
      %3628 = vmatprep.subr.mxu0 0.0
      %3629 = vmatpush1.msra.mxu0 0.0
      %3630 = vmatprep.subr.mxu0 0.0
      %3631 = vmatpush1.msra.mxu0 0.0
      %3632 = vmatprep.subr.mxu0 0.0
      %3633 = vmatpush1.msra.mxu0 0.0
      %3634 = vmatprep.subr.mxu0 0.0
      %3635 = vmatpush1.msra.mxu0 0.0
      %3636 = vmatprep.subr.mxu0 0.0
      %3637 = vmatpush1.msra.mxu0 0.0
      %3638 = vmatprep.subr.mxu0 0.0
      %3639 = vmatpush1.msra.mxu0 0.0
      %3640 = vmatprep.mubr.f32.mxu0 0.0
      %v3641 = vand.u32 %v3486, 4294901760
      %3642 = vmatmul.mubr.f32.gmra.mrb[0].mxu0 %v3641
      %v3643 = vpop.f32.mrb[0].mxu0
      %v3644 = vadd.f32 %v3562, %v3643
      %v3645 = vpop.f32.mrb[0].mxu0
      %v3646 = vadd.f32 %v3564, %v3645
      %3647 = vdwg.mxu0
      %v3648 = vand.u32 %v2991, 4294901760
      %v3649 = vsub.f32 %v2991, %v3648
      %3650 = vmatprep.subr.mxu0 %v3649
      %v3651 = vand.u32 %v2990, 4294901760
      %v3652 = vsub.f32 %v2990, %v3651
      %3653 = vmatpush1.msra.mxu0 %v3652
      %3654 = vmatprep.subr.mxu0 0.0
      %3655 = vmatpush1.msra.mxu0 0.0
      %3656 = vmatprep.subr.mxu0 0.0
      %3657 = vmatpush1.msra.mxu0 0.0
      %3658 = vmatprep.subr.mxu0 0.0
      %3659 = vmatpush1.msra.mxu0 0.0
      %3660 = vmatprep.subr.mxu0 0.0
      %3661 = vmatpush1.msra.mxu0 0.0
      %3662 = vmatprep.subr.mxu0 0.0
      %3663 = vmatpush1.msra.mxu0 0.0
      %3664 = vmatprep.subr.mxu0 0.0
      %3665 = vmatpush1.msra.mxu0 0.0
      %3666 = vmatprep.subr.mxu0 0.0
      %3667 = vmatpush1.msra.mxu0 0.0
      %3668 = vmatprep.subr.mxu0 0.0
      %3669 = vmatpush1.msra.mxu0 0.0
      %3670 = vmatprep.subr.mxu0 0.0
      %3671 = vmatpush1.msra.mxu0 0.0
      %3672 = vmatprep.subr.mxu0 0.0
      %3673 = vmatpush1.msra.mxu0 0.0
      %3674 = vmatprep.subr.mxu0 0.0
      %3675 = vmatpush1.msra.mxu0 0.0
      %3676 = vmatprep.subr.mxu0 0.0
      %3677 = vmatpush1.msra.mxu0 0.0
      %3678 = vmatprep.subr.mxu0 0.0
      %3679 = vmatpush1.msra.mxu0 0.0
      %3680 = vmatprep.subr.mxu0 0.0
      %3681 = vmatpush1.msra.mxu0 0.0
      %3682 = vmatprep.subr.mxu0 0.0
      %3683 = vmatpush1.msra.mxu0 0.0
      %3684 = vmatprep.subr.mxu0 0.0
      %3685 = vmatpush1.msra.mxu0 0.0
      %3686 = vmatprep.subr.mxu0 0.0
      %3687 = vmatpush1.msra.mxu0 0.0
      %3688 = vmatprep.subr.mxu0 0.0
      %3689 = vmatpush1.msra.mxu0 0.0
      %3690 = vmatprep.subr.mxu0 0.0
      %3691 = vmatpush1.msra.mxu0 0.0
      %3692 = vmatprep.subr.mxu0 0.0
      %3693 = vmatpush1.msra.mxu0 0.0
      %3694 = vmatprep.subr.mxu0 0.0
      %3695 = vmatpush1.msra.mxu0 0.0
      %3696 = vmatprep.subr.mxu0 0.0
      %3697 = vmatpush1.msra.mxu0 0.0
      %3698 = vmatprep.subr.mxu0 0.0
      %3699 = vmatpush1.msra.mxu0 0.0
      %3700 = vmatprep.subr.mxu0 0.0
      %3701 = vmatpush1.msra.mxu0 0.0
      %3702 = vmatprep.subr.mxu0 0.0
      %3703 = vmatpush1.msra.mxu0 0.0
      %3704 = vmatprep.subr.mxu0 0.0
      %3705 = vmatpush1.msra.mxu0 0.0
      %3706 = vmatprep.subr.mxu0 0.0
      %3707 = vmatpush1.msra.mxu0 0.0
      %3708 = vmatprep.subr.mxu0 0.0
      %3709 = vmatpush1.msra.mxu0 0.0
      %3710 = vmatprep.subr.mxu0 0.0
      %3711 = vmatpush1.msra.mxu0 0.0
      %3712 = vmatprep.subr.mxu0 0.0
      %3713 = vmatpush1.msra.mxu0 0.0
      %3714 = vmatprep.subr.mxu0 0.0
      %3715 = vmatpush1.msra.mxu0 0.0
      %3716 = vmatprep.mubr.f32.mxu0 0.0
      %v3717 = vand.u32 %v3486, 4294901760
      %v3718 = vsub.f32 %v3486, %v3717
      %3719 = vmatmul.mubr.f32.gmra.mrb[0].mxu0 %v3718
      %v3720 = vpop.f32.mrb[0].mxu0
      %v3721 = vadd.f32 %v3644, %v3720
      %v3722 = vpop.f32.mrb[0].mxu0
      %v3723 = vadd.f32 %v3646, %v3722
      %3724 = vdwg.mxu0
      %v3725 = vand.u32 %v2991, 4294901760
      %3726 = vmatprep.subr.mxu0 %v3725
      %v3727 = vand.u32 %v2990, 4294901760
      %3728 = vmatpush1.msra.mxu0 %v3727
      %3729 = vmatprep.subr.mxu0 0.0
      %3730 = vmatpush1.msra.mxu0 0.0
      %3731 = vmatprep.subr.mxu0 0.0
      %3732 = vmatpush1.msra.mxu0 0.0
      %3733 = vmatprep.subr.mxu0 0.0
      %3734 = vmatpush1.msra.mxu0 0.0
      %3735 = vmatprep.subr.mxu0 0.0
      %3736 = vmatpush1.msra.mxu0 0.0
      %3737 = vmatprep.subr.mxu0 0.0
      %3738 = vmatpush1.msra.mxu0 0.0
      %3739 = vmatprep.subr.mxu0 0.0
      %3740 = vmatpush1.msra.mxu0 0.0
      %3741 = vmatprep.subr.mxu0 0.0
      %3742 = vmatpush1.msra.mxu0 0.0
      %3743 = vmatprep.subr.mxu0 0.0
      %3744 = vmatpush1.msra.mxu0 0.0
      %3745 = vmatprep.subr.mxu0 0.0
      %3746 = vmatpush1.msra.mxu0 0.0
      %3747 = vmatprep.subr.mxu0 0.0
      %3748 = vmatpush1.msra.mxu0 0.0
      %3749 = vmatprep.subr.mxu0 0.0
      %3750 = vmatpush1.msra.mxu0 0.0
      %3751 = vmatprep.subr.mxu0 0.0
      %3752 = vmatpush1.msra.mxu0 0.0
      %3753 = vmatprep.subr.mxu0 0.0
      %3754 = vmatpush1.msra.mxu0 0.0
      %3755 = vmatprep.subr.mxu0 0.0
      %3756 = vmatpush1.msra.mxu0 0.0
      %3757 = vmatprep.subr.mxu0 0.0
      %3758 = vmatpush1.msra.mxu0 0.0
      %3759 = vmatprep.subr.mxu0 0.0
      %3760 = vmatpush1.msra.mxu0 0.0
      %3761 = vmatprep.subr.mxu0 0.0
      %3762 = vmatpush1.msra.mxu0 0.0
      %3763 = vmatprep.subr.mxu0 0.0
      %3764 = vmatpush1.msra.mxu0 0.0
      %3765 = vmatprep.subr.mxu0 0.0
      %3766 = vmatpush1.msra.mxu0 0.0
      %3767 = vmatprep.subr.mxu0 0.0
      %3768 = vmatpush1.msra.mxu0 0.0
      %3769 = vmatprep.subr.mxu0 0.0
      %3770 = vmatpush1.msra.mxu0 0.0
      %3771 = vmatprep.subr.mxu0 0.0
      %3772 = vmatpush1.msra.mxu0 0.0
      %3773 = vmatprep.subr.mxu0 0.0
      %3774 = vmatpush1.msra.mxu0 0.0
      %3775 = vmatprep.subr.mxu0 0.0
      %3776 = vmatpush1.msra.mxu0 0.0
      %3777 = vmatprep.subr.mxu0 0.0
      %3778 = vmatpush1.msra.mxu0 0.0
      %3779 = vmatprep.subr.mxu0 0.0
      %3780 = vmatpush1.msra.mxu0 0.0
      %3781 = vmatprep.subr.mxu0 0.0
      %3782 = vmatpush1.msra.mxu0 0.0
      %3783 = vmatprep.subr.mxu0 0.0
      %3784 = vmatpush1.msra.mxu0 0.0
      %3785 = vmatprep.subr.mxu0 0.0
      %3786 = vmatpush1.msra.mxu0 0.0
      %3787 = vmatprep.subr.mxu0 0.0
      %3788 = vmatpush1.msra.mxu0 0.0
      %3789 = vmatprep.subr.mxu0 0.0
      %3790 = vmatpush1.msra.mxu0 0.0
      %3791 = vmatprep.mubr.f32.mxu0 0.0
      %v3792 = vand.u32 %v3486, 4294901760
      %v3793 = vsub.f32 %v3486, %v3792
      %v3794 = vand.u32 %v3793, 4294901760
      %3795 = vmatmul.mubr.f32.gmra.mrb[0].mxu0 %v3794
      %v3796 = vpop.f32.mrb[0].mxu0
      %v3797 = vadd.f32 %v3721, %v3796
      %v3798 = vpop.f32.mrb[0].mxu0
      %v3799 = vadd.f32 %v3723, %v3798
      %3800 = vdwg.mxu0
      %v3801 = vand.u32 %v2991, 4294901760
      %v3802 = vsub.f32 %v2991, %v3801
      %v3803 = vand.u32 %v3802, 4294901760
      %3804 = vmatprep.subr.mxu0 %v3803
      %v3805 = vand.u32 %v2990, 4294901760
      %v3806 = vsub.f32 %v2990, %v3805
      %v3807 = vand.u32 %v3806, 4294901760
      %3808 = vmatpush1.msra.mxu0 %v3807
      %3809 = vmatprep.subr.mxu0 0.0
      %3810 = vmatpush1.msra.mxu0 0.0
      %3811 = vmatprep.subr.mxu0 0.0
      %3812 = vmatpush1.msra.mxu0 0.0
      %3813 = vmatprep.subr.mxu0 0.0
      %3814 = vmatpush1.msra.mxu0 0.0
      %3815 = vmatprep.subr.mxu0 0.0
      %3816 = vmatpush1.msra.mxu0 0.0
      %3817 = vmatprep.subr.mxu0 0.0
      %3818 = vmatpush1.msra.mxu0 0.0
      %3819 = vmatprep.subr.mxu0 0.0
      %3820 = vmatpush1.msra.mxu0 0.0
      %3821 = vmatprep.subr.mxu0 0.0
      %3822 = vmatpush1.msra.mxu0 0.0
      %3823 = vmatprep.subr.mxu0 0.0
      %3824 = vmatpush1.msra.mxu0 0.0
      %3825 = vmatprep.subr.mxu0 0.0
      %3826 = vmatpush1.msra.mxu0 0.0
      %3827 = vmatprep.subr.mxu0 0.0
      %3828 = vmatpush1.msra.mxu0 0.0
      %3829 = vmatprep.subr.mxu0 0.0
      %3830 = vmatpush1.msra.mxu0 0.0
      %3831 = vmatprep.subr.mxu0 0.0
      %3832 = vmatpush1.msra.mxu0 0.0
      %3833 = vmatprep.subr.mxu0 0.0
      %3834 = vmatpush1.msra.mxu0 0.0
      %3835 = vmatprep.subr.mxu0 0.0
      %3836 = vmatpush1.msra.mxu0 0.0
      %3837 = vmatprep.subr.mxu0 0.0
      %3838 = vmatpush1.msra.mxu0 0.0
      %3839 = vmatprep.subr.mxu0 0.0
      %3840 = vmatpush1.msra.mxu0 0.0
      %3841 = vmatprep.subr.mxu0 0.0
      %3842 = vmatpush1.msra.mxu0 0.0
      %3843 = vmatprep.subr.mxu0 0.0
      %3844 = vmatpush1.msra.mxu0 0.0
      %3845 = vmatprep.subr.mxu0 0.0
      %3846 = vmatpush1.msra.mxu0 0.0
      %3847 = vmatprep.subr.mxu0 0.0
      %3848 = vmatpush1.msra.mxu0 0.0
      %3849 = vmatprep.subr.mxu0 0.0
      %3850 = vmatpush1.msra.mxu0 0.0
      %3851 = vmatprep.subr.mxu0 0.0
      %3852 = vmatpush1.msra.mxu0 0.0
      %3853 = vmatprep.subr.mxu0 0.0
      %3854 = vmatpush1.msra.mxu0 0.0
      %3855 = vmatprep.subr.mxu0 0.0
      %3856 = vmatpush1.msra.mxu0 0.0
      %3857 = vmatprep.subr.mxu0 0.0
      %3858 = vmatpush1.msra.mxu0 0.0
      %3859 = vmatprep.subr.mxu0 0.0
      %3860 = vmatpush1.msra.mxu0 0.0
      %3861 = vmatprep.subr.mxu0 0.0
      %3862 = vmatpush1.msra.mxu0 0.0
      %3863 = vmatprep.subr.mxu0 0.0
      %3864 = vmatpush1.msra.mxu0 0.0
      %3865 = vmatprep.subr.mxu0 0.0
      %3866 = vmatpush1.msra.mxu0 0.0
      %3867 = vmatprep.subr.mxu0 0.0
      %3868 = vmatpush1.msra.mxu0 0.0
      %3869 = vmatprep.subr.mxu0 0.0
      %3870 = vmatpush1.msra.mxu0 0.0
      %3871 = vmatprep.mubr.f32.mxu0 0.0
      %v3872 = vand.u32 %v3486, 4294901760
      %3873 = vmatmul.mubr.f32.gmra.mrb[0].mxu0 %v3872
      %v3874 = vpop.f32.mrb[0].mxu0
      %v3875 = vadd.f32 %v3797, %v3874
      %v3876 = vpop.f32.mrb[0].mxu0
      %v3877 = vadd.f32 %v3799, %v3876
      %3878 = vdwg.mxu0
      %v3879 = vand.u32 %v2991, 4294901760
      %3880 = vmatprep.subr.mxu0 %v3879
      %v3881 = vand.u32 %v2990, 4294901760
      %3882 = vmatpush1.msra.mxu0 %v3881
      %3883 = vmatprep.subr.mxu0 0.0
      %3884 = vmatpush1.msra.mxu0 0.0
      %3885 = vmatprep.subr.mxu0 0.0
      %3886 = vmatpush1.msra.mxu0 0.0
      %3887 = vmatprep.subr.mxu0 0.0
      %3888 = vmatpush1.msra.mxu0 0.0
      %3889 = vmatprep.subr.mxu0 0.0
      %3890 = vmatpush1.msra.mxu0 0.0
      %3891 = vmatprep.subr.mxu0 0.0
      %3892 = vmatpush1.msra.mxu0 0.0
      %3893 = vmatprep.subr.mxu0 0.0
      %3894 = vmatpush1.msra.mxu0 0.0
      %3895 = vmatprep.subr.mxu0 0.0
      %3896 = vmatpush1.msra.mxu0 0.0
      %3897 = vmatprep.subr.mxu0 0.0
      %3898 = vmatpush1.msra.mxu0 0.0
      %3899 = vmatprep.subr.mxu0 0.0
      %3900 = vmatpush1.msra.mxu0 0.0
      %3901 = vmatprep.subr.mxu0 0.0
      %3902 = vmatpush1.msra.mxu0 0.0
      %3903 = vmatprep.subr.mxu0 0.0
      %3904 = vmatpush1.msra.mxu0 0.0
      %3905 = vmatprep.subr.mxu0 0.0
      %3906 = vmatpush1.msra.mxu0 0.0
      %3907 = vmatprep.subr.mxu0 0.0
      %3908 = vmatpush1.msra.mxu0 0.0
      %3909 = vmatprep.subr.mxu0 0.0
      %3910 = vmatpush1.msra.mxu0 0.0
      %3911 = vmatprep.subr.mxu0 0.0
      %3912 = vmatpush1.msra.mxu0 0.0
      %3913 = vmatprep.subr.mxu0 0.0
      %3914 = vmatpush1.msra.mxu0 0.0
      %3915 = vmatprep.subr.mxu0 0.0
      %3916 = vmatpush1.msra.mxu0 0.0
      %3917 = vmatprep.subr.mxu0 0.0
      %3918 = vmatpush1.msra.mxu0 0.0
      %3919 = vmatprep.subr.mxu0 0.0
      %3920 = vmatpush1.msra.mxu0 0.0
      %3921 = vmatprep.subr.mxu0 0.0
      %3922 = vmatpush1.msra.mxu0 0.0
      %3923 = vmatprep.subr.mxu0 0.0
      %3924 = vmatpush1.msra.mxu0 0.0
      %3925 = vmatprep.subr.mxu0 0.0
      %3926 = vmatpush1.msra.mxu0 0.0
      %3927 = vmatprep.subr.mxu0 0.0
      %3928 = vmatpush1.msra.mxu0 0.0
      %3929 = vmatprep.subr.mxu0 0.0
      %3930 = vmatpush1.msra.mxu0 0.0
      %3931 = vmatprep.subr.mxu0 0.0
      %3932 = vmatpush1.msra.mxu0 0.0
      %3933 = vmatprep.subr.mxu0 0.0
      %3934 = vmatpush1.msra.mxu0 0.0
      %3935 = vmatprep.subr.mxu0 0.0
      %3936 = vmatpush1.msra.mxu0 0.0
      %3937 = vmatprep.subr.mxu0 0.0
      %3938 = vmatpush1.msra.mxu0 0.0
      %3939 = vmatprep.subr.mxu0 0.0
      %3940 = vmatpush1.msra.mxu0 0.0
      %3941 = vmatprep.subr.mxu0 0.0
      %3942 = vmatpush1.msra.mxu0 0.0
      %3943 = vmatprep.subr.mxu0 0.0
      %3944 = vmatpush1.msra.mxu0 0.0
      %3945 = vmatprep.mubr.f32.mxu0 0.0
      %v3946 = vand.u32 %v3486, 4294901760
      %3947 = vmatmul.mubr.f32.gmra.mrb[0].mxu0 %v3946
      %v3948 = vpop.f32.mrb[0].mxu0
      %v3949 = vadd.f32 %v3875, %v3948
      %v3950 = vpop.f32.mrb[0].mxu0
      %v3951 = vadd.f32 %v3877, %v3950
      %3952 = vdwg.mxu0
      %3953 = vrot.lane.b32.xlu0 %v468, 15
      %v3954 = vpop.permute.xlu0 %3953
      %3955 = vrot.lane.b32.xlu0 %v469, 15
      %v3956 = vpop.permute.xlu0 %3955
      %vm3957 = vcmp.lt.s32.totalorder %v2974, 15
      %v3958 = vsel %vm3957, %v3954, %v3956
      %v3959 = vsel %vm3957, %v3956, %v3954
      %s3960 = scalar_lea.vmem %s13, 2
      %v3961 = vld [vmem:[%s3960] ss:$8 sm:$0x3]
      %v3963 = vlaneseq
      %v3964 = vshrl.u32 %v3963, 7
      %v3965 = vsub.s32 0, %v3964
      %v3966 = vrot.slane %v3961, %v3965
      %v3967 = vlaneseq
      %v3968 = vshrl.u32 %v3967, 7
      %v3969 = vsub.s32 1, %v3968
      %v3970 = vrot.slane %v3961, %v3969
      %v3973 = vmul.f32 %v3959, %v3966
      %v3974 = vmul.f32 %v3958, %v3970
      %s3975 = scalar_lea.vmem %s6, 16
      %v3976 = vld [vmem:[%s3975] sm:$0xff]
      %v3978 = vsel %vm1371, %v3976, 0
      %v3980 = vand.u32 %v3974, 4294901760
      %3981 = vmatprep.subr.mxu0 %v3980
      %v3982 = vand.u32 %v3973, 4294901760
      %3983 = vmatpush1.msra.mxu0 %v3982
      %3984 = vmatprep.subr.mxu0 0.0
      %3985 = vmatpush1.msra.mxu0 0.0
      %3986 = vmatprep.subr.mxu0 0.0
      %3987 = vmatpush1.msra.mxu0 0.0
      %3988 = vmatprep.subr.mxu0 0.0
      %3989 = vmatpush1.msra.mxu0 0.0
      %3990 = vmatprep.subr.mxu0 0.0
      %3991 = vmatpush1.msra.mxu0 0.0
      %3992 = vmatprep.subr.mxu0 0.0
      %3993 = vmatpush1.msra.mxu0 0.0
      %3994 = vmatprep.subr.mxu0 0.0
      %3995 = vmatpush1.msra.mxu0 0.0
      %3996 = vmatprep.subr.mxu0 0.0
      %3997 = vmatpush1.msra.mxu0 0.0
      %3998 = vmatprep.subr.mxu0 0.0
      %3999 = vmatpush1.msra.mxu0 0.0
      %4000 = vmatprep.subr.mxu0 0.0
      %4001 = vmatpush1.msra.mxu0 0.0
      %4002 = vmatprep.subr.mxu0 0.0
      %4003 = vmatpush1.msra.mxu0 0.0
      %4004 = vmatprep.subr.mxu0 0.0
      %4005 = vmatpush1.msra.mxu0 0.0
      %4006 = vmatprep.subr.mxu0 0.0
      %4007 = vmatpush1.msra.mxu0 0.0
      %4008 = vmatprep.subr.mxu0 0.0
      %4009 = vmatpush1.msra.mxu0 0.0
      %4010 = vmatprep.subr.mxu0 0.0
      %4011 = vmatpush1.msra.mxu0 0.0
      %4012 = vmatprep.subr.mxu0 0.0
      %4013 = vmatpush1.msra.mxu0 0.0
      %4014 = vmatprep.subr.mxu0 0.0
      %4015 = vmatpush1.msra.mxu0 0.0
      %4016 = vmatprep.subr.mxu0 0.0
      %4017 = vmatpush1.msra.mxu0 0.0
      %4018 = vmatprep.subr.mxu0 0.0
      %4019 = vmatpush1.msra.mxu0 0.0
      %4020 = vmatprep.subr.mxu0 0.0
      %4021 = vmatpush1.msra.mxu0 0.0
      %4022 = vmatprep.subr.mxu0 0.0
      %4023 = vmatpush1.msra.mxu0 0.0
      %4024 = vmatprep.subr.mxu0 0.0
      %4025 = vmatpush1.msra.mxu0 0.0
      %4026 = vmatprep.subr.mxu0 0.0
      %4027 = vmatpush1.msra.mxu0 0.0
      %4028 = vmatprep.subr.mxu0 0.0
      %4029 = vmatpush1.msra.mxu0 0.0
      %4030 = vmatprep.subr.mxu0 0.0
      %4031 = vmatpush1.msra.mxu0 0.0
      %4032 = vmatprep.subr.mxu0 0.0
      %4033 = vmatpush1.msra.mxu0 0.0
      %4034 = vmatprep.subr.mxu0 0.0
      %4035 = vmatpush1.msra.mxu0 0.0
      %4036 = vmatprep.subr.mxu0 0.0
      %4037 = vmatpush1.msra.mxu0 0.0
      %4038 = vmatprep.subr.mxu0 0.0
      %4039 = vmatpush1.msra.mxu0 0.0
      %4040 = vmatprep.subr.mxu0 0.0
      %4041 = vmatpush1.msra.mxu0 0.0
      %4042 = vmatprep.subr.mxu0 0.0
      %4043 = vmatpush1.msra.mxu0 0.0
      %4044 = vmatprep.subr.mxu0 0.0
      %4045 = vmatpush1.msra.mxu0 0.0
      %4046 = vmatprep.mubr.f32.mxu0 0.0
      %v4047 = vand.u32 %v3978, 4294901760
      %v4048 = vsub.f32 %v3978, %v4047
      %v4049 = vand.u32 %v4048, 4294901760
      %v4050 = vsub.f32 %v4048, %v4049
      %v4051 = vand.u32 %v4050, 4294901760
      %4052 = vmatmul.mubr.f32.gmra.mrb[0].mxu0 %v4051
      %v4053 = vpop.f32.mrb[0].mxu0
      %v4054 = vadd.f32 0.0, %v4053
      %v4055 = vpop.f32.mrb[0].mxu0
      %v4056 = vadd.f32 0.0, %v4055
      %4057 = vdwg.mxu0
      %v4058 = vand.u32 %v3974, 4294901760
      %v4059 = vsub.f32 %v3974, %v4058
      %v4060 = vand.u32 %v4059, 4294901760
      %v4061 = vsub.f32 %v4059, %v4060
      %v4062 = vand.u32 %v4061, 4294901760
      %4063 = vmatprep.subr.mxu0 %v4062
      %v4064 = vand.u32 %v3973, 4294901760
      %v4065 = vsub.f32 %v3973, %v4064
      %v4066 = vand.u32 %v4065, 4294901760
      %v4067 = vsub.f32 %v4065, %v4066
      %v4068 = vand.u32 %v4067, 4294901760
      %4069 = vmatpush1.msra.mxu0 %v4068
      %4070 = vmatprep.subr.mxu0 0.0
      %4071 = vmatpush1.msra.mxu0 0.0
      %4072 = vmatprep.subr.mxu0 0.0
      %4073 = vmatpush1.msra.mxu0 0.0
      %4074 = vmatprep.subr.mxu0 0.0
      %4075 = vmatpush1.msra.mxu0 0.0
      %4076 = vmatprep.subr.mxu0 0.0
      %4077 = vmatpush1.msra.mxu0 0.0
      %4078 = vmatprep.subr.mxu0 0.0
      %4079 = vmatpush1.msra.mxu0 0.0
      %4080 = vmatprep.subr.mxu0 0.0
      %4081 = vmatpush1.msra.mxu0 0.0
      %4082 = vmatprep.subr.mxu0 0.0
      %4083 = vmatpush1.msra.mxu0 0.0
      %4084 = vmatprep.subr.mxu0 0.0
      %4085 = vmatpush1.msra.mxu0 0.0
      %4086 = vmatprep.subr.mxu0 0.0
      %4087 = vmatpush1.msra.mxu0 0.0
      %4088 = vmatprep.subr.mxu0 0.0
      %4089 = vmatpush1.msra.mxu0 0.0
      %4090 = vmatprep.subr.mxu0 0.0
      %4091 = vmatpush1.msra.mxu0 0.0
      %4092 = vmatprep.subr.mxu0 0.0
      %4093 = vmatpush1.msra.mxu0 0.0
      %4094 = vmatprep.subr.mxu0 0.0
      %4095 = vmatpush1.msra.mxu0 0.0
      %4096 = vmatprep.subr.mxu0 0.0
      %4097 = vmatpush1.msra.mxu0 0.0
      %4098 = vmatprep.subr.mxu0 0.0
      %4099 = vmatpush1.msra.mxu0 0.0
      %4100 = vmatprep.subr.mxu0 0.0
      %4101 = vmatpush1.msra.mxu0 0.0
      %4102 = vmatprep.subr.mxu0 0.0
      %4103 = vmatpush1.msra.mxu0 0.0
      %4104 = vmatprep.subr.mxu0 0.0
      %4105 = vmatpush1.msra.mxu0 0.0
      %4106 = vmatprep.subr.mxu0 0.0
      %4107 = vmatpush1.msra.mxu0 0.0
      %4108 = vmatprep.subr.mxu0 0.0
      %4109 = vmatpush1.msra.mxu0 0.0
      %4110 = vmatprep.subr.mxu0 0.0
      %4111 = vmatpush1.msra.mxu0 0.0
      %4112 = vmatprep.subr.mxu0 0.0
      %4113 = vmatpush1.msra.mxu0 0.0
      %4114 = vmatprep.subr.mxu0 0.0
      %4115 = vmatpush1.msra.mxu0 0.0
      %4116 = vmatprep.subr.mxu0 0.0
      %4117 = vmatpush1.msra.mxu0 0.0
      %4118 = vmatprep.subr.mxu0 0.0
      %4119 = vmatpush1.msra.mxu0 0.0
      %4120 = vmatprep.subr.mxu0 0.0
      %4121 = vmatpush1.msra.mxu0 0.0
      %4122 = vmatprep.subr.mxu0 0.0
      %4123 = vmatpush1.msra.mxu0 0.0
      %4124 = vmatprep.subr.mxu0 0.0
      %4125 = vmatpush1.msra.mxu0 0.0
      %4126 = vmatprep.subr.mxu0 0.0
      %4127 = vmatpush1.msra.mxu0 0.0
      %4128 = vmatprep.subr.mxu0 0.0
      %4129 = vmatpush1.msra.mxu0 0.0
      %4130 = vmatprep.subr.mxu0 0.0
      %4131 = vmatpush1.msra.mxu0 0.0
      %4132 = vmatprep.mubr.f32.mxu0 0.0
      %v4133 = vand.u32 %v3978, 4294901760
      %4134 = vmatmul.mubr.f32.gmra.mrb[0].mxu0 %v4133
      %v4135 = vpop.f32.mrb[0].mxu0
      %v4136 = vadd.f32 %v4054, %v4135
      %v4137 = vpop.f32.mrb[0].mxu0
      %v4138 = vadd.f32 %v4056, %v4137
      %4139 = vdwg.mxu0
      %v4140 = vand.u32 %v3974, 4294901760
      %v4141 = vsub.f32 %v3974, %v4140
      %4142 = vmatprep.subr.mxu0 %v4141
      %v4143 = vand.u32 %v3973, 4294901760
      %v4144 = vsub.f32 %v3973, %v4143
      %4145 = vmatpush1.msra.mxu0 %v4144
      %4146 = vmatprep.subr.mxu0 0.0
      %4147 = vmatpush1.msra.mxu0 0.0
      %4148 = vmatprep.subr.mxu0 0.0
      %4149 = vmatpush1.msra.mxu0 0.0
      %4150 = vmatprep.subr.mxu0 0.0
      %4151 = vmatpush1.msra.mxu0 0.0
      %4152 = vmatprep.subr.mxu0 0.0
      %4153 = vmatpush1.msra.mxu0 0.0
      %4154 = vmatprep.subr.mxu0 0.0
      %4155 = vmatpush1.msra.mxu0 0.0
      %4156 = vmatprep.subr.mxu0 0.0
      %4157 = vmatpush1.msra.mxu0 0.0
      %4158 = vmatprep.subr.mxu0 0.0
      %4159 = vmatpush1.msra.mxu0 0.0
      %4160 = vmatprep.subr.mxu0 0.0
      %4161 = vmatpush1.msra.mxu0 0.0
      %4162 = vmatprep.subr.mxu0 0.0
      %4163 = vmatpush1.msra.mxu0 0.0
      %4164 = vmatprep.subr.mxu0 0.0
      %4165 = vmatpush1.msra.mxu0 0.0
      %4166 = vmatprep.subr.mxu0 0.0
      %4167 = vmatpush1.msra.mxu0 0.0
      %4168 = vmatprep.subr.mxu0 0.0
      %4169 = vmatpush1.msra.mxu0 0.0
      %4170 = vmatprep.subr.mxu0 0.0
      %4171 = vmatpush1.msra.mxu0 0.0
      %4172 = vmatprep.subr.mxu0 0.0
      %4173 = vmatpush1.msra.mxu0 0.0
      %4174 = vmatprep.subr.mxu0 0.0
      %4175 = vmatpush1.msra.mxu0 0.0
      %4176 = vmatprep.subr.mxu0 0.0
      %4177 = vmatpush1.msra.mxu0 0.0
      %4178 = vmatprep.subr.mxu0 0.0
      %4179 = vmatpush1.msra.mxu0 0.0
      %4180 = vmatprep.subr.mxu0 0.0
      %4181 = vmatpush1.msra.mxu0 0.0
      %4182 = vmatprep.subr.mxu0 0.0
      %4183 = vmatpush1.msra.mxu0 0.0
      %4184 = vmatprep.subr.mxu0 0.0
      %4185 = vmatpush1.msra.mxu0 0.0
      %4186 = vmatprep.subr.mxu0 0.0
      %4187 = vmatpush1.msra.mxu0 0.0
      %4188 = vmatprep.subr.mxu0 0.0
      %4189 = vmatpush1.msra.mxu0 0.0
      %4190 = vmatprep.subr.mxu0 0.0
      %4191 = vmatpush1.msra.mxu0 0.0
      %4192 = vmatprep.subr.mxu0 0.0
      %4193 = vmatpush1.msra.mxu0 0.0
      %4194 = vmatprep.subr.mxu0 0.0
      %4195 = vmatpush1.msra.mxu0 0.0
      %4196 = vmatprep.subr.mxu0 0.0
      %4197 = vmatpush1.msra.mxu0 0.0
      %4198 = vmatprep.subr.mxu0 0.0
      %4199 = vmatpush1.msra.mxu0 0.0
      %4200 = vmatprep.subr.mxu0 0.0
      %4201 = vmatpush1.msra.mxu0 0.0
      %4202 = vmatprep.subr.mxu0 0.0
      %4203 = vmatpush1.msra.mxu0 0.0
      %4204 = vmatprep.subr.mxu0 0.0
      %4205 = vmatpush1.msra.mxu0 0.0
      %4206 = vmatprep.subr.mxu0 0.0
      %4207 = vmatpush1.msra.mxu0 0.0
      %4208 = vmatprep.mubr.f32.mxu0 0.0
      %v4209 = vand.u32 %v3978, 4294901760
      %v4210 = vsub.f32 %v3978, %v4209
      %4211 = vmatmul.mubr.f32.gmra.mrb[0].mxu0 %v4210
      %v4212 = vpop.f32.mrb[0].mxu0
      %v4213 = vadd.f32 %v4136, %v4212
      %v4214 = vpop.f32.mrb[0].mxu0
      %v4215 = vadd.f32 %v4138, %v4214
      %4216 = vdwg.mxu0
      %v4217 = vand.u32 %v3974, 4294901760
      %4218 = vmatprep.subr.mxu0 %v4217
      %v4219 = vand.u32 %v3973, 4294901760
      %4220 = vmatpush1.msra.mxu0 %v4219
      %4221 = vmatprep.subr.mxu0 0.0
      %4222 = vmatpush1.msra.mxu0 0.0
      %4223 = vmatprep.subr.mxu0 0.0
      %4224 = vmatpush1.msra.mxu0 0.0
      %4225 = vmatprep.subr.mxu0 0.0
      %4226 = vmatpush1.msra.mxu0 0.0
      %4227 = vmatprep.subr.mxu0 0.0
      %4228 = vmatpush1.msra.mxu0 0.0
      %4229 = vmatprep.subr.mxu0 0.0
      %4230 = vmatpush1.msra.mxu0 0.0
      %4231 = vmatprep.subr.mxu0 0.0
      %4232 = vmatpush1.msra.mxu0 0.0
      %4233 = vmatprep.subr.mxu0 0.0
      %4234 = vmatpush1.msra.mxu0 0.0
      %4235 = vmatprep.subr.mxu0 0.0
      %4236 = vmatpush1.msra.mxu0 0.0
      %4237 = vmatprep.subr.mxu0 0.0
      %4238 = vmatpush1.msra.mxu0 0.0
      %4239 = vmatprep.subr.mxu0 0.0
      %4240 = vmatpush1.msra.mxu0 0.0
      %4241 = vmatprep.subr.mxu0 0.0
      %4242 = vmatpush1.msra.mxu0 0.0
      %4243 = vmatprep.subr.mxu0 0.0
      %4244 = vmatpush1.msra.mxu0 0.0
      %4245 = vmatprep.subr.mxu0 0.0
      %4246 = vmatpush1.msra.mxu0 0.0
      %4247 = vmatprep.subr.mxu0 0.0
      %4248 = vmatpush1.msra.mxu0 0.0
      %4249 = vmatprep.subr.mxu0 0.0
      %4250 = vmatpush1.msra.mxu0 0.0
      %4251 = vmatprep.subr.mxu0 0.0
      %4252 = vmatpush1.msra.mxu0 0.0
      %4253 = vmatprep.subr.mxu0 0.0
      %4254 = vmatpush1.msra.mxu0 0.0
      %4255 = vmatprep.subr.mxu0 0.0
      %4256 = vmatpush1.msra.mxu0 0.0
      %4257 = vmatprep.subr.mxu0 0.0
      %4258 = vmatpush1.msra.mxu0 0.0
      %4259 = vmatprep.subr.mxu0 0.0
      %4260 = vmatpush1.msra.mxu0 0.0
      %4261 = vmatprep.subr.mxu0 0.0
      %4262 = vmatpush1.msra.mxu0 0.0
      %4263 = vmatprep.subr.mxu0 0.0
      %4264 = vmatpush1.msra.mxu0 0.0
      %4265 = vmatprep.subr.mxu0 0.0
      %4266 = vmatpush1.msra.mxu0 0.0
      %4267 = vmatprep.subr.mxu0 0.0
      %4268 = vmatpush1.msra.mxu0 0.0
      %4269 = vmatprep.subr.mxu0 0.0
      %4270 = vmatpush1.msra.mxu0 0.0
      %4271 = vmatprep.subr.mxu0 0.0
      %4272 = vmatpush1.msra.mxu0 0.0
      %4273 = vmatprep.subr.mxu0 0.0
      %4274 = vmatpush1.msra.mxu0 0.0
      %4275 = vmatprep.subr.mxu0 0.0
      %4276 = vmatpush1.msra.mxu0 0.0
      %4277 = vmatprep.subr.mxu0 0.0
      %4278 = vmatpush1.msra.mxu0 0.0
      %4279 = vmatprep.subr.mxu0 0.0
      %4280 = vmatpush1.msra.mxu0 0.0
      %4281 = vmatprep.subr.mxu0 0.0
      %4282 = vmatpush1.msra.mxu0 0.0
      %4283 = vmatprep.mubr.f32.mxu0 0.0
      %v4284 = vand.u32 %v3978, 4294901760
      %v4285 = vsub.f32 %v3978, %v4284
      %v4286 = vand.u32 %v4285, 4294901760
      %4287 = vmatmul.mubr.f32.gmra.mrb[0].mxu0 %v4286
      %v4288 = vpop.f32.mrb[0].mxu0
      %v4289 = vadd.f32 %v4213, %v4288
      %v4290 = vpop.f32.mrb[0].mxu0
      %v4291 = vadd.f32 %v4215, %v4290
      %4292 = vdwg.mxu0
      %v4293 = vand.u32 %v3974, 4294901760
      %v4294 = vsub.f32 %v3974, %v4293
      %v4295 = vand.u32 %v4294, 4294901760
      %4296 = vmatprep.subr.mxu0 %v4295
      %v4297 = vand.u32 %v3973, 4294901760
      %v4298 = vsub.f32 %v3973, %v4297
      %v4299 = vand.u32 %v4298, 4294901760
      %4300 = vmatpush1.msra.mxu0 %v4299
      %4301 = vmatprep.subr.mxu0 0.0
      %4302 = vmatpush1.msra.mxu0 0.0
      %4303 = vmatprep.subr.mxu0 0.0
      %4304 = vmatpush1.msra.mxu0 0.0
      %4305 = vmatprep.subr.mxu0 0.0
      %4306 = vmatpush1.msra.mxu0 0.0
      %4307 = vmatprep.subr.mxu0 0.0
      %4308 = vmatpush1.msra.mxu0 0.0
      %4309 = vmatprep.subr.mxu0 0.0
      %4310 = vmatpush1.msra.mxu0 0.0
      %4311 = vmatprep.subr.mxu0 0.0
      %4312 = vmatpush1.msra.mxu0 0.0
      %4313 = vmatprep.subr.mxu0 0.0
      %4314 = vmatpush1.msra.mxu0 0.0
      %4315 = vmatprep.subr.mxu0 0.0
      %4316 = vmatpush1.msra.mxu0 0.0
      %4317 = vmatprep.subr.mxu0 0.0
      %4318 = vmatpush1.msra.mxu0 0.0
      %4319 = vmatprep.subr.mxu0 0.0
      %4320 = vmatpush1.msra.mxu0 0.0
      %4321 = vmatprep.subr.mxu0 0.0
      %4322 = vmatpush1.msra.mxu0 0.0
      %4323 = vmatprep.subr.mxu0 0.0
      %4324 = vmatpush1.msra.mxu0 0.0
      %4325 = vmatprep.subr.mxu0 0.0
      %4326 = vmatpush1.msra.mxu0 0.0
      %4327 = vmatprep.subr.mxu0 0.0
      %4328 = vmatpush1.msra.mxu0 0.0
      %4329 = vmatprep.subr.mxu0 0.0
      %4330 = vmatpush1.msra.mxu0 0.0
      %4331 = vmatprep.subr.mxu0 0.0
      %4332 = vmatpush1.msra.mxu0 0.0
      %4333 = vmatprep.subr.mxu0 0.0
      %4334 = vmatpush1.msra.mxu0 0.0
      %4335 = vmatprep.subr.mxu0 0.0
      %4336 = vmatpush1.msra.mxu0 0.0
      %4337 = vmatprep.subr.mxu0 0.0
      %4338 = vmatpush1.msra.mxu0 0.0
      %4339 = vmatprep.subr.mxu0 0.0
      %4340 = vmatpush1.msra.mxu0 0.0
      %4341 = vmatprep.subr.mxu0 0.0
      %4342 = vmatpush1.msra.mxu0 0.0
      %4343 = vmatprep.subr.mxu0 0.0
      %4344 = vmatpush1.msra.mxu0 0.0
      %4345 = vmatprep.subr.mxu0 0.0
      %4346 = vmatpush1.msra.mxu0 0.0
      %4347 = vmatprep.subr.mxu0 0.0
      %4348 = vmatpush1.msra.mxu0 0.0
      %4349 = vmatprep.subr.mxu0 0.0
      %4350 = vmatpush1.msra.mxu0 0.0
      %4351 = vmatprep.subr.mxu0 0.0
      %4352 = vmatpush1.msra.mxu0 0.0
      %4353 = vmatprep.subr.mxu0 0.0
      %4354 = vmatpush1.msra.mxu0 0.0
      %4355 = vmatprep.subr.mxu0 0.0
      %4356 = vmatpush1.msra.mxu0 0.0
      %4357 = vmatprep.subr.mxu0 0.0
      %4358 = vmatpush1.msra.mxu0 0.0
      %4359 = vmatprep.subr.mxu0 0.0
      %4360 = vmatpush1.msra.mxu0 0.0
      %4361 = vmatprep.subr.mxu0 0.0
      %4362 = vmatpush1.msra.mxu0 0.0
      %4363 = vmatprep.mubr.f32.mxu0 0.0
      %v4364 = vand.u32 %v3978, 4294901760
      %4365 = vmatmul.mubr.f32.gmra.mrb[0].mxu0 %v4364
      %v4366 = vpop.f32.mrb[0].mxu0
      %v4367 = vadd.f32 %v4289, %v4366
      %v4368 = vpop.f32.mrb[0].mxu0
      %v4369 = vadd.f32 %v4291, %v4368
      %4370 = vdwg.mxu0
      %v4371 = vand.u32 %v3974, 4294901760
      %4372 = vmatprep.subr.mxu0 %v4371
      %v4373 = vand.u32 %v3973, 4294901760
      %4374 = vmatpush1.msra.mxu0 %v4373
      %4375 = vmatprep.subr.mxu0 0.0
      %4376 = vmatpush1.msra.mxu0 0.0
      %4377 = vmatprep.subr.mxu0 0.0
      %4378 = vmatpush1.msra.mxu0 0.0
      %4379 = vmatprep.subr.mxu0 0.0
      %4380 = vmatpush1.msra.mxu0 0.0
      %4381 = vmatprep.subr.mxu0 0.0
      %4382 = vmatpush1.msra.mxu0 0.0
      %4383 = vmatprep.subr.mxu0 0.0
      %4384 = vmatpush1.msra.mxu0 0.0
      %4385 = vmatprep.subr.mxu0 0.0
      %4386 = vmatpush1.msra.mxu0 0.0
      %4387 = vmatprep.subr.mxu0 0.0
      %4388 = vmatpush1.msra.mxu0 0.0
      %4389 = vmatprep.subr.mxu0 0.0
      %4390 = vmatpush1.msra.mxu0 0.0
      %4391 = vmatprep.subr.mxu0 0.0
      %4392 = vmatpush1.msra.mxu0 0.0
      %4393 = vmatprep.subr.mxu0 0.0
      %4394 = vmatpush1.msra.mxu0 0.0
      %4395 = vmatprep.subr.mxu0 0.0
      %4396 = vmatpush1.msra.mxu0 0.0
      %4397 = vmatprep.subr.mxu0 0.0
      %4398 = vmatpush1.msra.mxu0 0.0
      %4399 = vmatprep.subr.mxu0 0.0
      %4400 = vmatpush1.msra.mxu0 0.0
      %4401 = vmatprep.subr.mxu0 0.0
      %4402 = vmatpush1.msra.mxu0 0.0
      %4403 = vmatprep.subr.mxu0 0.0
      %4404 = vmatpush1.msra.mxu0 0.0
      %4405 = vmatprep.subr.mxu0 0.0
      %4406 = vmatpush1.msra.mxu0 0.0
      %4407 = vmatprep.subr.mxu0 0.0
      %4408 = vmatpush1.msra.mxu0 0.0
      %4409 = vmatprep.subr.mxu0 0.0
      %4410 = vmatpush1.msra.mxu0 0.0
      %4411 = vmatprep.subr.mxu0 0.0
      %4412 = vmatpush1.msra.mxu0 0.0
      %4413 = vmatprep.subr.mxu0 0.0
      %4414 = vmatpush1.msra.mxu0 0.0
      %4415 = vmatprep.subr.mxu0 0.0
      %4416 = vmatpush1.msra.mxu0 0.0
      %4417 = vmatprep.subr.mxu0 0.0
      %4418 = vmatpush1.msra.mxu0 0.0
      %4419 = vmatprep.subr.mxu0 0.0
      %4420 = vmatpush1.msra.mxu0 0.0
      %4421 = vmatprep.subr.mxu0 0.0
      %4422 = vmatpush1.msra.mxu0 0.0
      %4423 = vmatprep.subr.mxu0 0.0
      %4424 = vmatpush1.msra.mxu0 0.0
      %4425 = vmatprep.subr.mxu0 0.0
      %4426 = vmatpush1.msra.mxu0 0.0
      %4427 = vmatprep.subr.mxu0 0.0
      %4428 = vmatpush1.msra.mxu0 0.0
      %4429 = vmatprep.subr.mxu0 0.0
      %4430 = vmatpush1.msra.mxu0 0.0
      %4431 = vmatprep.subr.mxu0 0.0
      %4432 = vmatpush1.msra.mxu0 0.0
      %4433 = vmatprep.subr.mxu0 0.0
      %4434 = vmatpush1.msra.mxu0 0.0
      %4435 = vmatprep.subr.mxu0 0.0
      %4436 = vmatpush1.msra.mxu0 0.0
      %4437 = vmatprep.mubr.f32.mxu0 0.0
      %v4438 = vand.u32 %v3978, 4294901760
      %4439 = vmatmul.mubr.f32.gmra.mrb[0].mxu0 %v4438
      %v4440 = vpop.f32.mrb[0].mxu0
      %v4441 = vadd.f32 %v4367, %v4440
      %v4442 = vpop.f32.mrb[0].mxu0
      %v4443 = vadd.f32 %v4369, %v4442
      %4444 = vdwg.mxu0
      %v4445 = vadd.f32 %v3949, %v4441
      %v4446 = vadd.f32 %v3951, %v4443
      %4447 = vrot.lane.b32.xlu0 %v468, 1
      %v4448 = vpop.permute.xlu0 %4447
      %4449 = vrot.lane.b32.xlu0 %v469, 1
      %v4450 = vpop.permute.xlu0 %4449
      %vm4451 = vcmp.lt.s32.totalorder %v2974, 1
      %v4452 = vsel %vm4451, %v4448, %v4450
      %v4453 = vsel %vm4451, %v4450, %v4448
      %s4454 = scalar_lea.vmem %s13, 3
      %v4455 = vld [vmem:[%s4454] ss:$8 sm:$0x3]
      %v4457 = vlaneseq
      %v4458 = vshrl.u32 %v4457, 7
      %v4459 = vsub.s32 0, %v4458
      %v4460 = vrot.slane %v4455, %v4459
      %v4461 = vlaneseq
      %v4462 = vshrl.u32 %v4461, 7
      %v4463 = vsub.s32 1, %v4462
      %v4464 = vrot.slane %v4455, %v4463
      %v4467 = vmul.f32 %v4453, %v4460
      %v4468 = vmul.f32 %v4452, %v4464
      %s4469 = scalar_lea.vmem %s6, 24
      %v4470 = vld [vmem:[%s4469] sm:$0xff]
      %v4472 = vsel %vm1371, %v4470, 0
      %v4474 = vand.u32 %v4468, 4294901760
      %4475 = vmatprep.subr.mxu0 %v4474
      %v4476 = vand.u32 %v4467, 4294901760
      %4477 = vmatpush1.msra.mxu0 %v4476
      %4478 = vmatprep.subr.mxu0 0.0
      %4479 = vmatpush1.msra.mxu0 0.0
      %4480 = vmatprep.subr.mxu0 0.0
      %4481 = vmatpush1.msra.mxu0 0.0
      %4482 = vmatprep.subr.mxu0 0.0
      %4483 = vmatpush1.msra.mxu0 0.0
      %4484 = vmatprep.subr.mxu0 0.0
      %4485 = vmatpush1.msra.mxu0 0.0
      %4486 = vmatprep.subr.mxu0 0.0
      %4487 = vmatpush1.msra.mxu0 0.0
      %4488 = vmatprep.subr.mxu0 0.0
      %4489 = vmatpush1.msra.mxu0 0.0
      %4490 = vmatprep.subr.mxu0 0.0
      %4491 = vmatpush1.msra.mxu0 0.0
      %4492 = vmatprep.subr.mxu0 0.0
      %4493 = vmatpush1.msra.mxu0 0.0
      %4494 = vmatprep.subr.mxu0 0.0
      %4495 = vmatpush1.msra.mxu0 0.0
      %4496 = vmatprep.subr.mxu0 0.0
      %4497 = vmatpush1.msra.mxu0 0.0
      %4498 = vmatprep.subr.mxu0 0.0
      %4499 = vmatpush1.msra.mxu0 0.0
      %4500 = vmatprep.subr.mxu0 0.0
      %4501 = vmatpush1.msra.mxu0 0.0
      %4502 = vmatprep.subr.mxu0 0.0
      %4503 = vmatpush1.msra.mxu0 0.0
      %4504 = vmatprep.subr.mxu0 0.0
      %4505 = vmatpush1.msra.mxu0 0.0
      %4506 = vmatprep.subr.mxu0 0.0
      %4507 = vmatpush1.msra.mxu0 0.0
      %4508 = vmatprep.subr.mxu0 0.0
      %4509 = vmatpush1.msra.mxu0 0.0
      %4510 = vmatprep.subr.mxu0 0.0
      %4511 = vmatpush1.msra.mxu0 0.0
      %4512 = vmatprep.subr.mxu0 0.0
      %4513 = vmatpush1.msra.mxu0 0.0
      %4514 = vmatprep.subr.mxu0 0.0
      %4515 = vmatpush1.msra.mxu0 0.0
      %4516 = vmatprep.subr.mxu0 0.0
      %4517 = vmatpush1.msra.mxu0 0.0
      %4518 = vmatprep.subr.mxu0 0.0
      %4519 = vmatpush1.msra.mxu0 0.0
      %4520 = vmatprep.subr.mxu0 0.0
      %4521 = vmatpush1.msra.mxu0 0.0
      %4522 = vmatprep.subr.mxu0 0.0
      %4523 = vmatpush1.msra.mxu0 0.0
      %4524 = vmatprep.subr.mxu0 0.0
      %4525 = vmatpush1.msra.mxu0 0.0
      %4526 = vmatprep.subr.mxu0 0.0
      %4527 = vmatpush1.msra.mxu0 0.0
      %4528 = vmatprep.subr.mxu0 0.0
      %4529 = vmatpush1.msra.mxu0 0.0
      %4530 = vmatprep.subr.mxu0 0.0
      %4531 = vmatpush1.msra.mxu0 0.0
      %4532 = vmatprep.subr.mxu0 0.0
      %4533 = vmatpush1.msra.mxu0 0.0
      %4534 = vmatprep.subr.mxu0 0.0
      %4535 = vmatpush1.msra.mxu0 0.0
      %4536 = vmatprep.subr.mxu0 0.0
      %4537 = vmatpush1.msra.mxu0 0.0
      %4538 = vmatprep.subr.mxu0 0.0
      %4539 = vmatpush1.msra.mxu0 0.0
      %4540 = vmatprep.mubr.f32.mxu0 0.0
      %v4541 = vand.u32 %v4472, 4294901760
      %v4542 = vsub.f32 %v4472, %v4541
      %v4543 = vand.u32 %v4542, 4294901760
      %v4544 = vsub.f32 %v4542, %v4543
      %v4545 = vand.u32 %v4544, 4294901760
      %4546 = vmatmul.mubr.f32.gmra.mrb[0].mxu0 %v4545
      %v4547 = vpop.f32.mrb[0].mxu0
      %v4548 = vadd.f32 0.0, %v4547
      %v4549 = vpop.f32.mrb[0].mxu0
      %v4550 = vadd.f32 0.0, %v4549
      %4551 = vdwg.mxu0
      %v4552 = vand.u32 %v4468, 4294901760
      %v4553 = vsub.f32 %v4468, %v4552
      %v4554 = vand.u32 %v4553, 4294901760
      %v4555 = vsub.f32 %v4553, %v4554
      %v4556 = vand.u32 %v4555, 4294901760
      %4557 = vmatprep.subr.mxu0 %v4556
      %v4558 = vand.u32 %v4467, 4294901760
      %v4559 = vsub.f32 %v4467, %v4558
      %v4560 = vand.u32 %v4559, 4294901760
      %v4561 = vsub.f32 %v4559, %v4560
      %v4562 = vand.u32 %v4561, 4294901760
      %4563 = vmatpush1.msra.mxu0 %v4562
      %4564 = vmatprep.subr.mxu0 0.0
      %4565 = vmatpush1.msra.mxu0 0.0
      %4566 = vmatprep.subr.mxu0 0.0
      %4567 = vmatpush1.msra.mxu0 0.0
      %4568 = vmatprep.subr.mxu0 0.0
      %4569 = vmatpush1.msra.mxu0 0.0
      %4570 = vmatprep.subr.mxu0 0.0
      %4571 = vmatpush1.msra.mxu0 0.0
      %4572 = vmatprep.subr.mxu0 0.0
      %4573 = vmatpush1.msra.mxu0 0.0
      %4574 = vmatprep.subr.mxu0 0.0
      %4575 = vmatpush1.msra.mxu0 0.0
      %4576 = vmatprep.subr.mxu0 0.0
      %4577 = vmatpush1.msra.mxu0 0.0
      %4578 = vmatprep.subr.mxu0 0.0
      %4579 = vmatpush1.msra.mxu0 0.0
      %4580 = vmatprep.subr.mxu0 0.0
      %4581 = vmatpush1.msra.mxu0 0.0
      %4582 = vmatprep.subr.mxu0 0.0
      %4583 = vmatpush1.msra.mxu0 0.0
      %4584 = vmatprep.subr.mxu0 0.0
      %4585 = vmatpush1.msra.mxu0 0.0
      %4586 = vmatprep.subr.mxu0 0.0
      %4587 = vmatpush1.msra.mxu0 0.0
      %4588 = vmatprep.subr.mxu0 0.0
      %4589 = vmatpush1.msra.mxu0 0.0
      %4590 = vmatprep.subr.mxu0 0.0
      %4591 = vmatpush1.msra.mxu0 0.0
      %4592 = vmatprep.subr.mxu0 0.0
      %4593 = vmatpush1.msra.mxu0 0.0
      %4594 = vmatprep.subr.mxu0 0.0
      %4595 = vmatpush1.msra.mxu0 0.0
      %4596 = vmatprep.subr.mxu0 0.0
      %4597 = vmatpush1.msra.mxu0 0.0
      %4598 = vmatprep.subr.mxu0 0.0
      %4599 = vmatpush1.msra.mxu0 0.0
      %4600 = vmatprep.subr.mxu0 0.0
      %4601 = vmatpush1.msra.mxu0 0.0
      %4602 = vmatprep.subr.mxu0 0.0
      %4603 = vmatpush1.msra.mxu0 0.0
      %4604 = vmatprep.subr.mxu0 0.0
      %4605 = vmatpush1.msra.mxu0 0.0
      %4606 = vmatprep.subr.mxu0 0.0
      %4607 = vmatpush1.msra.mxu0 0.0
      %4608 = vmatprep.subr.mxu0 0.0
      %4609 = vmatpush1.msra.mxu0 0.0
      %4610 = vmatprep.subr.mxu0 0.0
      %4611 = vmatpush1.msra.mxu0 0.0
      %4612 = vmatprep.subr.mxu0 0.0
      %4613 = vmatpush1.msra.mxu0 0.0
      %4614 = vmatprep.subr.mxu0 0.0
      %4615 = vmatpush1.msra.mxu0 0.0
      %4616 = vmatprep.subr.mxu0 0.0
      %4617 = vmatpush1.msra.mxu0 0.0
      %4618 = vmatprep.subr.mxu0 0.0
      %4619 = vmatpush1.msra.mxu0 0.0
      %4620 = vmatprep.subr.mxu0 0.0
      %4621 = vmatpush1.msra.mxu0 0.0
      %4622 = vmatprep.subr.mxu0 0.0
      %4623 = vmatpush1.msra.mxu0 0.0
      %4624 = vmatprep.subr.mxu0 0.0
      %4625 = vmatpush1.msra.mxu0 0.0
      %4626 = vmatprep.mubr.f32.mxu0 0.0
      %v4627 = vand.u32 %v4472, 4294901760
      %4628 = vmatmul.mubr.f32.gmra.mrb[0].mxu0 %v4627
      %v4629 = vpop.f32.mrb[0].mxu0
      %v4630 = vadd.f32 %v4548, %v4629
      %v4631 = vpop.f32.mrb[0].mxu0
      %v4632 = vadd.f32 %v4550, %v4631
      %4633 = vdwg.mxu0
      %v4634 = vand.u32 %v4468, 4294901760
      %v4635 = vsub.f32 %v4468, %v4634
      %4636 = vmatprep.subr.mxu0 %v4635
      %v4637 = vand.u32 %v4467, 4294901760
      %v4638 = vsub.f32 %v4467, %v4637
      %4639 = vmatpush1.msra.mxu0 %v4638
      %4640 = vmatprep.subr.mxu0 0.0
      %4641 = vmatpush1.msra.mxu0 0.0
      %4642 = vmatprep.subr.mxu0 0.0
      %4643 = vmatpush1.msra.mxu0 0.0
      %4644 = vmatprep.subr.mxu0 0.0
      %4645 = vmatpush1.msra.mxu0 0.0
      %4646 = vmatprep.subr.mxu0 0.0
      %4647 = vmatpush1.msra.mxu0 0.0
      %4648 = vmatprep.subr.mxu0 0.0
      %4649 = vmatpush1.msra.mxu0 0.0
      %4650 = vmatprep.subr.mxu0 0.0
      %4651 = vmatpush1.msra.mxu0 0.0
      %4652 = vmatprep.subr.mxu0 0.0
      %4653 = vmatpush1.msra.mxu0 0.0
      %4654 = vmatprep.subr.mxu0 0.0
      %4655 = vmatpush1.msra.mxu0 0.0
      %4656 = vmatprep.subr.mxu0 0.0
      %4657 = vmatpush1.msra.mxu0 0.0
      %4658 = vmatprep.subr.mxu0 0.0
      %4659 = vmatpush1.msra.mxu0 0.0
      %4660 = vmatprep.subr.mxu0 0.0
      %4661 = vmatpush1.msra.mxu0 0.0
      %4662 = vmatprep.subr.mxu0 0.0
      %4663 = vmatpush1.msra.mxu0 0.0
      %4664 = vmatprep.subr.mxu0 0.0
      %4665 = vmatpush1.msra.mxu0 0.0
      %4666 = vmatprep.subr.mxu0 0.0
      %4667 = vmatpush1.msra.mxu0 0.0
      %4668 = vmatprep.subr.mxu0 0.0
      %4669 = vmatpush1.msra.mxu0 0.0
      %4670 = vmatprep.subr.mxu0 0.0
      %4671 = vmatpush1.msra.mxu0 0.0
      %4672 = vmatprep.subr.mxu0 0.0
      %4673 = vmatpush1.msra.mxu0 0.0
      %4674 = vmatprep.subr.mxu0 0.0
      %4675 = vmatpush1.msra.mxu0 0.0
      %4676 = vmatprep.subr.mxu0 0.0
      %4677 = vmatpush1.msra.mxu0 0.0
      %4678 = vmatprep.subr.mxu0 0.0
      %4679 = vmatpush1.msra.mxu0 0.0
      %4680 = vmatprep.subr.mxu0 0.0
      %4681 = vmatpush1.msra.mxu0 0.0
      %4682 = vmatprep.subr.mxu0 0.0
      %4683 = vmatpush1.msra.mxu0 0.0
      %4684 = vmatprep.subr.mxu0 0.0
      %4685 = vmatpush1.msra.mxu0 0.0
      %4686 = vmatprep.subr.mxu0 0.0
      %4687 = vmatpush1.msra.mxu0 0.0
      %4688 = vmatprep.subr.mxu0 0.0
      %4689 = vmatpush1.msra.mxu0 0.0
      %4690 = vmatprep.subr.mxu0 0.0
      %4691 = vmatpush1.msra.mxu0 0.0
      %4692 = vmatprep.subr.mxu0 0.0
      %4693 = vmatpush1.msra.mxu0 0.0
      %4694 = vmatprep.subr.mxu0 0.0
      %4695 = vmatpush1.msra.mxu0 0.0
      %4696 = vmatprep.subr.mxu0 0.0
      %4697 = vmatpush1.msra.mxu0 0.0
      %4698 = vmatprep.subr.mxu0 0.0
      %4699 = vmatpush1.msra.mxu0 0.0
      %4700 = vmatprep.subr.mxu0 0.0
      %4701 = vmatpush1.msra.mxu0 0.0
      %4702 = vmatprep.mubr.f32.mxu0 0.0
      %v4703 = vand.u32 %v4472, 4294901760
      %v4704 = vsub.f32 %v4472, %v4703
      %4705 = vmatmul.mubr.f32.gmra.mrb[0].mxu0 %v4704
      %v4706 = vpop.f32.mrb[0].mxu0
      %v4707 = vadd.f32 %v4630, %v4706
      %v4708 = vpop.f32.mrb[0].mxu0
      %v4709 = vadd.f32 %v4632, %v4708
      %4710 = vdwg.mxu0
      %v4711 = vand.u32 %v4468, 4294901760
      %4712 = vmatprep.subr.mxu0 %v4711
      %v4713 = vand.u32 %v4467, 4294901760
      %4714 = vmatpush1.msra.mxu0 %v4713
      %4715 = vmatprep.subr.mxu0 0.0
      %4716 = vmatpush1.msra.mxu0 0.0
      %4717 = vmatprep.subr.mxu0 0.0
      %4718 = vmatpush1.msra.mxu0 0.0
      %4719 = vmatprep.subr.mxu0 0.0
      %4720 = vmatpush1.msra.mxu0 0.0
      %4721 = vmatprep.subr.mxu0 0.0
      %4722 = vmatpush1.msra.mxu0 0.0
      %4723 = vmatprep.subr.mxu0 0.0
      %4724 = vmatpush1.msra.mxu0 0.0
      %4725 = vmatprep.subr.mxu0 0.0
      %4726 = vmatpush1.msra.mxu0 0.0
      %4727 = vmatprep.subr.mxu0 0.0
      %4728 = vmatpush1.msra.mxu0 0.0
      %4729 = vmatprep.subr.mxu0 0.0
      %4730 = vmatpush1.msra.mxu0 0.0
      %4731 = vmatprep.subr.mxu0 0.0
      %4732 = vmatpush1.msra.mxu0 0.0
      %4733 = vmatprep.subr.mxu0 0.0
      %4734 = vmatpush1.msra.mxu0 0.0
      %4735 = vmatprep.subr.mxu0 0.0
      %4736 = vmatpush1.msra.mxu0 0.0
      %4737 = vmatprep.subr.mxu0 0.0
      %4738 = vmatpush1.msra.mxu0 0.0
      %4739 = vmatprep.subr.mxu0 0.0
      %4740 = vmatpush1.msra.mxu0 0.0
      %4741 = vmatprep.subr.mxu0 0.0
      %4742 = vmatpush1.msra.mxu0 0.0
      %4743 = vmatprep.subr.mxu0 0.0
      %4744 = vmatpush1.msra.mxu0 0.0
      %4745 = vmatprep.subr.mxu0 0.0
      %4746 = vmatpush1.msra.mxu0 0.0
      %4747 = vmatprep.subr.mxu0 0.0
      %4748 = vmatpush1.msra.mxu0 0.0
      %4749 = vmatprep.subr.mxu0 0.0
      %4750 = vmatpush1.msra.mxu0 0.0
      %4751 = vmatprep.subr.mxu0 0.0
      %4752 = vmatpush1.msra.mxu0 0.0
      %4753 = vmatprep.subr.mxu0 0.0
      %4754 = vmatpush1.msra.mxu0 0.0
      %4755 = vmatprep.subr.mxu0 0.0
      %4756 = vmatpush1.msra.mxu0 0.0
      %4757 = vmatprep.subr.mxu0 0.0
      %4758 = vmatpush1.msra.mxu0 0.0
      %4759 = vmatprep.subr.mxu0 0.0
      %4760 = vmatpush1.msra.mxu0 0.0
      %4761 = vmatprep.subr.mxu0 0.0
      %4762 = vmatpush1.msra.mxu0 0.0
      %4763 = vmatprep.subr.mxu0 0.0
      %4764 = vmatpush1.msra.mxu0 0.0
      %4765 = vmatprep.subr.mxu0 0.0
      %4766 = vmatpush1.msra.mxu0 0.0
      %4767 = vmatprep.subr.mxu0 0.0
      %4768 = vmatpush1.msra.mxu0 0.0
      %4769 = vmatprep.subr.mxu0 0.0
      %4770 = vmatpush1.msra.mxu0 0.0
      %4771 = vmatprep.subr.mxu0 0.0
      %4772 = vmatpush1.msra.mxu0 0.0
      %4773 = vmatprep.subr.mxu0 0.0
      %4774 = vmatpush1.msra.mxu0 0.0
      %4775 = vmatprep.subr.mxu0 0.0
      %4776 = vmatpush1.msra.mxu0 0.0
      %4777 = vmatprep.mubr.f32.mxu0 0.0
      %v4778 = vand.u32 %v4472, 4294901760
      %v4779 = vsub.f32 %v4472, %v4778
      %v4780 = vand.u32 %v4779, 4294901760
      %4781 = vmatmul.mubr.f32.gmra.mrb[0].mxu0 %v4780
      %v4782 = vpop.f32.mrb[0].mxu0
      %v4783 = vadd.f32 %v4707, %v4782
      %v4784 = vpop.f32.mrb[0].mxu0
      %v4785 = vadd.f32 %v4709, %v4784
      %4786 = vdwg.mxu0
      %v4787 = vand.u32 %v4468, 4294901760
      %v4788 = vsub.f32 %v4468, %v4787
      %v4789 = vand.u32 %v4788, 4294901760
      %4790 = vmatprep.subr.mxu0 %v4789
      %v4791 = vand.u32 %v4467, 4294901760
      %v4792 = vsub.f32 %v4467, %v4791
      %v4793 = vand.u32 %v4792, 4294901760
      %4794 = vmatpush1.msra.mxu0 %v4793
      %4795 = vmatprep.subr.mxu0 0.0
      %4796 = vmatpush1.msra.mxu0 0.0
      %4797 = vmatprep.subr.mxu0 0.0
      %4798 = vmatpush1.msra.mxu0 0.0
      %4799 = vmatprep.subr.mxu0 0.0
      %4800 = vmatpush1.msra.mxu0 0.0
      %4801 = vmatprep.subr.mxu0 0.0
      %4802 = vmatpush1.msra.mxu0 0.0
      %4803 = vmatprep.subr.mxu0 0.0
      %4804 = vmatpush1.msra.mxu0 0.0
      %4805 = vmatprep.subr.mxu0 0.0
      %4806 = vmatpush1.msra.mxu0 0.0
      %4807 = vmatprep.subr.mxu0 0.0
      %4808 = vmatpush1.msra.mxu0 0.0
      %4809 = vmatprep.subr.mxu0 0.0
      %4810 = vmatpush1.msra.mxu0 0.0
      %4811 = vmatprep.subr.mxu0 0.0
      %4812 = vmatpush1.msra.mxu0 0.0
      %4813 = vmatprep.subr.mxu0 0.0
      %4814 = vmatpush1.msra.mxu0 0.0
      %4815 = vmatprep.subr.mxu0 0.0
      %4816 = vmatpush1.msra.mxu0 0.0
      %4817 = vmatprep.subr.mxu0 0.0
      %4818 = vmatpush1.msra.mxu0 0.0
      %4819 = vmatprep.subr.mxu0 0.0
      %4820 = vmatpush1.msra.mxu0 0.0
      %4821 = vmatprep.subr.mxu0 0.0
      %4822 = vmatpush1.msra.mxu0 0.0
      %4823 = vmatprep.subr.mxu0 0.0
      %4824 = vmatpush1.msra.mxu0 0.0
      %4825 = vmatprep.subr.mxu0 0.0
      %4826 = vmatpush1.msra.mxu0 0.0
      %4827 = vmatprep.subr.mxu0 0.0
      %4828 = vmatpush1.msra.mxu0 0.0
      %4829 = vmatprep.subr.mxu0 0.0
      %4830 = vmatpush1.msra.mxu0 0.0
      %4831 = vmatprep.subr.mxu0 0.0
      %4832 = vmatpush1.msra.mxu0 0.0
      %4833 = vmatprep.subr.mxu0 0.0
      %4834 = vmatpush1.msra.mxu0 0.0
      %4835 = vmatprep.subr.mxu0 0.0
      %4836 = vmatpush1.msra.mxu0 0.0
      %4837 = vmatprep.subr.mxu0 0.0
      %4838 = vmatpush1.msra.mxu0 0.0
      %4839 = vmatprep.subr.mxu0 0.0
      %4840 = vmatpush1.msra.mxu0 0.0
      %4841 = vmatprep.subr.mxu0 0.0
      %4842 = vmatpush1.msra.mxu0 0.0
      %4843 = vmatprep.subr.mxu0 0.0
      %4844 = vmatpush1.msra.mxu0 0.0
      %4845 = vmatprep.subr.mxu0 0.0
      %4846 = vmatpush1.msra.mxu0 0.0
      %4847 = vmatprep.subr.mxu0 0.0
      %4848 = vmatpush1.msra.mxu0 0.0
      %4849 = vmatprep.subr.mxu0 0.0
      %4850 = vmatpush1.msra.mxu0 0.0
      %4851 = vmatprep.subr.mxu0 0.0
      %4852 = vmatpush1.msra.mxu0 0.0
      %4853 = vmatprep.subr.mxu0 0.0
      %4854 = vmatpush1.msra.mxu0 0.0
      %4855 = vmatprep.subr.mxu0 0.0
      %4856 = vmatpush1.msra.mxu0 0.0
      %4857 = vmatprep.mubr.f32.mxu0 0.0
      %v4858 = vand.u32 %v4472, 4294901760
      %4859 = vmatmul.mubr.f32.gmra.mrb[0].mxu0 %v4858
      %v4860 = vpop.f32.mrb[0].mxu0
      %v4861 = vadd.f32 %v4783, %v4860
      %v4862 = vpop.f32.mrb[0].mxu0
      %v4863 = vadd.f32 %v4785, %v4862
      %4864 = vdwg.mxu0
      %v4865 = vand.u32 %v4468, 4294901760
      %4866 = vmatprep.subr.mxu0 %v4865
      %v4867 = vand.u32 %v4467, 4294901760
      %4868 = vmatpush1.msra.mxu0 %v4867
      %4869 = vmatprep.subr.mxu0 0.0
      %4870 = vmatpush1.msra.mxu0 0.0
      %4871 = vmatprep.subr.mxu0 0.0
      %4872 = vmatpush1.msra.mxu0 0.0
      %4873 = vmatprep.subr.mxu0 0.0
      %4874 = vmatpush1.msra.mxu0 0.0
      %4875 = vmatprep.subr.mxu0 0.0
      %4876 = vmatpush1.msra.mxu0 0.0
      %4877 = vmatprep.subr.mxu0 0.0
      %4878 = vmatpush1.msra.mxu0 0.0
      %4879 = vmatprep.subr.mxu0 0.0
      %4880 = vmatpush1.msra.mxu0 0.0
      %4881 = vmatprep.subr.mxu0 0.0
      %4882 = vmatpush1.msra.mxu0 0.0
      %4883 = vmatprep.subr.mxu0 0.0
      %4884 = vmatpush1.msra.mxu0 0.0
      %4885 = vmatprep.subr.mxu0 0.0
      %4886 = vmatpush1.msra.mxu0 0.0
      %4887 = vmatprep.subr.mxu0 0.0
      %4888 = vmatpush1.msra.mxu0 0.0
      %4889 = vmatprep.subr.mxu0 0.0
      %4890 = vmatpush1.msra.mxu0 0.0
      %4891 = vmatprep.subr.mxu0 0.0
      %4892 = vmatpush1.msra.mxu0 0.0
      %4893 = vmatprep.subr.mxu0 0.0
      %4894 = vmatpush1.msra.mxu0 0.0
      %4895 = vmatprep.subr.mxu0 0.0
      %4896 = vmatpush1.msra.mxu0 0.0
      %4897 = vmatprep.subr.mxu0 0.0
      %4898 = vmatpush1.msra.mxu0 0.0
      %4899 = vmatprep.subr.mxu0 0.0
      %4900 = vmatpush1.msra.mxu0 0.0
      %4901 = vmatprep.subr.mxu0 0.0
      %4902 = vmatpush1.msra.mxu0 0.0
      %4903 = vmatprep.subr.mxu0 0.0
      %4904 = vmatpush1.msra.mxu0 0.0
      %4905 = vmatprep.subr.mxu0 0.0
      %4906 = vmatpush1.msra.mxu0 0.0
      %4907 = vmatprep.subr.mxu0 0.0
      %4908 = vmatpush1.msra.mxu0 0.0
      %4909 = vmatprep.subr.mxu0 0.0
      %4910 = vmatpush1.msra.mxu0 0.0
      %4911 = vmatprep.subr.mxu0 0.0
      %4912 = vmatpush1.msra.mxu0 0.0
      %4913 = vmatprep.subr.mxu0 0.0
      %4914 = vmatpush1.msra.mxu0 0.0
      %4915 = vmatprep.subr.mxu0 0.0
      %4916 = vmatpush1.msra.mxu0 0.0
      %4917 = vmatprep.subr.mxu0 0.0
      %4918 = vmatpush1.msra.mxu0 0.0
      %4919 = vmatprep.subr.mxu0 0.0
      %4920 = vmatpush1.msra.mxu0 0.0
      %4921 = vmatprep.subr.mxu0 0.0
      %4922 = vmatpush1.msra.mxu0 0.0
      %4923 = vmatprep.subr.mxu0 0.0
      %4924 = vmatpush1.msra.mxu0 0.0
      %4925 = vmatprep.subr.mxu0 0.0
      %4926 = vmatpush1.msra.mxu0 0.0
      %4927 = vmatprep.subr.mxu0 0.0
      %4928 = vmatpush1.msra.mxu0 0.0
      %4929 = vmatprep.subr.mxu0 0.0
      %4930 = vmatpush1.msra.mxu0 0.0
      %4931 = vmatprep.mubr.f32.mxu0 0.0
      %v4932 = vand.u32 %v4472, 4294901760
      %4933 = vmatmul.mubr.f32.gmra.mrb[0].mxu0 %v4932
      %v4934 = vpop.f32.mrb[0].mxu0
      %v4935 = vadd.f32 %v4861, %v4934
      %v4936 = vpop.f32.mrb[0].mxu0
      %v4937 = vadd.f32 %v4863, %v4936
      %4938 = vdwg.mxu0
      %v4939 = vadd.f32 %v4445, %v4935
      %v4940 = vadd.f32 %v4446, %v4937
      %s4941 = scalar_lea.vmem %s6, 32
      %v4942 = vld [vmem:[%s4941] sm:$0xff]
      %v4944 = vsel %vm1371, %v4942, 0
      %v4946 = vand.u32 %v469, 4294901760
      %4947 = vmatprep.subr.mxu0 %v4946
      %v4948 = vand.u32 %v468, 4294901760
      %4949 = vmatpush1.msra.mxu0 %v4948
      %4950 = vmatprep.subr.mxu0 0.0
      %4951 = vmatpush1.msra.mxu0 0.0
      %4952 = vmatprep.subr.mxu0 0.0
      %4953 = vmatpush1.msra.mxu0 0.0
      %4954 = vmatprep.subr.mxu0 0.0
      %4955 = vmatpush1.msra.mxu0 0.0
      %4956 = vmatprep.subr.mxu0 0.0
      %4957 = vmatpush1.msra.mxu0 0.0
      %4958 = vmatprep.subr.mxu0 0.0
      %4959 = vmatpush1.msra.mxu0 0.0
      %4960 = vmatprep.subr.mxu0 0.0
      %4961 = vmatpush1.msra.mxu0 0.0
      %4962 = vmatprep.subr.mxu0 0.0
      %4963 = vmatpush1.msra.mxu0 0.0
      %4964 = vmatprep.subr.mxu0 0.0
      %4965 = vmatpush1.msra.mxu0 0.0
      %4966 = vmatprep.subr.mxu0 0.0
      %4967 = vmatpush1.msra.mxu0 0.0
      %4968 = vmatprep.subr.mxu0 0.0
      %4969 = vmatpush1.msra.mxu0 0.0
      %4970 = vmatprep.subr.mxu0 0.0
      %4971 = vmatpush1.msra.mxu0 0.0
      %4972 = vmatprep.subr.mxu0 0.0
      %4973 = vmatpush1.msra.mxu0 0.0
      %4974 = vmatprep.subr.mxu0 0.0
      %4975 = vmatpush1.msra.mxu0 0.0
      %4976 = vmatprep.subr.mxu0 0.0
      %4977 = vmatpush1.msra.mxu0 0.0
      %4978 = vmatprep.subr.mxu0 0.0
      %4979 = vmatpush1.msra.mxu0 0.0
      %4980 = vmatprep.subr.mxu0 0.0
      %4981 = vmatpush1.msra.mxu0 0.0
      %4982 = vmatprep.subr.mxu0 0.0
      %4983 = vmatpush1.msra.mxu0 0.0
      %4984 = vmatprep.subr.mxu0 0.0
      %4985 = vmatpush1.msra.mxu0 0.0
      %4986 = vmatprep.subr.mxu0 0.0
      %4987 = vmatpush1.msra.mxu0 0.0
      %4988 = vmatprep.subr.mxu0 0.0
      %4989 = vmatpush1.msra.mxu0 0.0
      %4990 = vmatprep.subr.mxu0 0.0
      %4991 = vmatpush1.msra.mxu0 0.0
      %4992 = vmatprep.subr.mxu0 0.0
      %4993 = vmatpush1.msra.mxu0 0.0
      %4994 = vmatprep.subr.mxu0 0.0
      %4995 = vmatpush1.msra.mxu0 0.0
      %4996 = vmatprep.subr.mxu0 0.0
      %4997 = vmatpush1.msra.mxu0 0.0
      %4998 = vmatprep.subr.mxu0 0.0
      %4999 = vmatpush1.msra.mxu0 0.0
      %5000 = vmatprep.subr.mxu0 0.0
      %5001 = vmatpush1.msra.mxu0 0.0
      %5002 = vmatprep.subr.mxu0 0.0
      %5003 = vmatpush1.msra.mxu0 0.0
      %5004 = vmatprep.subr.mxu0 0.0
      %5005 = vmatpush1.msra.mxu0 0.0
      %5006 = vmatprep.subr.mxu0 0.0
      %5007 = vmatpush1.msra.mxu0 0.0
      %5008 = vmatprep.subr.mxu0 0.0
      %5009 = vmatpush1.msra.mxu0 0.0
      %5010 = vmatprep.subr.mxu0 0.0
      %5011 = vmatpush1.msra.mxu0 0.0
      %5012 = vmatprep.mubr.f32.mxu0 0.0
      %v5013 = vand.u32 %v4944, 4294901760
      %v5014 = vsub.f32 %v4944, %v5013
      %v5015 = vand.u32 %v5014, 4294901760
      %v5016 = vsub.f32 %v5014, %v5015
      %v5017 = vand.u32 %v5016, 4294901760
      %5018 = vmatmul.mubr.f32.gmra.mrb[0].mxu0 %v5017
      %v5019 = vpop.f32.mrb[0].mxu0
      %v5020 = vadd.f32 0.0, %v5019
      %v5021 = vpop.f32.mrb[0].mxu0
      %v5022 = vadd.f32 0.0, %v5021
      %5023 = vdwg.mxu0
      %v5024 = vand.u32 %v469, 4294901760
      %v5025 = vsub.f32 %v469, %v5024
      %v5026 = vand.u32 %v5025, 4294901760
      %v5027 = vsub.f32 %v5025, %v5026
      %v5028 = vand.u32 %v5027, 4294901760
      %5029 = vmatprep.subr.mxu0 %v5028
      %v5030 = vand.u32 %v468, 4294901760
      %v5031 = vsub.f32 %v468, %v5030
      %v5032 = vand.u32 %v5031, 4294901760
      %v5033 = vsub.f32 %v5031, %v5032
      %v5034 = vand.u32 %v5033, 4294901760
      %5035 = vmatpush1.msra.mxu0 %v5034
      %5036 = vmatprep.subr.mxu0 0.0
      %5037 = vmatpush1.msra.mxu0 0.0
      %5038 = vmatprep.subr.mxu0 0.0
      %5039 = vmatpush1.msra.mxu0 0.0
      %5040 = vmatprep.subr.mxu0 0.0
      %5041 = vmatpush1.msra.mxu0 0.0
      %5042 = vmatprep.subr.mxu0 0.0
      %5043 = vmatpush1.msra.mxu0 0.0
      %5044 = vmatprep.subr.mxu0 0.0
      %5045 = vmatpush1.msra.mxu0 0.0
      %5046 = vmatprep.subr.mxu0 0.0
      %5047 = vmatpush1.msra.mxu0 0.0
      %5048 = vmatprep.subr.mxu0 0.0
      %5049 = vmatpush1.msra.mxu0 0.0
      %5050 = vmatprep.subr.mxu0 0.0
      %5051 = vmatpush1.msra.mxu0 0.0
      %5052 = vmatprep.subr.mxu0 0.0
      %5053 = vmatpush1.msra.mxu0 0.0
      %5054 = vmatprep.subr.mxu0 0.0
      %5055 = vmatpush1.msra.mxu0 0.0
      %5056 = vmatprep.subr.mxu0 0.0
      %5057 = vmatpush1.msra.mxu0 0.0
      %5058 = vmatprep.subr.mxu0 0.0
      %5059 = vmatpush1.msra.mxu0 0.0
      %5060 = vmatprep.subr.mxu0 0.0
      %5061 = vmatpush1.msra.mxu0 0.0
      %5062 = vmatprep.subr.mxu0 0.0
      %5063 = vmatpush1.msra.mxu0 0.0
      %5064 = vmatprep.subr.mxu0 0.0
      %5065 = vmatpush1.msra.mxu0 0.0
      %5066 = vmatprep.subr.mxu0 0.0
      %5067 = vmatpush1.msra.mxu0 0.0
      %5068 = vmatprep.subr.mxu0 0.0
      %5069 = vmatpush1.msra.mxu0 0.0
      %5070 = vmatprep.subr.mxu0 0.0
      %5071 = vmatpush1.msra.mxu0 0.0
      %5072 = vmatprep.subr.mxu0 0.0
      %5073 = vmatpush1.msra.mxu0 0.0
      %5074 = vmatprep.subr.mxu0 0.0
      %5075 = vmatpush1.msra.mxu0 0.0
      %5076 = vmatprep.subr.mxu0 0.0
      %5077 = vmatpush1.msra.mxu0 0.0
      %5078 = vmatprep.subr.mxu0 0.0
      %5079 = vmatpush1.msra.mxu0 0.0
      %5080 = vmatprep.subr.mxu0 0.0
      %5081 = vmatpush1.msra.mxu0 0.0
      %5082 = vmatprep.subr.mxu0 0.0
      %5083 = vmatpush1.msra.mxu0 0.0
      %5084 = vmatprep.subr.mxu0 0.0
      %5085 = vmatpush1.msra.mxu0 0.0
      %5086 = vmatprep.subr.mxu0 0.0
      %5087 = vmatpush1.msra.mxu0 0.0
      %5088 = vmatprep.subr.mxu0 0.0
      %5089 = vmatpush1.msra.mxu0 0.0
      %5090 = vmatprep.subr.mxu0 0.0
      %5091 = vmatpush1.msra.mxu0 0.0
      %5092 = vmatprep.subr.mxu0 0.0
      %5093 = vmatpush1.msra.mxu0 0.0
      %5094 = vmatprep.subr.mxu0 0.0
      %5095 = vmatpush1.msra.mxu0 0.0
      %5096 = vmatprep.subr.mxu0 0.0
      %5097 = vmatpush1.msra.mxu0 0.0
      %5098 = vmatprep.mubr.f32.mxu0 0.0
      %v5099 = vand.u32 %v4944, 4294901760
      %5100 = vmatmul.mubr.f32.gmra.mrb[0].mxu0 %v5099
      %v5101 = vpop.f32.mrb[0].mxu0
      %v5102 = vadd.f32 %v5020, %v5101
      %v5103 = vpop.f32.mrb[0].mxu0
      %v5104 = vadd.f32 %v5022, %v5103
      %5105 = vdwg.mxu0
      %v5106 = vand.u32 %v469, 4294901760
      %v5107 = vsub.f32 %v469, %v5106
      %5108 = vmatprep.subr.mxu0 %v5107
      %v5109 = vand.u32 %v468, 4294901760
      %v5110 = vsub.f32 %v468, %v5109
      %5111 = vmatpush1.msra.mxu0 %v5110
      %5112 = vmatprep.subr.mxu0 0.0
      %5113 = vmatpush1.msra.mxu0 0.0
      %5114 = vmatprep.subr.mxu0 0.0
      %5115 = vmatpush1.msra.mxu0 0.0
      %5116 = vmatprep.subr.mxu0 0.0
      %5117 = vmatpush1.msra.mxu0 0.0
      %5118 = vmatprep.subr.mxu0 0.0
      %5119 = vmatpush1.msra.mxu0 0.0
      %5120 = vmatprep.subr.mxu0 0.0
      %5121 = vmatpush1.msra.mxu0 0.0
      %5122 = vmatprep.subr.mxu0 0.0
      %5123 = vmatpush1.msra.mxu0 0.0
      %5124 = vmatprep.subr.mxu0 0.0
      %5125 = vmatpush1.msra.mxu0 0.0
      %5126 = vmatprep.subr.mxu0 0.0
      %5127 = vmatpush1.msra.mxu0 0.0
      %5128 = vmatprep.subr.mxu0 0.0
      %5129 = vmatpush1.msra.mxu0 0.0
      %5130 = vmatprep.subr.mxu0 0.0
      %5131 = vmatpush1.msra.mxu0 0.0
      %5132 = vmatprep.subr.mxu0 0.0
      %5133 = vmatpush1.msra.mxu0 0.0
      %5134 = vmatprep.subr.mxu0 0.0
      %5135 = vmatpush1.msra.mxu0 0.0
      %5136 = vmatprep.subr.mxu0 0.0
      %5137 = vmatpush1.msra.mxu0 0.0
      %5138 = vmatprep.subr.mxu0 0.0
      %5139 = vmatpush1.msra.mxu0 0.0
      %5140 = vmatprep.subr.mxu0 0.0
      %5141 = vmatpush1.msra.mxu0 0.0
      %5142 = vmatprep.subr.mxu0 0.0
      %5143 = vmatpush1.msra.mxu0 0.0
      %5144 = vmatprep.subr.mxu0 0.0
      %5145 = vmatpush1.msra.mxu0 0.0
      %5146 = vmatprep.subr.mxu0 0.0
      %5147 = vmatpush1.msra.mxu0 0.0
      %5148 = vmatprep.subr.mxu0 0.0
      %5149 = vmatpush1.msra.mxu0 0.0
      %5150 = vmatprep.subr.mxu0 0.0
      %5151 = vmatpush1.msra.mxu0 0.0
      %5152 = vmatprep.subr.mxu0 0.0
      %5153 = vmatpush1.msra.mxu0 0.0
      %5154 = vmatprep.subr.mxu0 0.0
      %5155 = vmatpush1.msra.mxu0 0.0
      %5156 = vmatprep.subr.mxu0 0.0
      %5157 = vmatpush1.msra.mxu0 0.0
      %5158 = vmatprep.subr.mxu0 0.0
      %5159 = vmatpush1.msra.mxu0 0.0
      %5160 = vmatprep.subr.mxu0 0.0
      %5161 = vmatpush1.msra.mxu0 0.0
      %5162 = vmatprep.subr.mxu0 0.0
      %5163 = vmatpush1.msra.mxu0 0.0
      %5164 = vmatprep.subr.mxu0 0.0
      %5165 = vmatpush1.msra.mxu0 0.0
      %5166 = vmatprep.subr.mxu0 0.0
      %5167 = vmatpush1.msra.mxu0 0.0
      %5168 = vmatprep.subr.mxu0 0.0
      %5169 = vmatpush1.msra.mxu0 0.0
      %5170 = vmatprep.subr.mxu0 0.0
      %5171 = vmatpush1.msra.mxu0 0.0
      %5172 = vmatprep.subr.mxu0 0.0
      %5173 = vmatpush1.msra.mxu0 0.0
      %5174 = vmatprep.mubr.f32.mxu0 0.0
      %v5175 = vand.u32 %v4944, 4294901760
      %v5176 = vsub.f32 %v4944, %v5175
      %5177 = vmatmul.mubr.f32.gmra.mrb[0].mxu0 %v5176
      %v5178 = vpop.f32.mrb[0].mxu0
      %v5179 = vadd.f32 %v5102, %v5178
      %v5180 = vpop.f32.mrb[0].mxu0
      %v5181 = vadd.f32 %v5104, %v5180
      %5182 = vdwg.mxu0
      %v5183 = vand.u32 %v469, 4294901760
      %5184 = vmatprep.subr.mxu0 %v5183
      %v5185 = vand.u32 %v468, 4294901760
      %5186 = vmatpush1.msra.mxu0 %v5185
      %5187 = vmatprep.subr.mxu0 0.0
      %5188 = vmatpush1.msra.mxu0 0.0
      %5189 = vmatprep.subr.mxu0 0.0
      %5190 = vmatpush1.msra.mxu0 0.0
      %5191 = vmatprep.subr.mxu0 0.0
      %5192 = vmatpush1.msra.mxu0 0.0
      %5193 = vmatprep.subr.mxu0 0.0
      %5194 = vmatpush1.msra.mxu0 0.0
      %5195 = vmatprep.subr.mxu0 0.0
      %5196 = vmatpush1.msra.mxu0 0.0
      %5197 = vmatprep.subr.mxu0 0.0
      %5198 = vmatpush1.msra.mxu0 0.0
      %5199 = vmatprep.subr.mxu0 0.0
      %5200 = vmatpush1.msra.mxu0 0.0
      %5201 = vmatprep.subr.mxu0 0.0
      %5202 = vmatpush1.msra.mxu0 0.0
      %5203 = vmatprep.subr.mxu0 0.0
      %5204 = vmatpush1.msra.mxu0 0.0
      %5205 = vmatprep.subr.mxu0 0.0
      %5206 = vmatpush1.msra.mxu0 0.0
      %5207 = vmatprep.subr.mxu0 0.0
      %5208 = vmatpush1.msra.mxu0 0.0
      %5209 = vmatprep.subr.mxu0 0.0
      %5210 = vmatpush1.msra.mxu0 0.0
      %5211 = vmatprep.subr.mxu0 0.0
      %5212 = vmatpush1.msra.mxu0 0.0
      %5213 = vmatprep.subr.mxu0 0.0
      %5214 = vmatpush1.msra.mxu0 0.0
      %5215 = vmatprep.subr.mxu0 0.0
      %5216 = vmatpush1.msra.mxu0 0.0
      %5217 = vmatprep.subr.mxu0 0.0
      %5218 = vmatpush1.msra.mxu0 0.0
      %5219 = vmatprep.subr.mxu0 0.0
      %5220 = vmatpush1.msra.mxu0 0.0
      %5221 = vmatprep.subr.mxu0 0.0
      %5222 = vmatpush1.msra.mxu0 0.0
      %5223 = vmatprep.subr.mxu0 0.0
      %5224 = vmatpush1.msra.mxu0 0.0
      %5225 = vmatprep.subr.mxu0 0.0
      %5226 = vmatpush1.msra.mxu0 0.0
      %5227 = vmatprep.subr.mxu0 0.0
      %5228 = vmatpush1.msra.mxu0 0.0
      %5229 = vmatprep.subr.mxu0 0.0
      %5230 = vmatpush1.msra.mxu0 0.0
      %5231 = vmatprep.subr.mxu0 0.0
      %5232 = vmatpush1.msra.mxu0 0.0
      %5233 = vmatprep.subr.mxu0 0.0
      %5234 = vmatpush1.msra.mxu0 0.0
      %5235 = vmatprep.subr.mxu0 0.0
      %5236 = vmatpush1.msra.mxu0 0.0
      %5237 = vmatprep.subr.mxu0 0.0
      %5238 = vmatpush1.msra.mxu0 0.0
      %5239 = vmatprep.subr.mxu0 0.0
      %5240 = vmatpush1.msra.mxu0 0.0
      %5241 = vmatprep.subr.mxu0 0.0
      %5242 = vmatpush1.msra.mxu0 0.0
      %5243 = vmatprep.subr.mxu0 0.0
      %5244 = vmatpush1.msra.mxu0 0.0
      %5245 = vmatprep.subr.mxu0 0.0
      %5246 = vmatpush1.msra.mxu0 0.0
      %5247 = vmatprep.subr.mxu0 0.0
      %5248 = vmatpush1.msra.mxu0 0.0
      %5249 = vmatprep.mubr.f32.mxu0 0.0
      %v5250 = vand.u32 %v4944, 4294901760
      %v5251 = vsub.f32 %v4944, %v5250
      %v5252 = vand.u32 %v5251, 4294901760
      %5253 = vmatmul.mubr.f32.gmra.mrb[0].mxu0 %v5252
      %v5254 = vpop.f32.mrb[0].mxu0
      %v5255 = vadd.f32 %v5179, %v5254
      %v5256 = vpop.f32.mrb[0].mxu0
      %v5257 = vadd.f32 %v5181, %v5256
      %5258 = vdwg.mxu0
      %v5259 = vand.u32 %v469, 4294901760
      %v5260 = vsub.f32 %v469, %v5259
      %v5261 = vand.u32 %v5260, 4294901760
      %5262 = vmatprep.subr.mxu0 %v5261
      %v5263 = vand.u32 %v468, 4294901760
      %v5264 = vsub.f32 %v468, %v5263
      %v5265 = vand.u32 %v5264, 4294901760
      %5266 = vmatpush1.msra.mxu0 %v5265
      %5267 = vmatprep.subr.mxu0 0.0
      %5268 = vmatpush1.msra.mxu0 0.0
      %5269 = vmatprep.subr.mxu0 0.0
      %5270 = vmatpush1.msra.mxu0 0.0
      %5271 = vmatprep.subr.mxu0 0.0
      %5272 = vmatpush1.msra.mxu0 0.0
      %5273 = vmatprep.subr.mxu0 0.0
      %5274 = vmatpush1.msra.mxu0 0.0
      %5275 = vmatprep.subr.mxu0 0.0
      %5276 = vmatpush1.msra.mxu0 0.0
      %5277 = vmatprep.subr.mxu0 0.0
      %5278 = vmatpush1.msra.mxu0 0.0
      %5279 = vmatprep.subr.mxu0 0.0
      %5280 = vmatpush1.msra.mxu0 0.0
      %5281 = vmatprep.subr.mxu0 0.0
      %5282 = vmatpush1.msra.mxu0 0.0
      %5283 = vmatprep.subr.mxu0 0.0
      %5284 = vmatpush1.msra.mxu0 0.0
      %5285 = vmatprep.subr.mxu0 0.0
      %5286 = vmatpush1.msra.mxu0 0.0
      %5287 = vmatprep.subr.mxu0 0.0
      %5288 = vmatpush1.msra.mxu0 0.0
      %5289 = vmatprep.subr.mxu0 0.0
      %5290 = vmatpush1.msra.mxu0 0.0
      %5291 = vmatprep.subr.mxu0 0.0
      %5292 = vmatpush1.msra.mxu0 0.0
      %5293 = vmatprep.subr.mxu0 0.0
      %5294 = vmatpush1.msra.mxu0 0.0
      %5295 = vmatprep.subr.mxu0 0.0
      %5296 = vmatpush1.msra.mxu0 0.0
      %5297 = vmatprep.subr.mxu0 0.0
      %5298 = vmatpush1.msra.mxu0 0.0
      %5299 = vmatprep.subr.mxu0 0.0
      %5300 = vmatpush1.msra.mxu0 0.0
      %5301 = vmatprep.subr.mxu0 0.0
      %5302 = vmatpush1.msra.mxu0 0.0
      %5303 = vmatprep.subr.mxu0 0.0
      %5304 = vmatpush1.msra.mxu0 0.0
      %5305 = vmatprep.subr.mxu0 0.0
      %5306 = vmatpush1.msra.mxu0 0.0
      %5307 = vmatprep.subr.mxu0 0.0
      %5308 = vmatpush1.msra.mxu0 0.0
      %5309 = vmatprep.subr.mxu0 0.0
      %5310 = vmatpush1.msra.mxu0 0.0
      %5311 = vmatprep.subr.mxu0 0.0
      %5312 = vmatpush1.msra.mxu0 0.0
      %5313 = vmatprep.subr.mxu0 0.0
      %5314 = vmatpush1.msra.mxu0 0.0
      %5315 = vmatprep.subr.mxu0 0.0
      %5316 = vmatpush1.msra.mxu0 0.0
      %5317 = vmatprep.subr.mxu0 0.0
      %5318 = vmatpush1.msra.mxu0 0.0
      %5319 = vmatprep.subr.mxu0 0.0
      %5320 = vmatpush1.msra.mxu0 0.0
      %5321 = vmatprep.subr.mxu0 0.0
      %5322 = vmatpush1.msra.mxu0 0.0
      %5323 = vmatprep.subr.mxu0 0.0
      %5324 = vmatpush1.msra.mxu0 0.0
      %5325 = vmatprep.subr.mxu0 0.0
      %5326 = vmatpush1.msra.mxu0 0.0
      %5327 = vmatprep.subr.mxu0 0.0
      %5328 = vmatpush1.msra.mxu0 0.0
      %5329 = vmatprep.mubr.f32.mxu0 0.0
      %v5330 = vand.u32 %v4944, 4294901760
      %5331 = vmatmul.mubr.f32.gmra.mrb[0].mxu0 %v5330
      %v5332 = vpop.f32.mrb[0].mxu0
      %v5333 = vadd.f32 %v5255, %v5332
      %v5334 = vpop.f32.mrb[0].mxu0
      %v5335 = vadd.f32 %v5257, %v5334
      %5336 = vdwg.mxu0
      %v5337 = vand.u32 %v469, 4294901760
      %5338 = vmatprep.subr.mxu0 %v5337
      %v5339 = vand.u32 %v468, 4294901760
      %5340 = vmatpush1.msra.mxu0 %v5339
      %5341 = vmatprep.subr.mxu0 0.0
      %5342 = vmatpush1.msra.mxu0 0.0
      %5343 = vmatprep.subr.mxu0 0.0
      %5344 = vmatpush1.msra.mxu0 0.0
      %5345 = vmatprep.subr.mxu0 0.0
      %5346 = vmatpush1.msra.mxu0 0.0
      %5347 = vmatprep.subr.mxu0 0.0
      %5348 = vmatpush1.msra.mxu0 0.0
      %5349 = vmatprep.subr.mxu0 0.0
      %5350 = vmatpush1.msra.mxu0 0.0
      %5351 = vmatprep.subr.mxu0 0.0
      %5352 = vmatpush1.msra.mxu0 0.0
      %5353 = vmatprep.subr.mxu0 0.0
      %5354 = vmatpush1.msra.mxu0 0.0
      %5355 = vmatprep.subr.mxu0 0.0
      %5356 = vmatpush1.msra.mxu0 0.0
      %5357 = vmatprep.subr.mxu0 0.0
      %5358 = vmatpush1.msra.mxu0 0.0
      %5359 = vmatprep.subr.mxu0 0.0
      %5360 = vmatpush1.msra.mxu0 0.0
      %5361 = vmatprep.subr.mxu0 0.0
      %5362 = vmatpush1.msra.mxu0 0.0
      %5363 = vmatprep.subr.mxu0 0.0
      %5364 = vmatpush1.msra.mxu0 0.0
      %5365 = vmatprep.subr.mxu0 0.0
      %5366 = vmatpush1.msra.mxu0 0.0
      %5367 = vmatprep.subr.mxu0 0.0
      %5368 = vmatpush1.msra.mxu0 0.0
      %5369 = vmatprep.subr.mxu0 0.0
      %5370 = vmatpush1.msra.mxu0 0.0
      %5371 = vmatprep.subr.mxu0 0.0
      %5372 = vmatpush1.msra.mxu0 0.0
      %5373 = vmatprep.subr.mxu0 0.0
      %5374 = vmatpush1.msra.mxu0 0.0
      %5375 = vmatprep.subr.mxu0 0.0
      %5376 = vmatpush1.msra.mxu0 0.0
      %5377 = vmatprep.subr.mxu0 0.0
      %5378 = vmatpush1.msra.mxu0 0.0
      %5379 = vmatprep.subr.mxu0 0.0
      %5380 = vmatpush1.msra.mxu0 0.0
      %5381 = vmatprep.subr.mxu0 0.0
      %5382 = vmatpush1.msra.mxu0 0.0
      %5383 = vmatprep.subr.mxu0 0.0
      %5384 = vmatpush1.msra.mxu0 0.0
      %5385 = vmatprep.subr.mxu0 0.0
      %5386 = vmatpush1.msra.mxu0 0.0
      %5387 = vmatprep.subr.mxu0 0.0
      %5388 = vmatpush1.msra.mxu0 0.0
      %5389 = vmatprep.subr.mxu0 0.0
      %5390 = vmatpush1.msra.mxu0 0.0
      %5391 = vmatprep.subr.mxu0 0.0
      %5392 = vmatpush1.msra.mxu0 0.0
      %5393 = vmatprep.subr.mxu0 0.0
      %5394 = vmatpush1.msra.mxu0 0.0
      %5395 = vmatprep.subr.mxu0 0.0
      %5396 = vmatpush1.msra.mxu0 0.0
      %5397 = vmatprep.subr.mxu0 0.0
      %5398 = vmatpush1.msra.mxu0 0.0
      %5399 = vmatprep.subr.mxu0 0.0
      %5400 = vmatpush1.msra.mxu0 0.0
      %5401 = vmatprep.subr.mxu0 0.0
      %5402 = vmatpush1.msra.mxu0 0.0
      %5403 = vmatprep.mubr.f32.mxu0 0.0
      %v5404 = vand.u32 %v4944, 4294901760
      %5405 = vmatmul.mubr.f32.gmra.mrb[0].mxu0 %v5404
      %v5406 = vpop.f32.mrb[0].mxu0
      %v5407 = vadd.f32 %v5333, %v5406
      %v5408 = vpop.f32.mrb[0].mxu0
      %v5409 = vadd.f32 %v5335, %v5408
      %5410 = vdwg.mxu0
      %v5411 = vadd.f32 %v4939, %v5407
      %v5412 = vadd.f32 %v4940, %v5409
      %5413 = vrot.lane.b32.xlu0 %v468, 127
      %v5414 = vpop.permute.xlu0 %5413
      %5415 = vrot.lane.b32.xlu0 %v469, 127
      %v5416 = vpop.permute.xlu0 %5415
      %vm5417 = vcmp.lt.s32.totalorder %v2974, 127
      %v5418 = vsel %vm5417, %v5414, %v5416
      %v5419 = vsel %vm5417, %v5416, %v5414
      %s5420 = scalar_lea.vmem %s13, 5
      %v5421 = vld [vmem:[%s5420] ss:$8 sm:$0x3]
      %v5423 = vlaneseq
      %v5424 = vshrl.u32 %v5423, 7
      %v5425 = vsub.s32 0, %v5424
      %v5426 = vrot.slane %v5421, %v5425
      %v5427 = vlaneseq
      %v5428 = vshrl.u32 %v5427, 7
      %v5429 = vsub.s32 1, %v5428
      %v5430 = vrot.slane %v5421, %v5429
      %v5433 = vmul.f32 %v5418, %v5426
      %v5434 = vmul.f32 %v5419, %v5430
      %s5435 = scalar_lea.vmem %s6, 40
      %v5436 = vld [vmem:[%s5435] sm:$0xff]
      %v5438 = vsel %vm1371, %v5436, 0
      %v5440 = vand.u32 %v5434, 4294901760
      %5441 = vmatprep.subr.mxu0 %v5440
      %v5442 = vand.u32 %v5433, 4294901760
      %5443 = vmatpush1.msra.mxu0 %v5442
      %5444 = vmatprep.subr.mxu0 0.0
      %5445 = vmatpush1.msra.mxu0 0.0
      %5446 = vmatprep.subr.mxu0 0.0
      %5447 = vmatpush1.msra.mxu0 0.0
      %5448 = vmatprep.subr.mxu0 0.0
      %5449 = vmatpush1.msra.mxu0 0.0
      %5450 = vmatprep.subr.mxu0 0.0
      %5451 = vmatpush1.msra.mxu0 0.0
      %5452 = vmatprep.subr.mxu0 0.0
      %5453 = vmatpush1.msra.mxu0 0.0
      %5454 = vmatprep.subr.mxu0 0.0
      %5455 = vmatpush1.msra.mxu0 0.0
      %5456 = vmatprep.subr.mxu0 0.0
      %5457 = vmatpush1.msra.mxu0 0.0
      %5458 = vmatprep.subr.mxu0 0.0
      %5459 = vmatpush1.msra.mxu0 0.0
      %5460 = vmatprep.subr.mxu0 0.0
      %5461 = vmatpush1.msra.mxu0 0.0
      %5462 = vmatprep.subr.mxu0 0.0
      %5463 = vmatpush1.msra.mxu0 0.0
      %5464 = vmatprep.subr.mxu0 0.0
      %5465 = vmatpush1.msra.mxu0 0.0
      %5466 = vmatprep.subr.mxu0 0.0
      %5467 = vmatpush1.msra.mxu0 0.0
      %5468 = vmatprep.subr.mxu0 0.0
      %5469 = vmatpush1.msra.mxu0 0.0
      %5470 = vmatprep.subr.mxu0 0.0
      %5471 = vmatpush1.msra.mxu0 0.0
      %5472 = vmatprep.subr.mxu0 0.0
      %5473 = vmatpush1.msra.mxu0 0.0
      %5474 = vmatprep.subr.mxu0 0.0
      %5475 = vmatpush1.msra.mxu0 0.0
      %5476 = vmatprep.subr.mxu0 0.0
      %5477 = vmatpush1.msra.mxu0 0.0
      %5478 = vmatprep.subr.mxu0 0.0
      %5479 = vmatpush1.msra.mxu0 0.0
      %5480 = vmatprep.subr.mxu0 0.0
      %5481 = vmatpush1.msra.mxu0 0.0
      %5482 = vmatprep.subr.mxu0 0.0
      %5483 = vmatpush1.msra.mxu0 0.0
      %5484 = vmatprep.subr.mxu0 0.0
      %5485 = vmatpush1.msra.mxu0 0.0
      %5486 = vmatprep.subr.mxu0 0.0
      %5487 = vmatpush1.msra.mxu0 0.0
      %5488 = vmatprep.subr.mxu0 0.0
      %5489 = vmatpush1.msra.mxu0 0.0
      %5490 = vmatprep.subr.mxu0 0.0
      %5491 = vmatpush1.msra.mxu0 0.0
      %5492 = vmatprep.subr.mxu0 0.0
      %5493 = vmatpush1.msra.mxu0 0.0
      %5494 = vmatprep.subr.mxu0 0.0
      %5495 = vmatpush1.msra.mxu0 0.0
      %5496 = vmatprep.subr.mxu0 0.0
      %5497 = vmatpush1.msra.mxu0 0.0
      %5498 = vmatprep.subr.mxu0 0.0
      %5499 = vmatpush1.msra.mxu0 0.0
      %5500 = vmatprep.subr.mxu0 0.0
      %5501 = vmatpush1.msra.mxu0 0.0
      %5502 = vmatprep.subr.mxu0 0.0
      %5503 = vmatpush1.msra.mxu0 0.0
      %5504 = vmatprep.subr.mxu0 0.0
      %5505 = vmatpush1.msra.mxu0 0.0
      %5506 = vmatprep.mubr.f32.mxu0 0.0
      %v5507 = vand.u32 %v5438, 4294901760
      %v5508 = vsub.f32 %v5438, %v5507
      %v5509 = vand.u32 %v5508, 4294901760
      %v5510 = vsub.f32 %v5508, %v5509
      %v5511 = vand.u32 %v5510, 4294901760
      %5512 = vmatmul.mubr.f32.gmra.mrb[0].mxu0 %v5511
      %v5513 = vpop.f32.mrb[0].mxu0
      %v5514 = vadd.f32 0.0, %v5513
      %v5515 = vpop.f32.mrb[0].mxu0
      %v5516 = vadd.f32 0.0, %v5515
      %5517 = vdwg.mxu0
      %v5518 = vand.u32 %v5434, 4294901760
      %v5519 = vsub.f32 %v5434, %v5518
      %v5520 = vand.u32 %v5519, 4294901760
      %v5521 = vsub.f32 %v5519, %v5520
      %v5522 = vand.u32 %v5521, 4294901760
      %5523 = vmatprep.subr.mxu0 %v5522
      %v5524 = vand.u32 %v5433, 4294901760
      %v5525 = vsub.f32 %v5433, %v5524
      %v5526 = vand.u32 %v5525, 4294901760
      %v5527 = vsub.f32 %v5525, %v5526
      %v5528 = vand.u32 %v5527, 4294901760
      %5529 = vmatpush1.msra.mxu0 %v5528
      %5530 = vmatprep.subr.mxu0 0.0
      %5531 = vmatpush1.msra.mxu0 0.0
      %5532 = vmatprep.subr.mxu0 0.0
      %5533 = vmatpush1.msra.mxu0 0.0
      %5534 = vmatprep.subr.mxu0 0.0
      %5535 = vmatpush1.msra.mxu0 0.0
      %5536 = vmatprep.subr.mxu0 0.0
      %5537 = vmatpush1.msra.mxu0 0.0
      %5538 = vmatprep.subr.mxu0 0.0
      %5539 = vmatpush1.msra.mxu0 0.0
      %5540 = vmatprep.subr.mxu0 0.0
      %5541 = vmatpush1.msra.mxu0 0.0
      %5542 = vmatprep.subr.mxu0 0.0
      %5543 = vmatpush1.msra.mxu0 0.0
      %5544 = vmatprep.subr.mxu0 0.0
      %5545 = vmatpush1.msra.mxu0 0.0
      %5546 = vmatprep.subr.mxu0 0.0
      %5547 = vmatpush1.msra.mxu0 0.0
      %5548 = vmatprep.subr.mxu0 0.0
      %5549 = vmatpush1.msra.mxu0 0.0
      %5550 = vmatprep.subr.mxu0 0.0
      %5551 = vmatpush1.msra.mxu0 0.0
      %5552 = vmatprep.subr.mxu0 0.0
      %5553 = vmatpush1.msra.mxu0 0.0
      %5554 = vmatprep.subr.mxu0 0.0
      %5555 = vmatpush1.msra.mxu0 0.0
      %5556 = vmatprep.subr.mxu0 0.0
      %5557 = vmatpush1.msra.mxu0 0.0
      %5558 = vmatprep.subr.mxu0 0.0
      %5559 = vmatpush1.msra.mxu0 0.0
      %5560 = vmatprep.subr.mxu0 0.0
      %5561 = vmatpush1.msra.mxu0 0.0
      %5562 = vmatprep.subr.mxu0 0.0
      %5563 = vmatpush1.msra.mxu0 0.0
      %5564 = vmatprep.subr.mxu0 0.0
      %5565 = vmatpush1.msra.mxu0 0.0
      %5566 = vmatprep.subr.mxu0 0.0
      %5567 = vmatpush1.msra.mxu0 0.0
      %5568 = vmatprep.subr.mxu0 0.0
      %5569 = vmatpush1.msra.mxu0 0.0
      %5570 = vmatprep.subr.mxu0 0.0
      %5571 = vmatpush1.msra.mxu0 0.0
      %5572 = vmatprep.subr.mxu0 0.0
      %5573 = vmatpush1.msra.mxu0 0.0
      %5574 = vmatprep.subr.mxu0 0.0
      %5575 = vmatpush1.msra.mxu0 0.0
      %5576 = vmatprep.subr.mxu0 0.0
      %5577 = vmatpush1.msra.mxu0 0.0
      %5578 = vmatprep.subr.mxu0 0.0
      %5579 = vmatpush1.msra.mxu0 0.0
      %5580 = vmatprep.subr.mxu0 0.0
      %5581 = vmatpush1.msra.mxu0 0.0
      %5582 = vmatprep.subr.mxu0 0.0
      %5583 = vmatpush1.msra.mxu0 0.0
      %5584 = vmatprep.subr.mxu0 0.0
      %5585 = vmatpush1.msra.mxu0 0.0
      %5586 = vmatprep.subr.mxu0 0.0
      %5587 = vmatpush1.msra.mxu0 0.0
      %5588 = vmatprep.subr.mxu0 0.0
      %5589 = vmatpush1.msra.mxu0 0.0
      %5590 = vmatprep.subr.mxu0 0.0
      %5591 = vmatpush1.msra.mxu0 0.0
      %5592 = vmatprep.mubr.f32.mxu0 0.0
      %v5593 = vand.u32 %v5438, 4294901760
      %5594 = vmatmul.mubr.f32.gmra.mrb[0].mxu0 %v5593
      %v5595 = vpop.f32.mrb[0].mxu0
      %v5596 = vadd.f32 %v5514, %v5595
      %v5597 = vpop.f32.mrb[0].mxu0
      %v5598 = vadd.f32 %v5516, %v5597
      %5599 = vdwg.mxu0
      %v5600 = vand.u32 %v5434, 4294901760
      %v5601 = vsub.f32 %v5434, %v5600
      %5602 = vmatprep.subr.mxu0 %v5601
      %v5603 = vand.u32 %v5433, 4294901760
      %v5604 = vsub.f32 %v5433, %v5603
      %5605 = vmatpush1.msra.mxu0 %v5604
      %5606 = vmatprep.subr.mxu0 0.0
      %5607 = vmatpush1.msra.mxu0 0.0
      %5608 = vmatprep.subr.mxu0 0.0
      %5609 = vmatpush1.msra.mxu0 0.0
      %5610 = vmatprep.subr.mxu0 0.0
      %5611 = vmatpush1.msra.mxu0 0.0
      %5612 = vmatprep.subr.mxu0 0.0
      %5613 = vmatpush1.msra.mxu0 0.0
      %5614 = vmatprep.subr.mxu0 0.0
      %5615 = vmatpush1.msra.mxu0 0.0
      %5616 = vmatprep.subr.mxu0 0.0
      %5617 = vmatpush1.msra.mxu0 0.0
      %5618 = vmatprep.subr.mxu0 0.0
      %5619 = vmatpush1.msra.mxu0 0.0
      %5620 = vmatprep.subr.mxu0 0.0
      %5621 = vmatpush1.msra.mxu0 0.0
      %5622 = vmatprep.subr.mxu0 0.0
      %5623 = vmatpush1.msra.mxu0 0.0
      %5624 = vmatprep.subr.mxu0 0.0
      %5625 = vmatpush1.msra.mxu0 0.0
      %5626 = vmatprep.subr.mxu0 0.0
      %5627 = vmatpush1.msra.mxu0 0.0
      %5628 = vmatprep.subr.mxu0 0.0
      %5629 = vmatpush1.msra.mxu0 0.0
      %5630 = vmatprep.subr.mxu0 0.0
      %5631 = vmatpush1.msra.mxu0 0.0
      %5632 = vmatprep.subr.mxu0 0.0
      %5633 = vmatpush1.msra.mxu0 0.0
      %5634 = vmatprep.subr.mxu0 0.0
      %5635 = vmatpush1.msra.mxu0 0.0
      %5636 = vmatprep.subr.mxu0 0.0
      %5637 = vmatpush1.msra.mxu0 0.0
      %5638 = vmatprep.subr.mxu0 0.0
      %5639 = vmatpush1.msra.mxu0 0.0
      %5640 = vmatprep.subr.mxu0 0.0
      %5641 = vmatpush1.msra.mxu0 0.0
      %5642 = vmatprep.subr.mxu0 0.0
      %5643 = vmatpush1.msra.mxu0 0.0
      %5644 = vmatprep.subr.mxu0 0.0
      %5645 = vmatpush1.msra.mxu0 0.0
      %5646 = vmatprep.subr.mxu0 0.0
      %5647 = vmatpush1.msra.mxu0 0.0
      %5648 = vmatprep.subr.mxu0 0.0
      %5649 = vmatpush1.msra.mxu0 0.0
      %5650 = vmatprep.subr.mxu0 0.0
      %5651 = vmatpush1.msra.mxu0 0.0
      %5652 = vmatprep.subr.mxu0 0.0
      %5653 = vmatpush1.msra.mxu0 0.0
      %5654 = vmatprep.subr.mxu0 0.0
      %5655 = vmatpush1.msra.mxu0 0.0
      %5656 = vmatprep.subr.mxu0 0.0
      %5657 = vmatpush1.msra.mxu0 0.0
      %5658 = vmatprep.subr.mxu0 0.0
      %5659 = vmatpush1.msra.mxu0 0.0
      %5660 = vmatprep.subr.mxu0 0.0
      %5661 = vmatpush1.msra.mxu0 0.0
      %5662 = vmatprep.subr.mxu0 0.0
      %5663 = vmatpush1.msra.mxu0 0.0
      %5664 = vmatprep.subr.mxu0 0.0
      %5665 = vmatpush1.msra.mxu0 0.0
      %5666 = vmatprep.subr.mxu0 0.0
      %5667 = vmatpush1.msra.mxu0 0.0
      %5668 = vmatprep.mubr.f32.mxu0 0.0
      %v5669 = vand.u32 %v5438, 4294901760
      %v5670 = vsub.f32 %v5438, %v5669
      %5671 = vmatmul.mubr.f32.gmra.mrb[0].mxu0 %v5670
      %v5672 = vpop.f32.mrb[0].mxu0
      %v5673 = vadd.f32 %v5596, %v5672
      %v5674 = vpop.f32.mrb[0].mxu0
      %v5675 = vadd.f32 %v5598, %v5674
      %5676 = vdwg.mxu0
      %v5677 = vand.u32 %v5434, 4294901760
      %5678 = vmatprep.subr.mxu0 %v5677
      %v5679 = vand.u32 %v5433, 4294901760
      %5680 = vmatpush1.msra.mxu0 %v5679
      %5681 = vmatprep.subr.mxu0 0.0
      %5682 = vmatpush1.msra.mxu0 0.0
      %5683 = vmatprep.subr.mxu0 0.0
      %5684 = vmatpush1.msra.mxu0 0.0
      %5685 = vmatprep.subr.mxu0 0.0
      %5686 = vmatpush1.msra.mxu0 0.0
      %5687 = vmatprep.subr.mxu0 0.0
      %5688 = vmatpush1.msra.mxu0 0.0
      %5689 = vmatprep.subr.mxu0 0.0
      %5690 = vmatpush1.msra.mxu0 0.0
      %5691 = vmatprep.subr.mxu0 0.0
      %5692 = vmatpush1.msra.mxu0 0.0
      %5693 = vmatprep.subr.mxu0 0.0
      %5694 = vmatpush1.msra.mxu0 0.0
      %5695 = vmatprep.subr.mxu0 0.0
      %5696 = vmatpush1.msra.mxu0 0.0
      %5697 = vmatprep.subr.mxu0 0.0
      %5698 = vmatpush1.msra.mxu0 0.0
      %5699 = vmatprep.subr.mxu0 0.0
      %5700 = vmatpush1.msra.mxu0 0.0
      %5701 = vmatprep.subr.mxu0 0.0
      %5702 = vmatpush1.msra.mxu0 0.0
      %5703 = vmatprep.subr.mxu0 0.0
      %5704 = vmatpush1.msra.mxu0 0.0
      %5705 = vmatprep.subr.mxu0 0.0
      %5706 = vmatpush1.msra.mxu0 0.0
      %5707 = vmatprep.subr.mxu0 0.0
      %5708 = vmatpush1.msra.mxu0 0.0
      %5709 = vmatprep.subr.mxu0 0.0
      %5710 = vmatpush1.msra.mxu0 0.0
      %5711 = vmatprep.subr.mxu0 0.0
      %5712 = vmatpush1.msra.mxu0 0.0
      %5713 = vmatprep.subr.mxu0 0.0
      %5714 = vmatpush1.msra.mxu0 0.0
      %5715 = vmatprep.subr.mxu0 0.0
      %5716 = vmatpush1.msra.mxu0 0.0
      %5717 = vmatprep.subr.mxu0 0.0
      %5718 = vmatpush1.msra.mxu0 0.0
      %5719 = vmatprep.subr.mxu0 0.0
      %5720 = vmatpush1.msra.mxu0 0.0
      %5721 = vmatprep.subr.mxu0 0.0
      %5722 = vmatpush1.msra.mxu0 0.0
      %5723 = vmatprep.subr.mxu0 0.0
      %5724 = vmatpush1.msra.mxu0 0.0
      %5725 = vmatprep.subr.mxu0 0.0
      %5726 = vmatpush1.msra.mxu0 0.0
      %5727 = vmatprep.subr.mxu0 0.0
      %5728 = vmatpush1.msra.mxu0 0.0
      %5729 = vmatprep.subr.mxu0 0.0
      %5730 = vmatpush1.msra.mxu0 0.0
      %5731 = vmatprep.subr.mxu0 0.0
      %5732 = vmatpush1.msra.mxu0 0.0
      %5733 = vmatprep.subr.mxu0 0.0
      %5734 = vmatpush1.msra.mxu0 0.0
      %5735 = vmatprep.subr.mxu0 0.0
      %5736 = vmatpush1.msra.mxu0 0.0
      %5737 = vmatprep.subr.mxu0 0.0
      %5738 = vmatpush1.msra.mxu0 0.0
      %5739 = vmatprep.subr.mxu0 0.0
      %5740 = vmatpush1.msra.mxu0 0.0
      %5741 = vmatprep.subr.mxu0 0.0
      %5742 = vmatpush1.msra.mxu0 0.0
      %5743 = vmatprep.mubr.f32.mxu0 0.0
      %v5744 = vand.u32 %v5438, 4294901760
      %v5745 = vsub.f32 %v5438, %v5744
      %v5746 = vand.u32 %v5745, 4294901760
      %5747 = vmatmul.mubr.f32.gmra.mrb[0].mxu0 %v5746
      %v5748 = vpop.f32.mrb[0].mxu0
      %v5749 = vadd.f32 %v5673, %v5748
      %v5750 = vpop.f32.mrb[0].mxu0
      %v5751 = vadd.f32 %v5675, %v5750
      %5752 = vdwg.mxu0
      %v5753 = vand.u32 %v5434, 4294901760
      %v5754 = vsub.f32 %v5434, %v5753
      %v5755 = vand.u32 %v5754, 4294901760
      %5756 = vmatprep.subr.mxu0 %v5755
      %v5757 = vand.u32 %v5433, 4294901760
      %v5758 = vsub.f32 %v5433, %v5757
      %v5759 = vand.u32 %v5758, 4294901760
      %5760 = vmatpush1.msra.mxu0 %v5759
      %5761 = vmatprep.subr.mxu0 0.0
      %5762 = vmatpush1.msra.mxu0 0.0
      %5763 = vmatprep.subr.mxu0 0.0
      %5764 = vmatpush1.msra.mxu0 0.0
      %5765 = vmatprep.subr.mxu0 0.0
      %5766 = vmatpush1.msra.mxu0 0.0
      %5767 = vmatprep.subr.mxu0 0.0
      %5768 = vmatpush1.msra.mxu0 0.0
      %5769 = vmatprep.subr.mxu0 0.0
      %5770 = vmatpush1.msra.mxu0 0.0
      %5771 = vmatprep.subr.mxu0 0.0
      %5772 = vmatpush1.msra.mxu0 0.0
      %5773 = vmatprep.subr.mxu0 0.0
      %5774 = vmatpush1.msra.mxu0 0.0
      %5775 = vmatprep.subr.mxu0 0.0
      %5776 = vmatpush1.msra.mxu0 0.0
      %5777 = vmatprep.subr.mxu0 0.0
      %5778 = vmatpush1.msra.mxu0 0.0
      %5779 = vmatprep.subr.mxu0 0.0
      %5780 = vmatpush1.msra.mxu0 0.0
      %5781 = vmatprep.subr.mxu0 0.0
      %5782 = vmatpush1.msra.mxu0 0.0
      %5783 = vmatprep.subr.mxu0 0.0
      %5784 = vmatpush1.msra.mxu0 0.0
      %5785 = vmatprep.subr.mxu0 0.0
      %5786 = vmatpush1.msra.mxu0 0.0
      %5787 = vmatprep.subr.mxu0 0.0
      %5788 = vmatpush1.msra.mxu0 0.0
      %5789 = vmatprep.subr.mxu0 0.0
      %5790 = vmatpush1.msra.mxu0 0.0
      %5791 = vmatprep.subr.mxu0 0.0
      %5792 = vmatpush1.msra.mxu0 0.0
      %5793 = vmatprep.subr.mxu0 0.0
      %5794 = vmatpush1.msra.mxu0 0.0
      %5795 = vmatprep.subr.mxu0 0.0
      %5796 = vmatpush1.msra.mxu0 0.0
      %5797 = vmatprep.subr.mxu0 0.0
      %5798 = vmatpush1.msra.mxu0 0.0
      %5799 = vmatprep.subr.mxu0 0.0
      %5800 = vmatpush1.msra.mxu0 0.0
      %5801 = vmatprep.subr.mxu0 0.0
      %5802 = vmatpush1.msra.mxu0 0.0
      %5803 = vmatprep.subr.mxu0 0.0
      %5804 = vmatpush1.msra.mxu0 0.0
      %5805 = vmatprep.subr.mxu0 0.0
      %5806 = vmatpush1.msra.mxu0 0.0
      %5807 = vmatprep.subr.mxu0 0.0
      %5808 = vmatpush1.msra.mxu0 0.0
      %5809 = vmatprep.subr.mxu0 0.0
      %5810 = vmatpush1.msra.mxu0 0.0
      %5811 = vmatprep.subr.mxu0 0.0
      %5812 = vmatpush1.msra.mxu0 0.0
      %5813 = vmatprep.subr.mxu0 0.0
      %5814 = vmatpush1.msra.mxu0 0.0
      %5815 = vmatprep.subr.mxu0 0.0
      %5816 = vmatpush1.msra.mxu0 0.0
      %5817 = vmatprep.subr.mxu0 0.0
      %5818 = vmatpush1.msra.mxu0 0.0
      %5819 = vmatprep.subr.mxu0 0.0
      %5820 = vmatpush1.msra.mxu0 0.0
      %5821 = vmatprep.subr.mxu0 0.0
      %5822 = vmatpush1.msra.mxu0 0.0
      %5823 = vmatprep.mubr.f32.mxu0 0.0
      %v5824 = vand.u32 %v5438, 4294901760
      %5825 = vmatmul.mubr.f32.gmra.mrb[0].mxu0 %v5824
      %v5826 = vpop.f32.mrb[0].mxu0
      %v5827 = vadd.f32 %v5749, %v5826
      %v5828 = vpop.f32.mrb[0].mxu0
      %v5829 = vadd.f32 %v5751, %v5828
      %5830 = vdwg.mxu0
      %v5831 = vand.u32 %v5434, 4294901760
      %5832 = vmatprep.subr.mxu0 %v5831
      %v5833 = vand.u32 %v5433, 4294901760
      %5834 = vmatpush1.msra.mxu0 %v5833
      %5835 = vmatprep.subr.mxu0 0.0
      %5836 = vmatpush1.msra.mxu0 0.0
      %5837 = vmatprep.subr.mxu0 0.0
      %5838 = vmatpush1.msra.mxu0 0.0
      %5839 = vmatprep.subr.mxu0 0.0
      %5840 = vmatpush1.msra.mxu0 0.0
      %5841 = vmatprep.subr.mxu0 0.0
      %5842 = vmatpush1.msra.mxu0 0.0
      %5843 = vmatprep.subr.mxu0 0.0
      %5844 = vmatpush1.msra.mxu0 0.0
      %5845 = vmatprep.subr.mxu0 0.0
      %5846 = vmatpush1.msra.mxu0 0.0
      %5847 = vmatprep.subr.mxu0 0.0
      %5848 = vmatpush1.msra.mxu0 0.0
      %5849 = vmatprep.subr.mxu0 0.0
      %5850 = vmatpush1.msra.mxu0 0.0
      %5851 = vmatprep.subr.mxu0 0.0
      %5852 = vmatpush1.msra.mxu0 0.0
      %5853 = vmatprep.subr.mxu0 0.0
      %5854 = vmatpush1.msra.mxu0 0.0
      %5855 = vmatprep.subr.mxu0 0.0
      %5856 = vmatpush1.msra.mxu0 0.0
      %5857 = vmatprep.subr.mxu0 0.0
      %5858 = vmatpush1.msra.mxu0 0.0
      %5859 = vmatprep.subr.mxu0 0.0
      %5860 = vmatpush1.msra.mxu0 0.0
      %5861 = vmatprep.subr.mxu0 0.0
      %5862 = vmatpush1.msra.mxu0 0.0
      %5863 = vmatprep.subr.mxu0 0.0
      %5864 = vmatpush1.msra.mxu0 0.0
      %5865 = vmatprep.subr.mxu0 0.0
      %5866 = vmatpush1.msra.mxu0 0.0
      %5867 = vmatprep.subr.mxu0 0.0
      %5868 = vmatpush1.msra.mxu0 0.0
      %5869 = vmatprep.subr.mxu0 0.0
      %5870 = vmatpush1.msra.mxu0 0.0
      %5871 = vmatprep.subr.mxu0 0.0
      %5872 = vmatpush1.msra.mxu0 0.0
      %5873 = vmatprep.subr.mxu0 0.0
      %5874 = vmatpush1.msra.mxu0 0.0
      %5875 = vmatprep.subr.mxu0 0.0
      %5876 = vmatpush1.msra.mxu0 0.0
      %5877 = vmatprep.subr.mxu0 0.0
      %5878 = vmatpush1.msra.mxu0 0.0
      %5879 = vmatprep.subr.mxu0 0.0
      %5880 = vmatpush1.msra.mxu0 0.0
      %5881 = vmatprep.subr.mxu0 0.0
      %5882 = vmatpush1.msra.mxu0 0.0
      %5883 = vmatprep.subr.mxu0 0.0
      %5884 = vmatpush1.msra.mxu0 0.0
      %5885 = vmatprep.subr.mxu0 0.0
      %5886 = vmatpush1.msra.mxu0 0.0
      %5887 = vmatprep.subr.mxu0 0.0
      %5888 = vmatpush1.msra.mxu0 0.0
      %5889 = vmatprep.subr.mxu0 0.0
      %5890 = vmatpush1.msra.mxu0 0.0
      %5891 = vmatprep.subr.mxu0 0.0
      %5892 = vmatpush1.msra.mxu0 0.0
      %5893 = vmatprep.subr.mxu0 0.0
      %5894 = vmatpush1.msra.mxu0 0.0
      %5895 = vmatprep.subr.mxu0 0.0
      %5896 = vmatpush1.msra.mxu0 0.0
      %5897 = vmatprep.mubr.f32.mxu0 0.0
      %v5898 = vand.u32 %v5438, 4294901760
      %5899 = vmatmul.mubr.f32.gmra.mrb[0].mxu0 %v5898
      %v5900 = vpop.f32.mrb[0].mxu0
      %v5901 = vadd.f32 %v5827, %v5900
      %v5902 = vpop.f32.mrb[0].mxu0
      %v5903 = vadd.f32 %v5829, %v5902
      %5904 = vdwg.mxu0
      %v5905 = vadd.f32 %v5411, %v5901
      %v5906 = vadd.f32 %v5412, %v5903
      %5907 = vrot.lane.b32.xlu0 %v468, 113
      %v5908 = vpop.permute.xlu0 %5907
      %5909 = vrot.lane.b32.xlu0 %v469, 113
      %v5910 = vpop.permute.xlu0 %5909
      %vm5911 = vcmp.lt.s32.totalorder %v2974, 113
      %v5912 = vsel %vm5911, %v5908, %v5910
      %v5913 = vsel %vm5911, %v5910, %v5908
      %s5914 = scalar_lea.vmem %s13, 6
      %v5915 = vld [vmem:[%s5914] ss:$8 sm:$0x3]
      %v5917 = vlaneseq
      %v5918 = vshrl.u32 %v5917, 7
      %v5919 = vsub.s32 0, %v5918
      %v5920 = vrot.slane %v5915, %v5919
      %v5921 = vlaneseq
      %v5922 = vshrl.u32 %v5921, 7
      %v5923 = vsub.s32 1, %v5922
      %v5924 = vrot.slane %v5915, %v5923
      %v5927 = vmul.f32 %v5912, %v5920
      %v5928 = vmul.f32 %v5913, %v5924
      %s5929 = scalar_lea.vmem %s6, 48
      %v5930 = vld [vmem:[%s5929] sm:$0xff]
      %v5932 = vsel %vm1371, %v5930, 0
      %v5934 = vand.u32 %v5928, 4294901760
      %5935 = vmatprep.subr.mxu0 %v5934
      %v5936 = vand.u32 %v5927, 4294901760
      %5937 = vmatpush1.msra.mxu0 %v5936
      %5938 = vmatprep.subr.mxu0 0.0
      %5939 = vmatpush1.msra.mxu0 0.0
      %5940 = vmatprep.subr.mxu0 0.0
      %5941 = vmatpush1.msra.mxu0 0.0
      %5942 = vmatprep.subr.mxu0 0.0
      %5943 = vmatpush1.msra.mxu0 0.0
      %5944 = vmatprep.subr.mxu0 0.0
      %5945 = vmatpush1.msra.mxu0 0.0
      %5946 = vmatprep.subr.mxu0 0.0
      %5947 = vmatpush1.msra.mxu0 0.0
      %5948 = vmatprep.subr.mxu0 0.0
      %5949 = vmatpush1.msra.mxu0 0.0
      %5950 = vmatprep.subr.mxu0 0.0
      %5951 = vmatpush1.msra.mxu0 0.0
      %5952 = vmatprep.subr.mxu0 0.0
      %5953 = vmatpush1.msra.mxu0 0.0
      %5954 = vmatprep.subr.mxu0 0.0
      %5955 = vmatpush1.msra.mxu0 0.0
      %5956 = vmatprep.subr.mxu0 0.0
      %5957 = vmatpush1.msra.mxu0 0.0
      %5958 = vmatprep.subr.mxu0 0.0
      %5959 = vmatpush1.msra.mxu0 0.0
      %5960 = vmatprep.subr.mxu0 0.0
      %5961 = vmatpush1.msra.mxu0 0.0
      %5962 = vmatprep.subr.mxu0 0.0
      %5963 = vmatpush1.msra.mxu0 0.0
      %5964 = vmatprep.subr.mxu0 0.0
      %5965 = vmatpush1.msra.mxu0 0.0
      %5966 = vmatprep.subr.mxu0 0.0
      %5967 = vmatpush1.msra.mxu0 0.0
      %5968 = vmatprep.subr.mxu0 0.0
      %5969 = vmatpush1.msra.mxu0 0.0
      %5970 = vmatprep.subr.mxu0 0.0
      %5971 = vmatpush1.msra.mxu0 0.0
      %5972 = vmatprep.subr.mxu0 0.0
      %5973 = vmatpush1.msra.mxu0 0.0
      %5974 = vmatprep.subr.mxu0 0.0
      %5975 = vmatpush1.msra.mxu0 0.0
      %5976 = vmatprep.subr.mxu0 0.0
      %5977 = vmatpush1.msra.mxu0 0.0
      %5978 = vmatprep.subr.mxu0 0.0
      %5979 = vmatpush1.msra.mxu0 0.0
      %5980 = vmatprep.subr.mxu0 0.0
      %5981 = vmatpush1.msra.mxu0 0.0
      %5982 = vmatprep.subr.mxu0 0.0
      %5983 = vmatpush1.msra.mxu0 0.0
      %5984 = vmatprep.subr.mxu0 0.0
      %5985 = vmatpush1.msra.mxu0 0.0
      %5986 = vmatprep.subr.mxu0 0.0
      %5987 = vmatpush1.msra.mxu0 0.0
      %5988 = vmatprep.subr.mxu0 0.0
      %5989 = vmatpush1.msra.mxu0 0.0
      %5990 = vmatprep.subr.mxu0 0.0
      %5991 = vmatpush1.msra.mxu0 0.0
      %5992 = vmatprep.subr.mxu0 0.0
      %5993 = vmatpush1.msra.mxu0 0.0
      %5994 = vmatprep.subr.mxu0 0.0
      %5995 = vmatpush1.msra.mxu0 0.0
      %5996 = vmatprep.subr.mxu0 0.0
      %5997 = vmatpush1.msra.mxu0 0.0
      %5998 = vmatprep.subr.mxu0 0.0
      %5999 = vmatpush1.msra.mxu0 0.0
      %6000 = vmatprep.mubr.f32.mxu0 0.0
      %v6001 = vand.u32 %v5932, 4294901760
      %v6002 = vsub.f32 %v5932, %v6001
      %v6003 = vand.u32 %v6002, 4294901760
      %v6004 = vsub.f32 %v6002, %v6003
      %v6005 = vand.u32 %v6004, 4294901760
      %6006 = vmatmul.mubr.f32.gmra.mrb[0].mxu0 %v6005
      %v6007 = vpop.f32.mrb[0].mxu0
      %v6008 = vadd.f32 0.0, %v6007
      %v6009 = vpop.f32.mrb[0].mxu0
      %v6010 = vadd.f32 0.0, %v6009
      %6011 = vdwg.mxu0
      %v6012 = vand.u32 %v5928, 4294901760
      %v6013 = vsub.f32 %v5928, %v6012
      %v6014 = vand.u32 %v6013, 4294901760
      %v6015 = vsub.f32 %v6013, %v6014
      %v6016 = vand.u32 %v6015, 4294901760
      %6017 = vmatprep.subr.mxu0 %v6016
      %v6018 = vand.u32 %v5927, 4294901760
      %v6019 = vsub.f32 %v5927, %v6018
      %v6020 = vand.u32 %v6019, 4294901760
      %v6021 = vsub.f32 %v6019, %v6020
      %v6022 = vand.u32 %v6021, 4294901760
      %6023 = vmatpush1.msra.mxu0 %v6022
      %6024 = vmatprep.subr.mxu0 0.0
      %6025 = vmatpush1.msra.mxu0 0.0
      %6026 = vmatprep.subr.mxu0 0.0
      %6027 = vmatpush1.msra.mxu0 0.0
      %6028 = vmatprep.subr.mxu0 0.0
      %6029 = vmatpush1.msra.mxu0 0.0
      %6030 = vmatprep.subr.mxu0 0.0
      %6031 = vmatpush1.msra.mxu0 0.0
      %6032 = vmatprep.subr.mxu0 0.0
      %6033 = vmatpush1.msra.mxu0 0.0
      %6034 = vmatprep.subr.mxu0 0.0
      %6035 = vmatpush1.msra.mxu0 0.0
      %6036 = vmatprep.subr.mxu0 0.0
      %6037 = vmatpush1.msra.mxu0 0.0
      %6038 = vmatprep.subr.mxu0 0.0
      %6039 = vmatpush1.msra.mxu0 0.0
      %6040 = vmatprep.subr.mxu0 0.0
      %6041 = vmatpush1.msra.mxu0 0.0
      %6042 = vmatprep.subr.mxu0 0.0
      %6043 = vmatpush1.msra.mxu0 0.0
      %6044 = vmatprep.subr.mxu0 0.0
      %6045 = vmatpush1.msra.mxu0 0.0
      %6046 = vmatprep.subr.mxu0 0.0
      %6047 = vmatpush1.msra.mxu0 0.0
      %6048 = vmatprep.subr.mxu0 0.0
      %6049 = vmatpush1.msra.mxu0 0.0
      %6050 = vmatprep.subr.mxu0 0.0
      %6051 = vmatpush1.msra.mxu0 0.0
      %6052 = vmatprep.subr.mxu0 0.0
      %6053 = vmatpush1.msra.mxu0 0.0
      %6054 = vmatprep.subr.mxu0 0.0
      %6055 = vmatpush1.msra.mxu0 0.0
      %6056 = vmatprep.subr.mxu0 0.0
      %6057 = vmatpush1.msra.mxu0 0.0
      %6058 = vmatprep.subr.mxu0 0.0
      %6059 = vmatpush1.msra.mxu0 0.0
      %6060 = vmatprep.subr.mxu0 0.0
      %6061 = vmatpush1.msra.mxu0 0.0
      %6062 = vmatprep.subr.mxu0 0.0
      %6063 = vmatpush1.msra.mxu0 0.0
      %6064 = vmatprep.subr.mxu0 0.0
      %6065 = vmatpush1.msra.mxu0 0.0
      %6066 = vmatprep.subr.mxu0 0.0
      %6067 = vmatpush1.msra.mxu0 0.0
      %6068 = vmatprep.subr.mxu0 0.0
      %6069 = vmatpush1.msra.mxu0 0.0
      %6070 = vmatprep.subr.mxu0 0.0
      %6071 = vmatpush1.msra.mxu0 0.0
      %6072 = vmatprep.subr.mxu0 0.0
      %6073 = vmatpush1.msra.mxu0 0.0
      %6074 = vmatprep.subr.mxu0 0.0
      %6075 = vmatpush1.msra.mxu0 0.0
      %6076 = vmatprep.subr.mxu0 0.0
      %6077 = vmatpush1.msra.mxu0 0.0
      %6078 = vmatprep.subr.mxu0 0.0
      %6079 = vmatpush1.msra.mxu0 0.0
      %6080 = vmatprep.subr.mxu0 0.0
      %6081 = vmatpush1.msra.mxu0 0.0
      %6082 = vmatprep.subr.mxu0 0.0
      %6083 = vmatpush1.msra.mxu0 0.0
      %6084 = vmatprep.subr.mxu0 0.0
      %6085 = vmatpush1.msra.mxu0 0.0
      %6086 = vmatprep.mubr.f32.mxu0 0.0
      %v6087 = vand.u32 %v5932, 4294901760
      %6088 = vmatmul.mubr.f32.gmra.mrb[0].mxu0 %v6087
      %v6089 = vpop.f32.mrb[0].mxu0
      %v6090 = vadd.f32 %v6008, %v6089
      %v6091 = vpop.f32.mrb[0].mxu0
      %v6092 = vadd.f32 %v6010, %v6091
      %6093 = vdwg.mxu0
      %v6094 = vand.u32 %v5928, 4294901760
      %v6095 = vsub.f32 %v5928, %v6094
      %6096 = vmatprep.subr.mxu0 %v6095
      %v6097 = vand.u32 %v5927, 4294901760
      %v6098 = vsub.f32 %v5927, %v6097
      %6099 = vmatpush1.msra.mxu0 %v6098
      %6100 = vmatprep.subr.mxu0 0.0
      %6101 = vmatpush1.msra.mxu0 0.0
      %6102 = vmatprep.subr.mxu0 0.0
      %6103 = vmatpush1.msra.mxu0 0.0
      %6104 = vmatprep.subr.mxu0 0.0
      %6105 = vmatpush1.msra.mxu0 0.0
      %6106 = vmatprep.subr.mxu0 0.0
      %6107 = vmatpush1.msra.mxu0 0.0
      %6108 = vmatprep.subr.mxu0 0.0
      %6109 = vmatpush1.msra.mxu0 0.0
      %6110 = vmatprep.subr.mxu0 0.0
      %6111 = vmatpush1.msra.mxu0 0.0
      %6112 = vmatprep.subr.mxu0 0.0
      %6113 = vmatpush1.msra.mxu0 0.0
      %6114 = vmatprep.subr.mxu0 0.0
      %6115 = vmatpush1.msra.mxu0 0.0
      %6116 = vmatprep.subr.mxu0 0.0
      %6117 = vmatpush1.msra.mxu0 0.0
      %6118 = vmatprep.subr.mxu0 0.0
      %6119 = vmatpush1.msra.mxu0 0.0
      %6120 = vmatprep.subr.mxu0 0.0
      %6121 = vmatpush1.msra.mxu0 0.0
      %6122 = vmatprep.subr.mxu0 0.0
      %6123 = vmatpush1.msra.mxu0 0.0
      %6124 = vmatprep.subr.mxu0 0.0
      %6125 = vmatpush1.msra.mxu0 0.0
      %6126 = vmatprep.subr.mxu0 0.0
      %6127 = vmatpush1.msra.mxu0 0.0
      %6128 = vmatprep.subr.mxu0 0.0
      %6129 = vmatpush1.msra.mxu0 0.0
      %6130 = vmatprep.subr.mxu0 0.0
      %6131 = vmatpush1.msra.mxu0 0.0
      %6132 = vmatprep.subr.mxu0 0.0
      %6133 = vmatpush1.msra.mxu0 0.0
      %6134 = vmatprep.subr.mxu0 0.0
      %6135 = vmatpush1.msra.mxu0 0.0
      %6136 = vmatprep.subr.mxu0 0.0
      %6137 = vmatpush1.msra.mxu0 0.0
      %6138 = vmatprep.subr.mxu0 0.0
      %6139 = vmatpush1.msra.mxu0 0.0
      %6140 = vmatprep.subr.mxu0 0.0
      %6141 = vmatpush1.msra.mxu0 0.0
      %6142 = vmatprep.subr.mxu0 0.0
      %6143 = vmatpush1.msra.mxu0 0.0
      %6144 = vmatprep.subr.mxu0 0.0
      %6145 = vmatpush1.msra.mxu0 0.0
      %6146 = vmatprep.subr.mxu0 0.0
      %6147 = vmatpush1.msra.mxu0 0.0
      %6148 = vmatprep.subr.mxu0 0.0
      %6149 = vmatpush1.msra.mxu0 0.0
      %6150 = vmatprep.subr.mxu0 0.0
      %6151 = vmatpush1.msra.mxu0 0.0
      %6152 = vmatprep.subr.mxu0 0.0
      %6153 = vmatpush1.msra.mxu0 0.0
      %6154 = vmatprep.subr.mxu0 0.0
      %6155 = vmatpush1.msra.mxu0 0.0
      %6156 = vmatprep.subr.mxu0 0.0
      %6157 = vmatpush1.msra.mxu0 0.0
      %6158 = vmatprep.subr.mxu0 0.0
      %6159 = vmatpush1.msra.mxu0 0.0
      %6160 = vmatprep.subr.mxu0 0.0
      %6161 = vmatpush1.msra.mxu0 0.0
      %6162 = vmatprep.mubr.f32.mxu0 0.0
      %v6163 = vand.u32 %v5932, 4294901760
      %v6164 = vsub.f32 %v5932, %v6163
      %6165 = vmatmul.mubr.f32.gmra.mrb[0].mxu0 %v6164
      %v6166 = vpop.f32.mrb[0].mxu0
      %v6167 = vadd.f32 %v6090, %v6166
      %v6168 = vpop.f32.mrb[0].mxu0
      %v6169 = vadd.f32 %v6092, %v6168
      %6170 = vdwg.mxu0
      %v6171 = vand.u32 %v5928, 4294901760
      %6172 = vmatprep.subr.mxu0 %v6171
      %v6173 = vand.u32 %v5927, 4294901760
      %6174 = vmatpush1.msra.mxu0 %v6173
      %6175 = vmatprep.subr.mxu0 0.0
      %6176 = vmatpush1.msra.mxu0 0.0
      %6177 = vmatprep.subr.mxu0 0.0
      %6178 = vmatpush1.msra.mxu0 0.0
      %6179 = vmatprep.subr.mxu0 0.0
      %6180 = vmatpush1.msra.mxu0 0.0
      %6181 = vmatprep.subr.mxu0 0.0
      %6182 = vmatpush1.msra.mxu0 0.0
      %6183 = vmatprep.subr.mxu0 0.0
      %6184 = vmatpush1.msra.mxu0 0.0
      %6185 = vmatprep.subr.mxu0 0.0
      %6186 = vmatpush1.msra.mxu0 0.0
      %6187 = vmatprep.subr.mxu0 0.0
      %6188 = vmatpush1.msra.mxu0 0.0
      %6189 = vmatprep.subr.mxu0 0.0
      %6190 = vmatpush1.msra.mxu0 0.0
      %6191 = vmatprep.subr.mxu0 0.0
      %6192 = vmatpush1.msra.mxu0 0.0
      %6193 = vmatprep.subr.mxu0 0.0
      %6194 = vmatpush1.msra.mxu0 0.0
      %6195 = vmatprep.subr.mxu0 0.0
      %6196 = vmatpush1.msra.mxu0 0.0
      %6197 = vmatprep.subr.mxu0 0.0
      %6198 = vmatpush1.msra.mxu0 0.0
      %6199 = vmatprep.subr.mxu0 0.0
      %6200 = vmatpush1.msra.mxu0 0.0
      %6201 = vmatprep.subr.mxu0 0.0
      %6202 = vmatpush1.msra.mxu0 0.0
      %6203 = vmatprep.subr.mxu0 0.0
      %6204 = vmatpush1.msra.mxu0 0.0
      %6205 = vmatprep.subr.mxu0 0.0
      %6206 = vmatpush1.msra.mxu0 0.0
      %6207 = vmatprep.subr.mxu0 0.0
      %6208 = vmatpush1.msra.mxu0 0.0
      %6209 = vmatprep.subr.mxu0 0.0
      %6210 = vmatpush1.msra.mxu0 0.0
      %6211 = vmatprep.subr.mxu0 0.0
      %6212 = vmatpush1.msra.mxu0 0.0
      %6213 = vmatprep.subr.mxu0 0.0
      %6214 = vmatpush1.msra.mxu0 0.0
      %6215 = vmatprep.subr.mxu0 0.0
      %6216 = vmatpush1.msra.mxu0 0.0
      %6217 = vmatprep.subr.mxu0 0.0
      %6218 = vmatpush1.msra.mxu0 0.0
      %6219 = vmatprep.subr.mxu0 0.0
      %6220 = vmatpush1.msra.mxu0 0.0
      %6221 = vmatprep.subr.mxu0 0.0
      %6222 = vmatpush1.msra.mxu0 0.0
      %6223 = vmatprep.subr.mxu0 0.0
      %6224 = vmatpush1.msra.mxu0 0.0
      %6225 = vmatprep.subr.mxu0 0.0
      %6226 = vmatpush1.msra.mxu0 0.0
      %6227 = vmatprep.subr.mxu0 0.0
      %6228 = vmatpush1.msra.mxu0 0.0
      %6229 = vmatprep.subr.mxu0 0.0
      %6230 = vmatpush1.msra.mxu0 0.0
      %6231 = vmatprep.subr.mxu0 0.0
      %6232 = vmatpush1.msra.mxu0 0.0
      %6233 = vmatprep.subr.mxu0 0.0
      %6234 = vmatpush1.msra.mxu0 0.0
      %6235 = vmatprep.subr.mxu0 0.0
      %6236 = vmatpush1.msra.mxu0 0.0
      %6237 = vmatprep.mubr.f32.mxu0 0.0
      %v6238 = vand.u32 %v5932, 4294901760
      %v6239 = vsub.f32 %v5932, %v6238
      %v6240 = vand.u32 %v6239, 4294901760
      %6241 = vmatmul.mubr.f32.gmra.mrb[0].mxu0 %v6240
      %v6242 = vpop.f32.mrb[0].mxu0
      %v6243 = vadd.f32 %v6167, %v6242
      %v6244 = vpop.f32.mrb[0].mxu0
      %v6245 = vadd.f32 %v6169, %v6244
      %6246 = vdwg.mxu0
      %v6247 = vand.u32 %v5928, 4294901760
      %v6248 = vsub.f32 %v5928, %v6247
      %v6249 = vand.u32 %v6248, 4294901760
      %6250 = vmatprep.subr.mxu0 %v6249
      %v6251 = vand.u32 %v5927, 4294901760
      %v6252 = vsub.f32 %v5927, %v6251
      %v6253 = vand.u32 %v6252, 4294901760
      %6254 = vmatpush1.msra.mxu0 %v6253
      %6255 = vmatprep.subr.mxu0 0.0
      %6256 = vmatpush1.msra.mxu0 0.0
      %6257 = vmatprep.subr.mxu0 0.0
      %6258 = vmatpush1.msra.mxu0 0.0
      %6259 = vmatprep.subr.mxu0 0.0
      %6260 = vmatpush1.msra.mxu0 0.0
      %6261 = vmatprep.subr.mxu0 0.0
      %6262 = vmatpush1.msra.mxu0 0.0
      %6263 = vmatprep.subr.mxu0 0.0
      %6264 = vmatpush1.msra.mxu0 0.0
      %6265 = vmatprep.subr.mxu0 0.0
      %6266 = vmatpush1.msra.mxu0 0.0
      %6267 = vmatprep.subr.mxu0 0.0
      %6268 = vmatpush1.msra.mxu0 0.0
      %6269 = vmatprep.subr.mxu0 0.0
      %6270 = vmatpush1.msra.mxu0 0.0
      %6271 = vmatprep.subr.mxu0 0.0
      %6272 = vmatpush1.msra.mxu0 0.0
      %6273 = vmatprep.subr.mxu0 0.0
      %6274 = vmatpush1.msra.mxu0 0.0
      %6275 = vmatprep.subr.mxu0 0.0
      %6276 = vmatpush1.msra.mxu0 0.0
      %6277 = vmatprep.subr.mxu0 0.0
      %6278 = vmatpush1.msra.mxu0 0.0
      %6279 = vmatprep.subr.mxu0 0.0
      %6280 = vmatpush1.msra.mxu0 0.0
      %6281 = vmatprep.subr.mxu0 0.0
      %6282 = vmatpush1.msra.mxu0 0.0
      %6283 = vmatprep.subr.mxu0 0.0
      %6284 = vmatpush1.msra.mxu0 0.0
      %6285 = vmatprep.subr.mxu0 0.0
      %6286 = vmatpush1.msra.mxu0 0.0
      %6287 = vmatprep.subr.mxu0 0.0
      %6288 = vmatpush1.msra.mxu0 0.0
      %6289 = vmatprep.subr.mxu0 0.0
      %6290 = vmatpush1.msra.mxu0 0.0
      %6291 = vmatprep.subr.mxu0 0.0
      %6292 = vmatpush1.msra.mxu0 0.0
      %6293 = vmatprep.subr.mxu0 0.0
      %6294 = vmatpush1.msra.mxu0 0.0
      %6295 = vmatprep.subr.mxu0 0.0
      %6296 = vmatpush1.msra.mxu0 0.0
      %6297 = vmatprep.subr.mxu0 0.0
      %6298 = vmatpush1.msra.mxu0 0.0
      %6299 = vmatprep.subr.mxu0 0.0
      %6300 = vmatpush1.msra.mxu0 0.0
      %6301 = vmatprep.subr.mxu0 0.0
      %6302 = vmatpush1.msra.mxu0 0.0
      %6303 = vmatprep.subr.mxu0 0.0
      %6304 = vmatpush1.msra.mxu0 0.0
      %6305 = vmatprep.subr.mxu0 0.0
      %6306 = vmatpush1.msra.mxu0 0.0
      %6307 = vmatprep.subr.mxu0 0.0
      %6308 = vmatpush1.msra.mxu0 0.0
      %6309 = vmatprep.subr.mxu0 0.0
      %6310 = vmatpush1.msra.mxu0 0.0
      %6311 = vmatprep.subr.mxu0 0.0
      %6312 = vmatpush1.msra.mxu0 0.0
      %6313 = vmatprep.subr.mxu0 0.0
      %6314 = vmatpush1.msra.mxu0 0.0
      %6315 = vmatprep.subr.mxu0 0.0
      %6316 = vmatpush1.msra.mxu0 0.0
      %6317 = vmatprep.mubr.f32.mxu0 0.0
      %v6318 = vand.u32 %v5932, 4294901760
      %6319 = vmatmul.mubr.f32.gmra.mrb[0].mxu0 %v6318
      %v6320 = vpop.f32.mrb[0].mxu0
      %v6321 = vadd.f32 %v6243, %v6320
      %v6322 = vpop.f32.mrb[0].mxu0
      %v6323 = vadd.f32 %v6245, %v6322
      %6324 = vdwg.mxu0
      %v6325 = vand.u32 %v5928, 4294901760
      %6326 = vmatprep.subr.mxu0 %v6325
      %v6327 = vand.u32 %v5927, 4294901760
      %6328 = vmatpush1.msra.mxu0 %v6327
      %6329 = vmatprep.subr.mxu0 0.0
      %6330 = vmatpush1.msra.mxu0 0.0
      %6331 = vmatprep.subr.mxu0 0.0
      %6332 = vmatpush1.msra.mxu0 0.0
      %6333 = vmatprep.subr.mxu0 0.0
      %6334 = vmatpush1.msra.mxu0 0.0
      %6335 = vmatprep.subr.mxu0 0.0
      %6336 = vmatpush1.msra.mxu0 0.0
      %6337 = vmatprep.subr.mxu0 0.0
      %6338 = vmatpush1.msra.mxu0 0.0
      %6339 = vmatprep.subr.mxu0 0.0
      %6340 = vmatpush1.msra.mxu0 0.0
      %6341 = vmatprep.subr.mxu0 0.0
      %6342 = vmatpush1.msra.mxu0 0.0
      %6343 = vmatprep.subr.mxu0 0.0
      %6344 = vmatpush1.msra.mxu0 0.0
      %6345 = vmatprep.subr.mxu0 0.0
      %6346 = vmatpush1.msra.mxu0 0.0
      %6347 = vmatprep.subr.mxu0 0.0
      %6348 = vmatpush1.msra.mxu0 0.0
      %6349 = vmatprep.subr.mxu0 0.0
      %6350 = vmatpush1.msra.mxu0 0.0
      %6351 = vmatprep.subr.mxu0 0.0
      %6352 = vmatpush1.msra.mxu0 0.0
      %6353 = vmatprep.subr.mxu0 0.0
      %6354 = vmatpush1.msra.mxu0 0.0
      %6355 = vmatprep.subr.mxu0 0.0
      %6356 = vmatpush1.msra.mxu0 0.0
      %6357 = vmatprep.subr.mxu0 0.0
      %6358 = vmatpush1.msra.mxu0 0.0
      %6359 = vmatprep.subr.mxu0 0.0
      %6360 = vmatpush1.msra.mxu0 0.0
      %6361 = vmatprep.subr.mxu0 0.0
      %6362 = vmatpush1.msra.mxu0 0.0
      %6363 = vmatprep.subr.mxu0 0.0
      %6364 = vmatpush1.msra.mxu0 0.0
      %6365 = vmatprep.subr.mxu0 0.0
      %6366 = vmatpush1.msra.mxu0 0.0
      %6367 = vmatprep.subr.mxu0 0.0
      %6368 = vmatpush1.msra.mxu0 0.0
      %6369 = vmatprep.subr.mxu0 0.0
      %6370 = vmatpush1.msra.mxu0 0.0
      %6371 = vmatprep.subr.mxu0 0.0
      %6372 = vmatpush1.msra.mxu0 0.0
      %6373 = vmatprep.subr.mxu0 0.0
      %6374 = vmatpush1.msra.mxu0 0.0
      %6375 = vmatprep.subr.mxu0 0.0
      %6376 = vmatpush1.msra.mxu0 0.0
      %6377 = vmatprep.subr.mxu0 0.0
      %6378 = vmatpush1.msra.mxu0 0.0
      %6379 = vmatprep.subr.mxu0 0.0
      %6380 = vmatpush1.msra.mxu0 0.0
      %6381 = vmatprep.subr.mxu0 0.0
      %6382 = vmatpush1.msra.mxu0 0.0
      %6383 = vmatprep.subr.mxu0 0.0
      %6384 = vmatpush1.msra.mxu0 0.0
      %6385 = vmatprep.subr.mxu0 0.0
      %6386 = vmatpush1.msra.mxu0 0.0
      %6387 = vmatprep.subr.mxu0 0.0
      %6388 = vmatpush1.msra.mxu0 0.0
      %6389 = vmatprep.subr.mxu0 0.0
      %6390 = vmatpush1.msra.mxu0 0.0
      %6391 = vmatprep.mubr.f32.mxu0 0.0
      %v6392 = vand.u32 %v5932, 4294901760
      %6393 = vmatmul.mubr.f32.gmra.mrb[0].mxu0 %v6392
      %v6394 = vpop.f32.mrb[0].mxu0
      %v6395 = vadd.f32 %v6321, %v6394
      %v6396 = vpop.f32.mrb[0].mxu0
      %v6397 = vadd.f32 %v6323, %v6396
      %6398 = vdwg.mxu0
      %v6399 = vadd.f32 %v5905, %v6395
      %v6400 = vadd.f32 %v5906, %v6397
      %6401 = vrot.lane.b32.xlu0 %v468, 112
      %v6402 = vpop.permute.xlu0 %6401
      %6403 = vrot.lane.b32.xlu0 %v469, 112
      %v6404 = vpop.permute.xlu0 %6403
      %vm6405 = vcmp.lt.s32.totalorder %v2974, 112
      %v6406 = vsel %vm6405, %v6402, %v6404
      %v6407 = vsel %vm6405, %v6404, %v6402
      %s6408 = scalar_lea.vmem %s13, 7
      %v6409 = vld [vmem:[%s6408] ss:$8 sm:$0x3]
      %v6411 = vlaneseq
      %v6412 = vshrl.u32 %v6411, 7
      %v6413 = vsub.s32 0, %v6412
      %v6414 = vrot.slane %v6409, %v6413
      %v6415 = vlaneseq
      %v6416 = vshrl.u32 %v6415, 7
      %v6417 = vsub.s32 1, %v6416
      %v6418 = vrot.slane %v6409, %v6417
      %v6421 = vmul.f32 %v6406, %v6414
      %v6422 = vmul.f32 %v6407, %v6418
      %s6423 = scalar_lea.vmem %s6, 56
      %v6424 = vld [vmem:[%s6423] sm:$0xff]
      %v6426 = vsel %vm1371, %v6424, 0
      %v6428 = vand.u32 %v6422, 4294901760
      %6429 = vmatprep.subr.mxu0 %v6428
      %v6430 = vand.u32 %v6421, 4294901760
      %6431 = vmatpush1.msra.mxu0 %v6430
      %6432 = vmatprep.subr.mxu0 0.0
      %6433 = vmatpush1.msra.mxu0 0.0
      %6434 = vmatprep.subr.mxu0 0.0
      %6435 = vmatpush1.msra.mxu0 0.0
      %6436 = vmatprep.subr.mxu0 0.0
      %6437 = vmatpush1.msra.mxu0 0.0
      %6438 = vmatprep.subr.mxu0 0.0
      %6439 = vmatpush1.msra.mxu0 0.0
      %6440 = vmatprep.subr.mxu0 0.0
      %6441 = vmatpush1.msra.mxu0 0.0
      %6442 = vmatprep.subr.mxu0 0.0
      %6443 = vmatpush1.msra.mxu0 0.0
      %6444 = vmatprep.subr.mxu0 0.0
      %6445 = vmatpush1.msra.mxu0 0.0
      %6446 = vmatprep.subr.mxu0 0.0
      %6447 = vmatpush1.msra.mxu0 0.0
      %6448 = vmatprep.subr.mxu0 0.0
      %6449 = vmatpush1.msra.mxu0 0.0
      %6450 = vmatprep.subr.mxu0 0.0
      %6451 = vmatpush1.msra.mxu0 0.0
      %6452 = vmatprep.subr.mxu0 0.0
      %6453 = vmatpush1.msra.mxu0 0.0
      %6454 = vmatprep.subr.mxu0 0.0
      %6455 = vmatpush1.msra.mxu0 0.0
      %6456 = vmatprep.subr.mxu0 0.0
      %6457 = vmatpush1.msra.mxu0 0.0
      %6458 = vmatprep.subr.mxu0 0.0
      %6459 = vmatpush1.msra.mxu0 0.0
      %6460 = vmatprep.subr.mxu0 0.0
      %6461 = vmatpush1.msra.mxu0 0.0
      %6462 = vmatprep.subr.mxu0 0.0
      %6463 = vmatpush1.msra.mxu0 0.0
      %6464 = vmatprep.subr.mxu0 0.0
      %6465 = vmatpush1.msra.mxu0 0.0
      %6466 = vmatprep.subr.mxu0 0.0
      %6467 = vmatpush1.msra.mxu0 0.0
      %6468 = vmatprep.subr.mxu0 0.0
      %6469 = vmatpush1.msra.mxu0 0.0
      %6470 = vmatprep.subr.mxu0 0.0
      %6471 = vmatpush1.msra.mxu0 0.0
      %6472 = vmatprep.subr.mxu0 0.0
      %6473 = vmatpush1.msra.mxu0 0.0
      %6474 = vmatprep.subr.mxu0 0.0
      %6475 = vmatpush1.msra.mxu0 0.0
      %6476 = vmatprep.subr.mxu0 0.0
      %6477 = vmatpush1.msra.mxu0 0.0
      %6478 = vmatprep.subr.mxu0 0.0
      %6479 = vmatpush1.msra.mxu0 0.0
      %6480 = vmatprep.subr.mxu0 0.0
      %6481 = vmatpush1.msra.mxu0 0.0
      %6482 = vmatprep.subr.mxu0 0.0
      %6483 = vmatpush1.msra.mxu0 0.0
      %6484 = vmatprep.subr.mxu0 0.0
      %6485 = vmatpush1.msra.mxu0 0.0
      %6486 = vmatprep.subr.mxu0 0.0
      %6487 = vmatpush1.msra.mxu0 0.0
      %6488 = vmatprep.subr.mxu0 0.0
      %6489 = vmatpush1.msra.mxu0 0.0
      %6490 = vmatprep.subr.mxu0 0.0
      %6491 = vmatpush1.msra.mxu0 0.0
      %6492 = vmatprep.subr.mxu0 0.0
      %6493 = vmatpush1.msra.mxu0 0.0
      %6494 = vmatprep.mubr.f32.mxu0 0.0
      %v6495 = vand.u32 %v6426, 4294901760
      %v6496 = vsub.f32 %v6426, %v6495
      %v6497 = vand.u32 %v6496, 4294901760
      %v6498 = vsub.f32 %v6496, %v6497
      %v6499 = vand.u32 %v6498, 4294901760
      %6500 = vmatmul.mubr.f32.gmra.mrb[0].mxu0 %v6499
      %v6501 = vpop.f32.mrb[0].mxu0
      %v6502 = vadd.f32 0.0, %v6501
      %v6503 = vpop.f32.mrb[0].mxu0
      %v6504 = vadd.f32 0.0, %v6503
      %6505 = vdwg.mxu0
      %v6506 = vand.u32 %v6422, 4294901760
      %v6507 = vsub.f32 %v6422, %v6506
      %v6508 = vand.u32 %v6507, 4294901760
      %v6509 = vsub.f32 %v6507, %v6508
      %v6510 = vand.u32 %v6509, 4294901760
      %6511 = vmatprep.subr.mxu0 %v6510
      %v6512 = vand.u32 %v6421, 4294901760
      %v6513 = vsub.f32 %v6421, %v6512
      %v6514 = vand.u32 %v6513, 4294901760
      %v6515 = vsub.f32 %v6513, %v6514
      %v6516 = vand.u32 %v6515, 4294901760
      %6517 = vmatpush1.msra.mxu0 %v6516
      %6518 = vmatprep.subr.mxu0 0.0
      %6519 = vmatpush1.msra.mxu0 0.0
      %6520 = vmatprep.subr.mxu0 0.0
      %6521 = vmatpush1.msra.mxu0 0.0
      %6522 = vmatprep.subr.mxu0 0.0
      %6523 = vmatpush1.msra.mxu0 0.0
      %6524 = vmatprep.subr.mxu0 0.0
      %6525 = vmatpush1.msra.mxu0 0.0
      %6526 = vmatprep.subr.mxu0 0.0
      %6527 = vmatpush1.msra.mxu0 0.0
      %6528 = vmatprep.subr.mxu0 0.0
      %6529 = vmatpush1.msra.mxu0 0.0
      %6530 = vmatprep.subr.mxu0 0.0
      %6531 = vmatpush1.msra.mxu0 0.0
      %6532 = vmatprep.subr.mxu0 0.0
      %6533 = vmatpush1.msra.mxu0 0.0
      %6534 = vmatprep.subr.mxu0 0.0
      %6535 = vmatpush1.msra.mxu0 0.0
      %6536 = vmatprep.subr.mxu0 0.0
      %6537 = vmatpush1.msra.mxu0 0.0
      %6538 = vmatprep.subr.mxu0 0.0
      %6539 = vmatpush1.msra.mxu0 0.0
      %6540 = vmatprep.subr.mxu0 0.0
      %6541 = vmatpush1.msra.mxu0 0.0
      %6542 = vmatprep.subr.mxu0 0.0
      %6543 = vmatpush1.msra.mxu0 0.0
      %6544 = vmatprep.subr.mxu0 0.0
      %6545 = vmatpush1.msra.mxu0 0.0
      %6546 = vmatprep.subr.mxu0 0.0
      %6547 = vmatpush1.msra.mxu0 0.0
      %6548 = vmatprep.subr.mxu0 0.0
      %6549 = vmatpush1.msra.mxu0 0.0
      %6550 = vmatprep.subr.mxu0 0.0
      %6551 = vmatpush1.msra.mxu0 0.0
      %6552 = vmatprep.subr.mxu0 0.0
      %6553 = vmatpush1.msra.mxu0 0.0
      %6554 = vmatprep.subr.mxu0 0.0
      %6555 = vmatpush1.msra.mxu0 0.0
      %6556 = vmatprep.subr.mxu0 0.0
      %6557 = vmatpush1.msra.mxu0 0.0
      %6558 = vmatprep.subr.mxu0 0.0
      %6559 = vmatpush1.msra.mxu0 0.0
      %6560 = vmatprep.subr.mxu0 0.0
      %6561 = vmatpush1.msra.mxu0 0.0
      %6562 = vmatprep.subr.mxu0 0.0
      %6563 = vmatpush1.msra.mxu0 0.0
      %6564 = vmatprep.subr.mxu0 0.0
      %6565 = vmatpush1.msra.mxu0 0.0
      %6566 = vmatprep.subr.mxu0 0.0
      %6567 = vmatpush1.msra.mxu0 0.0
      %6568 = vmatprep.subr.mxu0 0.0
      %6569 = vmatpush1.msra.mxu0 0.0
      %6570 = vmatprep.subr.mxu0 0.0
      %6571 = vmatpush1.msra.mxu0 0.0
      %6572 = vmatprep.subr.mxu0 0.0
      %6573 = vmatpush1.msra.mxu0 0.0
      %6574 = vmatprep.subr.mxu0 0.0
      %6575 = vmatpush1.msra.mxu0 0.0
      %6576 = vmatprep.subr.mxu0 0.0
      %6577 = vmatpush1.msra.mxu0 0.0
      %6578 = vmatprep.subr.mxu0 0.0
      %6579 = vmatpush1.msra.mxu0 0.0
      %6580 = vmatprep.mubr.f32.mxu0 0.0
      %v6581 = vand.u32 %v6426, 4294901760
      %6582 = vmatmul.mubr.f32.gmra.mrb[0].mxu0 %v6581
      %v6583 = vpop.f32.mrb[0].mxu0
      %v6584 = vadd.f32 %v6502, %v6583
      %v6585 = vpop.f32.mrb[0].mxu0
      %v6586 = vadd.f32 %v6504, %v6585
      %6587 = vdwg.mxu0
      %v6588 = vand.u32 %v6422, 4294901760
      %v6589 = vsub.f32 %v6422, %v6588
      %6590 = vmatprep.subr.mxu0 %v6589
      %v6591 = vand.u32 %v6421, 4294901760
      %v6592 = vsub.f32 %v6421, %v6591
      %6593 = vmatpush1.msra.mxu0 %v6592
      %6594 = vmatprep.subr.mxu0 0.0
      %6595 = vmatpush1.msra.mxu0 0.0
      %6596 = vmatprep.subr.mxu0 0.0
      %6597 = vmatpush1.msra.mxu0 0.0
      %6598 = vmatprep.subr.mxu0 0.0
      %6599 = vmatpush1.msra.mxu0 0.0
      %6600 = vmatprep.subr.mxu0 0.0
      %6601 = vmatpush1.msra.mxu0 0.0
      %6602 = vmatprep.subr.mxu0 0.0
      %6603 = vmatpush1.msra.mxu0 0.0
      %6604 = vmatprep.subr.mxu0 0.0
      %6605 = vmatpush1.msra.mxu0 0.0
      %6606 = vmatprep.subr.mxu0 0.0
      %6607 = vmatpush1.msra.mxu0 0.0
      %6608 = vmatprep.subr.mxu0 0.0
      %6609 = vmatpush1.msra.mxu0 0.0
      %6610 = vmatprep.subr.mxu0 0.0
      %6611 = vmatpush1.msra.mxu0 0.0
      %6612 = vmatprep.subr.mxu0 0.0
      %6613 = vmatpush1.msra.mxu0 0.0
      %6614 = vmatprep.subr.mxu0 0.0
      %6615 = vmatpush1.msra.mxu0 0.0
      %6616 = vmatprep.subr.mxu0 0.0
      %6617 = vmatpush1.msra.mxu0 0.0
      %6618 = vmatprep.subr.mxu0 0.0
      %6619 = vmatpush1.msra.mxu0 0.0
      %6620 = vmatprep.subr.mxu0 0.0
      %6621 = vmatpush1.msra.mxu0 0.0
      %6622 = vmatprep.subr.mxu0 0.0
      %6623 = vmatpush1.msra.mxu0 0.0
      %6624 = vmatprep.subr.mxu0 0.0
      %6625 = vmatpush1.msra.mxu0 0.0
      %6626 = vmatprep.subr.mxu0 0.0
      %6627 = vmatpush1.msra.mxu0 0.0
      %6628 = vmatprep.subr.mxu0 0.0
      %6629 = vmatpush1.msra.mxu0 0.0
      %6630 = vmatprep.subr.mxu0 0.0
      %6631 = vmatpush1.msra.mxu0 0.0
      %6632 = vmatprep.subr.mxu0 0.0
      %6633 = vmatpush1.msra.mxu0 0.0
      %6634 = vmatprep.subr.mxu0 0.0
      %6635 = vmatpush1.msra.mxu0 0.0
      %6636 = vmatprep.subr.mxu0 0.0
      %6637 = vmatpush1.msra.mxu0 0.0
      %6638 = vmatprep.subr.mxu0 0.0
      %6639 = vmatpush1.msra.mxu0 0.0
      %6640 = vmatprep.subr.mxu0 0.0
      %6641 = vmatpush1.msra.mxu0 0.0
      %6642 = vmatprep.subr.mxu0 0.0
      %6643 = vmatpush1.msra.mxu0 0.0
      %6644 = vmatprep.subr.mxu0 0.0
      %6645 = vmatpush1.msra.mxu0 0.0
      %6646 = vmatprep.subr.mxu0 0.0
      %6647 = vmatpush1.msra.mxu0 0.0
      %6648 = vmatprep.subr.mxu0 0.0
      %6649 = vmatpush1.msra.mxu0 0.0
      %6650 = vmatprep.subr.mxu0 0.0
      %6651 = vmatpush1.msra.mxu0 0.0
      %6652 = vmatprep.subr.mxu0 0.0
      %6653 = vmatpush1.msra.mxu0 0.0
      %6654 = vmatprep.subr.mxu0 0.0
      %6655 = vmatpush1.msra.mxu0 0.0
      %6656 = vmatprep.mubr.f32.mxu0 0.0
      %v6657 = vand.u32 %v6426, 4294901760
      %v6658 = vsub.f32 %v6426, %v6657
      %6659 = vmatmul.mubr.f32.gmra.mrb[0].mxu0 %v6658
      %v6660 = vpop.f32.mrb[0].mxu0
      %v6661 = vadd.f32 %v6584, %v6660
      %v6662 = vpop.f32.mrb[0].mxu0
      %v6663 = vadd.f32 %v6586, %v6662
      %6664 = vdwg.mxu0
      %v6665 = vand.u32 %v6422, 4294901760
      %6666 = vmatprep.subr.mxu0 %v6665
      %v6667 = vand.u32 %v6421, 4294901760
      %6668 = vmatpush1.msra.mxu0 %v6667
      %6669 = vmatprep.subr.mxu0 0.0
      %6670 = vmatpush1.msra.mxu0 0.0
      %6671 = vmatprep.subr.mxu0 0.0
      %6672 = vmatpush1.msra.mxu0 0.0
      %6673 = vmatprep.subr.mxu0 0.0
      %6674 = vmatpush1.msra.mxu0 0.0
      %6675 = vmatprep.subr.mxu0 0.0
      %6676 = vmatpush1.msra.mxu0 0.0
      %6677 = vmatprep.subr.mxu0 0.0
      %6678 = vmatpush1.msra.mxu0 0.0
      %6679 = vmatprep.subr.mxu0 0.0
      %6680 = vmatpush1.msra.mxu0 0.0
      %6681 = vmatprep.subr.mxu0 0.0
      %6682 = vmatpush1.msra.mxu0 0.0
      %6683 = vmatprep.subr.mxu0 0.0
      %6684 = vmatpush1.msra.mxu0 0.0
      %6685 = vmatprep.subr.mxu0 0.0
      %6686 = vmatpush1.msra.mxu0 0.0
      %6687 = vmatprep.subr.mxu0 0.0
      %6688 = vmatpush1.msra.mxu0 0.0
      %6689 = vmatprep.subr.mxu0 0.0
      %6690 = vmatpush1.msra.mxu0 0.0
      %6691 = vmatprep.subr.mxu0 0.0
      %6692 = vmatpush1.msra.mxu0 0.0
      %6693 = vmatprep.subr.mxu0 0.0
      %6694 = vmatpush1.msra.mxu0 0.0
      %6695 = vmatprep.subr.mxu0 0.0
      %6696 = vmatpush1.msra.mxu0 0.0
      %6697 = vmatprep.subr.mxu0 0.0
      %6698 = vmatpush1.msra.mxu0 0.0
      %6699 = vmatprep.subr.mxu0 0.0
      %6700 = vmatpush1.msra.mxu0 0.0
      %6701 = vmatprep.subr.mxu0 0.0
      %6702 = vmatpush1.msra.mxu0 0.0
      %6703 = vmatprep.subr.mxu0 0.0
      %6704 = vmatpush1.msra.mxu0 0.0
      %6705 = vmatprep.subr.mxu0 0.0
      %6706 = vmatpush1.msra.mxu0 0.0
      %6707 = vmatprep.subr.mxu0 0.0
      %6708 = vmatpush1.msra.mxu0 0.0
      %6709 = vmatprep.subr.mxu0 0.0
      %6710 = vmatpush1.msra.mxu0 0.0
      %6711 = vmatprep.subr.mxu0 0.0
      %6712 = vmatpush1.msra.mxu0 0.0
      %6713 = vmatprep.subr.mxu0 0.0
      %6714 = vmatpush1.msra.mxu0 0.0
      %6715 = vmatprep.subr.mxu0 0.0
      %6716 = vmatpush1.msra.mxu0 0.0
      %6717 = vmatprep.subr.mxu0 0.0
      %6718 = vmatpush1.msra.mxu0 0.0
      %6719 = vmatprep.subr.mxu0 0.0
      %6720 = vmatpush1.msra.mxu0 0.0
      %6721 = vmatprep.subr.mxu0 0.0
      %6722 = vmatpush1.msra.mxu0 0.0
      %6723 = vmatprep.subr.mxu0 0.0
      %6724 = vmatpush1.msra.mxu0 0.0
      %6725 = vmatprep.subr.mxu0 0.0
      %6726 = vmatpush1.msra.mxu0 0.0
      %6727 = vmatprep.subr.mxu0 0.0
      %6728 = vmatpush1.msra.mxu0 0.0
      %6729 = vmatprep.subr.mxu0 0.0
      %6730 = vmatpush1.msra.mxu0 0.0
      %6731 = vmatprep.mubr.f32.mxu0 0.0
      %v6732 = vand.u32 %v6426, 4294901760
      %v6733 = vsub.f32 %v6426, %v6732
      %v6734 = vand.u32 %v6733, 4294901760
      %6735 = vmatmul.mubr.f32.gmra.mrb[0].mxu0 %v6734
      %v6736 = vpop.f32.mrb[0].mxu0
      %v6737 = vadd.f32 %v6661, %v6736
      %v6738 = vpop.f32.mrb[0].mxu0
      %v6739 = vadd.f32 %v6663, %v6738
      %6740 = vdwg.mxu0
      %v6741 = vand.u32 %v6422, 4294901760
      %v6742 = vsub.f32 %v6422, %v6741
      %v6743 = vand.u32 %v6742, 4294901760
      %6744 = vmatprep.subr.mxu0 %v6743
      %v6745 = vand.u32 %v6421, 4294901760
      %v6746 = vsub.f32 %v6421, %v6745
      %v6747 = vand.u32 %v6746, 4294901760
      %6748 = vmatpush1.msra.mxu0 %v6747
      %6749 = vmatprep.subr.mxu0 0.0
      %6750 = vmatpush1.msra.mxu0 0.0
      %6751 = vmatprep.subr.mxu0 0.0
      %6752 = vmatpush1.msra.mxu0 0.0
      %6753 = vmatprep.subr.mxu0 0.0
      %6754 = vmatpush1.msra.mxu0 0.0
      %6755 = vmatprep.subr.mxu0 0.0
      %6756 = vmatpush1.msra.mxu0 0.0
      %6757 = vmatprep.subr.mxu0 0.0
      %6758 = vmatpush1.msra.mxu0 0.0
      %6759 = vmatprep.subr.mxu0 0.0
      %6760 = vmatpush1.msra.mxu0 0.0
      %6761 = vmatprep.subr.mxu0 0.0
      %6762 = vmatpush1.msra.mxu0 0.0
      %6763 = vmatprep.subr.mxu0 0.0
      %6764 = vmatpush1.msra.mxu0 0.0
      %6765 = vmatprep.subr.mxu0 0.0
      %6766 = vmatpush1.msra.mxu0 0.0
      %6767 = vmatprep.subr.mxu0 0.0
      %6768 = vmatpush1.msra.mxu0 0.0
      %6769 = vmatprep.subr.mxu0 0.0
      %6770 = vmatpush1.msra.mxu0 0.0
      %6771 = vmatprep.subr.mxu0 0.0
      %6772 = vmatpush1.msra.mxu0 0.0
      %6773 = vmatprep.subr.mxu0 0.0
      %6774 = vmatpush1.msra.mxu0 0.0
      %6775 = vmatprep.subr.mxu0 0.0
      %6776 = vmatpush1.msra.mxu0 0.0
      %6777 = vmatprep.subr.mxu0 0.0
      %6778 = vmatpush1.msra.mxu0 0.0
      %6779 = vmatprep.subr.mxu0 0.0
      %6780 = vmatpush1.msra.mxu0 0.0
      %6781 = vmatprep.subr.mxu0 0.0
      %6782 = vmatpush1.msra.mxu0 0.0
      %6783 = vmatprep.subr.mxu0 0.0
      %6784 = vmatpush1.msra.mxu0 0.0
      %6785 = vmatprep.subr.mxu0 0.0
      %6786 = vmatpush1.msra.mxu0 0.0
      %6787 = vmatprep.subr.mxu0 0.0
      %6788 = vmatpush1.msra.mxu0 0.0
      %6789 = vmatprep.subr.mxu0 0.0
      %6790 = vmatpush1.msra.mxu0 0.0
      %6791 = vmatprep.subr.mxu0 0.0
      %6792 = vmatpush1.msra.mxu0 0.0
      %6793 = vmatprep.subr.mxu0 0.0
      %6794 = vmatpush1.msra.mxu0 0.0
      %6795 = vmatprep.subr.mxu0 0.0
      %6796 = vmatpush1.msra.mxu0 0.0
      %6797 = vmatprep.subr.mxu0 0.0
      %6798 = vmatpush1.msra.mxu0 0.0
      %6799 = vmatprep.subr.mxu0 0.0
      %6800 = vmatpush1.msra.mxu0 0.0
      %6801 = vmatprep.subr.mxu0 0.0
      %6802 = vmatpush1.msra.mxu0 0.0
      %6803 = vmatprep.subr.mxu0 0.0
      %6804 = vmatpush1.msra.mxu0 0.0
      %6805 = vmatprep.subr.mxu0 0.0
      %6806 = vmatpush1.msra.mxu0 0.0
      %6807 = vmatprep.subr.mxu0 0.0
      %6808 = vmatpush1.msra.mxu0 0.0
      %6809 = vmatprep.subr.mxu0 0.0
      %6810 = vmatpush1.msra.mxu0 0.0
      %6811 = vmatprep.mubr.f32.mxu0 0.0
      %v6812 = vand.u32 %v6426, 4294901760
      %6813 = vmatmul.mubr.f32.gmra.mrb[0].mxu0 %v6812
      %v6814 = vpop.f32.mrb[0].mxu0
      %v6815 = vadd.f32 %v6737, %v6814
      %v6816 = vpop.f32.mrb[0].mxu0
      %v6817 = vadd.f32 %v6739, %v6816
      %6818 = vdwg.mxu0
      %v6819 = vand.u32 %v6422, 4294901760
      %6820 = vmatprep.subr.mxu0 %v6819
      %v6821 = vand.u32 %v6421, 4294901760
      %6822 = vmatpush1.msra.mxu0 %v6821
      %6823 = vmatprep.subr.mxu0 0.0
      %6824 = vmatpush1.msra.mxu0 0.0
      %6825 = vmatprep.subr.mxu0 0.0
      %6826 = vmatpush1.msra.mxu0 0.0
      %6827 = vmatprep.subr.mxu0 0.0
      %6828 = vmatpush1.msra.mxu0 0.0
      %6829 = vmatprep.subr.mxu0 0.0
      %6830 = vmatpush1.msra.mxu0 0.0
      %6831 = vmatprep.subr.mxu0 0.0
      %6832 = vmatpush1.msra.mxu0 0.0
      %6833 = vmatprep.subr.mxu0 0.0
      %6834 = vmatpush1.msra.mxu0 0.0
      %6835 = vmatprep.subr.mxu0 0.0
      %6836 = vmatpush1.msra.mxu0 0.0
      %6837 = vmatprep.subr.mxu0 0.0
      %6838 = vmatpush1.msra.mxu0 0.0
      %6839 = vmatprep.subr.mxu0 0.0
      %6840 = vmatpush1.msra.mxu0 0.0
      %6841 = vmatprep.subr.mxu0 0.0
      %6842 = vmatpush1.msra.mxu0 0.0
      %6843 = vmatprep.subr.mxu0 0.0
      %6844 = vmatpush1.msra.mxu0 0.0
      %6845 = vmatprep.subr.mxu0 0.0
      %6846 = vmatpush1.msra.mxu0 0.0
      %6847 = vmatprep.subr.mxu0 0.0
      %6848 = vmatpush1.msra.mxu0 0.0
      %6849 = vmatprep.subr.mxu0 0.0
      %6850 = vmatpush1.msra.mxu0 0.0
      %6851 = vmatprep.subr.mxu0 0.0
      %6852 = vmatpush1.msra.mxu0 0.0
      %6853 = vmatprep.subr.mxu0 0.0
      %6854 = vmatpush1.msra.mxu0 0.0
      %6855 = vmatprep.subr.mxu0 0.0
      %6856 = vmatpush1.msra.mxu0 0.0
      %6857 = vmatprep.subr.mxu0 0.0
      %6858 = vmatpush1.msra.mxu0 0.0
      %6859 = vmatprep.subr.mxu0 0.0
      %6860 = vmatpush1.msra.mxu0 0.0
      %6861 = vmatprep.subr.mxu0 0.0
      %6862 = vmatpush1.msra.mxu0 0.0
      %6863 = vmatprep.subr.mxu0 0.0
      %6864 = vmatpush1.msra.mxu0 0.0
      %6865 = vmatprep.subr.mxu0 0.0
      %6866 = vmatpush1.msra.mxu0 0.0
      %6867 = vmatprep.subr.mxu0 0.0
      %6868 = vmatpush1.msra.mxu0 0.0
      %6869 = vmatprep.subr.mxu0 0.0
      %6870 = vmatpush1.msra.mxu0 0.0
      %6871 = vmatprep.subr.mxu0 0.0
      %6872 = vmatpush1.msra.mxu0 0.0
      %6873 = vmatprep.subr.mxu0 0.0
      %6874 = vmatpush1.msra.mxu0 0.0
      %6875 = vmatprep.subr.mxu0 0.0
      %6876 = vmatpush1.msra.mxu0 0.0
      %6877 = vmatprep.subr.mxu0 0.0
      %6878 = vmatpush1.msra.mxu0 0.0
      %6879 = vmatprep.subr.mxu0 0.0
      %6880 = vmatpush1.msra.mxu0 0.0
      %6881 = vmatprep.subr.mxu0 0.0
      %6882 = vmatpush1.msra.mxu0 0.0
      %6883 = vmatprep.subr.mxu0 0.0
      %6884 = vmatpush1.msra.mxu0 0.0
      %6885 = vmatprep.mubr.f32.mxu0 0.0
      %v6886 = vand.u32 %v6426, 4294901760
      %6887 = vmatmul.mubr.f32.gmra.mrb[0].mxu0 %v6886
      %v6888 = vpop.f32.mrb[0].mxu0
      %v6889 = vadd.f32 %v6815, %v6888
      %v6890 = vpop.f32.mrb[0].mxu0
      %v6891 = vadd.f32 %v6817, %v6890
      %6892 = vdwg.mxu0
      %v6893 = vadd.f32 %v6399, %v6889
      %v6894 = vadd.f32 %v6400, %v6891
      %6895 = vrot.lane.b32.xlu0 %v468, 111
      %v6896 = vpop.permute.xlu0 %6895
      %6897 = vrot.lane.b32.xlu0 %v469, 111
      %v6898 = vpop.permute.xlu0 %6897
      %vm6899 = vcmp.lt.s32.totalorder %v2974, 111
      %v6900 = vsel %vm6899, %v6896, %v6898
      %v6901 = vsel %vm6899, %v6898, %v6896
      %s6902 = scalar_lea.vmem %s13, 16
      %v6903 = vld [vmem:[%s6902] ss:$8 sm:$0x3]
      %v6905 = vlaneseq
      %v6906 = vshrl.u32 %v6905, 7
      %v6907 = vsub.s32 0, %v6906
      %v6908 = vrot.slane %v6903, %v6907
      %v6909 = vlaneseq
      %v6910 = vshrl.u32 %v6909, 7
      %v6911 = vsub.s32 1, %v6910
      %v6912 = vrot.slane %v6903, %v6911
      %v6915 = vmul.f32 %v6900, %v6908
      %v6916 = vmul.f32 %v6901, %v6912
      %s6917 = scalar_lea.vmem %s6, 64
      %v6918 = vld [vmem:[%s6917] sm:$0xff]
      %v6920 = vsel %vm1371, %v6918, 0
      %v6922 = vand.u32 %v6916, 4294901760
      %6923 = vmatprep.subr.mxu0 %v6922
      %v6924 = vand.u32 %v6915, 4294901760
      %6925 = vmatpush1.msra.mxu0 %v6924
      %6926 = vmatprep.subr.mxu0 0.0
      %6927 = vmatpush1.msra.mxu0 0.0
      %6928 = vmatprep.subr.mxu0 0.0
      %6929 = vmatpush1.msra.mxu0 0.0
      %6930 = vmatprep.subr.mxu0 0.0
      %6931 = vmatpush1.msra.mxu0 0.0
      %6932 = vmatprep.subr.mxu0 0.0
      %6933 = vmatpush1.msra.mxu0 0.0
      %6934 = vmatprep.subr.mxu0 0.0
      %6935 = vmatpush1.msra.mxu0 0.0
      %6936 = vmatprep.subr.mxu0 0.0
      %6937 = vmatpush1.msra.mxu0 0.0
      %6938 = vmatprep.subr.mxu0 0.0
      %6939 = vmatpush1.msra.mxu0 0.0
      %6940 = vmatprep.subr.mxu0 0.0
      %6941 = vmatpush1.msra.mxu0 0.0
      %6942 = vmatprep.subr.mxu0 0.0
      %6943 = vmatpush1.msra.mxu0 0.0
      %6944 = vmatprep.subr.mxu0 0.0
      %6945 = vmatpush1.msra.mxu0 0.0
      %6946 = vmatprep.subr.mxu0 0.0
      %6947 = vmatpush1.msra.mxu0 0.0
      %6948 = vmatprep.subr.mxu0 0.0
      %6949 = vmatpush1.msra.mxu0 0.0
      %6950 = vmatprep.subr.mxu0 0.0
      %6951 = vmatpush1.msra.mxu0 0.0
      %6952 = vmatprep.subr.mxu0 0.0
      %6953 = vmatpush1.msra.mxu0 0.0
      %6954 = vmatprep.subr.mxu0 0.0
      %6955 = vmatpush1.msra.mxu0 0.0
      %6956 = vmatprep.subr.mxu0 0.0
      %6957 = vmatpush1.msra.mxu0 0.0
      %6958 = vmatprep.subr.mxu0 0.0
      %6959 = vmatpush1.msra.mxu0 0.0
      %6960 = vmatprep.subr.mxu0 0.0
      %6961 = vmatpush1.msra.mxu0 0.0
      %6962 = vmatprep.subr.mxu0 0.0
      %6963 = vmatpush1.msra.mxu0 0.0
      %6964 = vmatprep.subr.mxu0 0.0
      %6965 = vmatpush1.msra.mxu0 0.0
      %6966 = vmatprep.subr.mxu0 0.0
      %6967 = vmatpush1.msra.mxu0 0.0
      %6968 = vmatprep.subr.mxu0 0.0
      %6969 = vmatpush1.msra.mxu0 0.0
      %6970 = vmatprep.subr.mxu0 0.0
      %6971 = vmatpush1.msra.mxu0 0.0
      %6972 = vmatprep.subr.mxu0 0.0
      %6973 = vmatpush1.msra.mxu0 0.0
      %6974 = vmatprep.subr.mxu0 0.0
      %6975 = vmatpush1.msra.mxu0 0.0
      %6976 = vmatprep.subr.mxu0 0.0
      %6977 = vmatpush1.msra.mxu0 0.0
      %6978 = vmatprep.subr.mxu0 0.0
      %6979 = vmatpush1.msra.mxu0 0.0
      %6980 = vmatprep.subr.mxu0 0.0
      %6981 = vmatpush1.msra.mxu0 0.0
      %6982 = vmatprep.subr.mxu0 0.0
      %6983 = vmatpush1.msra.mxu0 0.0
      %6984 = vmatprep.subr.mxu0 0.0
      %6985 = vmatpush1.msra.mxu0 0.0
      %6986 = vmatprep.subr.mxu0 0.0
      %6987 = vmatpush1.msra.mxu0 0.0
      %6988 = vmatprep.mubr.f32.mxu0 0.0
      %v6989 = vand.u32 %v6920, 4294901760
      %v6990 = vsub.f32 %v6920, %v6989
      %v6991 = vand.u32 %v6990, 4294901760
      %v6992 = vsub.f32 %v6990, %v6991
      %v6993 = vand.u32 %v6992, 4294901760
      %6994 = vmatmul.mubr.f32.gmra.mrb[0].mxu0 %v6993
      %v6995 = vpop.f32.mrb[0].mxu0
      %v6996 = vadd.f32 0.0, %v6995
      %v6997 = vpop.f32.mrb[0].mxu0
      %v6998 = vadd.f32 0.0, %v6997
      %6999 = vdwg.mxu0
      %v7000 = vand.u32 %v6916, 4294901760
      %v7001 = vsub.f32 %v6916, %v7000
      %v7002 = vand.u32 %v7001, 4294901760
      %v7003 = vsub.f32 %v7001, %v7002
      %v7004 = vand.u32 %v7003, 4294901760
      %7005 = vmatprep.subr.mxu0 %v7004
      %v7006 = vand.u32 %v6915, 4294901760
      %v7007 = vsub.f32 %v6915, %v7006
      %v7008 = vand.u32 %v7007, 4294901760
      %v7009 = vsub.f32 %v7007, %v7008
      %v7010 = vand.u32 %v7009, 4294901760
      %7011 = vmatpush1.msra.mxu0 %v7010
      %7012 = vmatprep.subr.mxu0 0.0
      %7013 = vmatpush1.msra.mxu0 0.0
      %7014 = vmatprep.subr.mxu0 0.0
      %7015 = vmatpush1.msra.mxu0 0.0
      %7016 = vmatprep.subr.mxu0 0.0
      %7017 = vmatpush1.msra.mxu0 0.0
      %7018 = vmatprep.subr.mxu0 0.0
      %7019 = vmatpush1.msra.mxu0 0.0
      %7020 = vmatprep.subr.mxu0 0.0
      %7021 = vmatpush1.msra.mxu0 0.0
      %7022 = vmatprep.subr.mxu0 0.0
      %7023 = vmatpush1.msra.mxu0 0.0
      %7024 = vmatprep.subr.mxu0 0.0
      %7025 = vmatpush1.msra.mxu0 0.0
      %7026 = vmatprep.subr.mxu0 0.0
      %7027 = vmatpush1.msra.mxu0 0.0
      %7028 = vmatprep.subr.mxu0 0.0
      %7029 = vmatpush1.msra.mxu0 0.0
      %7030 = vmatprep.subr.mxu0 0.0
      %7031 = vmatpush1.msra.mxu0 0.0
      %7032 = vmatprep.subr.mxu0 0.0
      %7033 = vmatpush1.msra.mxu0 0.0
      %7034 = vmatprep.subr.mxu0 0.0
      %7035 = vmatpush1.msra.mxu0 0.0
      %7036 = vmatprep.subr.mxu0 0.0
      %7037 = vmatpush1.msra.mxu0 0.0
      %7038 = vmatprep.subr.mxu0 0.0
      %7039 = vmatpush1.msra.mxu0 0.0
      %7040 = vmatprep.subr.mxu0 0.0
      %7041 = vmatpush1.msra.mxu0 0.0
      %7042 = vmatprep.subr.mxu0 0.0
      %7043 = vmatpush1.msra.mxu0 0.0
      %7044 = vmatprep.subr.mxu0 0.0
      %7045 = vmatpush1.msra.mxu0 0.0
      %7046 = vmatprep.subr.mxu0 0.0
      %7047 = vmatpush1.msra.mxu0 0.0
      %7048 = vmatprep.subr.mxu0 0.0
      %7049 = vmatpush1.msra.mxu0 0.0
      %7050 = vmatprep.subr.mxu0 0.0
      %7051 = vmatpush1.msra.mxu0 0.0
      %7052 = vmatprep.subr.mxu0 0.0
      %7053 = vmatpush1.msra.mxu0 0.0
      %7054 = vmatprep.subr.mxu0 0.0
      %7055 = vmatpush1.msra.mxu0 0.0
      %7056 = vmatprep.subr.mxu0 0.0
      %7057 = vmatpush1.msra.mxu0 0.0
      %7058 = vmatprep.subr.mxu0 0.0
      %7059 = vmatpush1.msra.mxu0 0.0
      %7060 = vmatprep.subr.mxu0 0.0
      %7061 = vmatpush1.msra.mxu0 0.0
      %7062 = vmatprep.subr.mxu0 0.0
      %7063 = vmatpush1.msra.mxu0 0.0
      %7064 = vmatprep.subr.mxu0 0.0
      %7065 = vmatpush1.msra.mxu0 0.0
      %7066 = vmatprep.subr.mxu0 0.0
      %7067 = vmatpush1.msra.mxu0 0.0
      %7068 = vmatprep.subr.mxu0 0.0
      %7069 = vmatpush1.msra.mxu0 0.0
      %7070 = vmatprep.subr.mxu0 0.0
      %7071 = vmatpush1.msra.mxu0 0.0
      %7072 = vmatprep.subr.mxu0 0.0
      %7073 = vmatpush1.msra.mxu0 0.0
      %7074 = vmatprep.mubr.f32.mxu0 0.0
      %v7075 = vand.u32 %v6920, 4294901760
      %7076 = vmatmul.mubr.f32.gmra.mrb[0].mxu0 %v7075
      %v7077 = vpop.f32.mrb[0].mxu0
      %v7078 = vadd.f32 %v6996, %v7077
      %v7079 = vpop.f32.mrb[0].mxu0
      %v7080 = vadd.f32 %v6998, %v7079
      %7081 = vdwg.mxu0
      %v7082 = vand.u32 %v6916, 4294901760
      %v7083 = vsub.f32 %v6916, %v7082
      %7084 = vmatprep.subr.mxu0 %v7083
      %v7085 = vand.u32 %v6915, 4294901760
      %v7086 = vsub.f32 %v6915, %v7085
      %7087 = vmatpush1.msra.mxu0 %v7086
      %7088 = vmatprep.subr.mxu0 0.0
      %7089 = vmatpush1.msra.mxu0 0.0
      %7090 = vmatprep.subr.mxu0 0.0
      %7091 = vmatpush1.msra.mxu0 0.0
      %7092 = vmatprep.subr.mxu0 0.0
      %7093 = vmatpush1.msra.mxu0 0.0
      %7094 = vmatprep.subr.mxu0 0.0
      %7095 = vmatpush1.msra.mxu0 0.0
      %7096 = vmatprep.subr.mxu0 0.0
      %7097 = vmatpush1.msra.mxu0 0.0
      %7098 = vmatprep.subr.mxu0 0.0
      %7099 = vmatpush1.msra.mxu0 0.0
      %7100 = vmatprep.subr.mxu0 0.0
      %7101 = vmatpush1.msra.mxu0 0.0
      %7102 = vmatprep.subr.mxu0 0.0
      %7103 = vmatpush1.msra.mxu0 0.0
      %7104 = vmatprep.subr.mxu0 0.0
      %7105 = vmatpush1.msra.mxu0 0.0
      %7106 = vmatprep.subr.mxu0 0.0
      %7107 = vmatpush1.msra.mxu0 0.0
      %7108 = vmatprep.subr.mxu0 0.0
      %7109 = vmatpush1.msra.mxu0 0.0
      %7110 = vmatprep.subr.mxu0 0.0
      %7111 = vmatpush1.msra.mxu0 0.0
      %7112 = vmatprep.subr.mxu0 0.0
      %7113 = vmatpush1.msra.mxu0 0.0
      %7114 = vmatprep.subr.mxu0 0.0
      %7115 = vmatpush1.msra.mxu0 0.0
      %7116 = vmatprep.subr.mxu0 0.0
      %7117 = vmatpush1.msra.mxu0 0.0
      %7118 = vmatprep.subr.mxu0 0.0
      %7119 = vmatpush1.msra.mxu0 0.0
      %7120 = vmatprep.subr.mxu0 0.0
      %7121 = vmatpush1.msra.mxu0 0.0
      %7122 = vmatprep.subr.mxu0 0.0
      %7123 = vmatpush1.msra.mxu0 0.0
      %7124 = vmatprep.subr.mxu0 0.0
      %7125 = vmatpush1.msra.mxu0 0.0
      %7126 = vmatprep.subr.mxu0 0.0
      %7127 = vmatpush1.msra.mxu0 0.0
      %7128 = vmatprep.subr.mxu0 0.0
      %7129 = vmatpush1.msra.mxu0 0.0
      %7130 = vmatprep.subr.mxu0 0.0
      %7131 = vmatpush1.msra.mxu0 0.0
      %7132 = vmatprep.subr.mxu0 0.0
      %7133 = vmatpush1.msra.mxu0 0.0
      %7134 = vmatprep.subr.mxu0 0.0
      %7135 = vmatpush1.msra.mxu0 0.0
      %7136 = vmatprep.subr.mxu0 0.0
      %7137 = vmatpush1.msra.mxu0 0.0
      %7138 = vmatprep.subr.mxu0 0.0
      %7139 = vmatpush1.msra.mxu0 0.0
      %7140 = vmatprep.subr.mxu0 0.0
      %7141 = vmatpush1.msra.mxu0 0.0
      %7142 = vmatprep.subr.mxu0 0.0
      %7143 = vmatpush1.msra.mxu0 0.0
      %7144 = vmatprep.subr.mxu0 0.0
      %7145 = vmatpush1.msra.mxu0 0.0
      %7146 = vmatprep.subr.mxu0 0.0
      %7147 = vmatpush1.msra.mxu0 0.0
      %7148 = vmatprep.subr.mxu0 0.0
      %7149 = vmatpush1.msra.mxu0 0.0
      %7150 = vmatprep.mubr.f32.mxu0 0.0
      %v7151 = vand.u32 %v6920, 4294901760
      %v7152 = vsub.f32 %v6920, %v7151
      %7153 = vmatmul.mubr.f32.gmra.mrb[0].mxu0 %v7152
      %v7154 = vpop.f32.mrb[0].mxu0
      %v7155 = vadd.f32 %v7078, %v7154
      %v7156 = vpop.f32.mrb[0].mxu0
      %v7157 = vadd.f32 %v7080, %v7156
      %7158 = vdwg.mxu0
      %v7159 = vand.u32 %v6916, 4294901760
      %7160 = vmatprep.subr.mxu0 %v7159
      %v7161 = vand.u32 %v6915, 4294901760
      %7162 = vmatpush1.msra.mxu0 %v7161
      %7163 = vmatprep.subr.mxu0 0.0
      %7164 = vmatpush1.msra.mxu0 0.0
      %7165 = vmatprep.subr.mxu0 0.0
      %7166 = vmatpush1.msra.mxu0 0.0
      %7167 = vmatprep.subr.mxu0 0.0
      %7168 = vmatpush1.msra.mxu0 0.0
      %7169 = vmatprep.subr.mxu0 0.0
      %7170 = vmatpush1.msra.mxu0 0.0
      %7171 = vmatprep.subr.mxu0 0.0
      %7172 = vmatpush1.msra.mxu0 0.0
      %7173 = vmatprep.subr.mxu0 0.0
      %7174 = vmatpush1.msra.mxu0 0.0
      %7175 = vmatprep.subr.mxu0 0.0
      %7176 = vmatpush1.msra.mxu0 0.0
      %7177 = vmatprep.subr.mxu0 0.0
      %7178 = vmatpush1.msra.mxu0 0.0
      %7179 = vmatprep.subr.mxu0 0.0
      %7180 = vmatpush1.msra.mxu0 0.0
      %7181 = vmatprep.subr.mxu0 0.0
      %7182 = vmatpush1.msra.mxu0 0.0
      %7183 = vmatprep.subr.mxu0 0.0
      %7184 = vmatpush1.msra.mxu0 0.0
      %7185 = vmatprep.subr.mxu0 0.0
      %7186 = vmatpush1.msra.mxu0 0.0
      %7187 = vmatprep.subr.mxu0 0.0
      %7188 = vmatpush1.msra.mxu0 0.0
      %7189 = vmatprep.subr.mxu0 0.0
      %7190 = vmatpush1.msra.mxu0 0.0
      %7191 = vmatprep.subr.mxu0 0.0
      %7192 = vmatpush1.msra.mxu0 0.0
      %7193 = vmatprep.subr.mxu0 0.0
      %7194 = vmatpush1.msra.mxu0 0.0
      %7195 = vmatprep.subr.mxu0 0.0
      %7196 = vmatpush1.msra.mxu0 0.0
      %7197 = vmatprep.subr.mxu0 0.0
      %7198 = vmatpush1.msra.mxu0 0.0
      %7199 = vmatprep.subr.mxu0 0.0
      %7200 = vmatpush1.msra.mxu0 0.0
      %7201 = vmatprep.subr.mxu0 0.0
      %7202 = vmatpush1.msra.mxu0 0.0
      %7203 = vmatprep.subr.mxu0 0.0
      %7204 = vmatpush1.msra.mxu0 0.0
      %7205 = vmatprep.subr.mxu0 0.0
      %7206 = vmatpush1.msra.mxu0 0.0
      %7207 = vmatprep.subr.mxu0 0.0
      %7208 = vmatpush1.msra.mxu0 0.0
      %7209 = vmatprep.subr.mxu0 0.0
      %7210 = vmatpush1.msra.mxu0 0.0
      %7211 = vmatprep.subr.mxu0 0.0
      %7212 = vmatpush1.msra.mxu0 0.0
      %7213 = vmatprep.subr.mxu0 0.0
      %7214 = vmatpush1.msra.mxu0 0.0
      %7215 = vmatprep.subr.mxu0 0.0
      %7216 = vmatpush1.msra.mxu0 0.0
      %7217 = vmatprep.subr.mxu0 0.0
      %7218 = vmatpush1.msra.mxu0 0.0
      %7219 = vmatprep.subr.mxu0 0.0
      %7220 = vmatpush1.msra.mxu0 0.0
      %7221 = vmatprep.subr.mxu0 0.0
      %7222 = vmatpush1.msra.mxu0 0.0
      %7223 = vmatprep.subr.mxu0 0.0
      %7224 = vmatpush1.msra.mxu0 0.0
      %7225 = vmatprep.mubr.f32.mxu0 0.0
      %v7226 = vand.u32 %v6920, 4294901760
      %v7227 = vsub.f32 %v6920, %v7226
      %v7228 = vand.u32 %v7227, 4294901760
      %7229 = vmatmul.mubr.f32.gmra.mrb[0].mxu0 %v7228
      %v7230 = vpop.f32.mrb[0].mxu0
      %v7231 = vadd.f32 %v7155, %v7230
      %v7232 = vpop.f32.mrb[0].mxu0
      %v7233 = vadd.f32 %v7157, %v7232
      %7234 = vdwg.mxu0
      %v7235 = vand.u32 %v6916, 4294901760
      %v7236 = vsub.f32 %v6916, %v7235
      %v7237 = vand.u32 %v7236, 4294901760
      %7238 = vmatprep.subr.mxu0 %v7237
      %v7239 = vand.u32 %v6915, 4294901760
      %v7240 = vsub.f32 %v6915, %v7239
      %v7241 = vand.u32 %v7240, 4294901760
      %7242 = vmatpush1.msra.mxu0 %v7241
      %7243 = vmatprep.subr.mxu0 0.0
      %7244 = vmatpush1.msra.mxu0 0.0
      %7245 = vmatprep.subr.mxu0 0.0
      %7246 = vmatpush1.msra.mxu0 0.0
      %7247 = vmatprep.subr.mxu0 0.0
      %7248 = vmatpush1.msra.mxu0 0.0
      %7249 = vmatprep.subr.mxu0 0.0
      %7250 = vmatpush1.msra.mxu0 0.0
      %7251 = vmatprep.subr.mxu0 0.0
      %7252 = vmatpush1.msra.mxu0 0.0
      %7253 = vmatprep.subr.mxu0 0.0
      %7254 = vmatpush1.msra.mxu0 0.0
      %7255 = vmatprep.subr.mxu0 0.0
      %7256 = vmatpush1.msra.mxu0 0.0
      %7257 = vmatprep.subr.mxu0 0.0
      %7258 = vmatpush1.msra.mxu0 0.0
      %7259 = vmatprep.subr.mxu0 0.0
      %7260 = vmatpush1.msra.mxu0 0.0
      %7261 = vmatprep.subr.mxu0 0.0
      %7262 = vmatpush1.msra.mxu0 0.0
      %7263 = vmatprep.subr.mxu0 0.0
      %7264 = vmatpush1.msra.mxu0 0.0
      %7265 = vmatprep.subr.mxu0 0.0
      %7266 = vmatpush1.msra.mxu0 0.0
      %7267 = vmatprep.subr.mxu0 0.0
      %7268 = vmatpush1.msra.mxu0 0.0
      %7269 = vmatprep.subr.mxu0 0.0
      %7270 = vmatpush1.msra.mxu0 0.0
      %7271 = vmatprep.subr.mxu0 0.0
      %7272 = vmatpush1.msra.mxu0 0.0
      %7273 = vmatprep.subr.mxu0 0.0
      %7274 = vmatpush1.msra.mxu0 0.0
      %7275 = vmatprep.subr.mxu0 0.0
      %7276 = vmatpush1.msra.mxu0 0.0
      %7277 = vmatprep.subr.mxu0 0.0
      %7278 = vmatpush1.msra.mxu0 0.0
      %7279 = vmatprep.subr.mxu0 0.0
      %7280 = vmatpush1.msra.mxu0 0.0
      %7281 = vmatprep.subr.mxu0 0.0
      %7282 = vmatpush1.msra.mxu0 0.0
      %7283 = vmatprep.subr.mxu0 0.0
      %7284 = vmatpush1.msra.mxu0 0.0
      %7285 = vmatprep.subr.mxu0 0.0
      %7286 = vmatpush1.msra.mxu0 0.0
      %7287 = vmatprep.subr.mxu0 0.0
      %7288 = vmatpush1.msra.mxu0 0.0
      %7289 = vmatprep.subr.mxu0 0.0
      %7290 = vmatpush1.msra.mxu0 0.0
      %7291 = vmatprep.subr.mxu0 0.0
      %7292 = vmatpush1.msra.mxu0 0.0
      %7293 = vmatprep.subr.mxu0 0.0
      %7294 = vmatpush1.msra.mxu0 0.0
      %7295 = vmatprep.subr.mxu0 0.0
      %7296 = vmatpush1.msra.mxu0 0.0
      %7297 = vmatprep.subr.mxu0 0.0
      %7298 = vmatpush1.msra.mxu0 0.0
      %7299 = vmatprep.subr.mxu0 0.0
      %7300 = vmatpush1.msra.mxu0 0.0
      %7301 = vmatprep.subr.mxu0 0.0
      %7302 = vmatpush1.msra.mxu0 0.0
      %7303 = vmatprep.subr.mxu0 0.0
      %7304 = vmatpush1.msra.mxu0 0.0
      %7305 = vmatprep.mubr.f32.mxu0 0.0
      %v7306 = vand.u32 %v6920, 4294901760
      %7307 = vmatmul.mubr.f32.gmra.mrb[0].mxu0 %v7306
      %v7308 = vpop.f32.mrb[0].mxu0
      %v7309 = vadd.f32 %v7231, %v7308
      %v7310 = vpop.f32.mrb[0].mxu0
      %v7311 = vadd.f32 %v7233, %v7310
      %7312 = vdwg.mxu0
      %v7313 = vand.u32 %v6916, 4294901760
      %7314 = vmatprep.subr.mxu0 %v7313
      %v7315 = vand.u32 %v6915, 4294901760
      %7316 = vmatpush1.msra.mxu0 %v7315
      %7317 = vmatprep.subr.mxu0 0.0
      %7318 = vmatpush1.msra.mxu0 0.0
      %7319 = vmatprep.subr.mxu0 0.0
      %7320 = vmatpush1.msra.mxu0 0.0
      %7321 = vmatprep.subr.mxu0 0.0
      %7322 = vmatpush1.msra.mxu0 0.0
      %7323 = vmatprep.subr.mxu0 0.0
      %7324 = vmatpush1.msra.mxu0 0.0
      %7325 = vmatprep.subr.mxu0 0.0
      %7326 = vmatpush1.msra.mxu0 0.0
      %7327 = vmatprep.subr.mxu0 0.0
      %7328 = vmatpush1.msra.mxu0 0.0
      %7329 = vmatprep.subr.mxu0 0.0
      %7330 = vmatpush1.msra.mxu0 0.0
      %7331 = vmatprep.subr.mxu0 0.0
      %7332 = vmatpush1.msra.mxu0 0.0
      %7333 = vmatprep.subr.mxu0 0.0
      %7334 = vmatpush1.msra.mxu0 0.0
      %7335 = vmatprep.subr.mxu0 0.0
      %7336 = vmatpush1.msra.mxu0 0.0
      %7337 = vmatprep.subr.mxu0 0.0
      %7338 = vmatpush1.msra.mxu0 0.0
      %7339 = vmatprep.subr.mxu0 0.0
      %7340 = vmatpush1.msra.mxu0 0.0
      %7341 = vmatprep.subr.mxu0 0.0
      %7342 = vmatpush1.msra.mxu0 0.0
      %7343 = vmatprep.subr.mxu0 0.0
      %7344 = vmatpush1.msra.mxu0 0.0
      %7345 = vmatprep.subr.mxu0 0.0
      %7346 = vmatpush1.msra.mxu0 0.0
      %7347 = vmatprep.subr.mxu0 0.0
      %7348 = vmatpush1.msra.mxu0 0.0
      %7349 = vmatprep.subr.mxu0 0.0
      %7350 = vmatpush1.msra.mxu0 0.0
      %7351 = vmatprep.subr.mxu0 0.0
      %7352 = vmatpush1.msra.mxu0 0.0
      %7353 = vmatprep.subr.mxu0 0.0
      %7354 = vmatpush1.msra.mxu0 0.0
      %7355 = vmatprep.subr.mxu0 0.0
      %7356 = vmatpush1.msra.mxu0 0.0
      %7357 = vmatprep.subr.mxu0 0.0
      %7358 = vmatpush1.msra.mxu0 0.0
      %7359 = vmatprep.subr.mxu0 0.0
      %7360 = vmatpush1.msra.mxu0 0.0
      %7361 = vmatprep.subr.mxu0 0.0
      %7362 = vmatpush1.msra.mxu0 0.0
      %7363 = vmatprep.subr.mxu0 0.0
      %7364 = vmatpush1.msra.mxu0 0.0
      %7365 = vmatprep.subr.mxu0 0.0
      %7366 = vmatpush1.msra.mxu0 0.0
      %7367 = vmatprep.subr.mxu0 0.0
      %7368 = vmatpush1.msra.mxu0 0.0
      %7369 = vmatprep.subr.mxu0 0.0
      %7370 = vmatpush1.msra.mxu0 0.0
      %7371 = vmatprep.subr.mxu0 0.0
      %7372 = vmatpush1.msra.mxu0 0.0
      %7373 = vmatprep.subr.mxu0 0.0
      %7374 = vmatpush1.msra.mxu0 0.0
      %7375 = vmatprep.subr.mxu0 0.0
      %7376 = vmatpush1.msra.mxu0 0.0
      %7377 = vmatprep.subr.mxu0 0.0
      %7378 = vmatpush1.msra.mxu0 0.0
      %7379 = vmatprep.mubr.f32.mxu0 0.0
      %v7380 = vand.u32 %v6920, 4294901760
      %7381 = vmatmul.mubr.f32.gmra.mrb[0].mxu0 %v7380
      %v7382 = vpop.f32.mrb[0].mxu0
      %v7383 = vadd.f32 %v7309, %v7382
      %v7384 = vpop.f32.mrb[0].mxu0
      %v7385 = vadd.f32 %v7311, %v7384
      %7386 = vdwg.mxu0
      %v7387 = vadd.f32 %v6893, %v7383
      %v7388 = vadd.f32 %v6894, %v7385
      %v7389 = vld [vmem:[%s7] sm:$0xff]
      %7391 = vset.pattern.permute.xlu0 0
      %7392 = vperm.xlu0 %7391, %v7389
      %v7393 = vpop.permute.xlu0 %7392
      %v7395 = vadd.f32 %v7387, %v7393
      %v7396 = vadd.f32 %v7388, %v7393
      %v7397 = vadd.f32 %v2967, %v2968
      %7398 = vadd.xlane.f32.xlu0 %v7397
      %v7399 = vpop.xlane.xlu0 %7398
      %v7400 = vmul.f32 %v7399, 0.00390625
      %v7401 = vadd.f32 %v7395, %v7396
      %7402 = vadd.xlane.f32.xlu0 %v7401
      %v7403 = vpop.xlane.xlu0 %7402
      %v7404 = vmul.f32 %v7403, 0.00390625
      %v7405 = vld [vmem:[%s10] sm:$0xff]
      %v7406 = vld [vmem:[%s10 + $0x8] sm:$0xff]
      %vm7407 = vcmask 130048
      %v7409 = vsel %vm7407, %v7405, 0
      %v7412 = vsel %vm7407, %v7406, 0
      %7414 = vmatprep.subr.mxu0 0.0
      %7415 = vmatpush1.msra.mxu0 %v7400
      %7416 = vmatprep.subr.mxu0 0.0
      %7417 = vmatpush1.msra.mxu0 %v7404
      %7418 = vmatprep.subr.mxu0 0.0
      %7419 = vmatpush1.msra.mxu0 0.0
      %7420 = vmatprep.subr.mxu0 0.0
      %7421 = vmatpush1.msra.mxu0 0.0
      %7422 = vmatprep.subr.mxu0 0.0
      %7423 = vmatpush1.msra.mxu0 0.0
      %7424 = vmatprep.subr.mxu0 0.0
      %7425 = vmatpush1.msra.mxu0 0.0
      %7426 = vmatprep.subr.mxu0 0.0
      %7427 = vmatpush1.msra.mxu0 0.0
      %7428 = vmatprep.subr.mxu0 0.0
      %7429 = vmatpush1.msra.mxu0 0.0
      %7430 = vmatprep.subr.mxu0 0.0
      %7431 = vmatpush1.msra.mxu0 0.0
      %7432 = vmatprep.subr.mxu0 0.0
      %7433 = vmatpush1.msra.mxu0 0.0
      %7434 = vmatprep.subr.mxu0 0.0
      %7435 = vmatpush1.msra.mxu0 0.0
      %7436 = vmatprep.subr.mxu0 0.0
      %7437 = vmatpush1.msra.mxu0 0.0
      %7438 = vmatprep.subr.mxu0 0.0
      %7439 = vmatpush1.msra.mxu0 0.0
      %7440 = vmatprep.subr.mxu0 0.0
      %7441 = vmatpush1.msra.mxu0 0.0
      %7442 = vmatprep.subr.mxu0 0.0
      %7443 = vmatpush1.msra.mxu0 0.0
      %7444 = vmatprep.subr.mxu0 0.0
      %7445 = vmatpush1.msra.mxu0 0.0
      %7446 = vmatprep.subr.mxu0 0.0
      %7447 = vmatpush1.msra.mxu0 0.0
      %7448 = vmatprep.subr.mxu0 0.0
      %7449 = vmatpush1.msra.mxu0 0.0
      %7450 = vmatprep.subr.mxu0 0.0
      %7451 = vmatpush1.msra.mxu0 0.0
      %7452 = vmatprep.subr.mxu0 0.0
      %7453 = vmatpush1.msra.mxu0 0.0
      %7454 = vmatprep.subr.mxu0 0.0
      %7455 = vmatpush1.msra.mxu0 0.0
      %7456 = vmatprep.subr.mxu0 0.0
      %7457 = vmatpush1.msra.mxu0 0.0
      %7458 = vmatprep.subr.mxu0 0.0
      %7459 = vmatpush1.msra.mxu0 0.0
      %7460 = vmatprep.subr.mxu0 0.0
      %7461 = vmatpush1.msra.mxu0 0.0
      %7462 = vmatprep.subr.mxu0 0.0
      %7463 = vmatpush1.msra.mxu0 0.0
      %7464 = vmatprep.subr.mxu0 0.0
      %7465 = vmatpush1.msra.mxu0 0.0
      %7466 = vmatprep.subr.mxu0 0.0
      %7467 = vmatpush1.msra.mxu0 0.0
      %7468 = vmatprep.subr.mxu0 0.0
      %7469 = vmatpush1.msra.mxu0 0.0
      %7470 = vmatprep.subr.mxu0 0.0
      %7471 = vmatpush1.msra.mxu0 0.0
      %7472 = vmatprep.subr.mxu0 0.0
      %7473 = vmatpush1.msra.mxu0 0.0
      %7474 = vmatprep.subr.mxu0 0.0
      %7475 = vmatpush1.msra.mxu0 0.0
      %7476 = vmatprep.subr.mxu0 0.0
      %7477 = vmatpush1.msra.mxu0 0.0
      %7478 = vmatprep.mubr.f32.mxu0 0.0
      %7479 = vmatmul.mubr.f32.gmra.mrb[0].mxu0 %v7409
      %v7480 = vpop.f32.mrb[0].mxu0
      %v7481 = vadd.f32 0.0, %v7480
      %v7482 = vpop.f32.mrb[0].mxu0
      %7483 = vmatprep.mubr.f32.mxu0 0.0
      %7484 = vmatmul.mubr.f32.gmra.mrb[0].mxu0 %v7412
      %v7485 = vpop.f32.mrb[0].mxu0
      %v7486 = vadd.f32 0.0, %v7485
      %v7487 = vpop.f32.mrb[0].mxu0
      %7488 = vdwg.mxu0
      %v7489 = vmul.f32 %v7481, 0.25
      %v7490 = vmul.f32 %v7486, 0.25
      %v7491 = vsub.f32 %v7400, %v7489
      %v7492 = vsub.f32 %v7404, %v7490
      %v7493 = vmul.f32 %v7491, 1.442695
      %v7494 = vpow.pop %v7493
      %v7495 = vmul.f32 %v7492, 1.442695
      %v7496 = vpow.pop %v7495
      %7497 = vmatprep.subr.mxu0 0.0
      %v7498 = vand.u32 %v7494, 4294901760
      %7499 = vmatpush1.msra.mxu0 %v7498
      %7500 = vmatprep.subr.mxu0 0.0
      %v7501 = vand.u32 %v7496, 4294901760
      %7502 = vmatpush1.msra.mxu0 %v7501
      %7503 = vmatprep.subr.mxu0 0.0
      %7504 = vmatpush1.msra.mxu0 0.0
      %7505 = vmatprep.subr.mxu0 0.0
      %7506 = vmatpush1.msra.mxu0 0.0
      %7507 = vmatprep.subr.mxu0 0.0
      %7508 = vmatpush1.msra.mxu0 0.0
      %7509 = vmatprep.subr.mxu0 0.0
      %7510 = vmatpush1.msra.mxu0 0.0
      %7511 = vmatprep.subr.mxu0 0.0
      %7512 = vmatpush1.msra.mxu0 0.0
      %7513 = vmatprep.subr.mxu0 0.0
      %7514 = vmatpush1.msra.mxu0 0.0
      %7515 = vmatprep.subr.mxu0 0.0
      %7516 = vmatpush1.msra.mxu0 0.0
      %7517 = vmatprep.subr.mxu0 0.0
      %7518 = vmatpush1.msra.mxu0 0.0
      %7519 = vmatprep.subr.mxu0 0.0
      %7520 = vmatpush1.msra.mxu0 0.0
      %7521 = vmatprep.subr.mxu0 0.0
      %7522 = vmatpush1.msra.mxu0 0.0
      %7523 = vmatprep.subr.mxu0 0.0
      %7524 = vmatpush1.msra.mxu0 0.0
      %7525 = vmatprep.subr.mxu0 0.0
      %7526 = vmatpush1.msra.mxu0 0.0
      %7527 = vmatprep.subr.mxu0 0.0
      %7528 = vmatpush1.msra.mxu0 0.0
      %7529 = vmatprep.subr.mxu0 0.0
      %7530 = vmatpush1.msra.mxu0 0.0
      %7531 = vmatprep.subr.mxu0 0.0
      %7532 = vmatpush1.msra.mxu0 0.0
      %7533 = vmatprep.subr.mxu0 0.0
      %7534 = vmatpush1.msra.mxu0 0.0
      %7535 = vmatprep.subr.mxu0 0.0
      %7536 = vmatpush1.msra.mxu0 0.0
      %7537 = vmatprep.subr.mxu0 0.0
      %7538 = vmatpush1.msra.mxu0 0.0
      %7539 = vmatprep.subr.mxu0 0.0
      %7540 = vmatpush1.msra.mxu0 0.0
      %7541 = vmatprep.subr.mxu0 0.0
      %7542 = vmatpush1.msra.mxu0 0.0
      %7543 = vmatprep.subr.mxu0 0.0
      %7544 = vmatpush1.msra.mxu0 0.0
      %7545 = vmatprep.subr.mxu0 0.0
      %7546 = vmatpush1.msra.mxu0 0.0
      %7547 = vmatprep.subr.mxu0 0.0
      %7548 = vmatpush1.msra.mxu0 0.0
      %7549 = vmatprep.subr.mxu0 0.0
      %7550 = vmatpush1.msra.mxu0 0.0
      %7551 = vmatprep.subr.mxu0 0.0
      %7552 = vmatpush1.msra.mxu0 0.0
      %7553 = vmatprep.subr.mxu0 0.0
      %7554 = vmatpush1.msra.mxu0 0.0
      %7555 = vmatprep.subr.mxu0 0.0
      %7556 = vmatpush1.msra.mxu0 0.0
      %7557 = vmatprep.subr.mxu0 0.0
      %7558 = vmatpush1.msra.mxu0 0.0
      %7559 = vmatprep.subr.mxu0 0.0
      %7560 = vmatpush1.msra.mxu0 0.0
      %7561 = vmatprep.subr.mxu0 0.0
      %7562 = vmatpush1.msra.mxu0 0.0
      %7563 = vmatprep.mubr.f32.mxu0 0.0
      %v7564 = vand.u32 %v7409, 4294901760
      %v7565 = vsub.f32 %v7409, %v7564
      %v7566 = vand.u32 %v7565, 4294901760
      %v7567 = vsub.f32 %v7565, %v7566
      %v7568 = vand.u32 %v7567, 4294901760
      %7569 = vmatmul.mubr.f32.gmra.mrb[0].mxu0 %v7568
      %v7570 = vpop.f32.mrb[0].mxu0
      %v7571 = vadd.f32 0.0, %v7570
      %v7572 = vpop.f32.mrb[0].mxu0
      %7573 = vmatprep.mubr.f32.mxu0 0.0
      %v7574 = vand.u32 %v7412, 4294901760
      %v7575 = vsub.f32 %v7412, %v7574
      %v7576 = vand.u32 %v7575, 4294901760
      %v7577 = vsub.f32 %v7575, %v7576
      %v7578 = vand.u32 %v7577, 4294901760
      %7579 = vmatmul.mubr.f32.gmra.mrb[0].mxu0 %v7578
      %v7580 = vpop.f32.mrb[0].mxu0
      %v7581 = vadd.f32 0.0, %v7580
      %v7582 = vpop.f32.mrb[0].mxu0
      %7583 = vdwg.mxu0
      %7584 = vmatprep.subr.mxu0 0.0
      %v7585 = vand.u32 %v7494, 4294901760
      %v7586 = vsub.f32 %v7494, %v7585
      %v7587 = vand.u32 %v7586, 4294901760
      %v7588 = vsub.f32 %v7586, %v7587
      %v7589 = vand.u32 %v7588, 4294901760
      %7590 = vmatpush1.msra.mxu0 %v7589
      %7591 = vmatprep.subr.mxu0 0.0
      %v7592 = vand.u32 %v7496, 4294901760
      %v7593 = vsub.f32 %v7496, %v7592
      %v7594 = vand.u32 %v7593, 4294901760
      %v7595 = vsub.f32 %v7593, %v7594
      %v7596 = vand.u32 %v7595, 4294901760
      %7597 = vmatpush1.msra.mxu0 %v7596
      %7598 = vmatprep.subr.mxu0 0.0
      %7599 = vmatpush1.msra.mxu0 0.0
      %7600 = vmatprep.subr.mxu0 0.0
      %7601 = vmatpush1.msra.mxu0 0.0
      %7602 = vmatprep.subr.mxu0 0.0
      %7603 = vmatpush1.msra.mxu0 0.0
      %7604 = vmatprep.subr.mxu0 0.0
      %7605 = vmatpush1.msra.mxu0 0.0
      %7606 = vmatprep.subr.mxu0 0.0
      %7607 = vmatpush1.msra.mxu0 0.0
      %7608 = vmatprep.subr.mxu0 0.0
      %7609 = vmatpush1.msra.mxu0 0.0
      %7610 = vmatprep.subr.mxu0 0.0
      %7611 = vmatpush1.msra.mxu0 0.0
      %7612 = vmatprep.subr.mxu0 0.0
      %7613 = vmatpush1.msra.mxu0 0.0
      %7614 = vmatprep.subr.mxu0 0.0
      %7615 = vmatpush1.msra.mxu0 0.0
      %7616 = vmatprep.subr.mxu0 0.0
      %7617 = vmatpush1.msra.mxu0 0.0
      %7618 = vmatprep.subr.mxu0 0.0
      %7619 = vmatpush1.msra.mxu0 0.0
      %7620 = vmatprep.subr.mxu0 0.0
      %7621 = vmatpush1.msra.mxu0 0.0
      %7622 = vmatprep.subr.mxu0 0.0
      %7623 = vmatpush1.msra.mxu0 0.0
      %7624 = vmatprep.subr.mxu0 0.0
      %7625 = vmatpush1.msra.mxu0 0.0
      %7626 = vmatprep.subr.mxu0 0.0
      %7627 = vmatpush1.msra.mxu0 0.0
      %7628 = vmatprep.subr.mxu0 0.0
      %7629 = vmatpush1.msra.mxu0 0.0
      %7630 = vmatprep.subr.mxu0 0.0
      %7631 = vmatpush1.msra.mxu0 0.0
      %7632 = vmatprep.subr.mxu0 0.0
      %7633 = vmatpush1.msra.mxu0 0.0
      %7634 = vmatprep.subr.mxu0 0.0
      %7635 = vmatpush1.msra.mxu0 0.0
      %7636 = vmatprep.subr.mxu0 0.0
      %7637 = vmatpush1.msra.mxu0 0.0
      %7638 = vmatprep.subr.mxu0 0.0
      %7639 = vmatpush1.msra.mxu0 0.0
      %7640 = vmatprep.subr.mxu0 0.0
      %7641 = vmatpush1.msra.mxu0 0.0
      %7642 = vmatprep.subr.mxu0 0.0
      %7643 = vmatpush1.msra.mxu0 0.0
      %7644 = vmatprep.subr.mxu0 0.0
      %7645 = vmatpush1.msra.mxu0 0.0
      %7646 = vmatprep.subr.mxu0 0.0
      %7647 = vmatpush1.msra.mxu0 0.0
      %7648 = vmatprep.subr.mxu0 0.0
      %7649 = vmatpush1.msra.mxu0 0.0
      %7650 = vmatprep.subr.mxu0 0.0
      %7651 = vmatpush1.msra.mxu0 0.0
      %7652 = vmatprep.subr.mxu0 0.0
      %7653 = vmatpush1.msra.mxu0 0.0
      %7654 = vmatprep.subr.mxu0 0.0
      %7655 = vmatpush1.msra.mxu0 0.0
      %7656 = vmatprep.subr.mxu0 0.0
      %7657 = vmatpush1.msra.mxu0 0.0
      %7658 = vmatprep.mubr.f32.mxu0 0.0
      %v7659 = vand.u32 %v7409, 4294901760
      %7660 = vmatmul.mubr.f32.gmra.mrb[0].mxu0 %v7659
      %v7661 = vpop.f32.mrb[0].mxu0
      %v7662 = vadd.f32 %v7571, %v7661
      %v7663 = vpop.f32.mrb[0].mxu0
      %7664 = vmatprep.mubr.f32.mxu0 0.0
      %v7665 = vand.u32 %v7412, 4294901760
      %7666 = vmatmul.mubr.f32.gmra.mrb[0].mxu0 %v7665
      %v7667 = vpop.f32.mrb[0].mxu0
      %v7668 = vadd.f32 %v7581, %v7667
      %v7669 = vpop.f32.mrb[0].mxu0
      %7670 = vdwg.mxu0
      %7671 = vmatprep.subr.mxu0 0.0
      %v7672 = vand.u32 %v7494, 4294901760
      %v7673 = vsub.f32 %v7494, %v7672
      %7674 = vmatpush1.msra.mxu0 %v7673
      %7675 = vmatprep.subr.mxu0 0.0
      %v7676 = vand.u32 %v7496, 4294901760
      %v7677 = vsub.f32 %v7496, %v7676
      %7678 = vmatpush1.msra.mxu0 %v7677
      %7679 = vmatprep.subr.mxu0 0.0
      %7680 = vmatpush1.msra.mxu0 0.0
      %7681 = vmatprep.subr.mxu0 0.0
      %7682 = vmatpush1.msra.mxu0 0.0
      %7683 = vmatprep.subr.mxu0 0.0
      %7684 = vmatpush1.msra.mxu0 0.0
      %7685 = vmatprep.subr.mxu0 0.0
      %7686 = vmatpush1.msra.mxu0 0.0
      %7687 = vmatprep.subr.mxu0 0.0
      %7688 = vmatpush1.msra.mxu0 0.0
      %7689 = vmatprep.subr.mxu0 0.0
      %7690 = vmatpush1.msra.mxu0 0.0
      %7691 = vmatprep.subr.mxu0 0.0
      %7692 = vmatpush1.msra.mxu0 0.0
      %7693 = vmatprep.subr.mxu0 0.0
      %7694 = vmatpush1.msra.mxu0 0.0
      %7695 = vmatprep.subr.mxu0 0.0
      %7696 = vmatpush1.msra.mxu0 0.0
      %7697 = vmatprep.subr.mxu0 0.0
      %7698 = vmatpush1.msra.mxu0 0.0
      %7699 = vmatprep.subr.mxu0 0.0
      %7700 = vmatpush1.msra.mxu0 0.0
      %7701 = vmatprep.subr.mxu0 0.0
      %7702 = vmatpush1.msra.mxu0 0.0
      %7703 = vmatprep.subr.mxu0 0.0
      %7704 = vmatpush1.msra.mxu0 0.0
      %7705 = vmatprep.subr.mxu0 0.0
      %7706 = vmatpush1.msra.mxu0 0.0
      %7707 = vmatprep.subr.mxu0 0.0
      %7708 = vmatpush1.msra.mxu0 0.0
      %7709 = vmatprep.subr.mxu0 0.0
      %7710 = vmatpush1.msra.mxu0 0.0
      %7711 = vmatprep.subr.mxu0 0.0
      %7712 = vmatpush1.msra.mxu0 0.0
      %7713 = vmatprep.subr.mxu0 0.0
      %7714 = vmatpush1.msra.mxu0 0.0
      %7715 = vmatprep.subr.mxu0 0.0
      %7716 = vmatpush1.msra.mxu0 0.0
      %7717 = vmatprep.subr.mxu0 0.0
      %7718 = vmatpush1.msra.mxu0 0.0
      %7719 = vmatprep.subr.mxu0 0.0
      %7720 = vmatpush1.msra.mxu0 0.0
      %7721 = vmatprep.subr.mxu0 0.0
      %7722 = vmatpush1.msra.mxu0 0.0
      %7723 = vmatprep.subr.mxu0 0.0
      %7724 = vmatpush1.msra.mxu0 0.0
      %7725 = vmatprep.subr.mxu0 0.0
      %7726 = vmatpush1.msra.mxu0 0.0
      %7727 = vmatprep.subr.mxu0 0.0
      %7728 = vmatpush1.msra.mxu0 0.0
      %7729 = vmatprep.subr.mxu0 0.0
      %7730 = vmatpush1.msra.mxu0 0.0
      %7731 = vmatprep.subr.mxu0 0.0
      %7732 = vmatpush1.msra.mxu0 0.0
      %7733 = vmatprep.subr.mxu0 0.0
      %7734 = vmatpush1.msra.mxu0 0.0
      %7735 = vmatprep.subr.mxu0 0.0
      %7736 = vmatpush1.msra.mxu0 0.0
      %7737 = vmatprep.subr.mxu0 0.0
      %7738 = vmatpush1.msra.mxu0 0.0
      %7739 = vmatprep.mubr.f32.mxu0 0.0
      %v7740 = vand.u32 %v7409, 4294901760
      %v7741 = vsub.f32 %v7409, %v7740
      %7742 = vmatmul.mubr.f32.gmra.mrb[0].mxu0 %v7741
      %v7743 = vpop.f32.mrb[0].mxu0
      %v7744 = vadd.f32 %v7662, %v7743
      %v7745 = vpop.f32.mrb[0].mxu0
      %7746 = vmatprep.mubr.f32.mxu0 0.0
      %v7747 = vand.u32 %v7412, 4294901760
      %v7748 = vsub.f32 %v7412, %v7747
      %7749 = vmatmul.mubr.f32.gmra.mrb[0].mxu0 %v7748
      %v7750 = vpop.f32.mrb[0].mxu0
      %v7751 = vadd.f32 %v7668, %v7750
      %v7752 = vpop.f32.mrb[0].mxu0
      %7753 = vdwg.mxu0
      %7754 = vmatprep.subr.mxu0 0.0
      %v7755 = vand.u32 %v7494, 4294901760
      %7756 = vmatpush1.msra.mxu0 %v7755
      %7757 = vmatprep.subr.mxu0 0.0
      %v7758 = vand.u32 %v7496, 4294901760
      %7759 = vmatpush1.msra.mxu0 %v7758
      %7760 = vmatprep.subr.mxu0 0.0
      %7761 = vmatpush1.msra.mxu0 0.0
      %7762 = vmatprep.subr.mxu0 0.0
      %7763 = vmatpush1.msra.mxu0 0.0
      %7764 = vmatprep.subr.mxu0 0.0
      %7765 = vmatpush1.msra.mxu0 0.0
      %7766 = vmatprep.subr.mxu0 0.0
      %7767 = vmatpush1.msra.mxu0 0.0
      %7768 = vmatprep.subr.mxu0 0.0
      %7769 = vmatpush1.msra.mxu0 0.0
      %7770 = vmatprep.subr.mxu0 0.0
      %7771 = vmatpush1.msra.mxu0 0.0
      %7772 = vmatprep.subr.mxu0 0.0
      %7773 = vmatpush1.msra.mxu0 0.0
      %7774 = vmatprep.subr.mxu0 0.0
      %7775 = vmatpush1.msra.mxu0 0.0
      %7776 = vmatprep.subr.mxu0 0.0
      %7777 = vmatpush1.msra.mxu0 0.0
      %7778 = vmatprep.subr.mxu0 0.0
      %7779 = vmatpush1.msra.mxu0 0.0
      %7780 = vmatprep.subr.mxu0 0.0
      %7781 = vmatpush1.msra.mxu0 0.0
      %7782 = vmatprep.subr.mxu0 0.0
      %7783 = vmatpush1.msra.mxu0 0.0
      %7784 = vmatprep.subr.mxu0 0.0
      %7785 = vmatpush1.msra.mxu0 0.0
      %7786 = vmatprep.subr.mxu0 0.0
      %7787 = vmatpush1.msra.mxu0 0.0
      %7788 = vmatprep.subr.mxu0 0.0
      %7789 = vmatpush1.msra.mxu0 0.0
      %7790 = vmatprep.subr.mxu0 0.0
      %7791 = vmatpush1.msra.mxu0 0.0
      %7792 = vmatprep.subr.mxu0 0.0
      %7793 = vmatpush1.msra.mxu0 0.0
      %7794 = vmatprep.subr.mxu0 0.0
      %7795 = vmatpush1.msra.mxu0 0.0
      %7796 = vmatprep.subr.mxu0 0.0
      %7797 = vmatpush1.msra.mxu0 0.0
      %7798 = vmatprep.subr.mxu0 0.0
      %7799 = vmatpush1.msra.mxu0 0.0
      %7800 = vmatprep.subr.mxu0 0.0
      %7801 = vmatpush1.msra.mxu0 0.0
      %7802 = vmatprep.subr.mxu0 0.0
      %7803 = vmatpush1.msra.mxu0 0.0
      %7804 = vmatprep.subr.mxu0 0.0
      %7805 = vmatpush1.msra.mxu0 0.0
      %7806 = vmatprep.subr.mxu0 0.0
      %7807 = vmatpush1.msra.mxu0 0.0
      %7808 = vmatprep.subr.mxu0 0.0
      %7809 = vmatpush1.msra.mxu0 0.0
      %7810 = vmatprep.subr.mxu0 0.0
      %7811 = vmatpush1.msra.mxu0 0.0
      %7812 = vmatprep.subr.mxu0 0.0
      %7813 = vmatpush1.msra.mxu0 0.0
      %7814 = vmatprep.subr.mxu0 0.0
      %7815 = vmatpush1.msra.mxu0 0.0
      %7816 = vmatprep.subr.mxu0 0.0
      %7817 = vmatpush1.msra.mxu0 0.0
      %7818 = vmatprep.subr.mxu0 0.0
      %7819 = vmatpush1.msra.mxu0 0.0
      %7820 = vmatprep.mubr.f32.mxu0 0.0
      %v7821 = vand.u32 %v7409, 4294901760
      %v7822 = vsub.f32 %v7409, %v7821
      %v7823 = vand.u32 %v7822, 4294901760
      %7824 = vmatmul.mubr.f32.gmra.mrb[0].mxu0 %v7823
      %v7825 = vpop.f32.mrb[0].mxu0
      %v7826 = vadd.f32 %v7744, %v7825
      %v7827 = vpop.f32.mrb[0].mxu0
      %7828 = vmatprep.mubr.f32.mxu0 0.0
      %v7829 = vand.u32 %v7412, 4294901760
      %v7830 = vsub.f32 %v7412, %v7829
      %v7831 = vand.u32 %v7830, 4294901760
      %7832 = vmatmul.mubr.f32.gmra.mrb[0].mxu0 %v7831
      %v7833 = vpop.f32.mrb[0].mxu0
      %v7834 = vadd.f32 %v7751, %v7833
      %v7835 = vpop.f32.mrb[0].mxu0
      %7836 = vdwg.mxu0
      %7837 = vmatprep.subr.mxu0 0.0
      %v7838 = vand.u32 %v7494, 4294901760
      %v7839 = vsub.f32 %v7494, %v7838
      %v7840 = vand.u32 %v7839, 4294901760
      %7841 = vmatpush1.msra.mxu0 %v7840
      %7842 = vmatprep.subr.mxu0 0.0
      %v7843 = vand.u32 %v7496, 4294901760
      %v7844 = vsub.f32 %v7496, %v7843
      %v7845 = vand.u32 %v7844, 4294901760
      %7846 = vmatpush1.msra.mxu0 %v7845
      %7847 = vmatprep.subr.mxu0 0.0
      %7848 = vmatpush1.msra.mxu0 0.0
      %7849 = vmatprep.subr.mxu0 0.0
      %7850 = vmatpush1.msra.mxu0 0.0
      %7851 = vmatprep.subr.mxu0 0.0
      %7852 = vmatpush1.msra.mxu0 0.0
      %7853 = vmatprep.subr.mxu0 0.0
      %7854 = vmatpush1.msra.mxu0 0.0
      %7855 = vmatprep.subr.mxu0 0.0
      %7856 = vmatpush1.msra.mxu0 0.0
      %7857 = vmatprep.subr.mxu0 0.0
      %7858 = vmatpush1.msra.mxu0 0.0
      %7859 = vmatprep.subr.mxu0 0.0
      %7860 = vmatpush1.msra.mxu0 0.0
      %7861 = vmatprep.subr.mxu0 0.0
      %7862 = vmatpush1.msra.mxu0 0.0
      %7863 = vmatprep.subr.mxu0 0.0
      %7864 = vmatpush1.msra.mxu0 0.0
      %7865 = vmatprep.subr.mxu0 0.0
      %7866 = vmatpush1.msra.mxu0 0.0
      %7867 = vmatprep.subr.mxu0 0.0
      %7868 = vmatpush1.msra.mxu0 0.0
      %7869 = vmatprep.subr.mxu0 0.0
      %7870 = vmatpush1.msra.mxu0 0.0
      %7871 = vmatprep.subr.mxu0 0.0
      %7872 = vmatpush1.msra.mxu0 0.0
      %7873 = vmatprep.subr.mxu0 0.0
      %7874 = vmatpush1.msra.mxu0 0.0
      %7875 = vmatprep.subr.mxu0 0.0
      %7876 = vmatpush1.msra.mxu0 0.0
      %7877 = vmatprep.subr.mxu0 0.0
      %7878 = vmatpush1.msra.mxu0 0.0
      %7879 = vmatprep.subr.mxu0 0.0
      %7880 = vmatpush1.msra.mxu0 0.0
      %7881 = vmatprep.subr.mxu0 0.0
      %7882 = vmatpush1.msra.mxu0 0.0
      %7883 = vmatprep.subr.mxu0 0.0
      %7884 = vmatpush1.msra.mxu0 0.0
      %7885 = vmatprep.subr.mxu0 0.0
      %7886 = vmatpush1.msra.mxu0 0.0
      %7887 = vmatprep.subr.mxu0 0.0
      %7888 = vmatpush1.msra.mxu0 0.0
      %7889 = vmatprep.subr.mxu0 0.0
      %7890 = vmatpush1.msra.mxu0 0.0
      %7891 = vmatprep.subr.mxu0 0.0
      %7892 = vmatpush1.msra.mxu0 0.0
      %7893 = vmatprep.subr.mxu0 0.0
      %7894 = vmatpush1.msra.mxu0 0.0
      %7895 = vmatprep.subr.mxu0 0.0
      %7896 = vmatpush1.msra.mxu0 0.0
      %7897 = vmatprep.subr.mxu0 0.0
      %7898 = vmatpush1.msra.mxu0 0.0
      %7899 = vmatprep.subr.mxu0 0.0
      %7900 = vmatpush1.msra.mxu0 0.0
      %7901 = vmatprep.subr.mxu0 0.0
      %7902 = vmatpush1.msra.mxu0 0.0
      %7903 = vmatprep.subr.mxu0 0.0
      %7904 = vmatpush1.msra.mxu0 0.0
      %7905 = vmatprep.subr.mxu0 0.0
      %7906 = vmatpush1.msra.mxu0 0.0
      %7907 = vmatprep.mubr.f32.mxu0 0.0
      %v7908 = vand.u32 %v7409, 4294901760
      %7909 = vmatmul.mubr.f32.gmra.mrb[0].mxu0 %v7908
      %v7910 = vpop.f32.mrb[0].mxu0
      %v7911 = vadd.f32 %v7826, %v7910
      %v7912 = vpop.f32.mrb[0].mxu0
      %7913 = vmatprep.mubr.f32.mxu0 0.0
      %v7914 = vand.u32 %v7412, 4294901760
      %7915 = vmatmul.mubr.f32.gmra.mrb[0].mxu0 %v7914
      %v7916 = vpop.f32.mrb[0].mxu0
      %v7917 = vadd.f32 %v7834, %v7916
      %v7918 = vpop.f32.mrb[0].mxu0
      %7919 = vdwg.mxu0
      %7920 = vmatprep.subr.mxu0 0.0
      %v7921 = vand.u32 %v7494, 4294901760
      %7922 = vmatpush1.msra.mxu0 %v7921
      %7923 = vmatprep.subr.mxu0 0.0
      %v7924 = vand.u32 %v7496, 4294901760
      %7925 = vmatpush1.msra.mxu0 %v7924
      %7926 = vmatprep.subr.mxu0 0.0
      %7927 = vmatpush1.msra.mxu0 0.0
      %7928 = vmatprep.subr.mxu0 0.0
      %7929 = vmatpush1.msra.mxu0 0.0
      %7930 = vmatprep.subr.mxu0 0.0
      %7931 = vmatpush1.msra.mxu0 0.0
      %7932 = vmatprep.subr.mxu0 0.0
      %7933 = vmatpush1.msra.mxu0 0.0
      %7934 = vmatprep.subr.mxu0 0.0
      %7935 = vmatpush1.msra.mxu0 0.0
      %7936 = vmatprep.subr.mxu0 0.0
      %7937 = vmatpush1.msra.mxu0 0.0
      %7938 = vmatprep.subr.mxu0 0.0
      %7939 = vmatpush1.msra.mxu0 0.0
      %7940 = vmatprep.subr.mxu0 0.0
      %7941 = vmatpush1.msra.mxu0 0.0
      %7942 = vmatprep.subr.mxu0 0.0
      %7943 = vmatpush1.msra.mxu0 0.0
      %7944 = vmatprep.subr.mxu0 0.0
      %7945 = vmatpush1.msra.mxu0 0.0
      %7946 = vmatprep.subr.mxu0 0.0
      %7947 = vmatpush1.msra.mxu0 0.0
      %7948 = vmatprep.subr.mxu0 0.0
      %7949 = vmatpush1.msra.mxu0 0.0
      %7950 = vmatprep.subr.mxu0 0.0
      %7951 = vmatpush1.msra.mxu0 0.0
      %7952 = vmatprep.subr.mxu0 0.0
      %7953 = vmatpush1.msra.mxu0 0.0
      %7954 = vmatprep.subr.mxu0 0.0
      %7955 = vmatpush1.msra.mxu0 0.0
      %7956 = vmatprep.subr.mxu0 0.0
      %7957 = vmatpush1.msra.mxu0 0.0
      %7958 = vmatprep.subr.mxu0 0.0
      %7959 = vmatpush1.msra.mxu0 0.0
      %7960 = vmatprep.subr.mxu0 0.0
      %7961 = vmatpush1.msra.mxu0 0.0
      %7962 = vmatprep.subr.mxu0 0.0
      %7963 = vmatpush1.msra.mxu0 0.0
      %7964 = vmatprep.subr.mxu0 0.0
      %7965 = vmatpush1.msra.mxu0 0.0
      %7966 = vmatprep.subr.mxu0 0.0
      %7967 = vmatpush1.msra.mxu0 0.0
      %7968 = vmatprep.subr.mxu0 0.0
      %7969 = vmatpush1.msra.mxu0 0.0
      %7970 = vmatprep.subr.mxu0 0.0
      %7971 = vmatpush1.msra.mxu0 0.0
      %7972 = vmatprep.subr.mxu0 0.0
      %7973 = vmatpush1.msra.mxu0 0.0
      %7974 = vmatprep.subr.mxu0 0.0
      %7975 = vmatpush1.msra.mxu0 0.0
      %7976 = vmatprep.subr.mxu0 0.0
      %7977 = vmatpush1.msra.mxu0 0.0
      %7978 = vmatprep.subr.mxu0 0.0
      %7979 = vmatpush1.msra.mxu0 0.0
      %7980 = vmatprep.subr.mxu0 0.0
      %7981 = vmatpush1.msra.mxu0 0.0
      %7982 = vmatprep.subr.mxu0 0.0
      %7983 = vmatpush1.msra.mxu0 0.0
      %7984 = vmatprep.subr.mxu0 0.0
      %7985 = vmatpush1.msra.mxu0 0.0
      %7986 = vmatprep.mubr.f32.mxu0 0.0
      %v7987 = vand.u32 %v7409, 4294901760
      %7988 = vmatmul.mubr.f32.gmra.mrb[0].mxu0 %v7987
      %v7989 = vpop.f32.mrb[0].mxu0
      %v7990 = vadd.f32 %v7911, %v7989
      %v7991 = vpop.f32.mrb[0].mxu0
      %7992 = vmatprep.mubr.f32.mxu0 0.0
      %v7993 = vand.u32 %v7412, 4294901760
      %7994 = vmatmul.mubr.f32.gmra.mrb[0].mxu0 %v7993
      %v7995 = vpop.f32.mrb[0].mxu0
      %v7996 = vadd.f32 %v7917, %v7995
      %v7997 = vpop.f32.mrb[0].mxu0
      %7998 = vdwg.mxu0
      %v7999 = vrcp.pop %v7990
      %v8000 = vmul.f32 %v7494, %v7999
      %v8001 = vrcp.pop %v7996
      %v8002 = vmul.f32 %v7496, %v8001
      %v8003 = vld [vmem:[%s11] sm:$0x3]
      %8005 = vset.pattern.permute.xlu0 0
      %8006 = vperm.xlu0 %8005, %v8000
      %v8007 = vpop.permute.xlu0 %8006
      %v8009 = vmul.f32 %v8007, %v7395
      %v8010 = vmul.f32 %v8007, %v7396
      %8012 = vset.pattern.permute.xlu0 0
      %8013 = vperm.xlu0 %8012, %v8002
      %v8014 = vpop.permute.xlu0 %8013
      %v8016 = vmul.f32 %v8014, %v2967
      %v8017 = vmul.f32 %v8014, %v2968
      %v8018 = vadd.f32 %v8009, %v8016
      %v8019 = vadd.f32 %v8010, %v8017
      %v8021 = vsel %vm1371, %v8003, 0
      %v8023 = vand.u32 %v8019, 4294901760
      %8024 = vmatprep.subr.mxu0 %v8023
      %v8025 = vand.u32 %v8018, 4294901760
      %8026 = vmatpush1.msra.mxu0 %v8025
      %8027 = vmatprep.subr.mxu0 0.0
      %8028 = vmatpush1.msra.mxu0 0.0
      %8029 = vmatprep.subr.mxu0 0.0
      %8030 = vmatpush1.msra.mxu0 0.0
      %8031 = vmatprep.subr.mxu0 0.0
      %8032 = vmatpush1.msra.mxu0 0.0
      %8033 = vmatprep.subr.mxu0 0.0
      %8034 = vmatpush1.msra.mxu0 0.0
      %8035 = vmatprep.subr.mxu0 0.0
      %8036 = vmatpush1.msra.mxu0 0.0
      %8037 = vmatprep.subr.mxu0 0.0
      %8038 = vmatpush1.msra.mxu0 0.0
      %8039 = vmatprep.subr.mxu0 0.0
      %8040 = vmatpush1.msra.mxu0 0.0
      %8041 = vmatprep.subr.mxu0 0.0
      %8042 = vmatpush1.msra.mxu0 0.0
      %8043 = vmatprep.subr.mxu0 0.0
      %8044 = vmatpush1.msra.mxu0 0.0
      %8045 = vmatprep.subr.mxu0 0.0
      %8046 = vmatpush1.msra.mxu0 0.0
      %8047 = vmatprep.subr.mxu0 0.0
      %8048 = vmatpush1.msra.mxu0 0.0
      %8049 = vmatprep.subr.mxu0 0.0
      %8050 = vmatpush1.msra.mxu0 0.0
      %8051 = vmatprep.subr.mxu0 0.0
      %8052 = vmatpush1.msra.mxu0 0.0
      %8053 = vmatprep.subr.mxu0 0.0
      %8054 = vmatpush1.msra.mxu0 0.0
      %8055 = vmatprep.subr.mxu0 0.0
      %8056 = vmatpush1.msra.mxu0 0.0
      %8057 = vmatprep.subr.mxu0 0.0
      %8058 = vmatpush1.msra.mxu0 0.0
      %8059 = vmatprep.subr.mxu0 0.0
      %8060 = vmatpush1.msra.mxu0 0.0
      %8061 = vmatprep.subr.mxu0 0.0
      %8062 = vmatpush1.msra.mxu0 0.0
      %8063 = vmatprep.subr.mxu0 0.0
      %8064 = vmatpush1.msra.mxu0 0.0
      %8065 = vmatprep.subr.mxu0 0.0
      %8066 = vmatpush1.msra.mxu0 0.0
      %8067 = vmatprep.subr.mxu0 0.0
      %8068 = vmatpush1.msra.mxu0 0.0
      %8069 = vmatprep.subr.mxu0 0.0
      %8070 = vmatpush1.msra.mxu0 0.0
      %8071 = vmatprep.subr.mxu0 0.0
      %8072 = vmatpush1.msra.mxu0 0.0
      %8073 = vmatprep.subr.mxu0 0.0
      %8074 = vmatpush1.msra.mxu0 0.0
      %8075 = vmatprep.subr.mxu0 0.0
      %8076 = vmatpush1.msra.mxu0 0.0
      %8077 = vmatprep.subr.mxu0 0.0
      %8078 = vmatpush1.msra.mxu0 0.0
      %8079 = vmatprep.subr.mxu0 0.0
      %8080 = vmatpush1.msra.mxu0 0.0
      %8081 = vmatprep.subr.mxu0 0.0
      %8082 = vmatpush1.msra.mxu0 0.0
      %8083 = vmatprep.subr.mxu0 0.0
      %8084 = vmatpush1.msra.mxu0 0.0
      %8085 = vmatprep.subr.mxu0 0.0
      %8086 = vmatpush1.msra.mxu0 0.0
      %8087 = vmatprep.subr.mxu0 0.0
      %8088 = vmatpush1.msra.mxu0 0.0
      %8089 = vmatprep.mubr.f32.mxu0 0.0
      %v8090 = vand.u32 %v8021, 4294901760
      %v8091 = vsub.f32 %v8021, %v8090
      %v8092 = vand.u32 %v8091, 4294901760
      %v8093 = vsub.f32 %v8091, %v8092
      %v8094 = vand.u32 %v8093, 4294901760
      %8095 = vmatmul.mubr.f32.gmra.mrb[0].mxu0 %v8094
      %v8096 = vpop.f32.mrb[0].mxu0
      %v8097 = vadd.f32 0.0, %v8096
      %v8098 = vpop.f32.mrb[0].mxu0
      %v8099 = vadd.f32 0.0, %v8098
      %8100 = vdwg.mxu0
      %v8101 = vand.u32 %v8019, 4294901760
      %v8102 = vsub.f32 %v8019, %v8101
      %v8103 = vand.u32 %v8102, 4294901760
      %v8104 = vsub.f32 %v8102, %v8103
      %v8105 = vand.u32 %v8104, 4294901760
      %8106 = vmatprep.subr.mxu0 %v8105
      %v8107 = vand.u32 %v8018, 4294901760
      %v8108 = vsub.f32 %v8018, %v8107
      %v8109 = vand.u32 %v8108, 4294901760
      %v8110 = vsub.f32 %v8108, %v8109
      %v8111 = vand.u32 %v8110, 4294901760
      %8112 = vmatpush1.msra.mxu0 %v8111
      %8113 = vmatprep.subr.mxu0 0.0
      %8114 = vmatpush1.msra.mxu0 0.0
      %8115 = vmatprep.subr.mxu0 0.0
      %8116 = vmatpush1.msra.mxu0 0.0
      %8117 = vmatprep.subr.mxu0 0.0
      %8118 = vmatpush1.msra.mxu0 0.0
      %8119 = vmatprep.subr.mxu0 0.0
      %8120 = vmatpush1.msra.mxu0 0.0
      %8121 = vmatprep.subr.mxu0 0.0
      %8122 = vmatpush1.msra.mxu0 0.0
      %8123 = vmatprep.subr.mxu0 0.0
      %8124 = vmatpush1.msra.mxu0 0.0
      %8125 = vmatprep.subr.mxu0 0.0
      %8126 = vmatpush1.msra.mxu0 0.0
      %8127 = vmatprep.subr.mxu0 0.0
      %8128 = vmatpush1.msra.mxu0 0.0
      %8129 = vmatprep.subr.mxu0 0.0
      %8130 = vmatpush1.msra.mxu0 0.0
      %8131 = vmatprep.subr.mxu0 0.0
      %8132 = vmatpush1.msra.mxu0 0.0
      %8133 = vmatprep.subr.mxu0 0.0
      %8134 = vmatpush1.msra.mxu0 0.0
      %8135 = vmatprep.subr.mxu0 0.0
      %8136 = vmatpush1.msra.mxu0 0.0
      %8137 = vmatprep.subr.mxu0 0.0
      %8138 = vmatpush1.msra.mxu0 0.0
      %8139 = vmatprep.subr.mxu0 0.0
      %8140 = vmatpush1.msra.mxu0 0.0
      %8141 = vmatprep.subr.mxu0 0.0
      %8142 = vmatpush1.msra.mxu0 0.0
      %8143 = vmatprep.subr.mxu0 0.0
      %8144 = vmatpush1.msra.mxu0 0.0
      %8145 = vmatprep.subr.mxu0 0.0
      %8146 = vmatpush1.msra.mxu0 0.0
      %8147 = vmatprep.subr.mxu0 0.0
      %8148 = vmatpush1.msra.mxu0 0.0
      %8149 = vmatprep.subr.mxu0 0.0
      %8150 = vmatpush1.msra.mxu0 0.0
      %8151 = vmatprep.subr.mxu0 0.0
      %8152 = vmatpush1.msra.mxu0 0.0
      %8153 = vmatprep.subr.mxu0 0.0
      %8154 = vmatpush1.msra.mxu0 0.0
      %8155 = vmatprep.subr.mxu0 0.0
      %8156 = vmatpush1.msra.mxu0 0.0
      %8157 = vmatprep.subr.mxu0 0.0
      %8158 = vmatpush1.msra.mxu0 0.0
      %8159 = vmatprep.subr.mxu0 0.0
      %8160 = vmatpush1.msra.mxu0 0.0
      %8161 = vmatprep.subr.mxu0 0.0
      %8162 = vmatpush1.msra.mxu0 0.0
      %8163 = vmatprep.subr.mxu0 0.0
      %8164 = vmatpush1.msra.mxu0 0.0
      %8165 = vmatprep.subr.mxu0 0.0
      %8166 = vmatpush1.msra.mxu0 0.0
      %8167 = vmatprep.subr.mxu0 0.0
      %8168 = vmatpush1.msra.mxu0 0.0
      %8169 = vmatprep.subr.mxu0 0.0
      %8170 = vmatpush1.msra.mxu0 0.0
      %8171 = vmatprep.subr.mxu0 0.0
      %8172 = vmatpush1.msra.mxu0 0.0
      %8173 = vmatprep.subr.mxu0 0.0
      %8174 = vmatpush1.msra.mxu0 0.0
      %8175 = vmatprep.mubr.f32.mxu0 0.0
      %v8176 = vand.u32 %v8021, 4294901760
      %8177 = vmatmul.mubr.f32.gmra.mrb[0].mxu0 %v8176
      %v8178 = vpop.f32.mrb[0].mxu0
      %v8179 = vadd.f32 %v8097, %v8178
      %v8180 = vpop.f32.mrb[0].mxu0
      %v8181 = vadd.f32 %v8099, %v8180
      %8182 = vdwg.mxu0
      %v8183 = vand.u32 %v8019, 4294901760
      %v8184 = vsub.f32 %v8019, %v8183
      %8185 = vmatprep.subr.mxu0 %v8184
      %v8186 = vand.u32 %v8018, 4294901760
      %v8187 = vsub.f32 %v8018, %v8186
      %8188 = vmatpush1.msra.mxu0 %v8187
      %8189 = vmatprep.subr.mxu0 0.0
      %8190 = vmatpush1.msra.mxu0 0.0
      %8191 = vmatprep.subr.mxu0 0.0
      %8192 = vmatpush1.msra.mxu0 0.0
      %8193 = vmatprep.subr.mxu0 0.0
      %8194 = vmatpush1.msra.mxu0 0.0
      %8195 = vmatprep.subr.mxu0 0.0
      %8196 = vmatpush1.msra.mxu0 0.0
      %8197 = vmatprep.subr.mxu0 0.0
      %8198 = vmatpush1.msra.mxu0 0.0
      %8199 = vmatprep.subr.mxu0 0.0
      %8200 = vmatpush1.msra.mxu0 0.0
      %8201 = vmatprep.subr.mxu0 0.0
      %8202 = vmatpush1.msra.mxu0 0.0
      %8203 = vmatprep.subr.mxu0 0.0
      %8204 = vmatpush1.msra.mxu0 0.0
      %8205 = vmatprep.subr.mxu0 0.0
      %8206 = vmatpush1.msra.mxu0 0.0
      %8207 = vmatprep.subr.mxu0 0.0
      %8208 = vmatpush1.msra.mxu0 0.0
      %8209 = vmatprep.subr.mxu0 0.0
      %8210 = vmatpush1.msra.mxu0 0.0
      %8211 = vmatprep.subr.mxu0 0.0
      %8212 = vmatpush1.msra.mxu0 0.0
      %8213 = vmatprep.subr.mxu0 0.0
      %8214 = vmatpush1.msra.mxu0 0.0
      %8215 = vmatprep.subr.mxu0 0.0
      %8216 = vmatpush1.msra.mxu0 0.0
      %8217 = vmatprep.subr.mxu0 0.0
      %8218 = vmatpush1.msra.mxu0 0.0
      %8219 = vmatprep.subr.mxu0 0.0
      %8220 = vmatpush1.msra.mxu0 0.0
      %8221 = vmatprep.subr.mxu0 0.0
      %8222 = vmatpush1.msra.mxu0 0.0
      %8223 = vmatprep.subr.mxu0 0.0
      %8224 = vmatpush1.msra.mxu0 0.0
      %8225 = vmatprep.subr.mxu0 0.0
      %8226 = vmatpush1.msra.mxu0 0.0
      %8227 = vmatprep.subr.mxu0 0.0
      %8228 = vmatpush1.msra.mxu0 0.0
      %8229 = vmatprep.subr.mxu0 0.0
      %8230 = vmatpush1.msra.mxu0 0.0
      %8231 = vmatprep.subr.mxu0 0.0
      %8232 = vmatpush1.msra.mxu0 0.0
      %8233 = vmatprep.subr.mxu0 0.0
      %8234 = vmatpush1.msra.mxu0 0.0
      %8235 = vmatprep.subr.mxu0 0.0
      %8236 = vmatpush1.msra.mxu0 0.0
      %8237 = vmatprep.subr.mxu0 0.0
      %8238 = vmatpush1.msra.mxu0 0.0
      %8239 = vmatprep.subr.mxu0 0.0
      %8240 = vmatpush1.msra.mxu0 0.0
      %8241 = vmatprep.subr.mxu0 0.0
      %8242 = vmatpush1.msra.mxu0 0.0
      %8243 = vmatprep.subr.mxu0 0.0
      %8244 = vmatpush1.msra.mxu0 0.0
      %8245 = vmatprep.subr.mxu0 0.0
      %8246 = vmatpush1.msra.mxu0 0.0
      %8247 = vmatprep.subr.mxu0 0.0
      %8248 = vmatpush1.msra.mxu0 0.0
      %8249 = vmatprep.subr.mxu0 0.0
      %8250 = vmatpush1.msra.mxu0 0.0
      %8251 = vmatprep.mubr.f32.mxu0 0.0
      %v8252 = vand.u32 %v8021, 4294901760
      %v8253 = vsub.f32 %v8021, %v8252
      %8254 = vmatmul.mubr.f32.gmra.mrb[0].mxu0 %v8253
      %v8255 = vpop.f32.mrb[0].mxu0
      %v8256 = vadd.f32 %v8179, %v8255
      %v8257 = vpop.f32.mrb[0].mxu0
      %v8258 = vadd.f32 %v8181, %v8257
      %8259 = vdwg.mxu0
      %v8260 = vand.u32 %v8019, 4294901760
      %8261 = vmatprep.subr.mxu0 %v8260
      %v8262 = vand.u32 %v8018, 4294901760
      %8263 = vmatpush1.msra.mxu0 %v8262
      %8264 = vmatprep.subr.mxu0 0.0
      %8265 = vmatpush1.msra.mxu0 0.0
      %8266 = vmatprep.subr.mxu0 0.0
      %8267 = vmatpush1.msra.mxu0 0.0
      %8268 = vmatprep.subr.mxu0 0.0
      %8269 = vmatpush1.msra.mxu0 0.0
      %8270 = vmatprep.subr.mxu0 0.0
      %8271 = vmatpush1.msra.mxu0 0.0
      %8272 = vmatprep.subr.mxu0 0.0
      %8273 = vmatpush1.msra.mxu0 0.0
      %8274 = vmatprep.subr.mxu0 0.0
      %8275 = vmatpush1.msra.mxu0 0.0
      %8276 = vmatprep.subr.mxu0 0.0
      %8277 = vmatpush1.msra.mxu0 0.0
      %8278 = vmatprep.subr.mxu0 0.0
      %8279 = vmatpush1.msra.mxu0 0.0
      %8280 = vmatprep.subr.mxu0 0.0
      %8281 = vmatpush1.msra.mxu0 0.0
      %8282 = vmatprep.subr.mxu0 0.0
      %8283 = vmatpush1.msra.mxu0 0.0
      %8284 = vmatprep.subr.mxu0 0.0
      %8285 = vmatpush1.msra.mxu0 0.0
      %8286 = vmatprep.subr.mxu0 0.0
      %8287 = vmatpush1.msra.mxu0 0.0
      %8288 = vmatprep.subr.mxu0 0.0
      %8289 = vmatpush1.msra.mxu0 0.0
      %8290 = vmatprep.subr.mxu0 0.0
      %8291 = vmatpush1.msra.mxu0 0.0
      %8292 = vmatprep.subr.mxu0 0.0
      %8293 = vmatpush1.msra.mxu0 0.0
      %8294 = vmatprep.subr.mxu0 0.0
      %8295 = vmatpush1.msra.mxu0 0.0
      %8296 = vmatprep.subr.mxu0 0.0
      %8297 = vmatpush1.msra.mxu0 0.0
      %8298 = vmatprep.subr.mxu0 0.0
      %8299 = vmatpush1.msra.mxu0 0.0
      %8300 = vmatprep.subr.mxu0 0.0
      %8301 = vmatpush1.msra.mxu0 0.0
      %8302 = vmatprep.subr.mxu0 0.0
      %8303 = vmatpush1.msra.mxu0 0.0
      %8304 = vmatprep.subr.mxu0 0.0
      %8305 = vmatpush1.msra.mxu0 0.0
      %8306 = vmatprep.subr.mxu0 0.0
      %8307 = vmatpush1.msra.mxu0 0.0
      %8308 = vmatprep.subr.mxu0 0.0
      %8309 = vmatpush1.msra.mxu0 0.0
      %8310 = vmatprep.subr.mxu0 0.0
      %8311 = vmatpush1.msra.mxu0 0.0
      %8312 = vmatprep.subr.mxu0 0.0
      %8313 = vmatpush1.msra.mxu0 0.0
      %8314 = vmatprep.subr.mxu0 0.0
      %8315 = vmatpush1.msra.mxu0 0.0
      %8316 = vmatprep.subr.mxu0 0.0
      %8317 = vmatpush1.msra.mxu0 0.0
      %8318 = vmatprep.subr.mxu0 0.0
      %8319 = vmatpush1.msra.mxu0 0.0
      %8320 = vmatprep.subr.mxu0 0.0
      %8321 = vmatpush1.msra.mxu0 0.0
      %8322 = vmatprep.subr.mxu0 0.0
      %8323 = vmatpush1.msra.mxu0 0.0
      %8324 = vmatprep.subr.mxu0 0.0
      %8325 = vmatpush1.msra.mxu0 0.0
      %8326 = vmatprep.mubr.f32.mxu0 0.0
      %v8327 = vand.u32 %v8021, 4294901760
      %v8328 = vsub.f32 %v8021, %v8327
      %v8329 = vand.u32 %v8328, 4294901760
      %8330 = vmatmul.mubr.f32.gmra.mrb[0].mxu0 %v8329
      %v8331 = vpop.f32.mrb[0].mxu0
      %v8332 = vadd.f32 %v8256, %v8331
      %v8333 = vpop.f32.mrb[0].mxu0
      %v8334 = vadd.f32 %v8258, %v8333
      %8335 = vdwg.mxu0
      %v8336 = vand.u32 %v8019, 4294901760
      %v8337 = vsub.f32 %v8019, %v8336
      %v8338 = vand.u32 %v8337, 4294901760
      %8339 = vmatprep.subr.mxu0 %v8338
      %v8340 = vand.u32 %v8018, 4294901760
      %v8341 = vsub.f32 %v8018, %v8340
      %v8342 = vand.u32 %v8341, 4294901760
      %8343 = vmatpush1.msra.mxu0 %v8342
      %8344 = vmatprep.subr.mxu0 0.0
      %8345 = vmatpush1.msra.mxu0 0.0
      %8346 = vmatprep.subr.mxu0 0.0
      %8347 = vmatpush1.msra.mxu0 0.0
      %8348 = vmatprep.subr.mxu0 0.0
      %8349 = vmatpush1.msra.mxu0 0.0
      %8350 = vmatprep.subr.mxu0 0.0
      %8351 = vmatpush1.msra.mxu0 0.0
      %8352 = vmatprep.subr.mxu0 0.0
      %8353 = vmatpush1.msra.mxu0 0.0
      %8354 = vmatprep.subr.mxu0 0.0
      %8355 = vmatpush1.msra.mxu0 0.0
      %8356 = vmatprep.subr.mxu0 0.0
      %8357 = vmatpush1.msra.mxu0 0.0
      %8358 = vmatprep.subr.mxu0 0.0
      %8359 = vmatpush1.msra.mxu0 0.0
      %8360 = vmatprep.subr.mxu0 0.0
      %8361 = vmatpush1.msra.mxu0 0.0
      %8362 = vmatprep.subr.mxu0 0.0
      %8363 = vmatpush1.msra.mxu0 0.0
      %8364 = vmatprep.subr.mxu0 0.0
      %8365 = vmatpush1.msra.mxu0 0.0
      %8366 = vmatprep.subr.mxu0 0.0
      %8367 = vmatpush1.msra.mxu0 0.0
      %8368 = vmatprep.subr.mxu0 0.0
      %8369 = vmatpush1.msra.mxu0 0.0
      %8370 = vmatprep.subr.mxu0 0.0
      %8371 = vmatpush1.msra.mxu0 0.0
      %8372 = vmatprep.subr.mxu0 0.0
      %8373 = vmatpush1.msra.mxu0 0.0
      %8374 = vmatprep.subr.mxu0 0.0
      %8375 = vmatpush1.msra.mxu0 0.0
      %8376 = vmatprep.subr.mxu0 0.0
      %8377 = vmatpush1.msra.mxu0 0.0
      %8378 = vmatprep.subr.mxu0 0.0
      %8379 = vmatpush1.msra.mxu0 0.0
      %8380 = vmatprep.subr.mxu0 0.0
      %8381 = vmatpush1.msra.mxu0 0.0
      %8382 = vmatprep.subr.mxu0 0.0
      %8383 = vmatpush1.msra.mxu0 0.0
      %8384 = vmatprep.subr.mxu0 0.0
      %8385 = vmatpush1.msra.mxu0 0.0
      %8386 = vmatprep.subr.mxu0 0.0
      %8387 = vmatpush1.msra.mxu0 0.0
      %8388 = vmatprep.subr.mxu0 0.0
      %8389 = vmatpush1.msra.mxu0 0.0
      %8390 = vmatprep.subr.mxu0 0.0
      %8391 = vmatpush1.msra.mxu0 0.0
      %8392 = vmatprep.subr.mxu0 0.0
      %8393 = vmatpush1.msra.mxu0 0.0
      %8394 = vmatprep.subr.mxu0 0.0
      %8395 = vmatpush1.msra.mxu0 0.0
      %8396 = vmatprep.subr.mxu0 0.0
      %8397 = vmatpush1.msra.mxu0 0.0
      %8398 = vmatprep.subr.mxu0 0.0
      %8399 = vmatpush1.msra.mxu0 0.0
      %8400 = vmatprep.subr.mxu0 0.0
      %8401 = vmatpush1.msra.mxu0 0.0
      %8402 = vmatprep.subr.mxu0 0.0
      %8403 = vmatpush1.msra.mxu0 0.0
      %8404 = vmatprep.subr.mxu0 0.0
      %8405 = vmatpush1.msra.mxu0 0.0
      %8406 = vmatprep.mubr.f32.mxu0 0.0
      %v8407 = vand.u32 %v8021, 4294901760
      %8408 = vmatmul.mubr.f32.gmra.mrb[0].mxu0 %v8407
      %v8409 = vpop.f32.mrb[0].mxu0
      %v8410 = vadd.f32 %v8332, %v8409
      %v8411 = vpop.f32.mrb[0].mxu0
      %v8412 = vadd.f32 %v8334, %v8411
      %8413 = vdwg.mxu0
      %v8414 = vand.u32 %v8019, 4294901760
      %8415 = vmatprep.subr.mxu0 %v8414
      %v8416 = vand.u32 %v8018, 4294901760
      %8417 = vmatpush1.msra.mxu0 %v8416
      %8418 = vmatprep.subr.mxu0 0.0
      %8419 = vmatpush1.msra.mxu0 0.0
      %8420 = vmatprep.subr.mxu0 0.0
      %8421 = vmatpush1.msra.mxu0 0.0
      %8422 = vmatprep.subr.mxu0 0.0
      %8423 = vmatpush1.msra.mxu0 0.0
      %8424 = vmatprep.subr.mxu0 0.0
      %8425 = vmatpush1.msra.mxu0 0.0
      %8426 = vmatprep.subr.mxu0 0.0
      %8427 = vmatpush1.msra.mxu0 0.0
      %8428 = vmatprep.subr.mxu0 0.0
      %8429 = vmatpush1.msra.mxu0 0.0
      %8430 = vmatprep.subr.mxu0 0.0
      %8431 = vmatpush1.msra.mxu0 0.0
      %8432 = vmatprep.subr.mxu0 0.0
      %8433 = vmatpush1.msra.mxu0 0.0
      %8434 = vmatprep.subr.mxu0 0.0
      %8435 = vmatpush1.msra.mxu0 0.0
      %8436 = vmatprep.subr.mxu0 0.0
      %8437 = vmatpush1.msra.mxu0 0.0
      %8438 = vmatprep.subr.mxu0 0.0
      %8439 = vmatpush1.msra.mxu0 0.0
      %8440 = vmatprep.subr.mxu0 0.0
      %8441 = vmatpush1.msra.mxu0 0.0
      %8442 = vmatprep.subr.mxu0 0.0
      %8443 = vmatpush1.msra.mxu0 0.0
      %8444 = vmatprep.subr.mxu0 0.0
      %8445 = vmatpush1.msra.mxu0 0.0
      %8446 = vmatprep.subr.mxu0 0.0
      %8447 = vmatpush1.msra.mxu0 0.0
      %8448 = vmatprep.subr.mxu0 0.0
      %8449 = vmatpush1.msra.mxu0 0.0
      %8450 = vmatprep.subr.mxu0 0.0
      %8451 = vmatpush1.msra.mxu0 0.0
      %8452 = vmatprep.subr.mxu0 0.0
      %8453 = vmatpush1.msra.mxu0 0.0
      %8454 = vmatprep.subr.mxu0 0.0
      %8455 = vmatpush1.msra.mxu0 0.0
      %8456 = vmatprep.subr.mxu0 0.0
      %8457 = vmatpush1.msra.mxu0 0.0
      %8458 = vmatprep.subr.mxu0 0.0
      %8459 = vmatpush1.msra.mxu0 0.0
      %8460 = vmatprep.subr.mxu0 0.0
      %8461 = vmatpush1.msra.mxu0 0.0
      %8462 = vmatprep.subr.mxu0 0.0
      %8463 = vmatpush1.msra.mxu0 0.0
      %8464 = vmatprep.subr.mxu0 0.0
      %8465 = vmatpush1.msra.mxu0 0.0
      %8466 = vmatprep.subr.mxu0 0.0
      %8467 = vmatpush1.msra.mxu0 0.0
      %8468 = vmatprep.subr.mxu0 0.0
      %8469 = vmatpush1.msra.mxu0 0.0
      %8470 = vmatprep.subr.mxu0 0.0
      %8471 = vmatpush1.msra.mxu0 0.0
      %8472 = vmatprep.subr.mxu0 0.0
      %8473 = vmatpush1.msra.mxu0 0.0
      %8474 = vmatprep.subr.mxu0 0.0
      %8475 = vmatpush1.msra.mxu0 0.0
      %8476 = vmatprep.subr.mxu0 0.0
      %8477 = vmatpush1.msra.mxu0 0.0
      %8478 = vmatprep.subr.mxu0 0.0
      %8479 = vmatpush1.msra.mxu0 0.0
      %8480 = vmatprep.mubr.f32.mxu0 0.0
      %v8481 = vand.u32 %v8021, 4294901760
      %8482 = vmatmul.mubr.f32.gmra.mrb[0].mxu0 %v8481
      %v8483 = vpop.f32.mrb[0].mxu0
      %v8484 = vadd.f32 %v8410, %v8483
      %v8485 = vpop.f32.mrb[0].mxu0
      %v8486 = vadd.f32 %v8412, %v8485
      %8487 = vdwg.mxu0
      %v8488 = vld [vmem:[%s12] sm:$0xff]
      %v8489 = vxor.u32 %v8484, 2147483648
      %v8490 = vxor.u32 %v8486, 2147483648
      %v8491 = vmul.f32 %v8489, 1.442695
      %v8492 = vpow.pop %v8491
      %v8493 = vmul.f32 %v8490, 1.442695
      %v8494 = vpow.pop %v8493
      %v8495 = vadd.f32 %v8492, 1.0
      %v8496 = vadd.f32 %v8494, 1.0
      %v8497 = vrcp.pop %v8495
      %v8498 = vmul.f32 1.0, %v8497
      %v8499 = vrcp.pop %v8496
      %v8500 = vmul.f32 1.0, %v8499
      %vm8501 = vcmask 15360
      %v8503 = vsel %vm8501, %v8488, 0
      %vm8505 = vcmask 1041408
      %v8507 = vsel %vm8505, %v8498, 0
      %v8510 = vsel %vm8505, %v8500, 0
      %v8512 = vand.u32 %v8510, 4294901760
      %8513 = vmatprep.subr.mxu0 %v8512
      %v8514 = vand.u32 %v8507, 4294901760
      %8515 = vmatpush1.msra.mxu0 %v8514
      %8516 = vmatprep.subr.mxu0 0.0
      %8517 = vmatpush1.msra.mxu0 0.0
      %8518 = vmatprep.subr.mxu0 0.0
      %8519 = vmatpush1.msra.mxu0 0.0
      %8520 = vmatprep.subr.mxu0 0.0
      %8521 = vmatpush1.msra.mxu0 0.0
      %8522 = vmatprep.subr.mxu0 0.0
      %8523 = vmatpush1.msra.mxu0 0.0
      %8524 = vmatprep.subr.mxu0 0.0
      %8525 = vmatpush1.msra.mxu0 0.0
      %8526 = vmatprep.subr.mxu0 0.0
      %8527 = vmatpush1.msra.mxu0 0.0
      %8528 = vmatprep.subr.mxu0 0.0
      %8529 = vmatpush1.msra.mxu0 0.0
      %8530 = vmatprep.subr.mxu0 0.0
      %8531 = vmatpush1.msra.mxu0 0.0
      %8532 = vmatprep.subr.mxu0 0.0
      %8533 = vmatpush1.msra.mxu0 0.0
      %8534 = vmatprep.subr.mxu0 0.0
      %8535 = vmatpush1.msra.mxu0 0.0
      %8536 = vmatprep.subr.mxu0 0.0
      %8537 = vmatpush1.msra.mxu0 0.0
      %8538 = vmatprep.subr.mxu0 0.0
      %8539 = vmatpush1.msra.mxu0 0.0
      %8540 = vmatprep.subr.mxu0 0.0
      %8541 = vmatpush1.msra.mxu0 0.0
      %8542 = vmatprep.subr.mxu0 0.0
      %8543 = vmatpush1.msra.mxu0 0.0
      %8544 = vmatprep.subr.mxu0 0.0
      %8545 = vmatpush1.msra.mxu0 0.0
      %8546 = vmatprep.subr.mxu0 0.0
      %8547 = vmatpush1.msra.mxu0 0.0
      %8548 = vmatprep.subr.mxu0 0.0
      %8549 = vmatpush1.msra.mxu0 0.0
      %8550 = vmatprep.subr.mxu0 0.0
      %8551 = vmatpush1.msra.mxu0 0.0
      %8552 = vmatprep.subr.mxu0 0.0
      %8553 = vmatpush1.msra.mxu0 0.0
      %8554 = vmatprep.subr.mxu0 0.0
      %8555 = vmatpush1.msra.mxu0 0.0
      %8556 = vmatprep.subr.mxu0 0.0
      %8557 = vmatpush1.msra.mxu0 0.0
      %8558 = vmatprep.subr.mxu0 0.0
      %8559 = vmatpush1.msra.mxu0 0.0
      %8560 = vmatprep.subr.mxu0 0.0
      %8561 = vmatpush1.msra.mxu0 0.0
      %8562 = vmatprep.subr.mxu0 0.0
      %8563 = vmatpush1.msra.mxu0 0.0
      %8564 = vmatprep.subr.mxu0 0.0
      %8565 = vmatpush1.msra.mxu0 0.0
      %8566 = vmatprep.subr.mxu0 0.0
      %8567 = vmatpush1.msra.mxu0 0.0
      %8568 = vmatprep.subr.mxu0 0.0
      %8569 = vmatpush1.msra.mxu0 0.0
      %8570 = vmatprep.subr.mxu0 0.0
      %8571 = vmatpush1.msra.mxu0 0.0
      %8572 = vmatprep.subr.mxu0 0.0
      %8573 = vmatpush1.msra.mxu0 0.0
      %8574 = vmatprep.subr.mxu0 0.0
      %8575 = vmatpush1.msra.mxu0 0.0
      %8576 = vmatprep.subr.mxu0 0.0
      %8577 = vmatpush1.msra.mxu0 0.0
      %8578 = vmatprep.mubr.f32.mxu0 0.0
      %v8579 = vand.u32 %v8503, 4294901760
      %v8580 = vsub.f32 %v8503, %v8579
      %v8581 = vand.u32 %v8580, 4294901760
      %v8582 = vsub.f32 %v8580, %v8581
      %v8583 = vand.u32 %v8582, 4294901760
      %8584 = vmatmul.mubr.f32.gmra.mrb[0].mxu0 %v8583
      %v8585 = vpop.f32.mrb[0].mxu0
      %v8586 = vadd.f32 0.0, %v8585
      %v8587 = vpop.f32.mrb[0].mxu0
      %v8588 = vadd.f32 0.0, %v8587
      %8589 = vdwg.mxu0
      %v8590 = vand.u32 %v8510, 4294901760
      %v8591 = vsub.f32 %v8510, %v8590
      %v8592 = vand.u32 %v8591, 4294901760
      %v8593 = vsub.f32 %v8591, %v8592
      %v8594 = vand.u32 %v8593, 4294901760
      %8595 = vmatprep.subr.mxu0 %v8594
      %v8596 = vand.u32 %v8507, 4294901760
      %v8597 = vsub.f32 %v8507, %v8596
      %v8598 = vand.u32 %v8597, 4294901760
      %v8599 = vsub.f32 %v8597, %v8598
      %v8600 = vand.u32 %v8599, 4294901760
      %8601 = vmatpush1.msra.mxu0 %v8600
      %8602 = vmatprep.subr.mxu0 0.0
      %8603 = vmatpush1.msra.mxu0 0.0
      %8604 = vmatprep.subr.mxu0 0.0
      %8605 = vmatpush1.msra.mxu0 0.0
      %8606 = vmatprep.subr.mxu0 0.0
      %8607 = vmatpush1.msra.mxu0 0.0
      %8608 = vmatprep.subr.mxu0 0.0
      %8609 = vmatpush1.msra.mxu0 0.0
      %8610 = vmatprep.subr.mxu0 0.0
      %8611 = vmatpush1.msra.mxu0 0.0
      %8612 = vmatprep.subr.mxu0 0.0
      %8613 = vmatpush1.msra.mxu0 0.0
      %8614 = vmatprep.subr.mxu0 0.0
      %8615 = vmatpush1.msra.mxu0 0.0
      %8616 = vmatprep.subr.mxu0 0.0
      %8617 = vmatpush1.msra.mxu0 0.0
      %8618 = vmatprep.subr.mxu0 0.0
      %8619 = vmatpush1.msra.mxu0 0.0
      %8620 = vmatprep.subr.mxu0 0.0
      %8621 = vmatpush1.msra.mxu0 0.0
      %8622 = vmatprep.subr.mxu0 0.0
      %8623 = vmatpush1.msra.mxu0 0.0
      %8624 = vmatprep.subr.mxu0 0.0
      %8625 = vmatpush1.msra.mxu0 0.0
      %8626 = vmatprep.subr.mxu0 0.0
      %8627 = vmatpush1.msra.mxu0 0.0
      %8628 = vmatprep.subr.mxu0 0.0
      %8629 = vmatpush1.msra.mxu0 0.0
      %8630 = vmatprep.subr.mxu0 0.0
      %8631 = vmatpush1.msra.mxu0 0.0
      %8632 = vmatprep.subr.mxu0 0.0
      %8633 = vmatpush1.msra.mxu0 0.0
      %8634 = vmatprep.subr.mxu0 0.0
      %8635 = vmatpush1.msra.mxu0 0.0
      %8636 = vmatprep.subr.mxu0 0.0
      %8637 = vmatpush1.msra.mxu0 0.0
      %8638 = vmatprep.subr.mxu0 0.0
      %8639 = vmatpush1.msra.mxu0 0.0
      %8640 = vmatprep.subr.mxu0 0.0
      %8641 = vmatpush1.msra.mxu0 0.0
      %8642 = vmatprep.subr.mxu0 0.0
      %8643 = vmatpush1.msra.mxu0 0.0
      %8644 = vmatprep.subr.mxu0 0.0
      %8645 = vmatpush1.msra.mxu0 0.0
      %8646 = vmatprep.subr.mxu0 0.0
      %8647 = vmatpush1.msra.mxu0 0.0
      %8648 = vmatprep.subr.mxu0 0.0
      %8649 = vmatpush1.msra.mxu0 0.0
      %8650 = vmatprep.subr.mxu0 0.0
      %8651 = vmatpush1.msra.mxu0 0.0
      %8652 = vmatprep.subr.mxu0 0.0
      %8653 = vmatpush1.msra.mxu0 0.0
      %8654 = vmatprep.subr.mxu0 0.0
      %8655 = vmatpush1.msra.mxu0 0.0
      %8656 = vmatprep.subr.mxu0 0.0
      %8657 = vmatpush1.msra.mxu0 0.0
      %8658 = vmatprep.subr.mxu0 0.0
      %8659 = vmatpush1.msra.mxu0 0.0
      %8660 = vmatprep.subr.mxu0 0.0
      %8661 = vmatpush1.msra.mxu0 0.0
      %8662 = vmatprep.subr.mxu0 0.0
      %8663 = vmatpush1.msra.mxu0 0.0
      %8664 = vmatprep.mubr.f32.mxu0 0.0
      %v8665 = vand.u32 %v8503, 4294901760
      %8666 = vmatmul.mubr.f32.gmra.mrb[0].mxu0 %v8665
      %v8667 = vpop.f32.mrb[0].mxu0
      %v8668 = vadd.f32 %v8586, %v8667
      %v8669 = vpop.f32.mrb[0].mxu0
      %v8670 = vadd.f32 %v8588, %v8669
      %8671 = vdwg.mxu0
      %v8672 = vand.u32 %v8510, 4294901760
      %v8673 = vsub.f32 %v8510, %v8672
      %8674 = vmatprep.subr.mxu0 %v8673
      %v8675 = vand.u32 %v8507, 4294901760
      %v8676 = vsub.f32 %v8507, %v8675
      %8677 = vmatpush1.msra.mxu0 %v8676
      %8678 = vmatprep.subr.mxu0 0.0
      %8679 = vmatpush1.msra.mxu0 0.0
      %8680 = vmatprep.subr.mxu0 0.0
      %8681 = vmatpush1.msra.mxu0 0.0
      %8682 = vmatprep.subr.mxu0 0.0
      %8683 = vmatpush1.msra.mxu0 0.0
      %8684 = vmatprep.subr.mxu0 0.0
      %8685 = vmatpush1.msra.mxu0 0.0
      %8686 = vmatprep.subr.mxu0 0.0
      %8687 = vmatpush1.msra.mxu0 0.0
      %8688 = vmatprep.subr.mxu0 0.0
      %8689 = vmatpush1.msra.mxu0 0.0
      %8690 = vmatprep.subr.mxu0 0.0
      %8691 = vmatpush1.msra.mxu0 0.0
      %8692 = vmatprep.subr.mxu0 0.0
      %8693 = vmatpush1.msra.mxu0 0.0
      %8694 = vmatprep.subr.mxu0 0.0
      %8695 = vmatpush1.msra.mxu0 0.0
      %8696 = vmatprep.subr.mxu0 0.0
      %8697 = vmatpush1.msra.mxu0 0.0
      %8698 = vmatprep.subr.mxu0 0.0
      %8699 = vmatpush1.msra.mxu0 0.0
      %8700 = vmatprep.subr.mxu0 0.0
      %8701 = vmatpush1.msra.mxu0 0.0
      %8702 = vmatprep.subr.mxu0 0.0
      %8703 = vmatpush1.msra.mxu0 0.0
      %8704 = vmatprep.subr.mxu0 0.0
      %8705 = vmatpush1.msra.mxu0 0.0
      %8706 = vmatprep.subr.mxu0 0.0
      %8707 = vmatpush1.msra.mxu0 0.0
      %8708 = vmatprep.subr.mxu0 0.0
      %8709 = vmatpush1.msra.mxu0 0.0
      %8710 = vmatprep.subr.mxu0 0.0
      %8711 = vmatpush1.msra.mxu0 0.0
      %8712 = vmatprep.subr.mxu0 0.0
      %8713 = vmatpush1.msra.mxu0 0.0
      %8714 = vmatprep.subr.mxu0 0.0
      %8715 = vmatpush1.msra.mxu0 0.0
      %8716 = vmatprep.subr.mxu0 0.0
      %8717 = vmatpush1.msra.mxu0 0.0
      %8718 = vmatprep.subr.mxu0 0.0
      %8719 = vmatpush1.msra.mxu0 0.0
      %8720 = vmatprep.subr.mxu0 0.0
      %8721 = vmatpush1.msra.mxu0 0.0
      %8722 = vmatprep.subr.mxu0 0.0
      %8723 = vmatpush1.msra.mxu0 0.0
      %8724 = vmatprep.subr.mxu0 0.0
      %8725 = vmatpush1.msra.mxu0 0.0
      %8726 = vmatprep.subr.mxu0 0.0
      %8727 = vmatpush1.msra.mxu0 0.0
      %8728 = vmatprep.subr.mxu0 0.0
      %8729 = vmatpush1.msra.mxu0 0.0
      %8730 = vmatprep.subr.mxu0 0.0
      %8731 = vmatpush1.msra.mxu0 0.0
      %8732 = vmatprep.subr.mxu0 0.0
      %8733 = vmatpush1.msra.mxu0 0.0
      %8734 = vmatprep.subr.mxu0 0.0
      %8735 = vmatpush1.msra.mxu0 0.0
      %8736 = vmatprep.subr.mxu0 0.0
      %8737 = vmatpush1.msra.mxu0 0.0
      %8738 = vmatprep.subr.mxu0 0.0
      %8739 = vmatpush1.msra.mxu0 0.0
      %8740 = vmatprep.mubr.f32.mxu0 0.0
      %v8741 = vand.u32 %v8503, 4294901760
      %v8742 = vsub.f32 %v8503, %v8741
      %8743 = vmatmul.mubr.f32.gmra.mrb[0].mxu0 %v8742
      %v8744 = vpop.f32.mrb[0].mxu0
      %v8745 = vadd.f32 %v8668, %v8744
      %v8746 = vpop.f32.mrb[0].mxu0
      %v8747 = vadd.f32 %v8670, %v8746
      %8748 = vdwg.mxu0
      %v8749 = vand.u32 %v8510, 4294901760
      %8750 = vmatprep.subr.mxu0 %v8749
      %v8751 = vand.u32 %v8507, 4294901760
      %8752 = vmatpush1.msra.mxu0 %v8751
      %8753 = vmatprep.subr.mxu0 0.0
      %8754 = vmatpush1.msra.mxu0 0.0
      %8755 = vmatprep.subr.mxu0 0.0
      %8756 = vmatpush1.msra.mxu0 0.0
      %8757 = vmatprep.subr.mxu0 0.0
      %8758 = vmatpush1.msra.mxu0 0.0
      %8759 = vmatprep.subr.mxu0 0.0
      %8760 = vmatpush1.msra.mxu0 0.0
      %8761 = vmatprep.subr.mxu0 0.0
      %8762 = vmatpush1.msra.mxu0 0.0
      %8763 = vmatprep.subr.mxu0 0.0
      %8764 = vmatpush1.msra.mxu0 0.0
      %8765 = vmatprep.subr.mxu0 0.0
      %8766 = vmatpush1.msra.mxu0 0.0
      %8767 = vmatprep.subr.mxu0 0.0
      %8768 = vmatpush1.msra.mxu0 0.0
      %8769 = vmatprep.subr.mxu0 0.0
      %8770 = vmatpush1.msra.mxu0 0.0
      %8771 = vmatprep.subr.mxu0 0.0
      %8772 = vmatpush1.msra.mxu0 0.0
      %8773 = vmatprep.subr.mxu0 0.0
      %8774 = vmatpush1.msra.mxu0 0.0
      %8775 = vmatprep.subr.mxu0 0.0
      %8776 = vmatpush1.msra.mxu0 0.0
      %8777 = vmatprep.subr.mxu0 0.0
      %8778 = vmatpush1.msra.mxu0 0.0
      %8779 = vmatprep.subr.mxu0 0.0
      %8780 = vmatpush1.msra.mxu0 0.0
      %8781 = vmatprep.subr.mxu0 0.0
      %8782 = vmatpush1.msra.mxu0 0.0
      %8783 = vmatprep.subr.mxu0 0.0
      %8784 = vmatpush1.msra.mxu0 0.0
      %8785 = vmatprep.subr.mxu0 0.0
      %8786 = vmatpush1.msra.mxu0 0.0
      %8787 = vmatprep.subr.mxu0 0.0
      %8788 = vmatpush1.msra.mxu0 0.0
      %8789 = vmatprep.subr.mxu0 0.0
      %8790 = vmatpush1.msra.mxu0 0.0
      %8791 = vmatprep.subr.mxu0 0.0
      %8792 = vmatpush1.msra.mxu0 0.0
      %8793 = vmatprep.subr.mxu0 0.0
      %8794 = vmatpush1.msra.mxu0 0.0
      %8795 = vmatprep.subr.mxu0 0.0
      %8796 = vmatpush1.msra.mxu0 0.0
      %8797 = vmatprep.subr.mxu0 0.0
      %8798 = vmatpush1.msra.mxu0 0.0
      %8799 = vmatprep.subr.mxu0 0.0
      %8800 = vmatpush1.msra.mxu0 0.0
      %8801 = vmatprep.subr.mxu0 0.0
      %8802 = vmatpush1.msra.mxu0 0.0
      %8803 = vmatprep.subr.mxu0 0.0
      %8804 = vmatpush1.msra.mxu0 0.0
      %8805 = vmatprep.subr.mxu0 0.0
      %8806 = vmatpush1.msra.mxu0 0.0
      %8807 = vmatprep.subr.mxu0 0.0
      %8808 = vmatpush1.msra.mxu0 0.0
      %8809 = vmatprep.subr.mxu0 0.0
      %8810 = vmatpush1.msra.mxu0 0.0
      %8811 = vmatprep.subr.mxu0 0.0
      %8812 = vmatpush1.msra.mxu0 0.0
      %8813 = vmatprep.subr.mxu0 0.0
      %8814 = vmatpush1.msra.mxu0 0.0
      %8815 = vmatprep.mubr.f32.mxu0 0.0
      %v8816 = vand.u32 %v8503, 4294901760
      %v8817 = vsub.f32 %v8503, %v8816
      %v8818 = vand.u32 %v8817, 4294901760
      %8819 = vmatmul.mubr.f32.gmra.mrb[0].mxu0 %v8818
      %v8820 = vpop.f32.mrb[0].mxu0
      %v8821 = vadd.f32 %v8745, %v8820
      %v8822 = vpop.f32.mrb[0].mxu0
      %v8823 = vadd.f32 %v8747, %v8822
      %8824 = vdwg.mxu0
      %v8825 = vand.u32 %v8510, 4294901760
      %v8826 = vsub.f32 %v8510, %v8825
      %v8827 = vand.u32 %v8826, 4294901760
      %8828 = vmatprep.subr.mxu0 %v8827
      %v8829 = vand.u32 %v8507, 4294901760
      %v8830 = vsub.f32 %v8507, %v8829
      %v8831 = vand.u32 %v8830, 4294901760
      %8832 = vmatpush1.msra.mxu0 %v8831
      %8833 = vmatprep.subr.mxu0 0.0
      %8834 = vmatpush1.msra.mxu0 0.0
      %8835 = vmatprep.subr.mxu0 0.0
      %8836 = vmatpush1.msra.mxu0 0.0
      %8837 = vmatprep.subr.mxu0 0.0
      %8838 = vmatpush1.msra.mxu0 0.0
      %8839 = vmatprep.subr.mxu0 0.0
      %8840 = vmatpush1.msra.mxu0 0.0
      %8841 = vmatprep.subr.mxu0 0.0
      %8842 = vmatpush1.msra.mxu0 0.0
      %8843 = vmatprep.subr.mxu0 0.0
      %8844 = vmatpush1.msra.mxu0 0.0
      %8845 = vmatprep.subr.mxu0 0.0
      %8846 = vmatpush1.msra.mxu0 0.0
      %8847 = vmatprep.subr.mxu0 0.0
      %8848 = vmatpush1.msra.mxu0 0.0
      %8849 = vmatprep.subr.mxu0 0.0
      %8850 = vmatpush1.msra.mxu0 0.0
      %8851 = vmatprep.subr.mxu0 0.0
      %8852 = vmatpush1.msra.mxu0 0.0
      %8853 = vmatprep.subr.mxu0 0.0
      %8854 = vmatpush1.msra.mxu0 0.0
      %8855 = vmatprep.subr.mxu0 0.0
      %8856 = vmatpush1.msra.mxu0 0.0
      %8857 = vmatprep.subr.mxu0 0.0
      %8858 = vmatpush1.msra.mxu0 0.0
      %8859 = vmatprep.subr.mxu0 0.0
      %8860 = vmatpush1.msra.mxu0 0.0
      %8861 = vmatprep.subr.mxu0 0.0
      %8862 = vmatpush1.msra.mxu0 0.0
      %8863 = vmatprep.subr.mxu0 0.0
      %8864 = vmatpush1.msra.mxu0 0.0
      %8865 = vmatprep.subr.mxu0 0.0
      %8866 = vmatpush1.msra.mxu0 0.0
      %8867 = vmatprep.subr.mxu0 0.0
      %8868 = vmatpush1.msra.mxu0 0.0
      %8869 = vmatprep.subr.mxu0 0.0
      %8870 = vmatpush1.msra.mxu0 0.0
      %8871 = vmatprep.subr.mxu0 0.0
      %8872 = vmatpush1.msra.mxu0 0.0
      %8873 = vmatprep.subr.mxu0 0.0
      %8874 = vmatpush1.msra.mxu0 0.0
      %8875 = vmatprep.subr.mxu0 0.0
      %8876 = vmatpush1.msra.mxu0 0.0
      %8877 = vmatprep.subr.mxu0 0.0
      %8878 = vmatpush1.msra.mxu0 0.0
      %8879 = vmatprep.subr.mxu0 0.0
      %8880 = vmatpush1.msra.mxu0 0.0
      %8881 = vmatprep.subr.mxu0 0.0
      %8882 = vmatpush1.msra.mxu0 0.0
      %8883 = vmatprep.subr.mxu0 0.0
      %8884 = vmatpush1.msra.mxu0 0.0
      %8885 = vmatprep.subr.mxu0 0.0
      %8886 = vmatpush1.msra.mxu0 0.0
      %8887 = vmatprep.subr.mxu0 0.0
      %8888 = vmatpush1.msra.mxu0 0.0
      %8889 = vmatprep.subr.mxu0 0.0
      %8890 = vmatpush1.msra.mxu0 0.0
      %8891 = vmatprep.subr.mxu0 0.0
      %8892 = vmatpush1.msra.mxu0 0.0
      %8893 = vmatprep.subr.mxu0 0.0
      %8894 = vmatpush1.msra.mxu0 0.0
      %8895 = vmatprep.mubr.f32.mxu0 0.0
      %v8896 = vand.u32 %v8503, 4294901760
      %8897 = vmatmul.mubr.f32.gmra.mrb[0].mxu0 %v8896
      %v8898 = vpop.f32.mrb[0].mxu0
      %v8899 = vadd.f32 %v8821, %v8898
      %v8900 = vpop.f32.mrb[0].mxu0
      %v8901 = vadd.f32 %v8823, %v8900
      %8902 = vdwg.mxu0
      %v8903 = vand.u32 %v8510, 4294901760
      %8904 = vmatprep.subr.mxu0 %v8903
      %v8905 = vand.u32 %v8507, 4294901760
      %8906 = vmatpush1.msra.mxu0 %v8905
      %8907 = vmatprep.subr.mxu0 0.0
      %8908 = vmatpush1.msra.mxu0 0.0
      %8909 = vmatprep.subr.mxu0 0.0
      %8910 = vmatpush1.msra.mxu0 0.0
      %8911 = vmatprep.subr.mxu0 0.0
      %8912 = vmatpush1.msra.mxu0 0.0
      %8913 = vmatprep.subr.mxu0 0.0
      %8914 = vmatpush1.msra.mxu0 0.0
      %8915 = vmatprep.subr.mxu0 0.0
      %8916 = vmatpush1.msra.mxu0 0.0
      %8917 = vmatprep.subr.mxu0 0.0
      %8918 = vmatpush1.msra.mxu0 0.0
      %8919 = vmatprep.subr.mxu0 0.0
      %8920 = vmatpush1.msra.mxu0 0.0
      %8921 = vmatprep.subr.mxu0 0.0
      %8922 = vmatpush1.msra.mxu0 0.0
      %8923 = vmatprep.subr.mxu0 0.0
      %8924 = vmatpush1.msra.mxu0 0.0
      %8925 = vmatprep.subr.mxu0 0.0
      %8926 = vmatpush1.msra.mxu0 0.0
      %8927 = vmatprep.subr.mxu0 0.0
      %8928 = vmatpush1.msra.mxu0 0.0
      %8929 = vmatprep.subr.mxu0 0.0
      %8930 = vmatpush1.msra.mxu0 0.0
      %8931 = vmatprep.subr.mxu0 0.0
      %8932 = vmatpush1.msra.mxu0 0.0
      %8933 = vmatprep.subr.mxu0 0.0
      %8934 = vmatpush1.msra.mxu0 0.0
      %8935 = vmatprep.subr.mxu0 0.0
      %8936 = vmatpush1.msra.mxu0 0.0
      %8937 = vmatprep.subr.mxu0 0.0
      %8938 = vmatpush1.msra.mxu0 0.0
      %8939 = vmatprep.subr.mxu0 0.0
      %8940 = vmatpush1.msra.mxu0 0.0
      %8941 = vmatprep.subr.mxu0 0.0
      %8942 = vmatpush1.msra.mxu0 0.0
      %8943 = vmatprep.subr.mxu0 0.0
      %8944 = vmatpush1.msra.mxu0 0.0
      %8945 = vmatprep.subr.mxu0 0.0
      %8946 = vmatpush1.msra.mxu0 0.0
      %8947 = vmatprep.subr.mxu0 0.0
      %8948 = vmatpush1.msra.mxu0 0.0
      %8949 = vmatprep.subr.mxu0 0.0
      %8950 = vmatpush1.msra.mxu0 0.0
      %8951 = vmatprep.subr.mxu0 0.0
      %8952 = vmatpush1.msra.mxu0 0.0
      %8953 = vmatprep.subr.mxu0 0.0
      %8954 = vmatpush1.msra.mxu0 0.0
      %8955 = vmatprep.subr.mxu0 0.0
      %8956 = vmatpush1.msra.mxu0 0.0
      %8957 = vmatprep.subr.mxu0 0.0
      %8958 = vmatpush1.msra.mxu0 0.0
      %8959 = vmatprep.subr.mxu0 0.0
      %8960 = vmatpush1.msra.mxu0 0.0
      %8961 = vmatprep.subr.mxu0 0.0
      %8962 = vmatpush1.msra.mxu0 0.0
      %8963 = vmatprep.subr.mxu0 0.0
      %8964 = vmatpush1.msra.mxu0 0.0
      %8965 = vmatprep.subr.mxu0 0.0
      %8966 = vmatpush1.msra.mxu0 0.0
      %8967 = vmatprep.subr.mxu0 0.0
      %8968 = vmatpush1.msra.mxu0 0.0
      %8969 = vmatprep.mubr.f32.mxu0 0.0
      %v8970 = vand.u32 %v8503, 4294901760
      %8971 = vmatmul.mubr.f32.gmra.mrb[0].mxu0 %v8970
      %v8972 = vpop.f32.mrb[0].mxu0
      %v8973 = vadd.f32 %v8899, %v8972
      %v8974 = vpop.f32.mrb[0].mxu0
      %v8975 = vadd.f32 %v8901, %v8974
      %8976 = vdwg.mxu0
      %v8977 = vmul.f32 %v468, %v8973
      %v8978 = vmul.f32 %v469, %v8975
      %8979 = vst [vmem:[%s467] sm:$0xff] %v8977
      %8980 = vst [vmem:[%s467 + $0x8] sm:$0xff] %v8978
      %p8981 = scmp.lt.s32.totalorder %s25, 1
      %s8982 = scalar_select %p8981, %s25, 1
      %s8983 = smul.addr %s8982, 2
      %s8984 = smul.addr %s8983, 8
      %s8985 = scalar_lea.vmem %s14, %s8984
      // Predicated region
      $region77: #{run.1} parent=75 // pred_check
        %p8986 = pneg %p342
      $region78: #{run.1} parent=75 // pred_check_branch
        %8988 = sbr.rel (%p8986) target = $region80
      $region79: #{run.1} parent=75 // pred_region
        _
      $region80: #{run.1} parent=75 // pred_fallthru
        _
    $region76: #{run.1} parent=5 // pred_fallthru
      _
    %p8989 = scmp.le.s32.totalorder 2, %s20
    // Predicated region
    $region81: #{run.1} parent=5 // pred_check
      %p8990 = pneg %p8989
    $region82: #{run.1} parent=5 // pred_check_branch
      %8992 = sbr.rel (%p8990) target = $region84
    $region83: #{run.1} parent=5 // pred_region
      %s8993 = ssub.s32 %s20, 2
      // Predicated region
      $region85: #{run.1} parent=83 // pred_check
        %p8994 = pneg %p348
      $region86: #{run.1} parent=83 // pred_check_branch
        %8996 = sbr.rel (%p8994) target = $region88
      $region87: #{run.1} parent=83 // pred_region
        %p8997 = scmp.lt.s32.totalorder %s26, 1
        %s8998 = scalar_select %p8997, %s26, 1
        %s8999 = smul.addr %s8998, 2
        %s9000 = smul.addr %s8999, 8
        %s9001 = scalar_lea.vmem %s14, %s9000
      $region88: #{run.1} parent=83 // pred_fallthru
        _
    $region84: #{run.1} parent=5 // pred_fallthru
      _
  $region6: #{run.1} parent=0 // loop_footer
    %s24 = sadd.s32 1, %s20
  $region7: #{run.1} parent=0 // loop_footer_branch
    %19 = sbr.rel target = $region3
  $region8: #{run.1} parent=0 // loop_exit
    _

</llo_original>
